<compile_context>
chip_gen: v7x
topology: tpu7x:2x2x1
jax: 0.10.0
libtpu: 0.0.40
codegen_flags: <defaults>
</compile_context>

<pallas_src>
import functools

import jax
import jax.numpy as jnp
from jax import lax
from jax.experimental import pallas as pl
from jax.experimental.pallas import tpu as pltpu

_VMEM = pl.BlockSpec(memory_space=pltpu.MemorySpace.VMEM)


def _pick_row_tile(n):
    # Prefer large M tiles (256/512) to feed the 256-wide MXUs on v6e/v7x.
    for t in (512, 256, 128, 64, 32, 16, 8):
        if n % t == 0:
            return t
    return n


# ----------------------------------------------------------------------------
# Kernel #1: fused time-parallel input projection for all three LSTMs
# ----------------------------------------------------------------------------
def _inproj_kernel(x_ref, w_ref, b_ref, o_ref):
    """o = x @ w + b; w is pre-transposed (E, 12H) bf16, f32 accumulation."""
    o_ref[...] = (jnp.dot(x_ref[...].astype(jnp.bfloat16), w_ref[...],
                          preferred_element_type=jnp.float32)
                  + b_ref[...])


def run_input_projection(x, wt_bf16, b):
    """Row-tiled o = x @ wt + b.  x: (N, E) f32, wt: (E, OUT) bf16, b: (1, OUT)."""
    N, E = x.shape
    OUT = wt_bf16.shape[1]
    rt = _pick_row_tile(N)
    return pl.pallas_call(
        _inproj_kernel,
        out_shape=jax.ShapeDtypeStruct((N, OUT), jnp.float32),
        grid=(N // rt,),
        in_specs=[pl.BlockSpec((rt, E), lambda i: (i, 0)),
                  pl.BlockSpec((E, OUT), lambda i: (0, 0)),
                  pl.BlockSpec((1, OUT), lambda i: (0, 0))],
        out_specs=pl.BlockSpec((rt, OUT), lambda i: (i, 0)),
        compiler_params=pltpu.CompilerParams(
            dimension_semantics=("arbitrary",)),
    )(x, wt_bf16, b)


# ----------------------------------------------------------------------------
# Kernel #2: bi-LSTM encoder + enc2dec + decoder LSTM + fc + masked CE, fused
# ----------------------------------------------------------------------------
def _fused_seq_kernel(xg_ref, mask_ref, tgt_ref,
                      whh_fwd_ref, whh_bwd_ref, whh_dec_ref,
                      w2h_ref, b2h_ref, w2c_ref, b2c_ref,
                      fc_wt_ref, fc_b_ref,
                      loss_ref, dec_out_ref, *, hq, hd, pad_id):
    """Single-invocation fused sequence kernel.

    xg_ref:   (T, B, 8*hq + 4*hd) f32  precomputed x @ W_ih + b; column slabs
              [0:4hq] fwd-enc, [4hq:8hq] bwd-enc, [8hq:8hq+4hd] decoder.
    mask_ref: (T, B, 1) f32  1.0 where t < length[b] (pads are trailing).
    tgt_ref:  (T*B, 1) int32 time-major shifted targets (pad at last step).
    whh_*:    (H, 4H) bf16 recurrent weights.
    w2h/w2c:  (hq, hd) bf16 enc2dec weights; b2h/b2c: (1, hd) f32.
    fc_wt:    (hd, V) bf16; fc_b: (1, V) f32.
    loss_ref: (1, 1) f32 output (mean CE over non-pad targets).
    dec_out_ref: (T*B, hd) f32 VMEM scratch for decoder hidden states.
    """
    T, B, _ = xg_ref.shape

    # Hoisted weight loads (each used T times).
    whh_fwd = whh_fwd_ref[...]
    whh_bwd = whh_bwd_ref[...]
    whh_dec = whh_dec_ref[...]

    def cell(xg, h, c, whh, H):
        gates = xg + jnp.dot(h.astype(jnp.bfloat16), whh,
                             preferred_element_type=jnp.float32)
        i_g = jax.nn.sigmoid(gates[:, 0 * H:1 * H])
        f_g = jax.nn.sigmoid(gates[:, 1 * H:2 * H])
        g_g = jnp.tanh(gates[:, 2 * H:3 * H])
        o_g = jax.nn.sigmoid(gates[:, 3 * H:4 * H])
        c_new = f_g * c + i_g * g_g
        h_new = o_g * jnp.tanh(c_new)
        return h_new, c_new

    # --- Bidirectional encoder: both directions per step, static time index.
    # Freeze-at-pad matches packed-sequence semantics because the initial state
    # is zero and pads are trailing.
    z = jnp.zeros((B, hq), jnp.float32)
    hf, cf, hb, cb = z, z, z, z
    for i in range(T):
        tf_ = i            # forward direction time index (compile-time const)
        tb_ = T - 1 - i    # backward direction time index (compile-time const)

        hf_new, cf_new = cell(xg_ref[tf_, :, 0:4 * hq], hf, cf, whh_fwd, hq)
        mf = mask_ref[tf_] > 0.0
        hf = jnp.where(mf, hf_new, hf)
        cf = jnp.where(mf, cf_new, cf)

        hb_new, cb_new = cell(xg_ref[tb_, :, 4 * hq:8 * hq], hb, cb, whh_bwd, hq)
        mb = mask_ref[tb_] > 0.0
        hb = jnp.where(mb, hb_new, hb)
        cb = jnp.where(mb, cb_new, cb)

    # --- enc2dec (h_fwd + h_bwd, c_fwd + c_bwd), fused into decoder prologue.
    h_sum = hf + hb
    c_sum = cf + cb
    h = (jnp.dot(h_sum.astype(jnp.bfloat16), w2h_ref[...],
                 preferred_element_type=jnp.float32) + b2h_ref[...])
    c = (jnp.dot(c_sum.astype(jnp.bfloat16), w2c_ref[...],
                 preferred_element_type=jnp.float32) + b2c_ref[...])

    # --- Decoder LSTM; per-step outputs (zeros at pad, like pad_packed_sequence).
    off = 8 * hq
    for t in range(T):
        h_new, c_new = cell(xg_ref[t, :, off:off + 4 * hd], h, c, whh_dec, hd)
        m = mask_ref[t] > 0.0
        dec_out_ref[t * B:(t + 1) * B, :] = jnp.where(m, h_new, 0.0)
        h = jnp.where(m, h_new, h)
        c = jnp.where(m, c_new, c)

    # --- decoder_fc + masked cross-entropy epilogue (logits stay in VMEM).
    logits = (jnp.dot(dec_out_ref[...].astype(jnp.bfloat16), fc_wt_ref[...],
                      preferred_element_type=jnp.float32) + fc_b_ref[...])
    N, V = logits.shape
    tgt = tgt_ref[...]                                           # (N, 1) int32
    mx = jnp.max(logits, axis=-1, keepdims=True)
    lse = jnp.log(jnp.sum(jnp.exp(logits - mx), axis=-1, keepdims=True)) + mx
    col = lax.broadcasted_iota(jnp.int32, (N, V), 1)
    tgt_logit = jnp.sum(jnp.where(col == tgt, logits, 0.0),
                        axis=-1, keepdims=True)
    valid = (tgt != pad_id).astype(jnp.float32)                  # ignore_index
    tot = jnp.sum(valid * (lse - tgt_logit))
    cnt = jnp.sum(valid)
    loss_ref[...] = (tot / jnp.maximum(cnt, 1.0)).reshape(1, 1)  # guard all-pad


def run_fused_seq(xg_all, mask, targets, params, pad_id):
    T, B, _ = xg_all.shape
    hq = params["whh_fwd"].shape[0]
    hd = params["whh_dec"].shape[0]
    kernel = functools.partial(_fused_seq_kernel, hq=hq, hd=hd, pad_id=pad_id)
    loss = pl.pallas_call(
        kernel,
        out_shape=jax.ShapeDtypeStruct((1, 1), jnp.float32),
        in_specs=[_VMEM] * 12,
        out_specs=_VMEM,
        scratch_shapes=[pltpu.VMEM((T * B, hd), jnp.float32)],
        compiler_params=pltpu.CompilerParams(
            vmem_limit_bytes=32 * 1024 * 1024),
    )(xg_all, mask, targets,
      params["whh_fwd"], params["whh_bwd"], params["whh_dec"],
      params["w2h"], params["b2h"], params["w2c"], params["b2c"],
      params["fc_wt"], params["fc_b"])
    return loss[0, 0]


# ----------------------------------------------------------------------------
# Parameter construction (deterministic, synthetic, pre-packed for the kernels)
# ----------------------------------------------------------------------------
def init_params(key, n_vocab, d_emb, q_d_h, d_d_h, pad_id):
    ks = jax.random.split(key, 16)
    s = 0.1

    def nrm(k, shape):
        return s * jax.random.normal(k, shape, dtype=jnp.float32)

    emb = nrm(ks[0], (n_vocab, d_emb)).at[pad_id].set(0.0)  # padding_idx row 0

    # PyTorch LSTM layout: W_ih (4H, in), W_hh (4H, H), gate order i|f|g|o.
    def lstm(k0, k1, k2, k3, in_dim, hid):
        wih = nrm(k0, (4 * hid, in_dim))
        whh = nrm(k1, (4 * hid, hid))
        bih = nrm(k2, (4 * hid,))
        bhh = nrm(k3, (4 * hid,))
        return wih.T, whh.T.astype(jnp.bfloat16), (bih + bhh).reshape(1, -1)

    wih_f, whh_f, b_f = lstm(ks[1], ks[2], ks[3], ks[4], d_emb, q_d_h)
    wih_b, whh_b, b_b = lstm(ks[5], ks[6], ks[7], ks[8], d_emb, q_d_h)
    wih_d, whh_d, b_d = lstm(ks[9], ks[10], ks[11], ks[12], d_emb, d_d_h)

    # Pre-concatenated / pre-cast fused input projection (done once at init,
    # not per forward): x @ [Wih_fwd | Wih_bwd | Wih_dec] + [b_f | b_b | b_d].
    wih_all = jnp.concatenate([wih_f, wih_b, wih_d], axis=1).astype(jnp.bfloat16)
    b_all = jnp.concatenate([b_f, b_b, b_d], axis=1)

    return dict(
        emb=emb,
        wih_all=wih_all, b_all=b_all,
        whh_fwd=whh_f, whh_bwd=whh_b, whh_dec=whh_d,
        w2h=nrm(ks[13], (d_d_h, q_d_h)).T.astype(jnp.bfloat16),
        b2h=jnp.zeros((1, d_d_h), jnp.float32),
        w2c=nrm(ks[14], (d_d_h, q_d_h)).T.astype(jnp.bfloat16),
        b2c=jnp.zeros((1, d_d_h), jnp.float32),
        fc_wt=nrm(ks[15], (n_vocab, d_d_h)).T.astype(jnp.bfloat16),
        fc_b=jnp.zeros((1, n_vocab), jnp.float32),
    )


# ----------------------------------------------------------------------------
# Forward pass (glue in plain JAX, hot paths in 2 Pallas calls)
# ----------------------------------------------------------------------------
def vae_dummy_forward(params, x_padded, lengths, pad_id):
    """Returns (kl_loss, recon_loss), matching VAEDummy.forward.

    x_padded: (B, T) int32 token ids, padded with pad_id (trailing pads)
    lengths:  (B,)   int32 valid lengths (max == T)
    """
    B, T = x_padded.shape
    Hq = params["whh_fwd"].shape[0]
    Hd = params["whh_dec"].shape[0]
    E = params["emb"].shape[1]

    # Time-major embedding gather (avoids transposing the largest activation).
    x_emb_tm = params["emb"][x_padded.T]                      # (T, B, E)
    mask = (jnp.arange(T)[:, None] < lengths[None, :]
            ).astype(jnp.float32)[:, :, None]                 # (T, B, 1)

    # Call #1: fused, time-parallel x @ W_ih for all three LSTMs.
    xg_flat = run_input_projection(x_emb_tm.reshape(T * B, E),
                                   params["wih_all"], params["b_all"])
    xg_all = xg_flat.reshape(T, B, 8 * Hq + 4 * Hd)           # free reshape

    # Shifted targets, time-major (tiny int32 permute); last step gets pad
    # targets (ignored), matching F.cross_entropy(y[:, :-1], x[:, 1:], pad).
    tgt_tm = jnp.concatenate([x_padded[:, 1:].T,
                              jnp.full((1, B), pad_id, jnp.int32)], axis=0)
    targets = tgt_tm.reshape(T * B, 1).astype(jnp.int32)

    # Call #2: encoder (both dirs) + enc2dec + decoder + fc + masked CE, fused.
    recon_loss = run_fused_seq(xg_all, mask, targets, params, pad_id)

    kl_loss = jnp.float32(0.0)
    return kl_loss, recon_loss


# TODO(synk): string2tensor / tensor2string / sample() (SELFIES decoding and
# multinomial sampling) are host-side utilities outside the forward hot path
# and are not implemented as kernels.


# ----------------------------------------------------------------------------
# Main
# ----------------------------------------------------------------------------
if __name__ == "__main__":
    # Small but (8,128)-aligned config so every tile is lane-dense.
    N_VOCAB = 128
    D_EMB = 128       # config.embedding_dim
    Q_D_H = 128       # config.q_d_h, q_n_layers=1, q_bidir=True
    D_D_H = 128       # config.d_d_h, d_n_layers=1
    PAD, BOS, EOS = 0, 1, 2
    B, T = 8, 8

    key = jax.random.PRNGKey(0)
    k_param, k_tok = jax.random.split(key)

    params = init_params(k_param, N_VOCAB, D_EMB, Q_D_H, D_D_H, PAD)

    # Build a "list of variable-length sequences" and pad it (pad_sequence).
    lengths = jnp.array([8, 6, 7, 5, 8, 4, 6, 8], dtype=jnp.int32)   # max == T
    body = jax.random.randint(k_tok, (B, T), 3, N_VOCAB, dtype=jnp.int32)
    x_padded = body.at[:, 0].set(BOS)
    col = jnp.arange(T)[None, :]
    x_padded = jnp.where(col == (lengths[:, None] - 1), EOS, x_padded)
    x_padded = jnp.where(col >= lengths[:, None], PAD, x_padded)     # (B, T)

    fwd = jax.jit(vae_dummy_forward, static_argnames=("pad_id",))
    kl_loss, recon_loss = fwd(params, x_padded, lengths, pad_id=PAD)
    kl_loss = jax.block_until_ready(kl_loss)
    recon_loss = jax.block_until_ready(recon_loss)

    assert jnp.isfinite(recon_loss), "recon_loss is not finite"
    print("KERNEL_OK")
</pallas_src>

<mosaic_0001>
module attributes {stable_mosaic.version = 11 : i64} {
  func.func @_inproj_kernel(%arg0: i32, %arg1: memref<64x128xf32, #tpu.memory_space<vmem>>, %arg2: memref<128x1536xbf16, #tpu.memory_space<vmem>>, %arg3: memref<1x1536xf32, #tpu.memory_space<vmem>>, %arg4: memref<64x1536xf32, #tpu.memory_space<vmem>>) attributes {dimension_semantics = [#tpu.dimension_semantics<arbitrary>], iteration_bounds = array<i64: 1>, scalar_prefetch = 0 : i64, scratch_operands = 0 : i64, tpu.core_type = #tpu.core_type<tc>, window_params = [{transform_indices = @transform_0, window_bounds = array<i64: 64, 128>}, {pipeline_mode = #tpu.pipeline_mode<synchronous>, transform_indices = @transform_1, window_bounds = array<i64: 128, 1536>}, {pipeline_mode = #tpu.pipeline_mode<synchronous>, transform_indices = @transform_2, window_bounds = array<i64: 1, 1536>}, {transform_indices = @transform_3, window_bounds = array<i64: 64, 1536>}]} {
    %c0 = arith.constant 0 : index
    %c0_0 = arith.constant 0 : index
    %0 = vector.load %arg1[%c0, %c0_0] : memref<64x128xf32, #tpu.memory_space<vmem>>, vector<64x128xf32>
    %1 = arith.truncf %0 : vector<64x128xf32> to vector<64x128xbf16>
    %c0_1 = arith.constant 0 : index
    %c0_2 = arith.constant 0 : index
    %2 = vector.load %arg2[%c0_1, %c0_2] : memref<128x1536xbf16, #tpu.memory_space<vmem>>, vector<128x1536xbf16>
    %cst = arith.constant dense<0.000000e+00> : vector<64x1536xf32>
    %3 = tpu.matmul %1, %2, %cst {dimension_numbers = #tpu.dot_dimension_numbers<[1], [0], [0], [1], [0, 0, 1, 1], [], []>} : vector<64x128xbf16>, vector<128x1536xbf16>, vector<64x1536xf32> -> vector<64x1536xf32>
    %c0_3 = arith.constant 0 : index
    %c0_4 = arith.constant 0 : index
    %4 = vector.load %arg3[%c0_3, %c0_4] : memref<1x1536xf32, #tpu.memory_space<vmem>>, vector<1x1536xf32>
    %5 = vector.broadcast %4 : vector<1x1536xf32> to vector<64x1536xf32>
    %6 = arith.addf %3, %5 : vector<64x1536xf32>
    %c0_5 = arith.constant 0 : index
    %c0_6 = arith.constant 0 : index
    %7 = vector.load %arg4[%c0_5, %c0_6] : memref<64x1536xf32, #tpu.memory_space<vmem>>, vector<64x1536xf32>
    tpu.vector_store %arg4[%c0_5, %c0_6], %6 {strides = array<i32>} : memref<64x1536xf32, #tpu.memory_space<vmem>>, vector<64x1536xf32>,
    return
  }
  func.func @transform_0(%arg0: i32) -> (i32, i32) {
    %c0_i32 = arith.constant 0 : i32
    %c0_i32_0 = arith.constant 0 : i32
    return %arg0, %c0_i32 : i32, i32
  }
  func.func @transform_1(%arg0: i32) -> (i32, i32) {
    %c0_i32 = arith.constant 0 : i32
    %c0_i32_0 = arith.constant 0 : i32
    %c0_i32_1 = arith.constant 0 : i32
    return %c0_i32, %c0_i32_0 : i32, i32
  }
  func.func @transform_2(%arg0: i32) -> (i32, i32) {
    %c0_i32 = arith.constant 0 : i32
    %c0_i32_0 = arith.constant 0 : i32
    %c0_i32_1 = arith.constant 0 : i32
    return %c0_i32, %c0_i32_0 : i32, i32
  }
  func.func @transform_3(%arg0: i32) -> (i32, i32) {
    %c0_i32 = arith.constant 0 : i32
    %c0_i32_0 = arith.constant 0 : i32
    return %arg0, %c0_i32 : i32, i32
  }
}

module attributes {stable_mosaic.version = 11 : i64} {
  func.func @_fused_seq_kernel(%arg0: memref<8x8x1536xf32, #tpu.memory_space<vmem>>, %arg1: memref<8x8x1xf32, #tpu.memory_space<vmem>>, %arg2: memref<64x1xi32, #tpu.memory_space<vmem>>, %arg3: memref<128x512xbf16, #tpu.memory_space<vmem>>, %arg4: memref<128x512xbf16, #tpu.memory_space<vmem>>, %arg5: memref<128x512xbf16, #tpu.memory_space<vmem>>, %arg6: memref<128x128xbf16, #tpu.memory_space<vmem>>, %arg7: memref<1x128xf32, #tpu.memory_space<vmem>>, %arg8: memref<128x128xbf16, #tpu.memory_space<vmem>>, %arg9: memref<1x128xf32, #tpu.memory_space<vmem>>, %arg10: memref<128x128xbf16, #tpu.memory_space<vmem>>, %arg11: memref<1x128xf32, #tpu.memory_space<vmem>>, %arg12: memref<1x1xf32, #tpu.memory_space<vmem>>, %arg13: memref<64x128xf32, #tpu.memory_space<vmem>>) attributes {dimension_semantics = [], scalar_prefetch = 0 : i64, scratch_operands = 1 : i64, tpu.core_type = #tpu.core_type<tc>} {
    %c0 = arith.constant 0 : index
    %c0_0 = arith.constant 0 : index
    %0 = vector.load %arg3[%c0, %c0_0] : memref<128x512xbf16, #tpu.memory_space<vmem>>, vector<128x512xbf16>
    %c0_1 = arith.constant 0 : index
    %c0_2 = arith.constant 0 : index
    %1 = vector.load %arg4[%c0_1, %c0_2] : memref<128x512xbf16, #tpu.memory_space<vmem>>, vector<128x512xbf16>
    %c0_3 = arith.constant 0 : index
    %c0_4 = arith.constant 0 : index
    %2 = vector.load %arg5[%c0_3, %c0_4] : memref<128x512xbf16, #tpu.memory_space<vmem>>, vector<128x512xbf16>
    %cst = arith.constant 0.000000e+00 : f32
    %3 = vector.broadcast %cst : f32 to vector<8x128xf32>
    %c0_5 = arith.constant 0 : index
    %c0_6 = arith.constant 0 : index
    %c0_7 = arith.constant 0 : index
    %4 = vector.load %arg0[%c0_5, %c0_6, %c0_7] : memref<8x8x1536xf32, #tpu.memory_space<vmem>>, vector<1x8x512xf32>
    %5 = vector.shape_cast %4 : vector<1x8x512xf32> to vector<8x512xf32>
    %6 = arith.truncf %3 : vector<8x128xf32> to vector<8x128xbf16>
    %cst_8 = arith.constant dense<0.000000e+00> : vector<8x512xf32>
    %7 = tpu.matmul %6, %0, %cst_8 {dimension_numbers = #tpu.dot_dimension_numbers<[1], [0], [0], [1], [0, 0, 1, 1], [], []>} : vector<8x128xbf16>, vector<128x512xbf16>, vector<8x512xf32> -> vector<8x512xf32>
    %8 = arith.addf %5, %7 : vector<8x512xf32>
    %9 = vector.extract_strided_slice %8 {offsets = [0, 0], sizes = [8, 128], strides = [1, 1]} : vector<8x512xf32> to vector<8x128xf32>
    %10 = arith.negf %9 : vector<8x128xf32>
    %11 = math.exp %10 : vector<8x128xf32>
    %cst_9 = arith.constant 1.000000e+00 : f32
    %12 = vector.broadcast %cst_9 : f32 to vector<8x128xf32>
    %13 = arith.addf %12, %11 : vector<8x128xf32>
    %14 = arith.divf %12, %13 : vector<8x128xf32>
    %15 = vector.extract_strided_slice %8 {offsets = [0, 128], sizes = [8, 128], strides = [1, 1]} : vector<8x512xf32> to vector<8x128xf32>
    %16 = arith.negf %15 : vector<8x128xf32>
    %17 = math.exp %16 : vector<8x128xf32>
    %cst_10 = arith.constant 1.000000e+00 : f32
    %18 = vector.broadcast %cst_10 : f32 to vector<8x128xf32>
    %19 = arith.addf %18, %17 : vector<8x128xf32>
    %20 = arith.divf %18, %19 : vector<8x128xf32>
    %21 = vector.extract_strided_slice %8 {offsets = [0, 256], sizes = [8, 128], strides = [1, 1]} : vector<8x512xf32> to vector<8x128xf32>
    %22 = math.tanh %21 : vector<8x128xf32>
    %23 = vector.extract_strided_slice %8 {offsets = [0, 384], sizes = [8, 128], strides = [1, 1]} : vector<8x512xf32> to vector<8x128xf32>
    %24 = arith.negf %23 : vector<8x128xf32>
    %25 = math.exp %24 : vector<8x128xf32>
    %cst_11 = arith.constant 1.000000e+00 : f32
    %26 = vector.broadcast %cst_11 : f32 to vector<8x128xf32>
    %27 = arith.addf %26, %25 : vector<8x128xf32>
    %28 = arith.divf %26, %27 : vector<8x128xf32>
    %29 = arith.mulf %20, %3 : vector<8x128xf32>
    %30 = arith.mulf %14, %22 : vector<8x128xf32>
    %31 = arith.addf %29, %30 : vector<8x128xf32>
    %32 = math.tanh %31 : vector<8x128xf32>
    %33 = arith.mulf %28, %32 : vector<8x128xf32>
    %c0_12 = arith.constant 0 : index
    %c0_13 = arith.constant 0 : index
    %c0_14 = arith.constant 0 : index
    %34 = vector.load %arg1[%c0_12, %c0_13, %c0_14] : memref<8x8x1xf32, #tpu.memory_space<vmem>>, vector<1x8x1xf32>
    %35 = vector.shape_cast %34 : vector<1x8x1xf32> to vector<8x1xf32>
    %cst_15 = arith.constant 0.000000e+00 : f32
    %36 = vector.broadcast %cst_15 : f32 to vector<8x1xf32>
    %37 = arith.cmpf ogt, %35, %36 : vector<8x1xf32>
    %38 = vector.shape_cast %37 : vector<8x1xi1> to vector<8x1xi1>
    %39 = vector.broadcast %38 : vector<8x1xi1> to vector<8x128xi1>
    %40 = arith.select %39, %33, %3 : vector<8x128xi1>, vector<8x128xf32>
    %41 = vector.shape_cast %37 : vector<8x1xi1> to vector<8x1xi1>
    %42 = vector.broadcast %41 : vector<8x1xi1> to vector<8x128xi1>
    %43 = arith.select %42, %31, %3 : vector<8x128xi1>, vector<8x128xf32>
    %c7 = arith.constant 7 : index
    %c0_16 = arith.constant 0 : index
    %c512 = arith.constant 512 : index
    %44 = vector.load %arg0[%c7, %c0_16, %c512] : memref<8x8x1536xf32, #tpu.memory_space<vmem>>, vector<1x8x512xf32>
    %45 = vector.shape_cast %44 : vector<1x8x512xf32> to vector<8x512xf32>
    %46 = arith.truncf %3 : vector<8x128xf32> to vector<8x128xbf16>
    %cst_17 = arith.constant dense<0.000000e+00> : vector<8x512xf32>
    %47 = tpu.matmul %46, %1, %cst_17 {dimension_numbers = #tpu.dot_dimension_numbers<[1], [0], [0], [1], [0, 0, 1, 1], [], []>} : vector<8x128xbf16>, vector<128x512xbf16>, vector<8x512xf32> -> vector<8x512xf32>
    %48 = arith.addf %45, %47 : vector<8x512xf32>
    %49 = vector.extract_strided_slice %48 {offsets = [0, 0], sizes = [8, 128], strides = [1, 1]} : vector<8x512xf32> to vector<8x128xf32>
    %50 = arith.negf %49 : vector<8x128xf32>
    %51 = math.exp %50 : vector<8x128xf32>
    %cst_18 = arith.constant 1.000000e+00 : f32
    %52 = vector.broadcast %cst_18 : f32 to vector<8x128xf32>
    %53 = arith.addf %52, %51 : vector<8x128xf32>
    %54 = arith.divf %52, %53 : vector<8x128xf32>
    %55 = vector.extract_strided_slice %48 {offsets = [0, 128], sizes = [8, 128], strides = [1, 1]} : vector<8x512xf32> to vector<8x128xf32>
    %56 = arith.negf %55 : vector<8x128xf32>
    %57 = math.exp %56 : vector<8x128xf32>
    %cst_19 = arith.constant 1.000000e+00 : f32
    %58 = vector.broadcast %cst_19 : f32 to vector<8x128xf32>
    %59 = arith.addf %58, %57 : vector<8x128xf32>
    %60 = arith.divf %58, %59 : vector<8x128xf32>
    %61 = vector.extract_strided_slice %48 {offsets = [0, 256], sizes = [8, 128], strides = [1, 1]} : vector<8x512xf32> to vector<8x128xf32>
    %62 = math.tanh %61 : vector<8x128xf32>
    %63 = vector.extract_strided_slice %48 {offsets = [0, 384], sizes = [8, 128], strides = [1, 1]} : vector<8x512xf32> to vector<8x128xf32>
    %64 = arith.negf %63 : vector<8x128xf32>
    %65 = math.exp %64 : vector<8x128xf32>
    %cst_20 = arith.constant 1.000000e+00 : f32
    %66 = vector.broadcast %cst_20 : f32 to vector<8x128xf32>
    %67 = arith.addf %66, %65 : vector<8x128xf32>
    %68 = arith.divf %66, %67 : vector<8x128xf32>
    %69 = arith.mulf %60, %3 : vector<8x128xf32>
    %70 = arith.mulf %54, %62 : vector<8x128xf32>
    %71 = arith.addf %69, %70 : vector<8x128xf32>
    %72 = math.tanh %71 : vector<8x128xf32>
    %73 = arith.mulf %68, %72 : vector<8x128xf32>
    %c7_21 = arith.constant 7 : index
    %c0_22 = arith.constant 0 : index
    %c0_23 = arith.constant 0 : index
    %74 = vector.load %arg1[%c7_21, %c0_22, %c0_23] : memref<8x8x1xf32, #tpu.memory_space<vmem>>, vector<1x8x1xf32>
    %75 = vector.shape_cast %74 : vector<1x8x1xf32> to vector<8x1xf32>
    %cst_24 = arith.constant 0.000000e+00 : f32
    %76 = vector.broadcast %cst_24 : f32 to vector<8x1xf32>
    %77 = arith.cmpf ogt, %75, %76 : vector<8x1xf32>
    %78 = vector.shape_cast %77 : vector<8x1xi1> to vector<8x1xi1>
    %79 = vector.broadcast %78 : vector<8x1xi1> to vector<8x128xi1>
    %80 = arith.select %79, %73, %3 : vector<8x128xi1>, vector<8x128xf32>
    %81 = vector.shape_cast %77 : vector<8x1xi1> to vector<8x1xi1>
    %82 = vector.broadcast %81 : vector<8x1xi1> to vector<8x128xi1>
    %83 = arith.select %82, %71, %3 : vector<8x128xi1>, vector<8x128xf32>
    %c1 = arith.constant 1 : index
    %c0_25 = arith.constant 0 : index
    %c0_26 = arith.constant 0 : index
    %84 = vector.load %arg0[%c1, %c0_25, %c0_26] : memref<8x8x1536xf32, #tpu.memory_space<vmem>>, vector<1x8x512xf32>
    %85 = vector.shape_cast %84 : vector<1x8x512xf32> to vector<8x512xf32>
    %86 = arith.truncf %40 : vector<8x128xf32> to vector<8x128xbf16>
    %cst_27 = arith.constant dense<0.000000e+00> : vector<8x512xf32>
    %87 = tpu.matmul %86, %0, %cst_27 {dimension_numbers = #tpu.dot_dimension_numbers<[1], [0], [0], [1], [0, 0, 1, 1], [], []>} : vector<8x128xbf16>, vector<128x512xbf16>, vector<8x512xf32> -> vector<8x512xf32>
    %88 = arith.addf %85, %87 : vector<8x512xf32>
    %89 = vector.extract_strided_slice %88 {offsets = [0, 0], sizes = [8, 128], strides = [1, 1]} : vector<8x512xf32> to vector<8x128xf32>
    %90 = arith.negf %89 : vector<8x128xf32>
    %91 = math.exp %90 : vector<8x128xf32>
    %cst_28 = arith.constant 1.000000e+00 : f32
    %92 = vector.broadcast %cst_28 : f32 to vector<8x128xf32>
    %93 = arith.addf %92, %91 : vector<8x128xf32>
    %94 = arith.divf %92, %93 : vector<8x128xf32>
    %95 = vector.extract_strided_slice %88 {offsets = [0, 128], sizes = [8, 128], strides = [1, 1]} : vector<8x512xf32> to vector<8x128xf32>
    %96 = arith.negf %95 : vector<8x128xf32>
    %97 = math.exp %96 : vector<8x128xf32>
    %cst_29 = arith.constant 1.000000e+00 : f32
    %98 = vector.broadcast %cst_29 : f32 to vector<8x128xf32>
    %99 = arith.addf %98, %97 : vector<8x128xf32>
    %100 = arith.divf %98, %99 : vector<8x128xf32>
    %101 = vector.extract_strided_slice %88 {offsets = [0, 256], sizes = [8, 128], strides = [1, 1]} : vector<8x512xf32> to vector<8x128xf32>
    %102 = math.tanh %101 : vector<8x128xf32>
    %103 = vector.extract_strided_slice %88 {offsets = [0, 384], sizes = [8, 128], strides = [1, 1]} : vector<8x512xf32> to vector<8x128xf32>
    %104 = arith.negf %103 : vector<8x128xf32>
    %105 = math.exp %104 : vector<8x128xf32>
    %cst_30 = arith.constant 1.000000e+00 : f32
    %106 = vector.broadcast %cst_30 : f32 to vector<8x128xf32>
    %107 = arith.addf %106, %105 : vector<8x128xf32>
    %108 = arith.divf %106, %107 : vector<8x128xf32>
    %109 = arith.mulf %100, %43 : vector<8x128xf32>
    %110 = arith.mulf %94, %102 : vector<8x128xf32>
    %111 = arith.addf %109, %110 : vector<8x128xf32>
    %112 = math.tanh %111 : vector<8x128xf32>
    %113 = arith.mulf %108, %112 : vector<8x128xf32>
    %c1_31 = arith.constant 1 : index
    %c0_32 = arith.constant 0 : index
    %c0_33 = arith.constant 0 : index
    %114 = vector.load %arg1[%c1_31, %c0_32, %c0_33] : memref<8x8x1xf32, #tpu.memory_space<vmem>>, vector<1x8x1xf32>
    %115 = vector.shape_cast %114 : vector<1x8x1xf32> to vector<8x1xf32>
    %cst_34 = arith.constant 0.000000e+00 : f32
    %116 = vector.broadcast %cst_34 : f32 to vector<8x1xf32>
    %117 = arith.cmpf ogt, %115, %116 : vector<8x1xf32>
    %118 = vector.shape_cast %117 : vector<8x1xi1> to vector<8x1xi1>
    %119 = vector.broadcast %118 : vector<8x1xi1> to vector<8x128xi1>
    %120 = arith.select %119, %113, %40 : vector<8x128xi1>, vector<8x128xf32>
    %121 = vector.shape_cast %117 : vector<8x1xi1> to vector<8x1xi1>
    %122 = vector.broadcast %121 : vector<8x1xi1> to vector<8x128xi1>
    %123 = arith.select %122, %111, %43 : vector<8x128xi1>, vector<8x128xf32>
    %c6 = arith.constant 6 : index
    %c0_35 = arith.constant 0 : index
    %c512_36 = arith.constant 512 : index
    %124 = vector.load %arg0[%c6, %c0_35, %c512_36] : memref<8x8x1536xf32, #tpu.memory_space<vmem>>, vector<1x8x512xf32>
    %125 = vector.shape_cast %124 : vector<1x8x512xf32> to vector<8x512xf32>
    %126 = arith.truncf %80 : vector<8x128xf32> to vector<8x128xbf16>
    %cst_37 = arith.constant dense<0.000000e+00> : vector<8x512xf32>
    %127 = tpu.matmul %126, %1, %cst_37 {dimension_numbers = #tpu.dot_dimension_numbers<[1], [0], [0], [1], [0, 0, 1, 1], [], []>} : vector<8x128xbf16>, vector<128x512xbf16>, vector<8x512xf32> -> vector<8x512xf32>
    %128 = arith.addf %125, %127 : vector<8x512xf32>
    %129 = vector.extract_strided_slice %128 {offsets = [0, 0], sizes = [8, 128], strides = [1, 1]} : vector<8x512xf32> to vector<8x128xf32>
    %130 = arith.negf %129 : vector<8x128xf32>
    %131 = math.exp %130 : vector<8x128xf32>
    %cst_38 = arith.constant 1.000000e+00 : f32
    %132 = vector.broadcast %cst_38 : f32 to vector<8x128xf32>
    %133 = arith.addf %132, %131 : vector<8x128xf32>
    %134 = arith.divf %132, %133 : vector<8x128xf32>
    %135 = vector.extract_strided_slice %128 {offsets = [0, 128], sizes = [8, 128], strides = [1, 1]} : vector<8x512xf32> to vector<8x128xf32>
    %136 = arith.negf %135 : vector<8x128xf32>
    %137 = math.exp %136 : vector<8x128xf32>
    %cst_39 = arith.constant 1.000000e+00 : f32
    %138 = vector.broadcast %cst_39 : f32 to vector<8x128xf32>
    %139 = arith.addf %138, %137 : vector<8x128xf32>
    %140 = arith.divf %138, %139 : vector<8x128xf32>
    %141 = vector.extract_strided_slice %128 {offsets = [0, 256], sizes = [8, 128], strides = [1, 1]} : vector<8x512xf32> to vector<8x128xf32>
    %142 = math.tanh %141 : vector<8x128xf32>
    %143 = vector.extract_strided_slice %128 {offsets = [0, 384], sizes = [8, 128], strides = [1, 1]} : vector<8x512xf32> to vector<8x128xf32>
    %144 = arith.negf %143 : vector<8x128xf32>
    %145 = math.exp %144 : vector<8x128xf32>
    %cst_40 = arith.constant 1.000000e+00 : f32
    %146 = vector.broadcast %cst_40 : f32 to vector<8x128xf32>
    %147 = arith.addf %146, %145 : vector<8x128xf32>
    %148 = arith.divf %146, %147 : vector<8x128xf32>
    %149 = arith.mulf %140, %83 : vector<8x128xf32>
    %150 = arith.mulf %134, %142 : vector<8x128xf32>
    %151 = arith.addf %149, %150 : vector<8x128xf32>
    %152 = math.tanh %151 : vector<8x128xf32>
    %153 = arith.mulf %148, %152 : vector<8x128xf32>
    %c6_41 = arith.constant 6 : index
    %c0_42 = arith.constant 0 : index
    %c0_43 = arith.constant 0 : index
    %154 = vector.load %arg1[%c6_41, %c0_42, %c0_43] : memref<8x8x1xf32, #tpu.memory_space<vmem>>, vector<1x8x1xf32>
    %155 = vector.shape_cast %154 : vector<1x8x1xf32> to vector<8x1xf32>
    %cst_44 = arith.constant 0.000000e+00 : f32
    %156 = vector.broadcast %cst_44 : f32 to vector<8x1xf32>
    %157 = arith.cmpf ogt, %155, %156 : vector<8x1xf32>
    %158 = vector.shape_cast %157 : vector<8x1xi1> to vector<8x1xi1>
    %159 = vector.broadcast %158 : vector<8x1xi1> to vector<8x128xi1>
    %160 = arith.select %159, %153, %80 : vector<8x128xi1>, vector<8x128xf32>
    %161 = vector.shape_cast %157 : vector<8x1xi1> to vector<8x1xi1>
    %162 = vector.broadcast %161 : vector<8x1xi1> to vector<8x128xi1>
    %163 = arith.select %162, %151, %83 : vector<8x128xi1>, vector<8x128xf32>
    %c2 = arith.constant 2 : index
    %c0_45 = arith.constant 0 : index
    %c0_46 = arith.constant 0 : index
    %164 = vector.load %arg0[%c2, %c0_45, %c0_46] : memref<8x8x1536xf32, #tpu.memory_space<vmem>>, vector<1x8x512xf32>
    %165 = vector.shape_cast %164 : vector<1x8x512xf32> to vector<8x512xf32>
    %166 = arith.truncf %120 : vector<8x128xf32> to vector<8x128xbf16>
    %cst_47 = arith.constant dense<0.000000e+00> : vector<8x512xf32>
    %167 = tpu.matmul %166, %0, %cst_47 {dimension_numbers = #tpu.dot_dimension_numbers<[1], [0], [0], [1], [0, 0, 1, 1], [], []>} : vector<8x128xbf16>, vector<128x512xbf16>, vector<8x512xf32> -> vector<8x512xf32>
    %168 = arith.addf %165, %167 : vector<8x512xf32>
    %169 = vector.extract_strided_slice %168 {offsets = [0, 0], sizes = [8, 128], strides = [1, 1]} : vector<8x512xf32> to vector<8x128xf32>
    %170 = arith.negf %169 : vector<8x128xf32>
    %171 = math.exp %170 : vector<8x128xf32>
    %cst_48 = arith.constant 1.000000e+00 : f32
    %172 = vector.broadcast %cst_48 : f32 to vector<8x128xf32>
    %173 = arith.addf %172, %171 : vector<8x128xf32>
    %174 = arith.divf %172, %173 : vector<8x128xf32>
    %175 = vector.extract_strided_slice %168 {offsets = [0, 128], sizes = [8, 128], strides = [1, 1]} : vector<8x512xf32> to vector<8x128xf32>
    %176 = arith.negf %175 : vector<8x128xf32>
    %177 = math.exp %176 : vector<8x128xf32>
    %cst_49 = arith.constant 1.000000e+00 : f32
    %178 = vector.broadcast %cst_49 : f32 to vector<8x128xf32>
    %179 = arith.addf %178, %177 : vector<8x128xf32>
    %180 = arith.divf %178, %179 : vector<8x128xf32>
    %181 = vector.extract_strided_slice %168 {offsets = [0, 256], sizes = [8, 128], strides = [1, 1]} : vector<8x512xf32> to vector<8x128xf32>
    %182 = math.tanh %181 : vector<8x128xf32>
    %183 = vector.extract_strided_slice %168 {offsets = [0, 384], sizes = [8, 128], strides = [1, 1]} : vector<8x512xf32> to vector<8x128xf32>
    %184 = arith.negf %183 : vector<8x128xf32>
    %185 = math.exp %184 : vector<8x128xf32>
    %cst_50 = arith.constant 1.000000e+00 : f32
    %186 = vector.broadcast %cst_50 : f32 to vector<8x128xf32>
    %187 = arith.addf %186, %185 : vector<8x128xf32>
    %188 = arith.divf %186, %187 : vector<8x128xf32>
    %189 = arith.mulf %180, %123 : vector<8x128xf32>
    %190 = arith.mulf %174, %182 : vector<8x128xf32>
    %191 = arith.addf %189, %190 : vector<8x128xf32>
    %192 = math.tanh %191 : vector<8x128xf32>
    %193 = arith.mulf %188, %192 : vector<8x128xf32>
    %c2_51 = arith.constant 2 : index
    %c0_52 = arith.constant 0 : index
    %c0_53 = arith.constant 0 : index
    %194 = vector.load %arg1[%c2_51, %c0_52, %c0_53] : memref<8x8x1xf32, #tpu.memory_space<vmem>>, vector<1x8x1xf32>
    %195 = vector.shape_cast %194 : vector<1x8x1xf32> to vector<8x1xf32>
    %cst_54 = arith.constant 0.000000e+00 : f32
    %196 = vector.broadcast %cst_54 : f32 to vector<8x1xf32>
    %197 = arith.cmpf ogt, %195, %196 : vector<8x1xf32>
    %198 = vector.shape_cast %197 : vector<8x1xi1> to vector<8x1xi1>
    %199 = vector.broadcast %198 : vector<8x1xi1> to vector<8x128xi1>
    %200 = arith.select %199, %193, %120 : vector<8x128xi1>, vector<8x128xf32>
    %201 = vector.shape_cast %197 : vector<8x1xi1> to vector<8x1xi1>
    %202 = vector.broadcast %201 : vector<8x1xi1> to vector<8x128xi1>
    %203 = arith.select %202, %191, %123 : vector<8x128xi1>, vector<8x128xf32>
    %c5 = arith.constant 5 : index
    %c0_55 = arith.constant 0 : index
    %c512_56 = arith.constant 512 : index
    %204 = vector.load %arg0[%c5, %c0_55, %c512_56] : memref<8x8x1536xf32, #tpu.memory_space<vmem>>, vector<1x8x512xf32>
    %205 = vector.shape_cast %204 : vector<1x8x512xf32> to vector<8x512xf32>
    %206 = arith.truncf %160 : vector<8x128xf32> to vector<8x128xbf16>
    %cst_57 = arith.constant dense<0.000000e+00> : vector<8x512xf32>
    %207 = tpu.matmul %206, %1, %cst_57 {dimension_numbers = #tpu.dot_dimension_numbers<[1], [0], [0], [1], [0, 0, 1, 1], [], []>} : vector<8x128xbf16>, vector<128x512xbf16>, vector<8x512xf32> -> vector<8x512xf32>
    %208 = arith.addf %205, %207 : vector<8x512xf32>
    %209 = vector.extract_strided_slice %208 {offsets = [0, 0], sizes = [8, 128], strides = [1, 1]} : vector<8x512xf32> to vector<8x128xf32>
    %210 = arith.negf %209 : vector<8x128xf32>
    %211 = math.exp %210 : vector<8x128xf32>
    %cst_58 = arith.constant 1.000000e+00 : f32
    %212 = vector.broadcast %cst_58 : f32 to vector<8x128xf32>
    %213 = arith.addf %212, %211 : vector<8x128xf32>
    %214 = arith.divf %212, %213 : vector<8x128xf32>
    %215 = vector.extract_strided_slice %208 {offsets = [0, 128], sizes = [8, 128], strides = [1, 1]} : vector<8x512xf32> to vector<8x128xf32>
    %216 = arith.negf %215 : vector<8x128xf32>
    %217 = math.exp %216 : vector<8x128xf32>
    %cst_59 = arith.constant 1.000000e+00 : f32
    %218 = vector.broadcast %cst_59 : f32 to vector<8x128xf32>
    %219 = arith.addf %218, %217 : vector<8x128xf32>
    %220 = arith.divf %218, %219 : vector<8x128xf32>
    %221 = vector.extract_strided_slice %208 {offsets = [0, 256], sizes = [8, 128], strides = [1, 1]} : vector<8x512xf32> to vector<8x128xf32>
    %222 = math.tanh %221 : vector<8x128xf32>
    %223 = vector.extract_strided_slice %208 {offsets = [0, 384], sizes = [8, 128], strides = [1, 1]} : vector<8x512xf32> to vector<8x128xf32>
    %224 = arith.negf %223 : vector<8x128xf32>
    %225 = math.exp %224 : vector<8x128xf32>
    %cst_60 = arith.constant 1.000000e+00 : f32
    %226 = vector.broadcast %cst_60 : f32 to vector<8x128xf32>
    %227 = arith.addf %226, %225 : vector<8x128xf32>
    %228 = arith.divf %226, %227 : vector<8x128xf32>
    %229 = arith.mulf %220, %163 : vector<8x128xf32>
    %230 = arith.mulf %214, %222 : vector<8x128xf32>
    %231 = arith.addf %229, %230 : vector<8x128xf32>
    %232 = math.tanh %231 : vector<8x128xf32>
    %233 = arith.mulf %228, %232 : vector<8x128xf32>
    %c5_61 = arith.constant 5 : index
    %c0_62 = arith.constant 0 : index
    %c0_63 = arith.constant 0 : index
    %234 = vector.load %arg1[%c5_61, %c0_62, %c0_63] : memref<8x8x1xf32, #tpu.memory_space<vmem>>, vector<1x8x1xf32>
    %235 = vector.shape_cast %234 : vector<1x8x1xf32> to vector<8x1xf32>
    %cst_64 = arith.constant 0.000000e+00 : f32
    %236 = vector.broadcast %cst_64 : f32 to vector<8x1xf32>
    %237 = arith.cmpf ogt, %235, %236 : vector<8x1xf32>
    %238 = vector.shape_cast %237 : vector<8x1xi1> to vector<8x1xi1>
    %239 = vector.broadcast %238 : vector<8x1xi1> to vector<8x128xi1>
    %240 = arith.select %239, %233, %160 : vector<8x128xi1>, vector<8x128xf32>
    %241 = vector.shape_cast %237 : vector<8x1xi1> to vector<8x1xi1>
    %242 = vector.broadcast %241 : vector<8x1xi1> to vector<8x128xi1>
    %243 = arith.select %242, %231, %163 : vector<8x128xi1>, vector<8x128xf32>
    %c3 = arith.constant 3 : index
    %c0_65 = arith.constant 0 : index
    %c0_66 = arith.constant 0 : index
    %244 = vector.load %arg0[%c3, %c0_65, %c0_66] : memref<8x8x1536xf32, #tpu.memory_space<vmem>>, vector<1x8x512xf32>
    %245 = vector.shape_cast %244 : vector<1x8x512xf32> to vector<8x512xf32>
    %246 = arith.truncf %200 : vector<8x128xf32> to vector<8x128xbf16>
    %cst_67 = arith.constant dense<0.000000e+00> : vector<8x512xf32>
    %247 = tpu.matmul %246, %0, %cst_67 {dimension_numbers = #tpu.dot_dimension_numbers<[1], [0], [0], [1], [0, 0, 1, 1], [], []>} : vector<8x128xbf16>, vector<128x512xbf16>, vector<8x512xf32> -> vector<8x512xf32>
    %248 = arith.addf %245, %247 : vector<8x512xf32>
    %249 = vector.extract_strided_slice %248 {offsets = [0, 0], sizes = [8, 128], strides = [1, 1]} : vector<8x512xf32> to vector<8x128xf32>
    %250 = arith.negf %249 : vector<8x128xf32>
    %251 = math.exp %250 : vector<8x128xf32>
    %cst_68 = arith.constant 1.000000e+00 : f32
    %252 = vector.broadcast %cst_68 : f32 to vector<8x128xf32>
    %253 = arith.addf %252, %251 : vector<8x128xf32>
    %254 = arith.divf %252, %253 : vector<8x128xf32>
    %255 = vector.extract_strided_slice %248 {offsets = [0, 128], sizes = [8, 128], strides = [1, 1]} : vector<8x512xf32> to vector<8x128xf32>
    %256 = arith.negf %255 : vector<8x128xf32>
    %257 = math.exp %256 : vector<8x128xf32>
    %cst_69 = arith.constant 1.000000e+00 : f32
    %258 = vector.broadcast %cst_69 : f32 to vector<8x128xf32>
    %259 = arith.addf %258, %257 : vector<8x128xf32>
    %260 = arith.divf %258, %259 : vector<8x128xf32>
    %261 = vector.extract_strided_slice %248 {offsets = [0, 256], sizes = [8, 128], strides = [1, 1]} : vector<8x512xf32> to vector<8x128xf32>
    %262 = math.tanh %261 : vector<8x128xf32>
    %263 = vector.extract_strided_slice %248 {offsets = [0, 384], sizes = [8, 128], strides = [1, 1]} : vector<8x512xf32> to vector<8x128xf32>
    %264 = arith.negf %263 : vector<8x128xf32>
    %265 = math.exp %264 : vector<8x128xf32>
    %cst_70 = arith.constant 1.000000e+00 : f32
    %266 = vector.broadcast %cst_70 : f32 to vector<8x128xf32>
    %267 = arith.addf %266, %265 : vector<8x128xf32>
    %268 = arith.divf %266, %267 : vector<8x128xf32>
    %269 = arith.mulf %260, %203 : vector<8x128xf32>
    %270 = arith.mulf %254, %262 : vector<8x128xf32>
    %271 = arith.addf %269, %270 : vector<8x128xf32>
    %272 = math.tanh %271 : vector<8x128xf32>
    %273 = arith.mulf %268, %272 : vector<8x128xf32>
    %c3_71 = arith.constant 3 : index
    %c0_72 = arith.constant 0 : index
    %c0_73 = arith.constant 0 : index
    %274 = vector.load %arg1[%c3_71, %c0_72, %c0_73] : memref<8x8x1xf32, #tpu.memory_space<vmem>>, vector<1x8x1xf32>
    %275 = vector.shape_cast %274 : vector<1x8x1xf32> to vector<8x1xf32>
    %cst_74 = arith.constant 0.000000e+00 : f32
    %276 = vector.broadcast %cst_74 : f32 to vector<8x1xf32>
    %277 = arith.cmpf ogt, %275, %276 : vector<8x1xf32>
    %278 = vector.shape_cast %277 : vector<8x1xi1> to vector<8x1xi1>
    %279 = vector.broadcast %278 : vector<8x1xi1> to vector<8x128xi1>
    %280 = arith.select %279, %273, %200 : vector<8x128xi1>, vector<8x128xf32>
    %281 = vector.shape_cast %277 : vector<8x1xi1> to vector<8x1xi1>
    %282 = vector.broadcast %281 : vector<8x1xi1> to vector<8x128xi1>
    %283 = arith.select %282, %271, %203 : vector<8x128xi1>, vector<8x128xf32>
    %c4 = arith.constant 4 : index
    %c0_75 = arith.constant 0 : index
    %c512_76 = arith.constant 512 : index
    %284 = vector.load %arg0[%c4, %c0_75, %c512_76] : memref<8x8x1536xf32, #tpu.memory_space<vmem>>, vector<1x8x512xf32>
    %285 = vector.shape_cast %284 : vector<1x8x512xf32> to vector<8x512xf32>
    %286 = arith.truncf %240 : vector<8x128xf32> to vector<8x128xbf16>
    %cst_77 = arith.constant dense<0.000000e+00> : vector<8x512xf32>
    %287 = tpu.matmul %286, %1, %cst_77 {dimension_numbers = #tpu.dot_dimension_numbers<[1], [0], [0], [1], [0, 0, 1, 1], [], []>} : vector<8x128xbf16>, vector<128x512xbf16>, vector<8x512xf32> -> vector<8x512xf32>
    %288 = arith.addf %285, %287 : vector<8x512xf32>
    %289 = vector.extract_strided_slice %288 {offsets = [0, 0], sizes = [8, 128], strides = [1, 1]} : vector<8x512xf32> to vector<8x128xf32>
    %290 = arith.negf %289 : vector<8x128xf32>
    %291 = math.exp %290 : vector<8x128xf32>
    %cst_78 = arith.constant 1.000000e+00 : f32
    %292 = vector.broadcast %cst_78 : f32 to vector<8x128xf32>
    %293 = arith.addf %292, %291 : vector<8x128xf32>
    %294 = arith.divf %292, %293 : vector<8x128xf32>
    %295 = vector.extract_strided_slice %288 {offsets = [0, 128], sizes = [8, 128], strides = [1, 1]} : vector<8x512xf32> to vector<8x128xf32>
    %296 = arith.negf %295 : vector<8x128xf32>
    %297 = math.exp %296 : vector<8x128xf32>
    %cst_79 = arith.constant 1.000000e+00 : f32
    %298 = vector.broadcast %cst_79 : f32 to vector<8x128xf32>
    %299 = arith.addf %298, %297 : vector<8x128xf32>
    %300 = arith.divf %298, %299 : vector<8x128xf32>
    %301 = vector.extract_strided_slice %288 {offsets = [0, 256], sizes = [8, 128], strides = [1, 1]} : vector<8x512xf32> to vector<8x128xf32>
    %302 = math.tanh %301 : vector<8x128xf32>
    %303 = vector.extract_strided_slice %288 {offsets = [0, 384], sizes = [8, 128], strides = [1, 1]} : vector<8x512xf32> to vector<8x128xf32>
    %304 = arith.negf %303 : vector<8x128xf32>
    %305 = math.exp %304 : vector<8x128xf32>
    %cst_80 = arith.constant 1.000000e+00 : f32
    %306 = vector.broadcast %cst_80 : f32 to vector<8x128xf32>
    %307 = arith.addf %306, %305 : vector<8x128xf32>
    %308 = arith.divf %306, %307 : vector<8x128xf32>
    %309 = arith.mulf %300, %243 : vector<8x128xf32>
    %310 = arith.mulf %294, %302 : vector<8x128xf32>
    %311 = arith.addf %309, %310 : vector<8x128xf32>
    %312 = math.tanh %311 : vector<8x128xf32>
    %313 = arith.mulf %308, %312 : vector<8x128xf32>
    %c4_81 = arith.constant 4 : index
    %c0_82 = arith.constant 0 : index
    %c0_83 = arith.constant 0 : index
    %314 = vector.load %arg1[%c4_81, %c0_82, %c0_83] : memref<8x8x1xf32, #tpu.memory_space<vmem>>, vector<1x8x1xf32>
    %315 = vector.shape_cast %314 : vector<1x8x1xf32> to vector<8x1xf32>
    %cst_84 = arith.constant 0.000000e+00 : f32
    %316 = vector.broadcast %cst_84 : f32 to vector<8x1xf32>
    %317 = arith.cmpf ogt, %315, %316 : vector<8x1xf32>
    %318 = vector.shape_cast %317 : vector<8x1xi1> to vector<8x1xi1>
    %319 = vector.broadcast %318 : vector<8x1xi1> to vector<8x128xi1>
    %320 = arith.select %319, %313, %240 : vector<8x128xi1>, vector<8x128xf32>
    %321 = vector.shape_cast %317 : vector<8x1xi1> to vector<8x1xi1>
    %322 = vector.broadcast %321 : vector<8x1xi1> to vector<8x128xi1>
    %323 = arith.select %322, %311, %243 : vector<8x128xi1>, vector<8x128xf32>
    %c4_85 = arith.constant 4 : index
    %c0_86 = arith.constant 0 : index
    %c0_87 = arith.constant 0 : index
    %324 = vector.load %arg0[%c4_85, %c0_86, %c0_87] : memref<8x8x1536xf32, #tpu.memory_space<vmem>>, vector<1x8x512xf32>
    %325 = vector.shape_cast %324 : vector<1x8x512xf32> to vector<8x512xf32>
    %326 = arith.truncf %280 : vector<8x128xf32> to vector<8x128xbf16>
    %cst_88 = arith.constant dense<0.000000e+00> : vector<8x512xf32>
    %327 = tpu.matmul %326, %0, %cst_88 {dimension_numbers = #tpu.dot_dimension_numbers<[1], [0], [0], [1], [0, 0, 1, 1], [], []>} : vector<8x128xbf16>, vector<128x512xbf16>, vector<8x512xf32> -> vector<8x512xf32>
    %328 = arith.addf %325, %327 : vector<8x512xf32>
    %329 = vector.extract_strided_slice %328 {offsets = [0, 0], sizes = [8, 128], strides = [1, 1]} : vector<8x512xf32> to vector<8x128xf32>
    %330 = arith.negf %329 : vector<8x128xf32>
    %331 = math.exp %330 : vector<8x128xf32>
    %cst_89 = arith.constant 1.000000e+00 : f32
    %332 = vector.broadcast %cst_89 : f32 to vector<8x128xf32>
    %333 = arith.addf %332, %331 : vector<8x128xf32>
    %334 = arith.divf %332, %333 : vector<8x128xf32>
    %335 = vector.extract_strided_slice %328 {offsets = [0, 128], sizes = [8, 128], strides = [1, 1]} : vector<8x512xf32> to vector<8x128xf32>
    %336 = arith.negf %335 : vector<8x128xf32>
    %337 = math.exp %336 : vector<8x128xf32>
    %cst_90 = arith.constant 1.000000e+00 : f32
    %338 = vector.broadcast %cst_90 : f32 to vector<8x128xf32>
    %339 = arith.addf %338, %337 : vector<8x128xf32>
    %340 = arith.divf %338, %339 : vector<8x128xf32>
    %341 = vector.extract_strided_slice %328 {offsets = [0, 256], sizes = [8, 128], strides = [1, 1]} : vector<8x512xf32> to vector<8x128xf32>
    %342 = math.tanh %341 : vector<8x128xf32>
    %343 = vector.extract_strided_slice %328 {offsets = [0, 384], sizes = [8, 128], strides = [1, 1]} : vector<8x512xf32> to vector<8x128xf32>
    %344 = arith.negf %343 : vector<8x128xf32>
    %345 = math.exp %344 : vector<8x128xf32>
    %cst_91 = arith.constant 1.000000e+00 : f32
    %346 = vector.broadcast %cst_91 : f32 to vector<8x128xf32>
    %347 = arith.addf %346, %345 : vector<8x128xf32>
    %348 = arith.divf %346, %347 : vector<8x128xf32>
    %349 = arith.mulf %340, %283 : vector<8x128xf32>
    %350 = arith.mulf %334, %342 : vector<8x128xf32>
    %351 = arith.addf %349, %350 : vector<8x128xf32>
    %352 = math.tanh %351 : vector<8x128xf32>
    %353 = arith.mulf %348, %352 : vector<8x128xf32>
    %c4_92 = arith.constant 4 : index
    %c0_93 = arith.constant 0 : index
    %c0_94 = arith.constant 0 : index
    %354 = vector.load %arg1[%c4_92, %c0_93, %c0_94] : memref<8x8x1xf32, #tpu.memory_space<vmem>>, vector<1x8x1xf32>
    %355 = vector.shape_cast %354 : vector<1x8x1xf32> to vector<8x1xf32>
    %cst_95 = arith.constant 0.000000e+00 : f32
    %356 = vector.broadcast %cst_95 : f32 to vector<8x1xf32>
    %357 = arith.cmpf ogt, %355, %356 : vector<8x1xf32>
    %358 = vector.shape_cast %357 : vector<8x1xi1> to vector<8x1xi1>
    %359 = vector.broadcast %358 : vector<8x1xi1> to vector<8x128xi1>
    %360 = arith.select %359, %353, %280 : vector<8x128xi1>, vector<8x128xf32>
    %361 = vector.shape_cast %357 : vector<8x1xi1> to vector<8x1xi1>
    %362 = vector.broadcast %361 : vector<8x1xi1> to vector<8x128xi1>
    %363 = arith.select %362, %351, %283 : vector<8x128xi1>, vector<8x128xf32>
    %c3_96 = arith.constant 3 : index
    %c0_97 = arith.constant 0 : index
    %c512_98 = arith.constant 512 : index
    %364 = vector.load %arg0[%c3_96, %c0_97, %c512_98] : memref<8x8x1536xf32, #tpu.memory_space<vmem>>, vector<1x8x512xf32>
    %365 = vector.shape_cast %364 : vector<1x8x512xf32> to vector<8x512xf32>
    %366 = arith.truncf %320 : vector<8x128xf32> to vector<8x128xbf16>
    %cst_99 = arith.constant dense<0.000000e+00> : vector<8x512xf32>
    %367 = tpu.matmul %366, %1, %cst_99 {dimension_numbers = #tpu.dot_dimension_numbers<[1], [0], [0], [1], [0, 0, 1, 1], [], []>} : vector<8x128xbf16>, vector<128x512xbf16>, vector<8x512xf32> -> vector<8x512xf32>
    %368 = arith.addf %365, %367 : vector<8x512xf32>
    %369 = vector.extract_strided_slice %368 {offsets = [0, 0], sizes = [8, 128], strides = [1, 1]} : vector<8x512xf32> to vector<8x128xf32>
    %370 = arith.negf %369 : vector<8x128xf32>
    %371 = math.exp %370 : vector<8x128xf32>
    %cst_100 = arith.constant 1.000000e+00 : f32
    %372 = vector.broadcast %cst_100 : f32 to vector<8x128xf32>
    %373 = arith.addf %372, %371 : vector<8x128xf32>
    %374 = arith.divf %372, %373 : vector<8x128xf32>
    %375 = vector.extract_strided_slice %368 {offsets = [0, 128], sizes = [8, 128], strides = [1, 1]} : vector<8x512xf32> to vector<8x128xf32>
    %376 = arith.negf %375 : vector<8x128xf32>
    %377 = math.exp %376 : vector<8x128xf32>
    %cst_101 = arith.constant 1.000000e+00 : f32
    %378 = vector.broadcast %cst_101 : f32 to vector<8x128xf32>
    %379 = arith.addf %378, %377 : vector<8x128xf32>
    %380 = arith.divf %378, %379 : vector<8x128xf32>
    %381 = vector.extract_strided_slice %368 {offsets = [0, 256], sizes = [8, 128], strides = [1, 1]} : vector<8x512xf32> to vector<8x128xf32>
    %382 = math.tanh %381 : vector<8x128xf32>
    %383 = vector.extract_strided_slice %368 {offsets = [0, 384], sizes = [8, 128], strides = [1, 1]} : vector<8x512xf32> to vector<8x128xf32>
    %384 = arith.negf %383 : vector<8x128xf32>
    %385 = math.exp %384 : vector<8x128xf32>
    %cst_102 = arith.constant 1.000000e+00 : f32
    %386 = vector.broadcast %cst_102 : f32 to vector<8x128xf32>
    %387 = arith.addf %386, %385 : vector<8x128xf32>
    %388 = arith.divf %386, %387 : vector<8x128xf32>
    %389 = arith.mulf %380, %323 : vector<8x128xf32>
    %390 = arith.mulf %374, %382 : vector<8x128xf32>
    %391 = arith.addf %389, %390 : vector<8x128xf32>
    %392 = math.tanh %391 : vector<8x128xf32>
    %393 = arith.mulf %388, %392 : vector<8x128xf32>
    %c3_103 = arith.constant 3 : index
    %c0_104 = arith.constant 0 : index
    %c0_105 = arith.constant 0 : index
    %394 = vector.load %arg1[%c3_103, %c0_104, %c0_105] : memref<8x8x1xf32, #tpu.memory_space<vmem>>, vector<1x8x1xf32>
    %395 = vector.shape_cast %394 : vector<1x8x1xf32> to vector<8x1xf32>
    %cst_106 = arith.constant 0.000000e+00 : f32
    %396 = vector.broadcast %cst_106 : f32 to vector<8x1xf32>
    %397 = arith.cmpf ogt, %395, %396 : vector<8x1xf32>
    %398 = vector.shape_cast %397 : vector<8x1xi1> to vector<8x1xi1>
    %399 = vector.broadcast %398 : vector<8x1xi1> to vector<8x128xi1>
    %400 = arith.select %399, %393, %320 : vector<8x128xi1>, vector<8x128xf32>
    %401 = vector.shape_cast %397 : vector<8x1xi1> to vector<8x1xi1>
    %402 = vector.broadcast %401 : vector<8x1xi1> to vector<8x128xi1>
    %403 = arith.select %402, %391, %323 : vector<8x128xi1>, vector<8x128xf32>
    %c5_107 = arith.constant 5 : index
    %c0_108 = arith.constant 0 : index
    %c0_109 = arith.constant 0 : index
    %404 = vector.load %arg0[%c5_107, %c0_108, %c0_109] : memref<8x8x1536xf32, #tpu.memory_space<vmem>>, vector<1x8x512xf32>
    %405 = vector.shape_cast %404 : vector<1x8x512xf32> to vector<8x512xf32>
    %406 = arith.truncf %360 : vector<8x128xf32> to vector<8x128xbf16>
    %cst_110 = arith.constant dense<0.000000e+00> : vector<8x512xf32>
    %407 = tpu.matmul %406, %0, %cst_110 {dimension_numbers = #tpu.dot_dimension_numbers<[1], [0], [0], [1], [0, 0, 1, 1], [], []>} : vector<8x128xbf16>, vector<128x512xbf16>, vector<8x512xf32> -> vector<8x512xf32>
    %408 = arith.addf %405, %407 : vector<8x512xf32>
    %409 = vector.extract_strided_slice %408 {offsets = [0, 0], sizes = [8, 128], strides = [1, 1]} : vector<8x512xf32> to vector<8x128xf32>
    %410 = arith.negf %409 : vector<8x128xf32>
    %411 = math.exp %410 : vector<8x128xf32>
    %cst_111 = arith.constant 1.000000e+00 : f32
    %412 = vector.broadcast %cst_111 : f32 to vector<8x128xf32>
    %413 = arith.addf %412, %411 : vector<8x128xf32>
    %414 = arith.divf %412, %413 : vector<8x128xf32>
    %415 = vector.extract_strided_slice %408 {offsets = [0, 128], sizes = [8, 128], strides = [1, 1]} : vector<8x512xf32> to vector<8x128xf32>
    %416 = arith.negf %415 : vector<8x128xf32>
    %417 = math.exp %416 : vector<8x128xf32>
    %cst_112 = arith.constant 1.000000e+00 : f32
    %418 = vector.broadcast %cst_112 : f32 to vector<8x128xf32>
    %419 = arith.addf %418, %417 : vector<8x128xf32>
    %420 = arith.divf %418, %419 : vector<8x128xf32>
    %421 = vector.extract_strided_slice %408 {offsets = [0, 256], sizes = [8, 128], strides = [1, 1]} : vector<8x512xf32> to vector<8x128xf32>
    %422 = math.tanh %421 : vector<8x128xf32>
    %423 = vector.extract_strided_slice %408 {offsets = [0, 384], sizes = [8, 128], strides = [1, 1]} : vector<8x512xf32> to vector<8x128xf32>
    %424 = arith.negf %423 : vector<8x128xf32>
    %425 = math.exp %424 : vector<8x128xf32>
    %cst_113 = arith.constant 1.000000e+00 : f32
    %426 = vector.broadcast %cst_113 : f32 to vector<8x128xf32>
    %427 = arith.addf %426, %425 : vector<8x128xf32>
    %428 = arith.divf %426, %427 : vector<8x128xf32>
    %429 = arith.mulf %420, %363 : vector<8x128xf32>
    %430 = arith.mulf %414, %422 : vector<8x128xf32>
    %431 = arith.addf %429, %430 : vector<8x128xf32>
    %432 = math.tanh %431 : vector<8x128xf32>
    %433 = arith.mulf %428, %432 : vector<8x128xf32>
    %c5_114 = arith.constant 5 : index
    %c0_115 = arith.constant 0 : index
    %c0_116 = arith.constant 0 : index
    %434 = vector.load %arg1[%c5_114, %c0_115, %c0_116] : memref<8x8x1xf32, #tpu.memory_space<vmem>>, vector<1x8x1xf32>
    %435 = vector.shape_cast %434 : vector<1x8x1xf32> to vector<8x1xf32>
    %cst_117 = arith.constant 0.000000e+00 : f32
    %436 = vector.broadcast %cst_117 : f32 to vector<8x1xf32>
    %437 = arith.cmpf ogt, %435, %436 : vector<8x1xf32>
    %438 = vector.shape_cast %437 : vector<8x1xi1> to vector<8x1xi1>
    %439 = vector.broadcast %438 : vector<8x1xi1> to vector<8x128xi1>
    %440 = arith.select %439, %433, %360 : vector<8x128xi1>, vector<8x128xf32>
    %441 = vector.shape_cast %437 : vector<8x1xi1> to vector<8x1xi1>
    %442 = vector.broadcast %441 : vector<8x1xi1> to vector<8x128xi1>
    %443 = arith.select %442, %431, %363 : vector<8x128xi1>, vector<8x128xf32>
    %c2_118 = arith.constant 2 : index
    %c0_119 = arith.constant 0 : index
    %c512_120 = arith.constant 512 : index
    %444 = vector.load %arg0[%c2_118, %c0_119, %c512_120] : memref<8x8x1536xf32, #tpu.memory_space<vmem>>, vector<1x8x512xf32>
    %445 = vector.shape_cast %444 : vector<1x8x512xf32> to vector<8x512xf32>
    %446 = arith.truncf %400 : vector<8x128xf32> to vector<8x128xbf16>
    %cst_121 = arith.constant dense<0.000000e+00> : vector<8x512xf32>
    %447 = tpu.matmul %446, %1, %cst_121 {dimension_numbers = #tpu.dot_dimension_numbers<[1], [0], [0], [1], [0, 0, 1, 1], [], []>} : vector<8x128xbf16>, vector<128x512xbf16>, vector<8x512xf32> -> vector<8x512xf32>
    %448 = arith.addf %445, %447 : vector<8x512xf32>
    %449 = vector.extract_strided_slice %448 {offsets = [0, 0], sizes = [8, 128], strides = [1, 1]} : vector<8x512xf32> to vector<8x128xf32>
    %450 = arith.negf %449 : vector<8x128xf32>
    %451 = math.exp %450 : vector<8x128xf32>
    %cst_122 = arith.constant 1.000000e+00 : f32
    %452 = vector.broadcast %cst_122 : f32 to vector<8x128xf32>
    %453 = arith.addf %452, %451 : vector<8x128xf32>
    %454 = arith.divf %452, %453 : vector<8x128xf32>
    %455 = vector.extract_strided_slice %448 {offsets = [0, 128], sizes = [8, 128], strides = [1, 1]} : vector<8x512xf32> to vector<8x128xf32>
    %456 = arith.negf %455 : vector<8x128xf32>
    %457 = math.exp %456 : vector<8x128xf32>
    %cst_123 = arith.constant 1.000000e+00 : f32
    %458 = vector.broadcast %cst_123 : f32 to vector<8x128xf32>
    %459 = arith.addf %458, %457 : vector<8x128xf32>
    %460 = arith.divf %458, %459 : vector<8x128xf32>
    %461 = vector.extract_strided_slice %448 {offsets = [0, 256], sizes = [8, 128], strides = [1, 1]} : vector<8x512xf32> to vector<8x128xf32>
    %462 = math.tanh %461 : vector<8x128xf32>
    %463 = vector.extract_strided_slice %448 {offsets = [0, 384], sizes = [8, 128], strides = [1, 1]} : vector<8x512xf32> to vector<8x128xf32>
    %464 = arith.negf %463 : vector<8x128xf32>
    %465 = math.exp %464 : vector<8x128xf32>
    %cst_124 = arith.constant 1.000000e+00 : f32
    %466 = vector.broadcast %cst_124 : f32 to vector<8x128xf32>
    %467 = arith.addf %466, %465 : vector<8x128xf32>
    %468 = arith.divf %466, %467 : vector<8x128xf32>
    %469 = arith.mulf %460, %403 : vector<8x128xf32>
    %470 = arith.mulf %454, %462 : vector<8x128xf32>
    %471 = arith.addf %469, %470 : vector<8x128xf32>
    %472 = math.tanh %471 : vector<8x128xf32>
    %473 = arith.mulf %468, %472 : vector<8x128xf32>
    %c2_125 = arith.constant 2 : index
    %c0_126 = arith.constant 0 : index
    %c0_127 = arith.constant 0 : index
    %474 = vector.load %arg1[%c2_125, %c0_126, %c0_127] : memref<8x8x1xf32, #tpu.memory_space<vmem>>, vector<1x8x1xf32>
    %475 = vector.shape_cast %474 : vector<1x8x1xf32> to vector<8x1xf32>
    %cst_128 = arith.constant 0.000000e+00 : f32
    %476 = vector.broadcast %cst_128 : f32 to vector<8x1xf32>
    %477 = arith.cmpf ogt, %475, %476 : vector<8x1xf32>
    %478 = vector.shape_cast %477 : vector<8x1xi1> to vector<8x1xi1>
    %479 = vector.broadcast %478 : vector<8x1xi1> to vector<8x128xi1>
    %480 = arith.select %479, %473, %400 : vector<8x128xi1>, vector<8x128xf32>
    %481 = vector.shape_cast %477 : vector<8x1xi1> to vector<8x1xi1>
    %482 = vector.broadcast %481 : vector<8x1xi1> to vector<8x128xi1>
    %483 = arith.select %482, %471, %403 : vector<8x128xi1>, vector<8x128xf32>
    %c6_129 = arith.constant 6 : index
    %c0_130 = arith.constant 0 : index
    %c0_131 = arith.constant 0 : index
    %484 = vector.load %arg0[%c6_129, %c0_130, %c0_131] : memref<8x8x1536xf32, #tpu.memory_space<vmem>>, vector<1x8x512xf32>
    %485 = vector.shape_cast %484 : vector<1x8x512xf32> to vector<8x512xf32>
    %486 = arith.truncf %440 : vector<8x128xf32> to vector<8x128xbf16>
    %cst_132 = arith.constant dense<0.000000e+00> : vector<8x512xf32>
    %487 = tpu.matmul %486, %0, %cst_132 {dimension_numbers = #tpu.dot_dimension_numbers<[1], [0], [0], [1], [0, 0, 1, 1], [], []>} : vector<8x128xbf16>, vector<128x512xbf16>, vector<8x512xf32> -> vector<8x512xf32>
    %488 = arith.addf %485, %487 : vector<8x512xf32>
    %489 = vector.extract_strided_slice %488 {offsets = [0, 0], sizes = [8, 128], strides = [1, 1]} : vector<8x512xf32> to vector<8x128xf32>
    %490 = arith.negf %489 : vector<8x128xf32>
    %491 = math.exp %490 : vector<8x128xf32>
    %cst_133 = arith.constant 1.000000e+00 : f32
    %492 = vector.broadcast %cst_133 : f32 to vector<8x128xf32>
    %493 = arith.addf %492, %491 : vector<8x128xf32>
    %494 = arith.divf %492, %493 : vector<8x128xf32>
    %495 = vector.extract_strided_slice %488 {offsets = [0, 128], sizes = [8, 128], strides = [1, 1]} : vector<8x512xf32> to vector<8x128xf32>
    %496 = arith.negf %495 : vector<8x128xf32>
    %497 = math.exp %496 : vector<8x128xf32>
    %cst_134 = arith.constant 1.000000e+00 : f32
    %498 = vector.broadcast %cst_134 : f32 to vector<8x128xf32>
    %499 = arith.addf %498, %497 : vector<8x128xf32>
    %500 = arith.divf %498, %499 : vector<8x128xf32>
    %501 = vector.extract_strided_slice %488 {offsets = [0, 256], sizes = [8, 128], strides = [1, 1]} : vector<8x512xf32> to vector<8x128xf32>
    %502 = math.tanh %501 : vector<8x128xf32>
    %503 = vector.extract_strided_slice %488 {offsets = [0, 384], sizes = [8, 128], strides = [1, 1]} : vector<8x512xf32> to vector<8x128xf32>
    %504 = arith.negf %503 : vector<8x128xf32>
    %505 = math.exp %504 : vector<8x128xf32>
    %cst_135 = arith.constant 1.000000e+00 : f32
    %506 = vector.broadcast %cst_135 : f32 to vector<8x128xf32>
    %507 = arith.addf %506, %505 : vector<8x128xf32>
    %508 = arith.divf %506, %507 : vector<8x128xf32>
    %509 = arith.mulf %500, %443 : vector<8x128xf32>
    %510 = arith.mulf %494, %502 : vector<8x128xf32>
    %511 = arith.addf %509, %510 : vector<8x128xf32>
    %512 = math.tanh %511 : vector<8x128xf32>
    %513 = arith.mulf %508, %512 : vector<8x128xf32>
    %c6_136 = arith.constant 6 : index
    %c0_137 = arith.constant 0 : index
    %c0_138 = arith.constant 0 : index
    %514 = vector.load %arg1[%c6_136, %c0_137, %c0_138] : memref<8x8x1xf32, #tpu.memory_space<vmem>>, vector<1x8x1xf32>
    %515 = vector.shape_cast %514 : vector<1x8x1xf32> to vector<8x1xf32>
    %cst_139 = arith.constant 0.000000e+00 : f32
    %516 = vector.broadcast %cst_139 : f32 to vector<8x1xf32>
    %517 = arith.cmpf ogt, %515, %516 : vector<8x1xf32>
    %518 = vector.shape_cast %517 : vector<8x1xi1> to vector<8x1xi1>
    %519 = vector.broadcast %518 : vector<8x1xi1> to vector<8x128xi1>
    %520 = arith.select %519, %513, %440 : vector<8x128xi1>, vector<8x128xf32>
    %521 = vector.shape_cast %517 : vector<8x1xi1> to vector<8x1xi1>
    %522 = vector.broadcast %521 : vector<8x1xi1> to vector<8x128xi1>
    %523 = arith.select %522, %511, %443 : vector<8x128xi1>, vector<8x128xf32>
    %c1_140 = arith.constant 1 : index
    %c0_141 = arith.constant 0 : index
    %c512_142 = arith.constant 512 : index
    %524 = vector.load %arg0[%c1_140, %c0_141, %c512_142] : memref<8x8x1536xf32, #tpu.memory_space<vmem>>, vector<1x8x512xf32>
    %525 = vector.shape_cast %524 : vector<1x8x512xf32> to vector<8x512xf32>
    %526 = arith.truncf %480 : vector<8x128xf32> to vector<8x128xbf16>
    %cst_143 = arith.constant dense<0.000000e+00> : vector<8x512xf32>
    %527 = tpu.matmul %526, %1, %cst_143 {dimension_numbers = #tpu.dot_dimension_numbers<[1], [0], [0], [1], [0, 0, 1, 1], [], []>} : vector<8x128xbf16>, vector<128x512xbf16>, vector<8x512xf32> -> vector<8x512xf32>
    %528 = arith.addf %525, %527 : vector<8x512xf32>
    %529 = vector.extract_strided_slice %528 {offsets = [0, 0], sizes = [8, 128], strides = [1, 1]} : vector<8x512xf32> to vector<8x128xf32>
    %530 = arith.negf %529 : vector<8x128xf32>
    %531 = math.exp %530 : vector<8x128xf32>
    %cst_144 = arith.constant 1.000000e+00 : f32
    %532 = vector.broadcast %cst_144 : f32 to vector<8x128xf32>
    %533 = arith.addf %532, %531 : vector<8x128xf32>
    %534 = arith.divf %532, %533 : vector<8x128xf32>
    %535 = vector.extract_strided_slice %528 {offsets = [0, 128], sizes = [8, 128], strides = [1, 1]} : vector<8x512xf32> to vector<8x128xf32>
    %536 = arith.negf %535 : vector<8x128xf32>
    %537 = math.exp %536 : vector<8x128xf32>
    %cst_145 = arith.constant 1.000000e+00 : f32
    %538 = vector.broadcast %cst_145 : f32 to vector<8x128xf32>
    %539 = arith.addf %538, %537 : vector<8x128xf32>
    %540 = arith.divf %538, %539 : vector<8x128xf32>
    %541 = vector.extract_strided_slice %528 {offsets = [0, 256], sizes = [8, 128], strides = [1, 1]} : vector<8x512xf32> to vector<8x128xf32>
    %542 = math.tanh %541 : vector<8x128xf32>
    %543 = vector.extract_strided_slice %528 {offsets = [0, 384], sizes = [8, 128], strides = [1, 1]} : vector<8x512xf32> to vector<8x128xf32>
    %544 = arith.negf %543 : vector<8x128xf32>
    %545 = math.exp %544 : vector<8x128xf32>
    %cst_146 = arith.constant 1.000000e+00 : f32
    %546 = vector.broadcast %cst_146 : f32 to vector<8x128xf32>
    %547 = arith.addf %546, %545 : vector<8x128xf32>
    %548 = arith.divf %546, %547 : vector<8x128xf32>
    %549 = arith.mulf %540, %483 : vector<8x128xf32>
    %550 = arith.mulf %534, %542 : vector<8x128xf32>
    %551 = arith.addf %549, %550 : vector<8x128xf32>
    %552 = math.tanh %551 : vector<8x128xf32>
    %553 = arith.mulf %548, %552 : vector<8x128xf32>
    %c1_147 = arith.constant 1 : index
    %c0_148 = arith.constant 0 : index
    %c0_149 = arith.constant 0 : index
    %554 = vector.load %arg1[%c1_147, %c0_148, %c0_149] : memref<8x8x1xf32, #tpu.memory_space<vmem>>, vector<1x8x1xf32>
    %555 = vector.shape_cast %554 : vector<1x8x1xf32> to vector<8x1xf32>
    %cst_150 = arith.constant 0.000000e+00 : f32
    %556 = vector.broadcast %cst_150 : f32 to vector<8x1xf32>
    %557 = arith.cmpf ogt, %555, %556 : vector<8x1xf32>
    %558 = vector.shape_cast %557 : vector<8x1xi1> to vector<8x1xi1>
    %559 = vector.broadcast %558 : vector<8x1xi1> to vector<8x128xi1>
    %560 = arith.select %559, %553, %480 : vector<8x128xi1>, vector<8x128xf32>
    %561 = vector.shape_cast %557 : vector<8x1xi1> to vector<8x1xi1>
    %562 = vector.broadcast %561 : vector<8x1xi1> to vector<8x128xi1>
    %563 = arith.select %562, %551, %483 : vector<8x128xi1>, vector<8x128xf32>
    %c7_151 = arith.constant 7 : index
    %c0_152 = arith.constant 0 : index
    %c0_153 = arith.constant 0 : index
    %564 = vector.load %arg0[%c7_151, %c0_152, %c0_153] : memref<8x8x1536xf32, #tpu.memory_space<vmem>>, vector<1x8x512xf32>
    %565 = vector.shape_cast %564 : vector<1x8x512xf32> to vector<8x512xf32>
    %566 = arith.truncf %520 : vector<8x128xf32> to vector<8x128xbf16>
    %cst_154 = arith.constant dense<0.000000e+00> : vector<8x512xf32>
    %567 = tpu.matmul %566, %0, %cst_154 {dimension_numbers = #tpu.dot_dimension_numbers<[1], [0], [0], [1], [0, 0, 1, 1], [], []>} : vector<8x128xbf16>, vector<128x512xbf16>, vector<8x512xf32> -> vector<8x512xf32>
    %568 = arith.addf %565, %567 : vector<8x512xf32>
    %569 = vector.extract_strided_slice %568 {offsets = [0, 0], sizes = [8, 128], strides = [1, 1]} : vector<8x512xf32> to vector<8x128xf32>
    %570 = arith.negf %569 : vector<8x128xf32>
    %571 = math.exp %570 : vector<8x128xf32>
    %cst_155 = arith.constant 1.000000e+00 : f32
    %572 = vector.broadcast %cst_155 : f32 to vector<8x128xf32>
    %573 = arith.addf %572, %571 : vector<8x128xf32>
    %574 = arith.divf %572, %573 : vector<8x128xf32>
    %575 = vector.extract_strided_slice %568 {offsets = [0, 128], sizes = [8, 128], strides = [1, 1]} : vector<8x512xf32> to vector<8x128xf32>
    %576 = arith.negf %575 : vector<8x128xf32>
    %577 = math.exp %576 : vector<8x128xf32>
    %cst_156 = arith.constant 1.000000e+00 : f32
    %578 = vector.broadcast %cst_156 : f32 to vector<8x128xf32>
    %579 = arith.addf %578, %577 : vector<8x128xf32>
    %580 = arith.divf %578, %579 : vector<8x128xf32>
    %581 = vector.extract_strided_slice %568 {offsets = [0, 256], sizes = [8, 128], strides = [1, 1]} : vector<8x512xf32> to vector<8x128xf32>
    %582 = math.tanh %581 : vector<8x128xf32>
    %583 = vector.extract_strided_slice %568 {offsets = [0, 384], sizes = [8, 128], strides = [1, 1]} : vector<8x512xf32> to vector<8x128xf32>
    %584 = arith.negf %583 : vector<8x128xf32>
    %585 = math.exp %584 : vector<8x128xf32>
    %cst_157 = arith.constant 1.000000e+00 : f32
    %586 = vector.broadcast %cst_157 : f32 to vector<8x128xf32>
    %587 = arith.addf %586, %585 : vector<8x128xf32>
    %588 = arith.divf %586, %587 : vector<8x128xf32>
    %589 = arith.mulf %580, %523 : vector<8x128xf32>
    %590 = arith.mulf %574, %582 : vector<8x128xf32>
    %591 = arith.addf %589, %590 : vector<8x128xf32>
    %592 = math.tanh %591 : vector<8x128xf32>
    %593 = arith.mulf %588, %592 : vector<8x128xf32>
    %c7_158 = arith.constant 7 : index
    %c0_159 = arith.constant 0 : index
    %c0_160 = arith.constant 0 : index
    %594 = vector.load %arg1[%c7_158, %c0_159, %c0_160] : memref<8x8x1xf32, #tpu.memory_space<vmem>>, vector<1x8x1xf32>
    %595 = vector.shape_cast %594 : vector<1x8x1xf32> to vector<8x1xf32>
    %cst_161 = arith.constant 0.000000e+00 : f32
    %596 = vector.broadcast %cst_161 : f32 to vector<8x1xf32>
    %597 = arith.cmpf ogt, %595, %596 : vector<8x1xf32>
    %598 = vector.shape_cast %597 : vector<8x1xi1> to vector<8x1xi1>
    %599 = vector.broadcast %598 : vector<8x1xi1> to vector<8x128xi1>
    %600 = arith.select %599, %593, %520 : vector<8x128xi1>, vector<8x128xf32>
    %601 = vector.shape_cast %597 : vector<8x1xi1> to vector<8x1xi1>
    %602 = vector.broadcast %601 : vector<8x1xi1> to vector<8x128xi1>
    %603 = arith.select %602, %591, %523 : vector<8x128xi1>, vector<8x128xf32>
    %c0_162 = arith.constant 0 : index
    %c0_163 = arith.constant 0 : index
    %c512_164 = arith.constant 512 : index
    %604 = vector.load %arg0[%c0_162, %c0_163, %c512_164] : memref<8x8x1536xf32, #tpu.memory_space<vmem>>, vector<1x8x512xf32>
    %605 = vector.shape_cast %604 : vector<1x8x512xf32> to vector<8x512xf32>
    %606 = arith.truncf %560 : vector<8x128xf32> to vector<8x128xbf16>
    %cst_165 = arith.constant dense<0.000000e+00> : vector<8x512xf32>
    %607 = tpu.matmul %606, %1, %cst_165 {dimension_numbers = #tpu.dot_dimension_numbers<[1], [0], [0], [1], [0, 0, 1, 1], [], []>} : vector<8x128xbf16>, vector<128x512xbf16>, vector<8x512xf32> -> vector<8x512xf32>
    %608 = arith.addf %605, %607 : vector<8x512xf32>
    %609 = vector.extract_strided_slice %608 {offsets = [0, 0], sizes = [8, 128], strides = [1, 1]} : vector<8x512xf32> to vector<8x128xf32>
    %610 = arith.negf %609 : vector<8x128xf32>
    %611 = math.exp %610 : vector<8x128xf32>
    %cst_166 = arith.constant 1.000000e+00 : f32
    %612 = vector.broadcast %cst_166 : f32 to vector<8x128xf32>
    %613 = arith.addf %612, %611 : vector<8x128xf32>
    %614 = arith.divf %612, %613 : vector<8x128xf32>
    %615 = vector.extract_strided_slice %608 {offsets = [0, 128], sizes = [8, 128], strides = [1, 1]} : vector<8x512xf32> to vector<8x128xf32>
    %616 = arith.negf %615 : vector<8x128xf32>
    %617 = math.exp %616 : vector<8x128xf32>
    %cst_167 = arith.constant 1.000000e+00 : f32
    %618 = vector.broadcast %cst_167 : f32 to vector<8x128xf32>
    %619 = arith.addf %618, %617 : vector<8x128xf32>
    %620 = arith.divf %618, %619 : vector<8x128xf32>
    %621 = vector.extract_strided_slice %608 {offsets = [0, 256], sizes = [8, 128], strides = [1, 1]} : vector<8x512xf32> to vector<8x128xf32>
    %622 = math.tanh %621 : vector<8x128xf32>
    %623 = vector.extract_strided_slice %608 {offsets = [0, 384], sizes = [8, 128], strides = [1, 1]} : vector<8x512xf32> to vector<8x128xf32>
    %624 = arith.negf %623 : vector<8x128xf32>
    %625 = math.exp %624 : vector<8x128xf32>
    %cst_168 = arith.constant 1.000000e+00 : f32
    %626 = vector.broadcast %cst_168 : f32 to vector<8x128xf32>
    %627 = arith.addf %626, %625 : vector<8x128xf32>
    %628 = arith.divf %626, %627 : vector<8x128xf32>
    %629 = arith.mulf %620, %563 : vector<8x128xf32>
    %630 = arith.mulf %614, %622 : vector<8x128xf32>
    %631 = arith.addf %629, %630 : vector<8x128xf32>
    %632 = math.tanh %631 : vector<8x128xf32>
    %633 = arith.mulf %628, %632 : vector<8x128xf32>
    %c0_169 = arith.constant 0 : index
    %c0_170 = arith.constant 0 : index
    %c0_171 = arith.constant 0 : index
    %634 = vector.load %arg1[%c0_169, %c0_170, %c0_171] : memref<8x8x1xf32, #tpu.memory_space<vmem>>, vector<1x8x1xf32>
    %635 = vector.shape_cast %634 : vector<1x8x1xf32> to vector<8x1xf32>
    %cst_172 = arith.constant 0.000000e+00 : f32
    %636 = vector.broadcast %cst_172 : f32 to vector<8x1xf32>
    %637 = arith.cmpf ogt, %635, %636 : vector<8x1xf32>
    %638 = vector.shape_cast %637 : vector<8x1xi1> to vector<8x1xi1>
    %639 = vector.broadcast %638 : vector<8x1xi1> to vector<8x128xi1>
    %640 = arith.select %639, %633, %560 : vector<8x128xi1>, vector<8x128xf32>
    %641 = vector.shape_cast %637 : vector<8x1xi1> to vector<8x1xi1>
    %642 = vector.broadcast %641 : vector<8x1xi1> to vector<8x128xi1>
    %643 = arith.select %642, %631, %563 : vector<8x128xi1>, vector<8x128xf32>
    %644 = arith.addf %600, %640 : vector<8x128xf32>
    %645 = arith.addf %603, %643 : vector<8x128xf32>
    %646 = arith.truncf %644 : vector<8x128xf32> to vector<8x128xbf16>
    %c0_173 = arith.constant 0 : index
    %c0_174 = arith.constant 0 : index
    %647 = vector.load %arg6[%c0_173, %c0_174] : memref<128x128xbf16, #tpu.memory_space<vmem>>, vector<128x128xbf16>
    %cst_175 = arith.constant dense<0.000000e+00> : vector<8x128xf32>
    %648 = tpu.matmul %646, %647, %cst_175 {dimension_numbers = #tpu.dot_dimension_numbers<[1], [0], [0], [1], [0, 0, 1, 1], [], []>} : vector<8x128xbf16>, vector<128x128xbf16>, vector<8x128xf32> -> vector<8x128xf32>
    %c0_176 = arith.constant 0 : index
    %c0_177 = arith.constant 0 : index
    %649 = vector.load %arg7[%c0_176, %c0_177] : memref<1x128xf32, #tpu.memory_space<vmem>>, vector<1x128xf32>
    %650 = vector.broadcast %649 : vector<1x128xf32> to vector<8x128xf32>
    %651 = arith.addf %648, %650 : vector<8x128xf32>
    %652 = arith.truncf %645 : vector<8x128xf32> to vector<8x128xbf16>
    %c0_178 = arith.constant 0 : index
    %c0_179 = arith.constant 0 : index
    %653 = vector.load %arg8[%c0_178, %c0_179] : memref<128x128xbf16, #tpu.memory_space<vmem>>, vector<128x128xbf16>
    %cst_180 = arith.constant dense<0.000000e+00> : vector<8x128xf32>
    %654 = tpu.matmul %652, %653, %cst_180 {dimension_numbers = #tpu.dot_dimension_numbers<[1], [0], [0], [1], [0, 0, 1, 1], [], []>} : vector<8x128xbf16>, vector<128x128xbf16>, vector<8x128xf32> -> vector<8x128xf32>
    %c0_181 = arith.constant 0 : index
    %c0_182 = arith.constant 0 : index
    %655 = vector.load %arg9[%c0_181, %c0_182] : memref<1x128xf32, #tpu.memory_space<vmem>>, vector<1x128xf32>
    %656 = vector.broadcast %655 : vector<1x128xf32> to vector<8x128xf32>
    %657 = arith.addf %654, %656 : vector<8x128xf32>
    %c0_183 = arith.constant 0 : index
    %c0_184 = arith.constant 0 : index
    %c1024 = arith.constant 1024 : index
    %658 = vector.load %arg0[%c0_183, %c0_184, %c1024] : memref<8x8x1536xf32, #tpu.memory_space<vmem>>, vector<1x8x512xf32>
    %659 = vector.shape_cast %658 : vector<1x8x512xf32> to vector<8x512xf32>
    %660 = arith.truncf %651 : vector<8x128xf32> to vector<8x128xbf16>
    %cst_185 = arith.constant dense<0.000000e+00> : vector<8x512xf32>
    %661 = tpu.matmul %660, %2, %cst_185 {dimension_numbers = #tpu.dot_dimension_numbers<[1], [0], [0], [1], [0, 0, 1, 1], [], []>} : vector<8x128xbf16>, vector<128x512xbf16>, vector<8x512xf32> -> vector<8x512xf32>
    %662 = arith.addf %659, %661 : vector<8x512xf32>
    %663 = vector.extract_strided_slice %662 {offsets = [0, 0], sizes = [8, 128], strides = [1, 1]} : vector<8x512xf32> to vector<8x128xf32>
    %664 = arith.negf %663 : vector<8x128xf32>
    %665 = math.exp %664 : vector<8x128xf32>
    %cst_186 = arith.constant 1.000000e+00 : f32
    %666 = vector.broadcast %cst_186 : f32 to vector<8x128xf32>
    %667 = arith.addf %666, %665 : vector<8x128xf32>
    %668 = arith.divf %666, %667 : vector<8x128xf32>
    %669 = vector.extract_strided_slice %662 {offsets = [0, 128], sizes = [8, 128], strides = [1, 1]} : vector<8x512xf32> to vector<8x128xf32>
    %670 = arith.negf %669 : vector<8x128xf32>
    %671 = math.exp %670 : vector<8x128xf32>
    %cst_187 = arith.constant 1.000000e+00 : f32
    %672 = vector.broadcast %cst_187 : f32 to vector<8x128xf32>
    %673 = arith.addf %672, %671 : vector<8x128xf32>
    %674 = arith.divf %672, %673 : vector<8x128xf32>
    %675 = vector.extract_strided_slice %662 {offsets = [0, 256], sizes = [8, 128], strides = [1, 1]} : vector<8x512xf32> to vector<8x128xf32>
    %676 = math.tanh %675 : vector<8x128xf32>
    %677 = vector.extract_strided_slice %662 {offsets = [0, 384], sizes = [8, 128], strides = [1, 1]} : vector<8x512xf32> to vector<8x128xf32>
    %678 = arith.negf %677 : vector<8x128xf32>
    %679 = math.exp %678 : vector<8x128xf32>
    %cst_188 = arith.constant 1.000000e+00 : f32
    %680 = vector.broadcast %cst_188 : f32 to vector<8x128xf32>
    %681 = arith.addf %680, %679 : vector<8x128xf32>
    %682 = arith.divf %680, %681 : vector<8x128xf32>
    %683 = arith.mulf %674, %657 : vector<8x128xf32>
    %684 = arith.mulf %668, %676 : vector<8x128xf32>
    %685 = arith.addf %683, %684 : vector<8x128xf32>
    %686 = math.tanh %685 : vector<8x128xf32>
    %687 = arith.mulf %682, %686 : vector<8x128xf32>
    %c0_189 = arith.constant 0 : index
    %c0_190 = arith.constant 0 : index
    %c0_191 = arith.constant 0 : index
    %688 = vector.load %arg1[%c0_189, %c0_190, %c0_191] : memref<8x8x1xf32, #tpu.memory_space<vmem>>, vector<1x8x1xf32>
    %689 = vector.shape_cast %688 : vector<1x8x1xf32> to vector<8x1xf32>
    %cst_192 = arith.constant 0.000000e+00 : f32
    %690 = vector.broadcast %cst_192 : f32 to vector<8x1xf32>
    %691 = arith.cmpf ogt, %689, %690 : vector<8x1xf32>
    %cst_193 = arith.constant 0.000000e+00 : f32
    %692 = vector.shape_cast %691 : vector<8x1xi1> to vector<8x1xi1>
    %693 = vector.broadcast %692 : vector<8x1xi1> to vector<8x128xi1>
    %694 = vector.broadcast %cst_193 : f32 to vector<8x128xf32>
    %695 = arith.select %693, %687, %694 : vector<8x128xi1>, vector<8x128xf32>
    %c0_194 = arith.constant 0 : index
    %c0_195 = arith.constant 0 : index
    %696 = vector.load %arg13[%c0_194, %c0_195] : memref<64x128xf32, #tpu.memory_space<vmem>>, vector<8x128xf32>
    tpu.vector_store %arg13[%c0_194, %c0_195], %695 {strides = array<i32>} : memref<64x128xf32, #tpu.memory_space<vmem>>, vector<8x128xf32>,
    %697 = vector.shape_cast %691 : vector<8x1xi1> to vector<8x1xi1>
    %698 = vector.broadcast %697 : vector<8x1xi1> to vector<8x128xi1>
    %699 = arith.select %698, %687, %651 : vector<8x128xi1>, vector<8x128xf32>
    %700 = vector.shape_cast %691 : vector<8x1xi1> to vector<8x1xi1>
    %701 = vector.broadcast %700 : vector<8x1xi1> to vector<8x128xi1>
    %702 = arith.select %701, %685, %657 : vector<8x128xi1>, vector<8x128xf32>
    %c1_196 = arith.constant 1 : index
    %c0_197 = arith.constant 0 : index
    %c1024_198 = arith.constant 1024 : index
    %703 = vector.load %arg0[%c1_196, %c0_197, %c1024_198] : memref<8x8x1536xf32, #tpu.memory_space<vmem>>, vector<1x8x512xf32>
    %704 = vector.shape_cast %703 : vector<1x8x512xf32> to vector<8x512xf32>
    %705 = arith.truncf %699 : vector<8x128xf32> to vector<8x128xbf16>
    %cst_199 = arith.constant dense<0.000000e+00> : vector<8x512xf32>
    %706 = tpu.matmul %705, %2, %cst_199 {dimension_numbers = #tpu.dot_dimension_numbers<[1], [0], [0], [1], [0, 0, 1, 1], [], []>} : vector<8x128xbf16>, vector<128x512xbf16>, vector<8x512xf32> -> vector<8x512xf32>
    %707 = arith.addf %704, %706 : vector<8x512xf32>
    %708 = vector.extract_strided_slice %707 {offsets = [0, 0], sizes = [8, 128], strides = [1, 1]} : vector<8x512xf32> to vector<8x128xf32>
    %709 = arith.negf %708 : vector<8x128xf32>
    %710 = math.exp %709 : vector<8x128xf32>
    %cst_200 = arith.constant 1.000000e+00 : f32
    %711 = vector.broadcast %cst_200 : f32 to vector<8x128xf32>
    %712 = arith.addf %711, %710 : vector<8x128xf32>
    %713 = arith.divf %711, %712 : vector<8x128xf32>
    %714 = vector.extract_strided_slice %707 {offsets = [0, 128], sizes = [8, 128], strides = [1, 1]} : vector<8x512xf32> to vector<8x128xf32>
    %715 = arith.negf %714 : vector<8x128xf32>
    %716 = math.exp %715 : vector<8x128xf32>
    %cst_201 = arith.constant 1.000000e+00 : f32
    %717 = vector.broadcast %cst_201 : f32 to vector<8x128xf32>
    %718 = arith.addf %717, %716 : vector<8x128xf32>
    %719 = arith.divf %717, %718 : vector<8x128xf32>
    %720 = vector.extract_strided_slice %707 {offsets = [0, 256], sizes = [8, 128], strides = [1, 1]} : vector<8x512xf32> to vector<8x128xf32>
    %721 = math.tanh %720 : vector<8x128xf32>
    %722 = vector.extract_strided_slice %707 {offsets = [0, 384], sizes = [8, 128], strides = [1, 1]} : vector<8x512xf32> to vector<8x128xf32>
    %723 = arith.negf %722 : vector<8x128xf32>
    %724 = math.exp %723 : vector<8x128xf32>
    %cst_202 = arith.constant 1.000000e+00 : f32
    %725 = vector.broadcast %cst_202 : f32 to vector<8x128xf32>
    %726 = arith.addf %725, %724 : vector<8x128xf32>
    %727 = arith.divf %725, %726 : vector<8x128xf32>
    %728 = arith.mulf %719, %702 : vector<8x128xf32>
    %729 = arith.mulf %713, %721 : vector<8x128xf32>
    %730 = arith.addf %728, %729 : vector<8x128xf32>
    %731 = math.tanh %730 : vector<8x128xf32>
    %732 = arith.mulf %727, %731 : vector<8x128xf32>
    %c1_203 = arith.constant 1 : index
    %c0_204 = arith.constant 0 : index
    %c0_205 = arith.constant 0 : index
    %733 = vector.load %arg1[%c1_203, %c0_204, %c0_205] : memref<8x8x1xf32, #tpu.memory_space<vmem>>, vector<1x8x1xf32>
    %734 = vector.shape_cast %733 : vector<1x8x1xf32> to vector<8x1xf32>
    %cst_206 = arith.constant 0.000000e+00 : f32
    %735 = vector.broadcast %cst_206 : f32 to vector<8x1xf32>
    %736 = arith.cmpf ogt, %734, %735 : vector<8x1xf32>
    %cst_207 = arith.constant 0.000000e+00 : f32
    %737 = vector.shape_cast %736 : vector<8x1xi1> to vector<8x1xi1>
    %738 = vector.broadcast %737 : vector<8x1xi1> to vector<8x128xi1>
    %739 = vector.broadcast %cst_207 : f32 to vector<8x128xf32>
    %740 = arith.select %738, %732, %739 : vector<8x128xi1>, vector<8x128xf32>
    %c8 = arith.constant 8 : index
    %c0_208 = arith.constant 0 : index
    %741 = vector.load %arg13[%c8, %c0_208] : memref<64x128xf32, #tpu.memory_space<vmem>>, vector<8x128xf32>
    tpu.vector_store %arg13[%c8, %c0_208], %740 {strides = array<i32>} : memref<64x128xf32, #tpu.memory_space<vmem>>, vector<8x128xf32>,
    %742 = vector.shape_cast %736 : vector<8x1xi1> to vector<8x1xi1>
    %743 = vector.broadcast %742 : vector<8x1xi1> to vector<8x128xi1>
    %744 = arith.select %743, %732, %699 : vector<8x128xi1>, vector<8x128xf32>
    %745 = vector.shape_cast %736 : vector<8x1xi1> to vector<8x1xi1>
    %746 = vector.broadcast %745 : vector<8x1xi1> to vector<8x128xi1>
    %747 = arith.select %746, %730, %702 : vector<8x128xi1>, vector<8x128xf32>
    %c2_209 = arith.constant 2 : index
    %c0_210 = arith.constant 0 : index
    %c1024_211 = arith.constant 1024 : index
    %748 = vector.load %arg0[%c2_209, %c0_210, %c1024_211] : memref<8x8x1536xf32, #tpu.memory_space<vmem>>, vector<1x8x512xf32>
    %749 = vector.shape_cast %748 : vector<1x8x512xf32> to vector<8x512xf32>
    %750 = arith.truncf %744 : vector<8x128xf32> to vector<8x128xbf16>
    %cst_212 = arith.constant dense<0.000000e+00> : vector<8x512xf32>
    %751 = tpu.matmul %750, %2, %cst_212 {dimension_numbers = #tpu.dot_dimension_numbers<[1], [0], [0], [1], [0, 0, 1, 1], [], []>} : vector<8x128xbf16>, vector<128x512xbf16>, vector<8x512xf32> -> vector<8x512xf32>
    %752 = arith.addf %749, %751 : vector<8x512xf32>
    %753 = vector.extract_strided_slice %752 {offsets = [0, 0], sizes = [8, 128], strides = [1, 1]} : vector<8x512xf32> to vector<8x128xf32>
    %754 = arith.negf %753 : vector<8x128xf32>
    %755 = math.exp %754 : vector<8x128xf32>
    %cst_213 = arith.constant 1.000000e+00 : f32
    %756 = vector.broadcast %cst_213 : f32 to vector<8x128xf32>
    %757 = arith.addf %756, %755 : vector<8x128xf32>
    %758 = arith.divf %756, %757 : vector<8x128xf32>
    %759 = vector.extract_strided_slice %752 {offsets = [0, 128], sizes = [8, 128], strides = [1, 1]} : vector<8x512xf32> to vector<8x128xf32>
    %760 = arith.negf %759 : vector<8x128xf32>
    %761 = math.exp %760 : vector<8x128xf32>
    %cst_214 = arith.constant 1.000000e+00 : f32
    %762 = vector.broadcast %cst_214 : f32 to vector<8x128xf32>
    %763 = arith.addf %762, %761 : vector<8x128xf32>
    %764 = arith.divf %762, %763 : vector<8x128xf32>
    %765 = vector.extract_strided_slice %752 {offsets = [0, 256], sizes = [8, 128], strides = [1, 1]} : vector<8x512xf32> to vector<8x128xf32>
    %766 = math.tanh %765 : vector<8x128xf32>
    %767 = vector.extract_strided_slice %752 {offsets = [0, 384], sizes = [8, 128], strides = [1, 1]} : vector<8x512xf32> to vector<8x128xf32>
    %768 = arith.negf %767 : vector<8x128xf32>
    %769 = math.exp %768 : vector<8x128xf32>
    %cst_215 = arith.constant 1.000000e+00 : f32
    %770 = vector.broadcast %cst_215 : f32 to vector<8x128xf32>
    %771 = arith.addf %770, %769 : vector<8x128xf32>
    %772 = arith.divf %770, %771 : vector<8x128xf32>
    %773 = arith.mulf %764, %747 : vector<8x128xf32>
    %774 = arith.mulf %758, %766 : vector<8x128xf32>
    %775 = arith.addf %773, %774 : vector<8x128xf32>
    %776 = math.tanh %775 : vector<8x128xf32>
    %777 = arith.mulf %772, %776 : vector<8x128xf32>
    %c2_216 = arith.constant 2 : index
    %c0_217 = arith.constant 0 : index
    %c0_218 = arith.constant 0 : index
    %778 = vector.load %arg1[%c2_216, %c0_217, %c0_218] : memref<8x8x1xf32, #tpu.memory_space<vmem>>, vector<1x8x1xf32>
    %779 = vector.shape_cast %778 : vector<1x8x1xf32> to vector<8x1xf32>
    %cst_219 = arith.constant 0.000000e+00 : f32
    %780 = vector.broadcast %cst_219 : f32 to vector<8x1xf32>
    %781 = arith.cmpf ogt, %779, %780 : vector<8x1xf32>
    %cst_220 = arith.constant 0.000000e+00 : f32
    %782 = vector.shape_cast %781 : vector<8x1xi1> to vector<8x1xi1>
    %783 = vector.broadcast %782 : vector<8x1xi1> to vector<8x128xi1>
    %784 = vector.broadcast %cst_220 : f32 to vector<8x128xf32>
    %785 = arith.select %783, %777, %784 : vector<8x128xi1>, vector<8x128xf32>
    %c16 = arith.constant 16 : index
    %c0_221 = arith.constant 0 : index
    %786 = vector.load %arg13[%c16, %c0_221] : memref<64x128xf32, #tpu.memory_space<vmem>>, vector<8x128xf32>
    tpu.vector_store %arg13[%c16, %c0_221], %785 {strides = array<i32>} : memref<64x128xf32, #tpu.memory_space<vmem>>, vector<8x128xf32>,
    %787 = vector.shape_cast %781 : vector<8x1xi1> to vector<8x1xi1>
    %788 = vector.broadcast %787 : vector<8x1xi1> to vector<8x128xi1>
    %789 = arith.select %788, %777, %744 : vector<8x128xi1>, vector<8x128xf32>
    %790 = vector.shape_cast %781 : vector<8x1xi1> to vector<8x1xi1>
    %791 = vector.broadcast %790 : vector<8x1xi1> to vector<8x128xi1>
    %792 = arith.select %791, %775, %747 : vector<8x128xi1>, vector<8x128xf32>
    %c3_222 = arith.constant 3 : index
    %c0_223 = arith.constant 0 : index
    %c1024_224 = arith.constant 1024 : index
    %793 = vector.load %arg0[%c3_222, %c0_223, %c1024_224] : memref<8x8x1536xf32, #tpu.memory_space<vmem>>, vector<1x8x512xf32>
    %794 = vector.shape_cast %793 : vector<1x8x512xf32> to vector<8x512xf32>
    %795 = arith.truncf %789 : vector<8x128xf32> to vector<8x128xbf16>
    %cst_225 = arith.constant dense<0.000000e+00> : vector<8x512xf32>
    %796 = tpu.matmul %795, %2, %cst_225 {dimension_numbers = #tpu.dot_dimension_numbers<[1], [0], [0], [1], [0, 0, 1, 1], [], []>} : vector<8x128xbf16>, vector<128x512xbf16>, vector<8x512xf32> -> vector<8x512xf32>
    %797 = arith.addf %794, %796 : vector<8x512xf32>
    %798 = vector.extract_strided_slice %797 {offsets = [0, 0], sizes = [8, 128], strides = [1, 1]} : vector<8x512xf32> to vector<8x128xf32>
    %799 = arith.negf %798 : vector<8x128xf32>
    %800 = math.exp %799 : vector<8x128xf32>
    %cst_226 = arith.constant 1.000000e+00 : f32
    %801 = vector.broadcast %cst_226 : f32 to vector<8x128xf32>
    %802 = arith.addf %801, %800 : vector<8x128xf32>
    %803 = arith.divf %801, %802 : vector<8x128xf32>
    %804 = vector.extract_strided_slice %797 {offsets = [0, 128], sizes = [8, 128], strides = [1, 1]} : vector<8x512xf32> to vector<8x128xf32>
    %805 = arith.negf %804 : vector<8x128xf32>
    %806 = math.exp %805 : vector<8x128xf32>
    %cst_227 = arith.constant 1.000000e+00 : f32
    %807 = vector.broadcast %cst_227 : f32 to vector<8x128xf32>
    %808 = arith.addf %807, %806 : vector<8x128xf32>
    %809 = arith.divf %807, %808 : vector<8x128xf32>
    %810 = vector.extract_strided_slice %797 {offsets = [0, 256], sizes = [8, 128], strides = [1, 1]} : vector<8x512xf32> to vector<8x128xf32>
    %811 = math.tanh %810 : vector<8x128xf32>
    %812 = vector.extract_strided_slice %797 {offsets = [0, 384], sizes = [8, 128], strides = [1, 1]} : vector<8x512xf32> to vector<8x128xf32>
    %813 = arith.negf %812 : vector<8x128xf32>
    %814 = math.exp %813 : vector<8x128xf32>
    %cst_228 = arith.constant 1.000000e+00 : f32
    %815 = vector.broadcast %cst_228 : f32 to vector<8x128xf32>
    %816 = arith.addf %815, %814 : vector<8x128xf32>
    %817 = arith.divf %815, %816 : vector<8x128xf32>
    %818 = arith.mulf %809, %792 : vector<8x128xf32>
    %819 = arith.mulf %803, %811 : vector<8x128xf32>
    %820 = arith.addf %818, %819 : vector<8x128xf32>
    %821 = math.tanh %820 : vector<8x128xf32>
    %822 = arith.mulf %817, %821 : vector<8x128xf32>
    %c3_229 = arith.constant 3 : index
    %c0_230 = arith.constant 0 : index
    %c0_231 = arith.constant 0 : index
    %823 = vector.load %arg1[%c3_229, %c0_230, %c0_231] : memref<8x8x1xf32, #tpu.memory_space<vmem>>, vector<1x8x1xf32>
    %824 = vector.shape_cast %823 : vector<1x8x1xf32> to vector<8x1xf32>
    %cst_232 = arith.constant 0.000000e+00 : f32
    %825 = vector.broadcast %cst_232 : f32 to vector<8x1xf32>
    %826 = arith.cmpf ogt, %824, %825 : vector<8x1xf32>
    %cst_233 = arith.constant 0.000000e+00 : f32
    %827 = vector.shape_cast %826 : vector<8x1xi1> to vector<8x1xi1>
    %828 = vector.broadcast %827 : vector<8x1xi1> to vector<8x128xi1>
    %829 = vector.broadcast %cst_233 : f32 to vector<8x128xf32>
    %830 = arith.select %828, %822, %829 : vector<8x128xi1>, vector<8x128xf32>
    %c24 = arith.constant 24 : index
    %c0_234 = arith.constant 0 : index
    %831 = vector.load %arg13[%c24, %c0_234] : memref<64x128xf32, #tpu.memory_space<vmem>>, vector<8x128xf32>
    tpu.vector_store %arg13[%c24, %c0_234], %830 {strides = array<i32>} : memref<64x128xf32, #tpu.memory_space<vmem>>, vector<8x128xf32>,
    %832 = vector.shape_cast %826 : vector<8x1xi1> to vector<8x1xi1>
    %833 = vector.broadcast %832 : vector<8x1xi1> to vector<8x128xi1>
    %834 = arith.select %833, %822, %789 : vector<8x128xi1>, vector<8x128xf32>
    %835 = vector.shape_cast %826 : vector<8x1xi1> to vector<8x1xi1>
    %836 = vector.broadcast %835 : vector<8x1xi1> to vector<8x128xi1>
    %837 = arith.select %836, %820, %792 : vector<8x128xi1>, vector<8x128xf32>
    %c4_235 = arith.constant 4 : index
    %c0_236 = arith.constant 0 : index
    %c1024_237 = arith.constant 1024 : index
    %838 = vector.load %arg0[%c4_235, %c0_236, %c1024_237] : memref<8x8x1536xf32, #tpu.memory_space<vmem>>, vector<1x8x512xf32>
    %839 = vector.shape_cast %838 : vector<1x8x512xf32> to vector<8x512xf32>
    %840 = arith.truncf %834 : vector<8x128xf32> to vector<8x128xbf16>
    %cst_238 = arith.constant dense<0.000000e+00> : vector<8x512xf32>
    %841 = tpu.matmul %840, %2, %cst_238 {dimension_numbers = #tpu.dot_dimension_numbers<[1], [0], [0], [1], [0, 0, 1, 1], [], []>} : vector<8x128xbf16>, vector<128x512xbf16>, vector<8x512xf32> -> vector<8x512xf32>
    %842 = arith.addf %839, %841 : vector<8x512xf32>
    %843 = vector.extract_strided_slice %842 {offsets = [0, 0], sizes = [8, 128], strides = [1, 1]} : vector<8x512xf32> to vector<8x128xf32>
    %844 = arith.negf %843 : vector<8x128xf32>
    %845 = math.exp %844 : vector<8x128xf32>
    %cst_239 = arith.constant 1.000000e+00 : f32
    %846 = vector.broadcast %cst_239 : f32 to vector<8x128xf32>
    %847 = arith.addf %846, %845 : vector<8x128xf32>
    %848 = arith.divf %846, %847 : vector<8x128xf32>
    %849 = vector.extract_strided_slice %842 {offsets = [0, 128], sizes = [8, 128], strides = [1, 1]} : vector<8x512xf32> to vector<8x128xf32>
    %850 = arith.negf %849 : vector<8x128xf32>
    %851 = math.exp %850 : vector<8x128xf32>
    %cst_240 = arith.constant 1.000000e+00 : f32
    %852 = vector.broadcast %cst_240 : f32 to vector<8x128xf32>
    %853 = arith.addf %852, %851 : vector<8x128xf32>
    %854 = arith.divf %852, %853 : vector<8x128xf32>
    %855 = vector.extract_strided_slice %842 {offsets = [0, 256], sizes = [8, 128], strides = [1, 1]} : vector<8x512xf32> to vector<8x128xf32>
    %856 = math.tanh %855 : vector<8x128xf32>
    %857 = vector.extract_strided_slice %842 {offsets = [0, 384], sizes = [8, 128], strides = [1, 1]} : vector<8x512xf32> to vector<8x128xf32>
    %858 = arith.negf %857 : vector<8x128xf32>
    %859 = math.exp %858 : vector<8x128xf32>
    %cst_241 = arith.constant 1.000000e+00 : f32
    %860 = vector.broadcast %cst_241 : f32 to vector<8x128xf32>
    %861 = arith.addf %860, %859 : vector<8x128xf32>
    %862 = arith.divf %860, %861 : vector<8x128xf32>
    %863 = arith.mulf %854, %837 : vector<8x128xf32>
    %864 = arith.mulf %848, %856 : vector<8x128xf32>
    %865 = arith.addf %863, %864 : vector<8x128xf32>
    %866 = math.tanh %865 : vector<8x128xf32>
    %867 = arith.mulf %862, %866 : vector<8x128xf32>
    %c4_242 = arith.constant 4 : index
    %c0_243 = arith.constant 0 : index
    %c0_244 = arith.constant 0 : index
    %868 = vector.load %arg1[%c4_242, %c0_243, %c0_244] : memref<8x8x1xf32, #tpu.memory_space<vmem>>, vector<1x8x1xf32>
    %869 = vector.shape_cast %868 : vector<1x8x1xf32> to vector<8x1xf32>
    %cst_245 = arith.constant 0.000000e+00 : f32
    %870 = vector.broadcast %cst_245 : f32 to vector<8x1xf32>
    %871 = arith.cmpf ogt, %869, %870 : vector<8x1xf32>
    %cst_246 = arith.constant 0.000000e+00 : f32
    %872 = vector.shape_cast %871 : vector<8x1xi1> to vector<8x1xi1>
    %873 = vector.broadcast %872 : vector<8x1xi1> to vector<8x128xi1>
    %874 = vector.broadcast %cst_246 : f32 to vector<8x128xf32>
    %875 = arith.select %873, %867, %874 : vector<8x128xi1>, vector<8x128xf32>
    %c32 = arith.constant 32 : index
    %c0_247 = arith.constant 0 : index
    %876 = vector.load %arg13[%c32, %c0_247] : memref<64x128xf32, #tpu.memory_space<vmem>>, vector<8x128xf32>
    tpu.vector_store %arg13[%c32, %c0_247], %875 {strides = array<i32>} : memref<64x128xf32, #tpu.memory_space<vmem>>, vector<8x128xf32>,
    %877 = vector.shape_cast %871 : vector<8x1xi1> to vector<8x1xi1>
    %878 = vector.broadcast %877 : vector<8x1xi1> to vector<8x128xi1>
    %879 = arith.select %878, %867, %834 : vector<8x128xi1>, vector<8x128xf32>
    %880 = vector.shape_cast %871 : vector<8x1xi1> to vector<8x1xi1>
    %881 = vector.broadcast %880 : vector<8x1xi1> to vector<8x128xi1>
    %882 = arith.select %881, %865, %837 : vector<8x128xi1>, vector<8x128xf32>
    %c5_248 = arith.constant 5 : index
    %c0_249 = arith.constant 0 : index
    %c1024_250 = arith.constant 1024 : index
    %883 = vector.load %arg0[%c5_248, %c0_249, %c1024_250] : memref<8x8x1536xf32, #tpu.memory_space<vmem>>, vector<1x8x512xf32>
    %884 = vector.shape_cast %883 : vector<1x8x512xf32> to vector<8x512xf32>
    %885 = arith.truncf %879 : vector<8x128xf32> to vector<8x128xbf16>
    %cst_251 = arith.constant dense<0.000000e+00> : vector<8x512xf32>
    %886 = tpu.matmul %885, %2, %cst_251 {dimension_numbers = #tpu.dot_dimension_numbers<[1], [0], [0], [1], [0, 0, 1, 1], [], []>} : vector<8x128xbf16>, vector<128x512xbf16>, vector<8x512xf32> -> vector<8x512xf32>
    %887 = arith.addf %884, %886 : vector<8x512xf32>
    %888 = vector.extract_strided_slice %887 {offsets = [0, 0], sizes = [8, 128], strides = [1, 1]} : vector<8x512xf32> to vector<8x128xf32>
    %889 = arith.negf %888 : vector<8x128xf32>
    %890 = math.exp %889 : vector<8x128xf32>
    %cst_252 = arith.constant 1.000000e+00 : f32
    %891 = vector.broadcast %cst_252 : f32 to vector<8x128xf32>
    %892 = arith.addf %891, %890 : vector<8x128xf32>
    %893 = arith.divf %891, %892 : vector<8x128xf32>
    %894 = vector.extract_strided_slice %887 {offsets = [0, 128], sizes = [8, 128], strides = [1, 1]} : vector<8x512xf32> to vector<8x128xf32>
    %895 = arith.negf %894 : vector<8x128xf32>
    %896 = math.exp %895 : vector<8x128xf32>
    %cst_253 = arith.constant 1.000000e+00 : f32
    %897 = vector.broadcast %cst_253 : f32 to vector<8x128xf32>
    %898 = arith.addf %897, %896 : vector<8x128xf32>
    %899 = arith.divf %897, %898 : vector<8x128xf32>
    %900 = vector.extract_strided_slice %887 {offsets = [0, 256], sizes = [8, 128], strides = [1, 1]} : vector<8x512xf32> to vector<8x128xf32>
    %901 = math.tanh %900 : vector<8x128xf32>
    %902 = vector.extract_strided_slice %887 {offsets = [0, 384], sizes = [8, 128], strides = [1, 1]} : vector<8x512xf32> to vector<8x128xf32>
    %903 = arith.negf %902 : vector<8x128xf32>
    %904 = math.exp %903 : vector<8x128xf32>
    %cst_254 = arith.constant 1.000000e+00 : f32
    %905 = vector.broadcast %cst_254 : f32 to vector<8x128xf32>
    %906 = arith.addf %905, %904 : vector<8x128xf32>
    %907 = arith.divf %905, %906 : vector<8x128xf32>
    %908 = arith.mulf %899, %882 : vector<8x128xf32>
    %909 = arith.mulf %893, %901 : vector<8x128xf32>
    %910 = arith.addf %908, %909 : vector<8x128xf32>
    %911 = math.tanh %910 : vector<8x128xf32>
    %912 = arith.mulf %907, %911 : vector<8x128xf32>
    %c5_255 = arith.constant 5 : index
    %c0_256 = arith.constant 0 : index
    %c0_257 = arith.constant 0 : index
    %913 = vector.load %arg1[%c5_255, %c0_256, %c0_257] : memref<8x8x1xf32, #tpu.memory_space<vmem>>, vector<1x8x1xf32>
    %914 = vector.shape_cast %913 : vector<1x8x1xf32> to vector<8x1xf32>
    %cst_258 = arith.constant 0.000000e+00 : f32
    %915 = vector.broadcast %cst_258 : f32 to vector<8x1xf32>
    %916 = arith.cmpf ogt, %914, %915 : vector<8x1xf32>
    %cst_259 = arith.constant 0.000000e+00 : f32
    %917 = vector.shape_cast %916 : vector<8x1xi1> to vector<8x1xi1>
    %918 = vector.broadcast %917 : vector<8x1xi1> to vector<8x128xi1>
    %919 = vector.broadcast %cst_259 : f32 to vector<8x128xf32>
    %920 = arith.select %918, %912, %919 : vector<8x128xi1>, vector<8x128xf32>
    %c40 = arith.constant 40 : index
    %c0_260 = arith.constant 0 : index
    %921 = vector.load %arg13[%c40, %c0_260] : memref<64x128xf32, #tpu.memory_space<vmem>>, vector<8x128xf32>
    tpu.vector_store %arg13[%c40, %c0_260], %920 {strides = array<i32>} : memref<64x128xf32, #tpu.memory_space<vmem>>, vector<8x128xf32>,
    %922 = vector.shape_cast %916 : vector<8x1xi1> to vector<8x1xi1>
    %923 = vector.broadcast %922 : vector<8x1xi1> to vector<8x128xi1>
    %924 = arith.select %923, %912, %879 : vector<8x128xi1>, vector<8x128xf32>
    %925 = vector.shape_cast %916 : vector<8x1xi1> to vector<8x1xi1>
    %926 = vector.broadcast %925 : vector<8x1xi1> to vector<8x128xi1>
    %927 = arith.select %926, %910, %882 : vector<8x128xi1>, vector<8x128xf32>
    %c6_261 = arith.constant 6 : index
    %c0_262 = arith.constant 0 : index
    %c1024_263 = arith.constant 1024 : index
    %928 = vector.load %arg0[%c6_261, %c0_262, %c1024_263] : memref<8x8x1536xf32, #tpu.memory_space<vmem>>, vector<1x8x512xf32>
    %929 = vector.shape_cast %928 : vector<1x8x512xf32> to vector<8x512xf32>
    %930 = arith.truncf %924 : vector<8x128xf32> to vector<8x128xbf16>
    %cst_264 = arith.constant dense<0.000000e+00> : vector<8x512xf32>
    %931 = tpu.matmul %930, %2, %cst_264 {dimension_numbers = #tpu.dot_dimension_numbers<[1], [0], [0], [1], [0, 0, 1, 1], [], []>} : vector<8x128xbf16>, vector<128x512xbf16>, vector<8x512xf32> -> vector<8x512xf32>
    %932 = arith.addf %929, %931 : vector<8x512xf32>
    %933 = vector.extract_strided_slice %932 {offsets = [0, 0], sizes = [8, 128], strides = [1, 1]} : vector<8x512xf32> to vector<8x128xf32>
    %934 = arith.negf %933 : vector<8x128xf32>
    %935 = math.exp %934 : vector<8x128xf32>
    %cst_265 = arith.constant 1.000000e+00 : f32
    %936 = vector.broadcast %cst_265 : f32 to vector<8x128xf32>
    %937 = arith.addf %936, %935 : vector<8x128xf32>
    %938 = arith.divf %936, %937 : vector<8x128xf32>
    %939 = vector.extract_strided_slice %932 {offsets = [0, 128], sizes = [8, 128], strides = [1, 1]} : vector<8x512xf32> to vector<8x128xf32>
    %940 = arith.negf %939 : vector<8x128xf32>
    %941 = math.exp %940 : vector<8x128xf32>
    %cst_266 = arith.constant 1.000000e+00 : f32
    %942 = vector.broadcast %cst_266 : f32 to vector<8x128xf32>
    %943 = arith.addf %942, %941 : vector<8x128xf32>
    %944 = arith.divf %942, %943 : vector<8x128xf32>
    %945 = vector.extract_strided_slice %932 {offsets = [0, 256], sizes = [8, 128], strides = [1, 1]} : vector<8x512xf32> to vector<8x128xf32>
    %946 = math.tanh %945 : vector<8x128xf32>
    %947 = vector.extract_strided_slice %932 {offsets = [0, 384], sizes = [8, 128], strides = [1, 1]} : vector<8x512xf32> to vector<8x128xf32>
    %948 = arith.negf %947 : vector<8x128xf32>
    %949 = math.exp %948 : vector<8x128xf32>
    %cst_267 = arith.constant 1.000000e+00 : f32
    %950 = vector.broadcast %cst_267 : f32 to vector<8x128xf32>
    %951 = arith.addf %950, %949 : vector<8x128xf32>
    %952 = arith.divf %950, %951 : vector<8x128xf32>
    %953 = arith.mulf %944, %927 : vector<8x128xf32>
    %954 = arith.mulf %938, %946 : vector<8x128xf32>
    %955 = arith.addf %953, %954 : vector<8x128xf32>
    %956 = math.tanh %955 : vector<8x128xf32>
    %957 = arith.mulf %952, %956 : vector<8x128xf32>
    %c6_268 = arith.constant 6 : index
    %c0_269 = arith.constant 0 : index
    %c0_270 = arith.constant 0 : index
    %958 = vector.load %arg1[%c6_268, %c0_269, %c0_270] : memref<8x8x1xf32, #tpu.memory_space<vmem>>, vector<1x8x1xf32>
    %959 = vector.shape_cast %958 : vector<1x8x1xf32> to vector<8x1xf32>
    %cst_271 = arith.constant 0.000000e+00 : f32
    %960 = vector.broadcast %cst_271 : f32 to vector<8x1xf32>
    %961 = arith.cmpf ogt, %959, %960 : vector<8x1xf32>
    %cst_272 = arith.constant 0.000000e+00 : f32
    %962 = vector.shape_cast %961 : vector<8x1xi1> to vector<8x1xi1>
    %963 = vector.broadcast %962 : vector<8x1xi1> to vector<8x128xi1>
    %964 = vector.broadcast %cst_272 : f32 to vector<8x128xf32>
    %965 = arith.select %963, %957, %964 : vector<8x128xi1>, vector<8x128xf32>
    %c48 = arith.constant 48 : index
    %c0_273 = arith.constant 0 : index
    %966 = vector.load %arg13[%c48, %c0_273] : memref<64x128xf32, #tpu.memory_space<vmem>>, vector<8x128xf32>
    tpu.vector_store %arg13[%c48, %c0_273], %965 {strides = array<i32>} : memref<64x128xf32, #tpu.memory_space<vmem>>, vector<8x128xf32>,
    %967 = vector.shape_cast %961 : vector<8x1xi1> to vector<8x1xi1>
    %968 = vector.broadcast %967 : vector<8x1xi1> to vector<8x128xi1>
    %969 = arith.select %968, %957, %924 : vector<8x128xi1>, vector<8x128xf32>
    %970 = vector.shape_cast %961 : vector<8x1xi1> to vector<8x1xi1>
    %971 = vector.broadcast %970 : vector<8x1xi1> to vector<8x128xi1>
    %972 = arith.select %971, %955, %927 : vector<8x128xi1>, vector<8x128xf32>
    %c7_274 = arith.constant 7 : index
    %c0_275 = arith.constant 0 : index
    %c1024_276 = arith.constant 1024 : index
    %973 = vector.load %arg0[%c7_274, %c0_275, %c1024_276] : memref<8x8x1536xf32, #tpu.memory_space<vmem>>, vector<1x8x512xf32>
    %974 = vector.shape_cast %973 : vector<1x8x512xf32> to vector<8x512xf32>
    %975 = arith.truncf %969 : vector<8x128xf32> to vector<8x128xbf16>
    %cst_277 = arith.constant dense<0.000000e+00> : vector<8x512xf32>
    %976 = tpu.matmul %975, %2, %cst_277 {dimension_numbers = #tpu.dot_dimension_numbers<[1], [0], [0], [1], [0, 0, 1, 1], [], []>} : vector<8x128xbf16>, vector<128x512xbf16>, vector<8x512xf32> -> vector<8x512xf32>
    %977 = arith.addf %974, %976 : vector<8x512xf32>
    %978 = vector.extract_strided_slice %977 {offsets = [0, 0], sizes = [8, 128], strides = [1, 1]} : vector<8x512xf32> to vector<8x128xf32>
    %979 = arith.negf %978 : vector<8x128xf32>
    %980 = math.exp %979 : vector<8x128xf32>
    %cst_278 = arith.constant 1.000000e+00 : f32
    %981 = vector.broadcast %cst_278 : f32 to vector<8x128xf32>
    %982 = arith.addf %981, %980 : vector<8x128xf32>
    %983 = arith.divf %981, %982 : vector<8x128xf32>
    %984 = vector.extract_strided_slice %977 {offsets = [0, 128], sizes = [8, 128], strides = [1, 1]} : vector<8x512xf32> to vector<8x128xf32>
    %985 = arith.negf %984 : vector<8x128xf32>
    %986 = math.exp %985 : vector<8x128xf32>
    %cst_279 = arith.constant 1.000000e+00 : f32
    %987 = vector.broadcast %cst_279 : f32 to vector<8x128xf32>
    %988 = arith.addf %987, %986 : vector<8x128xf32>
    %989 = arith.divf %987, %988 : vector<8x128xf32>
    %990 = vector.extract_strided_slice %977 {offsets = [0, 256], sizes = [8, 128], strides = [1, 1]} : vector<8x512xf32> to vector<8x128xf32>
    %991 = math.tanh %990 : vector<8x128xf32>
    %992 = vector.extract_strided_slice %977 {offsets = [0, 384], sizes = [8, 128], strides = [1, 1]} : vector<8x512xf32> to vector<8x128xf32>
    %993 = arith.negf %992 : vector<8x128xf32>
    %994 = math.exp %993 : vector<8x128xf32>
    %cst_280 = arith.constant 1.000000e+00 : f32
    %995 = vector.broadcast %cst_280 : f32 to vector<8x128xf32>
    %996 = arith.addf %995, %994 : vector<8x128xf32>
    %997 = arith.divf %995, %996 : vector<8x128xf32>
    %998 = arith.mulf %989, %972 : vector<8x128xf32>
    %999 = arith.mulf %983, %991 : vector<8x128xf32>
    %1000 = arith.addf %998, %999 : vector<8x128xf32>
    %1001 = math.tanh %1000 : vector<8x128xf32>
    %1002 = arith.mulf %997, %1001 : vector<8x128xf32>
    %c7_281 = arith.constant 7 : index
    %c0_282 = arith.constant 0 : index
    %c0_283 = arith.constant 0 : index
    %1003 = vector.load %arg1[%c7_281, %c0_282, %c0_283] : memref<8x8x1xf32, #tpu.memory_space<vmem>>, vector<1x8x1xf32>
    %1004 = vector.shape_cast %1003 : vector<1x8x1xf32> to vector<8x1xf32>
    %cst_284 = arith.constant 0.000000e+00 : f32
    %1005 = vector.broadcast %cst_284 : f32 to vector<8x1xf32>
    %1006 = arith.cmpf ogt, %1004, %1005 : vector<8x1xf32>
    %cst_285 = arith.constant 0.000000e+00 : f32
    %1007 = vector.shape_cast %1006 : vector<8x1xi1> to vector<8x1xi1>
    %1008 = vector.broadcast %1007 : vector<8x1xi1> to vector<8x128xi1>
    %1009 = vector.broadcast %cst_285 : f32 to vector<8x128xf32>
    %1010 = arith.select %1008, %1002, %1009 : vector<8x128xi1>, vector<8x128xf32>
    %c56 = arith.constant 56 : index
    %c0_286 = arith.constant 0 : index
    %1011 = vector.load %arg13[%c56, %c0_286] : memref<64x128xf32, #tpu.memory_space<vmem>>, vector<8x128xf32>
    tpu.vector_store %arg13[%c56, %c0_286], %1010 {strides = array<i32>} : memref<64x128xf32, #tpu.memory_space<vmem>>, vector<8x128xf32>,
    %c0_287 = arith.constant 0 : index
    %c0_288 = arith.constant 0 : index
    %1012 = vector.load %arg13[%c0_287, %c0_288] : memref<64x128xf32, #tpu.memory_space<vmem>>, vector<64x128xf32>
    %1013 = arith.truncf %1012 : vector<64x128xf32> to vector<64x128xbf16>
    %c0_289 = arith.constant 0 : index
    %c0_290 = arith.constant 0 : index
    %1014 = vector.load %arg10[%c0_289, %c0_290] : memref<128x128xbf16, #tpu.memory_space<vmem>>, vector<128x128xbf16>
    %cst_291 = arith.constant dense<0.000000e+00> : vector<64x128xf32>
    %1015 = tpu.matmul %1013, %1014, %cst_291 {dimension_numbers = #tpu.dot_dimension_numbers<[1], [0], [0], [1], [0, 0, 1, 1], [], []>} : vector<64x128xbf16>, vector<128x128xbf16>, vector<64x128xf32> -> vector<64x128xf32>
    %c0_292 = arith.constant 0 : index
    %c0_293 = arith.constant 0 : index
    %1016 = vector.load %arg11[%c0_292, %c0_293] : memref<1x128xf32, #tpu.memory_space<vmem>>, vector<1x128xf32>
    %1017 = vector.broadcast %1016 : vector<1x128xf32> to vector<64x128xf32>
    %1018 = arith.addf %1015, %1017 : vector<64x128xf32>
    %c0_294 = arith.constant 0 : index
    %c0_295 = arith.constant 0 : index
    %1019 = vector.load %arg2[%c0_294, %c0_295] : memref<64x1xi32, #tpu.memory_space<vmem>>, vector<64x1xi32>
    %cst_296 = arith.constant dense<0xFF800000> : vector<64xf32>
    %1020 = vector.multi_reduction <maximumf>, %1018, %cst_296 [1] : vector<64x128xf32> to vector<64xf32>
    %1021 = vector.shape_cast %1020 : vector<64xf32> to vector<64x1xf32>
    %1022 = vector.broadcast %1021 : vector<64x1xf32> to vector<64x128xf32>
    %1023 = arith.subf %1018, %1022 : vector<64x128xf32>
    %1024 = math.exp %1023 : vector<64x128xf32>
    %cst_297 = arith.constant dense<0.000000e+00> : vector<64xf32>
    %1025 = vector.multi_reduction <add>, %1024, %cst_297 [1] : vector<64x128xf32> to vector<64xf32>
    %1026 = vector.shape_cast %1025 : vector<64xf32> to vector<64x1xf32>
    %1027 = math.log %1026 : vector<64x1xf32>
    %1028 = arith.addf %1027, %1021 : vector<64x1xf32>
    %1029 = tpu.iota {dimensions = array<i32: 1>} : vector<64x128xi32>
    %1030 = vector.broadcast %1019 : vector<64x1xi32> to vector<64x128xi32>
    %1031 = arith.cmpi eq, %1029, %1030 : vector<64x128xi32>
    %cst_298 = arith.constant 0.000000e+00 : f32
    %1032 = vector.broadcast %cst_298 : f32 to vector<64x128xf32>
    %1033 = arith.select %1031, %1018, %1032 : vector<64x128xi1>, vector<64x128xf32>
    %cst_299 = arith.constant dense<0.000000e+00> : vector<64xf32>
    %1034 = vector.multi_reduction <add>, %1033, %cst_299 [1] : vector<64x128xf32> to vector<64xf32>
    %1035 = vector.shape_cast %1034 : vector<64xf32> to vector<64x1xf32>
    %c0_i32 = arith.constant 0 : i32
    %1036 = vector.broadcast %c0_i32 : i32 to vector<64x1xi32>
    %1037 = arith.cmpi ne, %1019, %1036 : vector<64x1xi32>
    %1038 = arith.extui %1037 : vector<64x1xi1> to vector<64x1xi32>
    %1039 = arith.sitofp %1038 : vector<64x1xi32> to vector<64x1xf32>
    %1040 = arith.subf %1028, %1035 : vector<64x1xf32>
    %1041 = arith.mulf %1039, %1040 : vector<64x1xf32>
    %1042 = vector.shape_cast %1041 : vector<64x1xf32> to vector<1x64x1xf32>
    %cst_300 = arith.constant dense<0.000000e+00> : vector<1xf32>
    %1043 = vector.multi_reduction <add>, %1042, %cst_300 [1, 2] : vector<1x64x1xf32> to vector<1xf32>
    %1044 = vector.shape_cast %1043 : vector<1xf32> to vector<1x1x1xf32>
    %1045 = vector.extract %1044[0, 0, 0] : f32 from vector<1x1x1xf32>
    %1046 = vector.shape_cast %1039 : vector<64x1xf32> to vector<1x64x1xf32>
    %cst_301 = arith.constant dense<0.000000e+00> : vector<1xf32>
    %1047 = vector.multi_reduction <add>, %1046, %cst_301 [1, 2] : vector<1x64x1xf32> to vector<1xf32>
    %1048 = vector.shape_cast %1047 : vector<1xf32> to vector<1x1x1xf32>
    %1049 = vector.extract %1048[0, 0, 0] : f32 from vector<1x1x1xf32>
    %cst_302 = arith.constant 1.000000e+00 : f32
    %1050 = arith.maximumf %1049, %cst_302 : f32
    %1051 = arith.divf %1045, %1050 : f32
    %1052 = vector.broadcast %1051 : f32 to vector<1x1xf32>
    %c0_303 = arith.constant 0 : index
    %c0_304 = arith.constant 0 : index
    %1053 = vector.load %arg12[%c0_303, %c0_304] : memref<1x1xf32, #tpu.memory_space<vmem>>, vector<1x1xf32>
    tpu.vector_store %arg12[%c0_303, %c0_304], %1052 {strides = array<i32>} : memref<1x1xf32, #tpu.memory_space<vmem>>, vector<1x1xf32>,
    return
  }
}

</mosaic_0001>

<llo_original>
// kernel: vae_dummy_forward.2
$region0: #{vae_dummy_forward.2}
  #allocation0 [shape = 'u32[]', space=smem, size = 0x4, offset = 0x4, fixed_abs, tag = 'smem constant byte address 0x4 - core index']
  #allocation1 [shape = 'u32[144,128]{1,0:T(1,128)}', space=vmem, size = 0x12000, scoped, tag = 'internal scratch']
  %s0 = inlined_call_operand.vmem [shape: f32[64,128], index: 0, kind: input, shape index: {}]
  %s1 = inlined_call_operand.hbm [shape: bf16[128,1536], index: 1, kind: input, shape index: {}]
  %s2 = inlined_call_operand.vmem [shape: f32[1,1536], index: 2, kind: input, shape index: {}]
  %s3 = inlined_call_operand.vmem [shape: f32[64,1536], index: 3, kind: output, shape index: {}]
  %s4 = sld [smem:[#allocation0]]
  $region26: #{vae_dummy_forward.2} parent=0
    _
  %s6 = ssub.s32 1, %s4
  %s7 = scalar_select 0, %s6, %s4
  $region1: #{vae_dummy_forward.2} parent=0
    #allocation2 [shape = 'u8[393216]{0}', space=vmem, size = 0x60000, scoped, tag = 'input window, operand 1, single buffered']
    #allocation3 [shape = 's32[1]{0}', space=sflag, size = 0x4, scoped, tag = 'scoped memory for vae_dummy_forward.2']
    %8 = vsyncpa [#allocation3], 0
    // Predicated region
    $region2: #{vae_dummy_forward.2} parent=1 // pred_check
      _
    $region3: #{vae_dummy_forward.2} parent=1 // pred_check_branch
      %10 = sbr.rel (0) target = $region5
    $region4: #{vae_dummy_forward.2} parent=1 // pred_region
      _
    $region5: #{vae_dummy_forward.2} parent=1 // pred_fallthru
      _
    // Predicated region
    $region6: #{vae_dummy_forward.2} parent=1 // pred_check
      _
    $region7: #{vae_dummy_forward.2} parent=1 // pred_check_branch
      %12 = sbr.rel (0) target = $region9
    $region8: #{vae_dummy_forward.2} parent=1 // pred_region
      %s14 = ssub.s32 12288, 12288
      %15 = vsyncadd [#allocation3], %s14
      %s16 = sshll.u32 [#allocation2], 4
      %s17 = int_to_ptr.vmem [resolvable:$true] %s16
      %22 = dma.hbm_to_vmem [thread:$0]  %s1, 12288, %s17, [#allocation3], 768, 768, 48
    $region9: #{vae_dummy_forward.2} parent=1 // pred_fallthru
      _
    // Predicated region
    $region10: #{vae_dummy_forward.2} parent=1 // pred_check
      _
    $region11: #{vae_dummy_forward.2} parent=1 // pred_check_branch
      %24 = sbr.rel (0) target = $region13
    $region12: #{vae_dummy_forward.2} parent=1 // pred_region
      _
    $region13: #{vae_dummy_forward.2} parent=1 // pred_fallthru
      _
    // Predicated region
    $region14: #{vae_dummy_forward.2} parent=1 // pred_check
      _
    $region15: #{vae_dummy_forward.2} parent=1 // pred_check_branch
      %26 = sbr.rel (0) target = $region17
    $region16: #{vae_dummy_forward.2} parent=1 // pred_region
      %27 = dma.done [#allocation3], 12288
    $region17: #{vae_dummy_forward.2} parent=1 // pred_fallthru
      _
    %v29 = vld [vmem:[%s0] sm:$0xff]
    %v30 = vld [vmem:[%s0 + $0x8] sm:$0xff]
    %v31 = vld [vmem:[%s0 + $0x10] sm:$0xff]
    %v32 = vld [vmem:[%s0 + $0x18] sm:$0xff]
    %v33 = vld [vmem:[%s0 + $0x20] sm:$0xff]
    %v34 = vld [vmem:[%s0 + $0x28] sm:$0xff]
    %v35 = vld [vmem:[%s0 + $0x30] sm:$0xff]
    %v36 = vld [vmem:[%s0 + $0x38] sm:$0xff]
    %v37 = vpack.c.bf16 %v30, %v29
    %v38 = vpack.c.bf16 %v32, %v31
    %v39 = vpack.c.bf16 %v34, %v33
    %v40 = vpack.c.bf16 %v36, %v35
    %v41 = vld [vmem:[#allocation2] sm:$0xff]
    %v42 = vld [vmem:[#allocation2 + $0x8] sm:$0xff]
    %v43 = vld [vmem:[#allocation2 + $0x10] sm:$0xff]
    %v44 = vld [vmem:[#allocation2 + $0x18] sm:$0xff]
    %v45 = vld [vmem:[#allocation2 + $0x20] sm:$0xff]
    %v46 = vld [vmem:[#allocation2 + $0x28] sm:$0xff]
    %v47 = vld [vmem:[#allocation2 + $0x30] sm:$0xff]
    %v48 = vld [vmem:[#allocation2 + $0x38] sm:$0xff]
    %v49 = vld [vmem:[#allocation2 + $0x40] sm:$0xff]
    %v50 = vld [vmem:[#allocation2 + $0x48] sm:$0xff]
    %v51 = vld [vmem:[#allocation2 + $0x50] sm:$0xff]
    %v52 = vld [vmem:[#allocation2 + $0x58] sm:$0xff]
    %v53 = vld [vmem:[#allocation2 + $0x60] sm:$0xff]
    %v54 = vld [vmem:[#allocation2 + $0x68] sm:$0xff]
    %v55 = vld [vmem:[#allocation2 + $0x70] sm:$0xff]
    %v56 = vld [vmem:[#allocation2 + $0x78] sm:$0xff]
    %v57 = vld [vmem:[#allocation2 + $0x80] sm:$0xff]
    %v58 = vld [vmem:[#allocation2 + $0x88] sm:$0xff]
    %v59 = vld [vmem:[#allocation2 + $0x90] sm:$0xff]
    %v60 = vld [vmem:[#allocation2 + $0x98] sm:$0xff]
    %v61 = vld [vmem:[#allocation2 + $0xa0] sm:$0xff]
    %v62 = vld [vmem:[#allocation2 + $0xa8] sm:$0xff]
    %v63 = vld [vmem:[#allocation2 + $0xb0] sm:$0xff]
    %v64 = vld [vmem:[#allocation2 + $0xb8] sm:$0xff]
    %v65 = vld [vmem:[#allocation2 + $0xc0] sm:$0xff]
    %v66 = vld [vmem:[#allocation2 + $0xc8] sm:$0xff]
    %v67 = vld [vmem:[#allocation2 + $0xd0] sm:$0xff]
    %v68 = vld [vmem:[#allocation2 + $0xd8] sm:$0xff]
    %v69 = vld [vmem:[#allocation2 + $0xe0] sm:$0xff]
    %v70 = vld [vmem:[#allocation2 + $0xe8] sm:$0xff]
    %v71 = vld [vmem:[#allocation2 + $0xf0] sm:$0xff]
    %v72 = vld [vmem:[#allocation2 + $0xf8] sm:$0xff]
    %v73 = vld [vmem:[#allocation2 + $0x100] sm:$0xff]
    %v74 = vld [vmem:[#allocation2 + $0x108] sm:$0xff]
    %v75 = vld [vmem:[#allocation2 + $0x110] sm:$0xff]
    %v76 = vld [vmem:[#allocation2 + $0x118] sm:$0xff]
    %v77 = vld [vmem:[#allocation2 + $0x120] sm:$0xff]
    %v78 = vld [vmem:[#allocation2 + $0x128] sm:$0xff]
    %v79 = vld [vmem:[#allocation2 + $0x130] sm:$0xff]
    %v80 = vld [vmem:[#allocation2 + $0x138] sm:$0xff]
    %v81 = vld [vmem:[#allocation2 + $0x140] sm:$0xff]
    %v82 = vld [vmem:[#allocation2 + $0x148] sm:$0xff]
    %v83 = vld [vmem:[#allocation2 + $0x150] sm:$0xff]
    %v84 = vld [vmem:[#allocation2 + $0x158] sm:$0xff]
    %v85 = vld [vmem:[#allocation2 + $0x160] sm:$0xff]
    %v86 = vld [vmem:[#allocation2 + $0x168] sm:$0xff]
    %v87 = vld [vmem:[#allocation2 + $0x170] sm:$0xff]
    %v88 = vld [vmem:[#allocation2 + $0x178] sm:$0xff]
    %v89 = vld [vmem:[#allocation2 + $0x180] sm:$0xff]
    %v90 = vld [vmem:[#allocation2 + $0x188] sm:$0xff]
    %v91 = vld [vmem:[#allocation2 + $0x190] sm:$0xff]
    %v92 = vld [vmem:[#allocation2 + $0x198] sm:$0xff]
    %v93 = vld [vmem:[#allocation2 + $0x1a0] sm:$0xff]
    %v94 = vld [vmem:[#allocation2 + $0x1a8] sm:$0xff]
    %v95 = vld [vmem:[#allocation2 + $0x1b0] sm:$0xff]
    %v96 = vld [vmem:[#allocation2 + $0x1b8] sm:$0xff]
    %v97 = vld [vmem:[#allocation2 + $0x1c0] sm:$0xff]
    %v98 = vld [vmem:[#allocation2 + $0x1c8] sm:$0xff]
    %v99 = vld [vmem:[#allocation2 + $0x1d0] sm:$0xff]
    %v100 = vld [vmem:[#allocation2 + $0x1d8] sm:$0xff]
    %v101 = vld [vmem:[#allocation2 + $0x1e0] sm:$0xff]
    %v102 = vld [vmem:[#allocation2 + $0x1e8] sm:$0xff]
    %v103 = vld [vmem:[#allocation2 + $0x1f0] sm:$0xff]
    %v104 = vld [vmem:[#allocation2 + $0x1f8] sm:$0xff]
    %v105 = vld [vmem:[#allocation2 + $0x200] sm:$0xff]
    %v106 = vld [vmem:[#allocation2 + $0x208] sm:$0xff]
    %v107 = vld [vmem:[#allocation2 + $0x210] sm:$0xff]
    %v108 = vld [vmem:[#allocation2 + $0x218] sm:$0xff]
    %v109 = vld [vmem:[#allocation2 + $0x220] sm:$0xff]
    %v110 = vld [vmem:[#allocation2 + $0x228] sm:$0xff]
    %v111 = vld [vmem:[#allocation2 + $0x230] sm:$0xff]
    %v112 = vld [vmem:[#allocation2 + $0x238] sm:$0xff]
    %v113 = vld [vmem:[#allocation2 + $0x240] sm:$0xff]
    %v114 = vld [vmem:[#allocation2 + $0x248] sm:$0xff]
    %v115 = vld [vmem:[#allocation2 + $0x250] sm:$0xff]
    %v116 = vld [vmem:[#allocation2 + $0x258] sm:$0xff]
    %v117 = vld [vmem:[#allocation2 + $0x260] sm:$0xff]
    %v118 = vld [vmem:[#allocation2 + $0x268] sm:$0xff]
    %v119 = vld [vmem:[#allocation2 + $0x270] sm:$0xff]
    %v120 = vld [vmem:[#allocation2 + $0x278] sm:$0xff]
    %v121 = vld [vmem:[#allocation2 + $0x280] sm:$0xff]
    %v122 = vld [vmem:[#allocation2 + $0x288] sm:$0xff]
    %v123 = vld [vmem:[#allocation2 + $0x290] sm:$0xff]
    %v124 = vld [vmem:[#allocation2 + $0x298] sm:$0xff]
    %v125 = vld [vmem:[#allocation2 + $0x2a0] sm:$0xff]
    %v126 = vld [vmem:[#allocation2 + $0x2a8] sm:$0xff]
    %v127 = vld [vmem:[#allocation2 + $0x2b0] sm:$0xff]
    %v128 = vld [vmem:[#allocation2 + $0x2b8] sm:$0xff]
    %v129 = vld [vmem:[#allocation2 + $0x2c0] sm:$0xff]
    %v130 = vld [vmem:[#allocation2 + $0x2c8] sm:$0xff]
    %v131 = vld [vmem:[#allocation2 + $0x2d0] sm:$0xff]
    %v132 = vld [vmem:[#allocation2 + $0x2d8] sm:$0xff]
    %v133 = vld [vmem:[#allocation2 + $0x2e0] sm:$0xff]
    %v134 = vld [vmem:[#allocation2 + $0x2e8] sm:$0xff]
    %v135 = vld [vmem:[#allocation2 + $0x2f0] sm:$0xff]
    %v136 = vld [vmem:[#allocation2 + $0x2f8] sm:$0xff]
    %v137 = vld [vmem:[%s2] sm:$0xff]
    %v138 = vld [vmem:[%s2 + $0x8] sm:$0xf]
    %v141 = vlaneseq
    %v142 = vshrl.u32 %v141, 7
    %v143 = vsub.s32 0, %v142
    %v144 = vrot.slane %v137, %v143
    %v145 = vlaneseq
    %v146 = vshrl.u32 %v145, 7
    %v147 = vsub.s32 1, %v146
    %v148 = vrot.slane %v137, %v147
    %v149 = vlaneseq
    %v150 = vshrl.u32 %v149, 7
    %v151 = vsub.s32 2, %v150
    %v152 = vrot.slane %v137, %v151
    %v153 = vlaneseq
    %v154 = vshrl.u32 %v153, 7
    %v155 = vsub.s32 3, %v154
    %v156 = vrot.slane %v137, %v155
    %v157 = vlaneseq
    %v158 = vshrl.u32 %v157, 7
    %v159 = vsub.s32 4, %v158
    %v160 = vrot.slane %v137, %v159
    %v161 = vlaneseq
    %v162 = vshrl.u32 %v161, 7
    %v163 = vsub.s32 5, %v162
    %v164 = vrot.slane %v137, %v163
    %v165 = vlaneseq
    %v166 = vshrl.u32 %v165, 7
    %v167 = vsub.s32 6, %v166
    %v168 = vrot.slane %v137, %v167
    %v169 = vlaneseq
    %v170 = vshrl.u32 %v169, 7
    %v171 = vsub.s32 7, %v170
    %v172 = vrot.slane %v137, %v171
    %v173 = vlaneseq
    %v174 = vshrl.u32 %v173, 7
    %v175 = vsub.s32 0, %v174
    %v176 = vrot.slane %v138, %v175
    %v177 = vlaneseq
    %v178 = vshrl.u32 %v177, 7
    %v179 = vsub.s32 1, %v178
    %v180 = vrot.slane %v138, %v179
    %v181 = vlaneseq
    %v182 = vshrl.u32 %v181, 7
    %v183 = vsub.s32 2, %v182
    %v184 = vrot.slane %v138, %v183
    %v185 = vlaneseq
    %v186 = vshrl.u32 %v185, 7
    %v187 = vsub.s32 3, %v186
    %v188 = vrot.slane %v138, %v187
    %v297 = vunpack.c.l.b16 %v41
    %v298 = vunpack.c.h.b16 %v41
    %v299 = vunpack.c.l.b16 %v42
    %v300 = vunpack.c.h.b16 %v42
    %v301 = vunpack.c.l.b16 %v43
    %v302 = vunpack.c.h.b16 %v43
    %v303 = vunpack.c.l.b16 %v44
    %v304 = vunpack.c.h.b16 %v44
    %v305 = vunpack.c.l.b16 %v45
    %v306 = vunpack.c.h.b16 %v45
    %v307 = vunpack.c.l.b16 %v46
    %v308 = vunpack.c.h.b16 %v46
    %v309 = vunpack.c.l.b16 %v47
    %v310 = vunpack.c.h.b16 %v47
    %v311 = vunpack.c.l.b16 %v48
    %v312 = vunpack.c.h.b16 %v48
    %v313 = vunpack.c.l.b16 %v49
    %v314 = vunpack.c.h.b16 %v49
    %v315 = vunpack.c.l.b16 %v50
    %v316 = vunpack.c.h.b16 %v50
    %v317 = vunpack.c.l.b16 %v51
    %v318 = vunpack.c.h.b16 %v51
    %v319 = vunpack.c.l.b16 %v52
    %v320 = vunpack.c.h.b16 %v52
    %v321 = vunpack.c.l.b16 %v53
    %v322 = vunpack.c.h.b16 %v53
    %v323 = vunpack.c.l.b16 %v54
    %v324 = vunpack.c.h.b16 %v54
    %v325 = vunpack.c.l.b16 %v55
    %v326 = vunpack.c.h.b16 %v55
    %v327 = vunpack.c.l.b16 %v56
    %v328 = vunpack.c.h.b16 %v56
    %v329 = vunpack.c.l.b16 %v57
    %v330 = vunpack.c.h.b16 %v57
    %v331 = vunpack.c.l.b16 %v58
    %v332 = vunpack.c.h.b16 %v58
    %v333 = vunpack.c.l.b16 %v59
    %v334 = vunpack.c.h.b16 %v59
    %v335 = vunpack.c.l.b16 %v60
    %v336 = vunpack.c.h.b16 %v60
    %v337 = vunpack.c.l.b16 %v61
    %v338 = vunpack.c.h.b16 %v61
    %v339 = vunpack.c.l.b16 %v62
    %v340 = vunpack.c.h.b16 %v62
    %v341 = vunpack.c.l.b16 %v63
    %v342 = vunpack.c.h.b16 %v63
    %v343 = vunpack.c.l.b16 %v64
    %v344 = vunpack.c.h.b16 %v64
    %v345 = vunpack.c.l.b16 %v65
    %v346 = vunpack.c.h.b16 %v65
    %v347 = vunpack.c.l.b16 %v66
    %v348 = vunpack.c.h.b16 %v66
    %v349 = vunpack.c.l.b16 %v67
    %v350 = vunpack.c.h.b16 %v67
    %v351 = vunpack.c.l.b16 %v68
    %v352 = vunpack.c.h.b16 %v68
    %v353 = vunpack.c.l.b16 %v69
    %v354 = vunpack.c.h.b16 %v69
    %v355 = vunpack.c.l.b16 %v70
    %v356 = vunpack.c.h.b16 %v70
    %v357 = vunpack.c.l.b16 %v71
    %v358 = vunpack.c.h.b16 %v71
    %v359 = vunpack.c.l.b16 %v72
    %v360 = vunpack.c.h.b16 %v72
    %v361 = vunpack.c.l.b16 %v73
    %v362 = vunpack.c.h.b16 %v73
    %v363 = vunpack.c.l.b16 %v74
    %v364 = vunpack.c.h.b16 %v74
    %v365 = vunpack.c.l.b16 %v75
    %v366 = vunpack.c.h.b16 %v75
    %v367 = vunpack.c.l.b16 %v76
    %v368 = vunpack.c.h.b16 %v76
    %v369 = vunpack.c.l.b16 %v77
    %v370 = vunpack.c.h.b16 %v77
    %v371 = vunpack.c.l.b16 %v78
    %v372 = vunpack.c.h.b16 %v78
    %v373 = vunpack.c.l.b16 %v79
    %v374 = vunpack.c.h.b16 %v79
    %v375 = vunpack.c.l.b16 %v80
    %v376 = vunpack.c.h.b16 %v80
    %v377 = vunpack.c.l.b16 %v81
    %v378 = vunpack.c.h.b16 %v81
    %v379 = vunpack.c.l.b16 %v82
    %v380 = vunpack.c.h.b16 %v82
    %v381 = vunpack.c.l.b16 %v83
    %v382 = vunpack.c.h.b16 %v83
    %v383 = vunpack.c.l.b16 %v84
    %v384 = vunpack.c.h.b16 %v84
    %v385 = vunpack.c.l.b16 %v85
    %v386 = vunpack.c.h.b16 %v85
    %v387 = vunpack.c.l.b16 %v86
    %v388 = vunpack.c.h.b16 %v86
    %v389 = vunpack.c.l.b16 %v87
    %v390 = vunpack.c.h.b16 %v87
    %v391 = vunpack.c.l.b16 %v88
    %v392 = vunpack.c.h.b16 %v88
    %v393 = vunpack.c.l.b16 %v89
    %v394 = vunpack.c.h.b16 %v89
    %v395 = vunpack.c.l.b16 %v90
    %v396 = vunpack.c.h.b16 %v90
    %v397 = vunpack.c.l.b16 %v91
    %v398 = vunpack.c.h.b16 %v91
    %v399 = vunpack.c.l.b16 %v92
    %v400 = vunpack.c.h.b16 %v92
    %v401 = vunpack.c.l.b16 %v93
    %v402 = vunpack.c.h.b16 %v93
    %v403 = vunpack.c.l.b16 %v94
    %v404 = vunpack.c.h.b16 %v94
    %v405 = vunpack.c.l.b16 %v95
    %v406 = vunpack.c.h.b16 %v95
    %v407 = vunpack.c.l.b16 %v96
    %v408 = vunpack.c.h.b16 %v96
    %v409 = vunpack.c.l.b16 %v97
    %v410 = vunpack.c.h.b16 %v97
    %v411 = vunpack.c.l.b16 %v98
    %v412 = vunpack.c.h.b16 %v98
    %v413 = vunpack.c.l.b16 %v99
    %v414 = vunpack.c.h.b16 %v99
    %v415 = vunpack.c.l.b16 %v100
    %v416 = vunpack.c.h.b16 %v100
    %v417 = vunpack.c.l.b16 %v101
    %v418 = vunpack.c.h.b16 %v101
    %v419 = vunpack.c.l.b16 %v102
    %v420 = vunpack.c.h.b16 %v102
    %v421 = vunpack.c.l.b16 %v103
    %v422 = vunpack.c.h.b16 %v103
    %v423 = vunpack.c.l.b16 %v104
    %v424 = vunpack.c.h.b16 %v104
    %v425 = vunpack.c.l.b16 %v105
    %v426 = vunpack.c.h.b16 %v105
    %v427 = vunpack.c.l.b16 %v106
    %v428 = vunpack.c.h.b16 %v106
    %v429 = vunpack.c.l.b16 %v107
    %v430 = vunpack.c.h.b16 %v107
    %v431 = vunpack.c.l.b16 %v108
    %v432 = vunpack.c.h.b16 %v108
    %v433 = vunpack.c.l.b16 %v109
    %v434 = vunpack.c.h.b16 %v109
    %v435 = vunpack.c.l.b16 %v110
    %v436 = vunpack.c.h.b16 %v110
    %v437 = vunpack.c.l.b16 %v111
    %v438 = vunpack.c.h.b16 %v111
    %v439 = vunpack.c.l.b16 %v112
    %v440 = vunpack.c.h.b16 %v112
    %v441 = vunpack.c.l.b16 %v113
    %v442 = vunpack.c.h.b16 %v113
    %v443 = vunpack.c.l.b16 %v114
    %v444 = vunpack.c.h.b16 %v114
    %v445 = vunpack.c.l.b16 %v115
    %v446 = vunpack.c.h.b16 %v115
    %v447 = vunpack.c.l.b16 %v116
    %v448 = vunpack.c.h.b16 %v116
    %v449 = vunpack.c.l.b16 %v117
    %v450 = vunpack.c.h.b16 %v117
    %v451 = vunpack.c.l.b16 %v118
    %v452 = vunpack.c.h.b16 %v118
    %v453 = vunpack.c.l.b16 %v119
    %v454 = vunpack.c.h.b16 %v119
    %v455 = vunpack.c.l.b16 %v120
    %v456 = vunpack.c.h.b16 %v120
    %v457 = vunpack.c.l.b16 %v121
    %v458 = vunpack.c.h.b16 %v121
    %v459 = vunpack.c.l.b16 %v122
    %v460 = vunpack.c.h.b16 %v122
    %v461 = vunpack.c.l.b16 %v123
    %v462 = vunpack.c.h.b16 %v123
    %v463 = vunpack.c.l.b16 %v124
    %v464 = vunpack.c.h.b16 %v124
    %v465 = vunpack.c.l.b16 %v125
    %v466 = vunpack.c.h.b16 %v125
    %v467 = vunpack.c.l.b16 %v126
    %v468 = vunpack.c.h.b16 %v126
    %v469 = vunpack.c.l.b16 %v127
    %v470 = vunpack.c.h.b16 %v127
    %v471 = vunpack.c.l.b16 %v128
    %v472 = vunpack.c.h.b16 %v128
    %v473 = vunpack.c.l.b16 %v129
    %v474 = vunpack.c.h.b16 %v129
    %v475 = vunpack.c.l.b16 %v130
    %v476 = vunpack.c.h.b16 %v130
    %v477 = vunpack.c.l.b16 %v131
    %v478 = vunpack.c.h.b16 %v131
    %v479 = vunpack.c.l.b16 %v132
    %v480 = vunpack.c.h.b16 %v132
    %v481 = vunpack.c.l.b16 %v133
    %v482 = vunpack.c.h.b16 %v133
    %v483 = vunpack.c.l.b16 %v134
    %v484 = vunpack.c.h.b16 %v134
    %v485 = vunpack.c.l.b16 %v135
    %v486 = vunpack.c.h.b16 %v135
    %v487 = vunpack.c.l.b16 %v136
    %v488 = vunpack.c.h.b16 %v136
    %v489 = vpack.c.b16 %v309, %v297
    %v490 = vpack.c.b16 %v310, %v298
    %v491 = vpack.c.b16 %v311, %v299
    %v492 = vpack.c.b16 %v312, %v300
    %v493 = vpack.c.b16 %v313, %v301
    %v494 = vpack.c.b16 %v314, %v302
    %v495 = vpack.c.b16 %v315, %v303
    %v496 = vpack.c.b16 %v316, %v304
    %v497 = vpack.c.b16 %v317, %v305
    %v498 = vpack.c.b16 %v318, %v306
    %v499 = vpack.c.b16 %v319, %v307
    %v500 = vpack.c.b16 %v320, %v308
    %v501 = vpack.c.b16 %v333, %v321
    %v502 = vpack.c.b16 %v334, %v322
    %v503 = vpack.c.b16 %v335, %v323
    %v504 = vpack.c.b16 %v336, %v324
    %v505 = vpack.c.b16 %v337, %v325
    %v506 = vpack.c.b16 %v338, %v326
    %v507 = vpack.c.b16 %v339, %v327
    %v508 = vpack.c.b16 %v340, %v328
    %v509 = vpack.c.b16 %v341, %v329
    %v510 = vpack.c.b16 %v342, %v330
    %v511 = vpack.c.b16 %v343, %v331
    %v512 = vpack.c.b16 %v344, %v332
    %v513 = vpack.c.b16 %v357, %v345
    %v514 = vpack.c.b16 %v358, %v346
    %v515 = vpack.c.b16 %v359, %v347
    %v516 = vpack.c.b16 %v360, %v348
    %v517 = vpack.c.b16 %v361, %v349
    %v518 = vpack.c.b16 %v362, %v350
    %v519 = vpack.c.b16 %v363, %v351
    %v520 = vpack.c.b16 %v364, %v352
    %v521 = vpack.c.b16 %v365, %v353
    %v522 = vpack.c.b16 %v366, %v354
    %v523 = vpack.c.b16 %v367, %v355
    %v524 = vpack.c.b16 %v368, %v356
    %v525 = vpack.c.b16 %v381, %v369
    %v526 = vpack.c.b16 %v382, %v370
    %v527 = vpack.c.b16 %v383, %v371
    %v528 = vpack.c.b16 %v384, %v372
    %v529 = vpack.c.b16 %v385, %v373
    %v530 = vpack.c.b16 %v386, %v374
    %v531 = vpack.c.b16 %v387, %v375
    %v532 = vpack.c.b16 %v388, %v376
    %v533 = vpack.c.b16 %v389, %v377
    %v534 = vpack.c.b16 %v390, %v378
    %v535 = vpack.c.b16 %v391, %v379
    %v536 = vpack.c.b16 %v392, %v380
    %v537 = vpack.c.b16 %v405, %v393
    %v538 = vpack.c.b16 %v406, %v394
    %v539 = vpack.c.b16 %v407, %v395
    %v540 = vpack.c.b16 %v408, %v396
    %v541 = vpack.c.b16 %v409, %v397
    %v542 = vpack.c.b16 %v410, %v398
    %v543 = vpack.c.b16 %v411, %v399
    %v544 = vpack.c.b16 %v412, %v400
    %v545 = vpack.c.b16 %v413, %v401
    %v546 = vpack.c.b16 %v414, %v402
    %v547 = vpack.c.b16 %v415, %v403
    %v548 = vpack.c.b16 %v416, %v404
    %v549 = vpack.c.b16 %v429, %v417
    %v550 = vpack.c.b16 %v430, %v418
    %v551 = vpack.c.b16 %v431, %v419
    %v552 = vpack.c.b16 %v432, %v420
    %v553 = vpack.c.b16 %v433, %v421
    %v554 = vpack.c.b16 %v434, %v422
    %v555 = vpack.c.b16 %v435, %v423
    %v556 = vpack.c.b16 %v436, %v424
    %v557 = vpack.c.b16 %v437, %v425
    %v558 = vpack.c.b16 %v438, %v426
    %v559 = vpack.c.b16 %v439, %v427
    %v560 = vpack.c.b16 %v440, %v428
    %v561 = vpack.c.b16 %v453, %v441
    %v562 = vpack.c.b16 %v454, %v442
    %v563 = vpack.c.b16 %v455, %v443
    %v564 = vpack.c.b16 %v456, %v444
    %v565 = vpack.c.b16 %v457, %v445
    %v566 = vpack.c.b16 %v458, %v446
    %v567 = vpack.c.b16 %v459, %v447
    %v568 = vpack.c.b16 %v460, %v448
    %v569 = vpack.c.b16 %v461, %v449
    %v570 = vpack.c.b16 %v462, %v450
    %v571 = vpack.c.b16 %v463, %v451
    %v572 = vpack.c.b16 %v464, %v452
    %v573 = vpack.c.b16 %v477, %v465
    %v574 = vpack.c.b16 %v478, %v466
    %v575 = vpack.c.b16 %v479, %v467
    %v576 = vpack.c.b16 %v480, %v468
    %v577 = vpack.c.b16 %v481, %v469
    %v578 = vpack.c.b16 %v482, %v470
    %v579 = vpack.c.b16 %v483, %v471
    %v580 = vpack.c.b16 %v484, %v472
    %v581 = vpack.c.b16 %v485, %v473
    %v582 = vpack.c.b16 %v486, %v474
    %v583 = vpack.c.b16 %v487, %v475
    %v584 = vpack.c.b16 %v488, %v476
    %681 = vmatprep.subr.bf16.mxu0 %v490
    %682 = vmatpush1.bf16.msra.mxu0 %v489
    %683 = vmatprep.subr.bf16.mxu0 %v502
    %684 = vmatpush1.bf16.msra.mxu0 %v501
    %685 = vmatprep.subr.bf16.mxu0 %v514
    %686 = vmatpush1.bf16.msra.mxu0 %v513
    %687 = vmatprep.subr.bf16.mxu0 %v526
    %688 = vmatpush1.bf16.msra.mxu0 %v525
    %689 = vmatprep.subr.bf16.mxu0 %v538
    %690 = vmatpush1.bf16.msra.mxu0 %v537
    %691 = vmatprep.subr.bf16.mxu0 %v550
    %692 = vmatpush1.bf16.msra.mxu0 %v549
    %693 = vmatprep.subr.bf16.mxu0 %v562
    %694 = vmatpush1.bf16.msra.mxu0 %v561
    %695 = vmatprep.subr.bf16.mxu0 %v574
    %696 = vmatpush1.bf16.msra.mxu0 %v573
    %697 = vmatprep.subr.bf16.mxu0 0
    %698 = vmatpush1.bf16.msra.mxu0 0
    %699 = vmatprep.subr.bf16.mxu0 0
    %700 = vmatpush1.bf16.msra.mxu0 0
    %701 = vmatprep.subr.bf16.mxu0 0
    %702 = vmatpush1.bf16.msra.mxu0 0
    %703 = vmatprep.subr.bf16.mxu0 0
    %704 = vmatpush1.bf16.msra.mxu0 0
    %705 = vmatprep.subr.bf16.mxu0 0
    %706 = vmatpush1.bf16.msra.mxu0 0
    %707 = vmatprep.subr.bf16.mxu0 0
    %708 = vmatpush1.bf16.msra.mxu0 0
    %709 = vmatprep.subr.bf16.mxu0 0
    %710 = vmatpush1.bf16.msra.mxu0 0
    %711 = vmatprep.subr.bf16.mxu0 0
    %712 = vmatpush1.bf16.msra.mxu0 0
    %713 = vmatprep.mubr.bf16.mxu0 0
    %714 = vmatmul.mubr.bf16.gmra.mrb[0].mxu0 %v37
    %v715 = vpop.f32.mrb[0].mxu0
    %v716 = vadd.f32 %v144, %v715
    %v717 = vpop.f32.mrb[0].mxu0
    %v718 = vadd.f32 %v148, %v717
    %v719 = vpop.f32.mrb[0].mxu0
    %v720 = vadd.f32 %v144, %v719
    %v721 = vpop.f32.mrb[0].mxu0
    %v722 = vadd.f32 %v148, %v721
    %723 = vmatprep.mubr.bf16.mxu0 0
    %724 = vmatmul.mubr.bf16.gmra.mrb[0].mxu0 %v38
    %v725 = vpop.f32.mrb[0].mxu0
    %v726 = vadd.f32 %v144, %v725
    %v727 = vpop.f32.mrb[0].mxu0
    %v728 = vadd.f32 %v148, %v727
    %v729 = vpop.f32.mrb[0].mxu0
    %v730 = vadd.f32 %v144, %v729
    %v731 = vpop.f32.mrb[0].mxu0
    %v732 = vadd.f32 %v148, %v731
    %733 = vmatprep.mubr.bf16.mxu0 0
    %734 = vmatmul.mubr.bf16.gmra.mrb[0].mxu0 %v39
    %v735 = vpop.f32.mrb[0].mxu0
    %v736 = vadd.f32 %v144, %v735
    %v737 = vpop.f32.mrb[0].mxu0
    %v738 = vadd.f32 %v148, %v737
    %v739 = vpop.f32.mrb[0].mxu0
    %v740 = vadd.f32 %v144, %v739
    %v741 = vpop.f32.mrb[0].mxu0
    %v742 = vadd.f32 %v148, %v741
    %743 = vmatprep.mubr.bf16.mxu0 0
    %744 = vmatmul.mubr.bf16.gmra.mrb[0].mxu0 %v40
    %v745 = vpop.f32.mrb[0].mxu0
    %v746 = vadd.f32 %v144, %v745
    %v747 = vpop.f32.mrb[0].mxu0
    %v748 = vadd.f32 %v148, %v747
    %v749 = vpop.f32.mrb[0].mxu0
    %v750 = vadd.f32 %v144, %v749
    %v751 = vpop.f32.mrb[0].mxu0
    %v752 = vadd.f32 %v148, %v751
    %753 = vdwg.mxu0
    %754 = vmatprep.subr.bf16.mxu0 %v492
    %755 = vmatpush1.bf16.msra.mxu0 %v491
    %756 = vmatprep.subr.bf16.mxu0 %v504
    %757 = vmatpush1.bf16.msra.mxu0 %v503
    %758 = vmatprep.subr.bf16.mxu0 %v516
    %759 = vmatpush1.bf16.msra.mxu0 %v515
    %760 = vmatprep.subr.bf16.mxu0 %v528
    %761 = vmatpush1.bf16.msra.mxu0 %v527
    %762 = vmatprep.subr.bf16.mxu0 %v540
    %763 = vmatpush1.bf16.msra.mxu0 %v539
    %764 = vmatprep.subr.bf16.mxu0 %v552
    %765 = vmatpush1.bf16.msra.mxu0 %v551
    %766 = vmatprep.subr.bf16.mxu0 %v564
    %767 = vmatpush1.bf16.msra.mxu0 %v563
    %768 = vmatprep.subr.bf16.mxu0 %v576
    %769 = vmatpush1.bf16.msra.mxu0 %v575
    %770 = vmatprep.subr.bf16.mxu0 0
    %771 = vmatpush1.bf16.msra.mxu0 0
    %772 = vmatprep.subr.bf16.mxu0 0
    %773 = vmatpush1.bf16.msra.mxu0 0
    %774 = vmatprep.subr.bf16.mxu0 0
    %775 = vmatpush1.bf16.msra.mxu0 0
    %776 = vmatprep.subr.bf16.mxu0 0
    %777 = vmatpush1.bf16.msra.mxu0 0
    %778 = vmatprep.subr.bf16.mxu0 0
    %779 = vmatpush1.bf16.msra.mxu0 0
    %780 = vmatprep.subr.bf16.mxu0 0
    %781 = vmatpush1.bf16.msra.mxu0 0
    %782 = vmatprep.subr.bf16.mxu0 0
    %783 = vmatpush1.bf16.msra.mxu0 0
    %784 = vmatprep.subr.bf16.mxu0 0
    %785 = vmatpush1.bf16.msra.mxu0 0
    %786 = vmatprep.mubr.bf16.mxu0 0
    %787 = vmatmul.mubr.bf16.gmra.mrb[0].mxu0 %v37
    %v788 = vpop.f32.mrb[0].mxu0
    %v789 = vadd.f32 %v152, %v788
    %v790 = vpop.f32.mrb[0].mxu0
    %v791 = vadd.f32 %v156, %v790
    %v792 = vpop.f32.mrb[0].mxu0
    %v793 = vadd.f32 %v152, %v792
    %v794 = vpop.f32.mrb[0].mxu0
    %v795 = vadd.f32 %v156, %v794
    %796 = vmatprep.mubr.bf16.mxu0 0
    %797 = vmatmul.mubr.bf16.gmra.mrb[0].mxu0 %v38
    %v798 = vpop.f32.mrb[0].mxu0
    %v799 = vadd.f32 %v152, %v798
    %v800 = vpop.f32.mrb[0].mxu0
    %v801 = vadd.f32 %v156, %v800
    %v802 = vpop.f32.mrb[0].mxu0
    %v803 = vadd.f32 %v152, %v802
    %v804 = vpop.f32.mrb[0].mxu0
    %v805 = vadd.f32 %v156, %v804
    %806 = vmatprep.mubr.bf16.mxu0 0
    %807 = vmatmul.mubr.bf16.gmra.mrb[0].mxu0 %v39
    %v808 = vpop.f32.mrb[0].mxu0
    %v809 = vadd.f32 %v152, %v808
    %v810 = vpop.f32.mrb[0].mxu0
    %v811 = vadd.f32 %v156, %v810
    %v812 = vpop.f32.mrb[0].mxu0
    %v813 = vadd.f32 %v152, %v812
    %v814 = vpop.f32.mrb[0].mxu0
    %v815 = vadd.f32 %v156, %v814
    %816 = vmatprep.mubr.bf16.mxu0 0
    %817 = vmatmul.mubr.bf16.gmra.mrb[0].mxu0 %v40
    %v818 = vpop.f32.mrb[0].mxu0
    %v819 = vadd.f32 %v152, %v818
    %v820 = vpop.f32.mrb[0].mxu0
    %v821 = vadd.f32 %v156, %v820
    %v822 = vpop.f32.mrb[0].mxu0
    %v823 = vadd.f32 %v152, %v822
    %v824 = vpop.f32.mrb[0].mxu0
    %v825 = vadd.f32 %v156, %v824
    %826 = vdwg.mxu0
    %827 = vmatprep.subr.bf16.mxu0 %v494
    %828 = vmatpush1.bf16.msra.mxu0 %v493
    %829 = vmatprep.subr.bf16.mxu0 %v506
    %830 = vmatpush1.bf16.msra.mxu0 %v505
    %831 = vmatprep.subr.bf16.mxu0 %v518
    %832 = vmatpush1.bf16.msra.mxu0 %v517
    %833 = vmatprep.subr.bf16.mxu0 %v530
    %834 = vmatpush1.bf16.msra.mxu0 %v529
    %835 = vmatprep.subr.bf16.mxu0 %v542
    %836 = vmatpush1.bf16.msra.mxu0 %v541
    %837 = vmatprep.subr.bf16.mxu0 %v554
    %838 = vmatpush1.bf16.msra.mxu0 %v553
    %839 = vmatprep.subr.bf16.mxu0 %v566
    %840 = vmatpush1.bf16.msra.mxu0 %v565
    %841 = vmatprep.subr.bf16.mxu0 %v578
    %842 = vmatpush1.bf16.msra.mxu0 %v577
    %843 = vmatprep.subr.bf16.mxu0 0
    %844 = vmatpush1.bf16.msra.mxu0 0
    %845 = vmatprep.subr.bf16.mxu0 0
    %846 = vmatpush1.bf16.msra.mxu0 0
    %847 = vmatprep.subr.bf16.mxu0 0
    %848 = vmatpush1.bf16.msra.mxu0 0
    %849 = vmatprep.subr.bf16.mxu0 0
    %850 = vmatpush1.bf16.msra.mxu0 0
    %851 = vmatprep.subr.bf16.mxu0 0
    %852 = vmatpush1.bf16.msra.mxu0 0
    %853 = vmatprep.subr.bf16.mxu0 0
    %854 = vmatpush1.bf16.msra.mxu0 0
    %855 = vmatprep.subr.bf16.mxu0 0
    %856 = vmatpush1.bf16.msra.mxu0 0
    %857 = vmatprep.subr.bf16.mxu0 0
    %858 = vmatpush1.bf16.msra.mxu0 0
    %859 = vmatprep.mubr.bf16.mxu0 0
    %860 = vmatmul.mubr.bf16.gmra.mrb[0].mxu0 %v37
    %v861 = vpop.f32.mrb[0].mxu0
    %v862 = vadd.f32 %v160, %v861
    %v863 = vpop.f32.mrb[0].mxu0
    %v864 = vadd.f32 %v164, %v863
    %v865 = vpop.f32.mrb[0].mxu0
    %v866 = vadd.f32 %v160, %v865
    %v867 = vpop.f32.mrb[0].mxu0
    %v868 = vadd.f32 %v164, %v867
    %869 = vmatprep.mubr.bf16.mxu0 0
    %870 = vmatmul.mubr.bf16.gmra.mrb[0].mxu0 %v38
    %v871 = vpop.f32.mrb[0].mxu0
    %v872 = vadd.f32 %v160, %v871
    %v873 = vpop.f32.mrb[0].mxu0
    %v874 = vadd.f32 %v164, %v873
    %v875 = vpop.f32.mrb[0].mxu0
    %v876 = vadd.f32 %v160, %v875
    %v877 = vpop.f32.mrb[0].mxu0
    %v878 = vadd.f32 %v164, %v877
    %879 = vmatprep.mubr.bf16.mxu0 0
    %880 = vmatmul.mubr.bf16.gmra.mrb[0].mxu0 %v39
    %v881 = vpop.f32.mrb[0].mxu0
    %v882 = vadd.f32 %v160, %v881
    %v883 = vpop.f32.mrb[0].mxu0
    %v884 = vadd.f32 %v164, %v883
    %v885 = vpop.f32.mrb[0].mxu0
    %v886 = vadd.f32 %v160, %v885
    %v887 = vpop.f32.mrb[0].mxu0
    %v888 = vadd.f32 %v164, %v887
    %889 = vmatprep.mubr.bf16.mxu0 0
    %890 = vmatmul.mubr.bf16.gmra.mrb[0].mxu0 %v40
    %v891 = vpop.f32.mrb[0].mxu0
    %v892 = vadd.f32 %v160, %v891
    %v893 = vpop.f32.mrb[0].mxu0
    %v894 = vadd.f32 %v164, %v893
    %v895 = vpop.f32.mrb[0].mxu0
    %v896 = vadd.f32 %v160, %v895
    %v897 = vpop.f32.mrb[0].mxu0
    %v898 = vadd.f32 %v164, %v897
    %899 = vdwg.mxu0
    %900 = vmatprep.subr.bf16.mxu0 %v496
    %901 = vmatpush1.bf16.msra.mxu0 %v495
    %902 = vmatprep.subr.bf16.mxu0 %v508
    %903 = vmatpush1.bf16.msra.mxu0 %v507
    %904 = vmatprep.subr.bf16.mxu0 %v520
    %905 = vmatpush1.bf16.msra.mxu0 %v519
    %906 = vmatprep.subr.bf16.mxu0 %v532
    %907 = vmatpush1.bf16.msra.mxu0 %v531
    %908 = vmatprep.subr.bf16.mxu0 %v544
    %909 = vmatpush1.bf16.msra.mxu0 %v543
    %910 = vmatprep.subr.bf16.mxu0 %v556
    %911 = vmatpush1.bf16.msra.mxu0 %v555
    %912 = vmatprep.subr.bf16.mxu0 %v568
    %913 = vmatpush1.bf16.msra.mxu0 %v567
    %914 = vmatprep.subr.bf16.mxu0 %v580
    %915 = vmatpush1.bf16.msra.mxu0 %v579
    %916 = vmatprep.subr.bf16.mxu0 0
    %917 = vmatpush1.bf16.msra.mxu0 0
    %918 = vmatprep.subr.bf16.mxu0 0
    %919 = vmatpush1.bf16.msra.mxu0 0
    %920 = vmatprep.subr.bf16.mxu0 0
    %921 = vmatpush1.bf16.msra.mxu0 0
    %922 = vmatprep.subr.bf16.mxu0 0
    %923 = vmatpush1.bf16.msra.mxu0 0
    %924 = vmatprep.subr.bf16.mxu0 0
    %925 = vmatpush1.bf16.msra.mxu0 0
    %926 = vmatprep.subr.bf16.mxu0 0
    %927 = vmatpush1.bf16.msra.mxu0 0
    %928 = vmatprep.subr.bf16.mxu0 0
    %929 = vmatpush1.bf16.msra.mxu0 0
    %930 = vmatprep.subr.bf16.mxu0 0
    %931 = vmatpush1.bf16.msra.mxu0 0
    %932 = vmatprep.mubr.bf16.mxu0 0
    %933 = vmatmul.mubr.bf16.gmra.mrb[0].mxu0 %v37
    %v934 = vpop.f32.mrb[0].mxu0
    %v935 = vadd.f32 %v168, %v934
    %v936 = vpop.f32.mrb[0].mxu0
    %v937 = vadd.f32 %v172, %v936
    %v938 = vpop.f32.mrb[0].mxu0
    %v939 = vadd.f32 %v168, %v938
    %v940 = vpop.f32.mrb[0].mxu0
    %v941 = vadd.f32 %v172, %v940
    %942 = vmatprep.mubr.bf16.mxu0 0
    %943 = vmatmul.mubr.bf16.gmra.mrb[0].mxu0 %v38
    %v944 = vpop.f32.mrb[0].mxu0
    %v945 = vadd.f32 %v168, %v944
    %v946 = vpop.f32.mrb[0].mxu0
    %v947 = vadd.f32 %v172, %v946
    %v948 = vpop.f32.mrb[0].mxu0
    %v949 = vadd.f32 %v168, %v948
    %v950 = vpop.f32.mrb[0].mxu0
    %v951 = vadd.f32 %v172, %v950
    %952 = vmatprep.mubr.bf16.mxu0 0
    %953 = vmatmul.mubr.bf16.gmra.mrb[0].mxu0 %v39
    %v954 = vpop.f32.mrb[0].mxu0
    %v955 = vadd.f32 %v168, %v954
    %v956 = vpop.f32.mrb[0].mxu0
    %v957 = vadd.f32 %v172, %v956
    %v958 = vpop.f32.mrb[0].mxu0
    %v959 = vadd.f32 %v168, %v958
    %v960 = vpop.f32.mrb[0].mxu0
    %v961 = vadd.f32 %v172, %v960
    %962 = vmatprep.mubr.bf16.mxu0 0
    %963 = vmatmul.mubr.bf16.gmra.mrb[0].mxu0 %v40
    %v964 = vpop.f32.mrb[0].mxu0
    %v965 = vadd.f32 %v168, %v964
    %v966 = vpop.f32.mrb[0].mxu0
    %v967 = vadd.f32 %v172, %v966
    %v968 = vpop.f32.mrb[0].mxu0
    %v969 = vadd.f32 %v168, %v968
    %v970 = vpop.f32.mrb[0].mxu0
    %v971 = vadd.f32 %v172, %v970
    %972 = vdwg.mxu0
    %973 = vmatprep.subr.bf16.mxu0 %v498
    %974 = vmatpush1.bf16.msra.mxu0 %v497
    %975 = vmatprep.subr.bf16.mxu0 %v510
    %976 = vmatpush1.bf16.msra.mxu0 %v509
    %977 = vmatprep.subr.bf16.mxu0 %v522
    %978 = vmatpush1.bf16.msra.mxu0 %v521
    %979 = vmatprep.subr.bf16.mxu0 %v534
    %980 = vmatpush1.bf16.msra.mxu0 %v533
    %981 = vmatprep.subr.bf16.mxu0 %v546
    %982 = vmatpush1.bf16.msra.mxu0 %v545
    %983 = vmatprep.subr.bf16.mxu0 %v558
    %984 = vmatpush1.bf16.msra.mxu0 %v557
    %985 = vmatprep.subr.bf16.mxu0 %v570
    %986 = vmatpush1.bf16.msra.mxu0 %v569
    %987 = vmatprep.subr.bf16.mxu0 %v582
    %988 = vmatpush1.bf16.msra.mxu0 %v581
    %989 = vmatprep.subr.bf16.mxu0 0
    %990 = vmatpush1.bf16.msra.mxu0 0
    %991 = vmatprep.subr.bf16.mxu0 0
    %992 = vmatpush1.bf16.msra.mxu0 0
    %993 = vmatprep.subr.bf16.mxu0 0
    %994 = vmatpush1.bf16.msra.mxu0 0
    %995 = vmatprep.subr.bf16.mxu0 0
    %996 = vmatpush1.bf16.msra.mxu0 0
    %997 = vmatprep.subr.bf16.mxu0 0
    %998 = vmatpush1.bf16.msra.mxu0 0
    %999 = vmatprep.subr.bf16.mxu0 0
    %1000 = vmatpush1.bf16.msra.mxu0 0
    %1001 = vmatprep.subr.bf16.mxu0 0
    %1002 = vmatpush1.bf16.msra.mxu0 0
    %1003 = vmatprep.subr.bf16.mxu0 0
    %1004 = vmatpush1.bf16.msra.mxu0 0
    %1005 = vmatprep.mubr.bf16.mxu0 0
    %1006 = vmatmul.mubr.bf16.gmra.mrb[0].mxu0 %v37
    %v1007 = vpop.f32.mrb[0].mxu0
    %v1008 = vadd.f32 %v176, %v1007
    %v1009 = vpop.f32.mrb[0].mxu0
    %v1010 = vadd.f32 %v180, %v1009
    %v1011 = vpop.f32.mrb[0].mxu0
    %v1012 = vadd.f32 %v176, %v1011
    %v1013 = vpop.f32.mrb[0].mxu0
    %v1014 = vadd.f32 %v180, %v1013
    %1015 = vmatprep.mubr.bf16.mxu0 0
    %1016 = vmatmul.mubr.bf16.gmra.mrb[0].mxu0 %v38
    %v1017 = vpop.f32.mrb[0].mxu0
    %v1018 = vadd.f32 %v176, %v1017
    %v1019 = vpop.f32.mrb[0].mxu0
    %v1020 = vadd.f32 %v180, %v1019
    %v1021 = vpop.f32.mrb[0].mxu0
    %v1022 = vadd.f32 %v176, %v1021
    %v1023 = vpop.f32.mrb[0].mxu0
    %v1024 = vadd.f32 %v180, %v1023
    %1025 = vmatprep.mubr.bf16.mxu0 0
    %1026 = vmatmul.mubr.bf16.gmra.mrb[0].mxu0 %v39
    %v1027 = vpop.f32.mrb[0].mxu0
    %v1028 = vadd.f32 %v176, %v1027
    %v1029 = vpop.f32.mrb[0].mxu0
    %v1030 = vadd.f32 %v180, %v1029
    %v1031 = vpop.f32.mrb[0].mxu0
    %v1032 = vadd.f32 %v176, %v1031
    %v1033 = vpop.f32.mrb[0].mxu0
    %v1034 = vadd.f32 %v180, %v1033
    %1035 = vmatprep.mubr.bf16.mxu0 0
    %1036 = vmatmul.mubr.bf16.gmra.mrb[0].mxu0 %v40
    %v1037 = vpop.f32.mrb[0].mxu0
    %v1038 = vadd.f32 %v176, %v1037
    %v1039 = vpop.f32.mrb[0].mxu0
    %v1040 = vadd.f32 %v180, %v1039
    %v1041 = vpop.f32.mrb[0].mxu0
    %v1042 = vadd.f32 %v176, %v1041
    %v1043 = vpop.f32.mrb[0].mxu0
    %v1044 = vadd.f32 %v180, %v1043
    %1045 = vdwg.mxu0
    %1046 = vmatprep.subr.bf16.mxu0 %v500
    %1047 = vmatpush1.bf16.msra.mxu0 %v499
    %1048 = vmatprep.subr.bf16.mxu0 %v512
    %1049 = vmatpush1.bf16.msra.mxu0 %v511
    %1050 = vmatprep.subr.bf16.mxu0 %v524
    %1051 = vmatpush1.bf16.msra.mxu0 %v523
    %1052 = vmatprep.subr.bf16.mxu0 %v536
    %1053 = vmatpush1.bf16.msra.mxu0 %v535
    %1054 = vmatprep.subr.bf16.mxu0 %v548
    %1055 = vmatpush1.bf16.msra.mxu0 %v547
    %1056 = vmatprep.subr.bf16.mxu0 %v560
    %1057 = vmatpush1.bf16.msra.mxu0 %v559
    %1058 = vmatprep.subr.bf16.mxu0 %v572
    %1059 = vmatpush1.bf16.msra.mxu0 %v571
    %1060 = vmatprep.subr.bf16.mxu0 %v584
    %1061 = vmatpush1.bf16.msra.mxu0 %v583
    %1062 = vmatprep.subr.bf16.mxu0 0
    %1063 = vmatpush1.bf16.msra.mxu0 0
    %1064 = vmatprep.subr.bf16.mxu0 0
    %1065 = vmatpush1.bf16.msra.mxu0 0
    %1066 = vmatprep.subr.bf16.mxu0 0
    %1067 = vmatpush1.bf16.msra.mxu0 0
    %1068 = vmatprep.subr.bf16.mxu0 0
    %1069 = vmatpush1.bf16.msra.mxu0 0
    %1070 = vmatprep.subr.bf16.mxu0 0
    %1071 = vmatpush1.bf16.msra.mxu0 0
    %1072 = vmatprep.subr.bf16.mxu0 0
    %1073 = vmatpush1.bf16.msra.mxu0 0
    %1074 = vmatprep.subr.bf16.mxu0 0
    %1075 = vmatpush1.bf16.msra.mxu0 0
    %1076 = vmatprep.subr.bf16.mxu0 0
    %1077 = vmatpush1.bf16.msra.mxu0 0
    %1078 = vmatprep.mubr.bf16.mxu0 0
    %1079 = vmatmul.mubr.bf16.gmra.mrb[0].mxu0 %v37
    %v1080 = vpop.f32.mrb[0].mxu0
    %v1081 = vadd.f32 %v184, %v1080
    %v1082 = vpop.f32.mrb[0].mxu0
    %v1083 = vadd.f32 %v188, %v1082
    %v1084 = vpop.f32.mrb[0].mxu0
    %v1085 = vadd.f32 %v184, %v1084
    %v1086 = vpop.f32.mrb[0].mxu0
    %v1087 = vadd.f32 %v188, %v1086
    %1088 = vmatprep.mubr.bf16.mxu0 0
    %1089 = vmatmul.mubr.bf16.gmra.mrb[0].mxu0 %v38
    %v1090 = vpop.f32.mrb[0].mxu0
    %v1091 = vadd.f32 %v184, %v1090
    %v1092 = vpop.f32.mrb[0].mxu0
    %v1093 = vadd.f32 %v188, %v1092
    %v1094 = vpop.f32.mrb[0].mxu0
    %v1095 = vadd.f32 %v184, %v1094
    %v1096 = vpop.f32.mrb[0].mxu0
    %v1097 = vadd.f32 %v188, %v1096
    %1098 = vmatprep.mubr.bf16.mxu0 0
    %1099 = vmatmul.mubr.bf16.gmra.mrb[0].mxu0 %v39
    %v1100 = vpop.f32.mrb[0].mxu0
    %v1101 = vadd.f32 %v184, %v1100
    %v1102 = vpop.f32.mrb[0].mxu0
    %v1103 = vadd.f32 %v188, %v1102
    %v1104 = vpop.f32.mrb[0].mxu0
    %v1105 = vadd.f32 %v184, %v1104
    %v1106 = vpop.f32.mrb[0].mxu0
    %v1107 = vadd.f32 %v188, %v1106
    %1108 = vmatprep.mubr.bf16.mxu0 0
    %1109 = vmatmul.mubr.bf16.gmra.mrb[0].mxu0 %v40
    %v1110 = vpop.f32.mrb[0].mxu0
    %v1111 = vadd.f32 %v184, %v1110
    %v1112 = vpop.f32.mrb[0].mxu0
    %v1113 = vadd.f32 %v188, %v1112
    %v1114 = vpop.f32.mrb[0].mxu0
    %v1115 = vadd.f32 %v184, %v1114
    %v1116 = vpop.f32.mrb[0].mxu0
    %v1117 = vadd.f32 %v188, %v1116
    %1118 = vdwg.mxu0
    %1119 = vst [vmem:[%s3] sm:$0xff] %v716
    %1120 = vst [vmem:[%s3 + $0x8] sm:$0xff] %v718
    %1121 = vst [vmem:[%s3 + $0x10] sm:$0xff] %v789
    %1122 = vst [vmem:[%s3 + $0x18] sm:$0xff] %v791
    %1123 = vst [vmem:[%s3 + $0x20] sm:$0xff] %v862
    %1124 = vst [vmem:[%s3 + $0x28] sm:$0xff] %v864
    %1125 = vst [vmem:[%s3 + $0x30] sm:$0xff] %v935
    %1126 = vst [vmem:[%s3 + $0x38] sm:$0xff] %v937
    %1127 = vst [vmem:[%s3 + $0x40] sm:$0xff] %v1008
    %1128 = vst [vmem:[%s3 + $0x48] sm:$0xff] %v1010
    %1129 = vst [vmem:[%s3 + $0x50] sm:$0xff] %v1081
    %1130 = vst [vmem:[%s3 + $0x58] sm:$0xff] %v1083
    %1131 = vst [vmem:[%s3 + $0x60] sm:$0xff] %v720
    %1132 = vst [vmem:[%s3 + $0x68] sm:$0xff] %v722
    %1133 = vst [vmem:[%s3 + $0x70] sm:$0xff] %v793
    %1134 = vst [vmem:[%s3 + $0x78] sm:$0xff] %v795
    %1135 = vst [vmem:[%s3 + $0x80] sm:$0xff] %v866
    %1136 = vst [vmem:[%s3 + $0x88] sm:$0xff] %v868
    %1137 = vst [vmem:[%s3 + $0x90] sm:$0xff] %v939
    %1138 = vst [vmem:[%s3 + $0x98] sm:$0xff] %v941
    %1139 = vst [vmem:[%s3 + $0xa0] sm:$0xff] %v1012
    %1140 = vst [vmem:[%s3 + $0xa8] sm:$0xff] %v1014
    %1141 = vst [vmem:[%s3 + $0xb0] sm:$0xff] %v1085
    %1142 = vst [vmem:[%s3 + $0xb8] sm:$0xff] %v1087
    %1143 = vst [vmem:[%s3 + $0xc0] sm:$0xff] %v726
    %1144 = vst [vmem:[%s3 + $0xc8] sm:$0xff] %v728
    %1145 = vst [vmem:[%s3 + $0xd0] sm:$0xff] %v799
    %1146 = vst [vmem:[%s3 + $0xd8] sm:$0xff] %v801
    %1147 = vst [vmem:[%s3 + $0xe0] sm:$0xff] %v872
    %1148 = vst [vmem:[%s3 + $0xe8] sm:$0xff] %v874
    %1149 = vst [vmem:[%s3 + $0xf0] sm:$0xff] %v945
    %1150 = vst [vmem:[%s3 + $0xf8] sm:$0xff] %v947
    %1151 = vst [vmem:[%s3 + $0x100] sm:$0xff] %v1018
    %1152 = vst [vmem:[%s3 + $0x108] sm:$0xff] %v1020
    %1153 = vst [vmem:[%s3 + $0x110] sm:$0xff] %v1091
    %1154 = vst [vmem:[%s3 + $0x118] sm:$0xff] %v1093
    %1155 = vst [vmem:[%s3 + $0x120] sm:$0xff] %v730
    %1156 = vst [vmem:[%s3 + $0x128] sm:$0xff] %v732
    %1157 = vst [vmem:[%s3 + $0x130] sm:$0xff] %v803
    %1158 = vst [vmem:[%s3 + $0x138] sm:$0xff] %v805
    %1159 = vst [vmem:[%s3 + $0x140] sm:$0xff] %v876
    %1160 = vst [vmem:[%s3 + $0x148] sm:$0xff] %v878
    %1161 = vst [vmem:[%s3 + $0x150] sm:$0xff] %v949
    %1162 = vst [vmem:[%s3 + $0x158] sm:$0xff] %v951
    %1163 = vst [vmem:[%s3 + $0x160] sm:$0xff] %v1022
    %1164 = vst [vmem:[%s3 + $0x168] sm:$0xff] %v1024
    %1165 = vst [vmem:[%s3 + $0x170] sm:$0xff] %v1095
    %1166 = vst [vmem:[%s3 + $0x178] sm:$0xff] %v1097
    %1167 = vst [vmem:[%s3 + $0x180] sm:$0xff] %v736
    %1168 = vst [vmem:[%s3 + $0x188] sm:$0xff] %v738
    %1169 = vst [vmem:[%s3 + $0x190] sm:$0xff] %v809
    %1170 = vst [vmem:[%s3 + $0x198] sm:$0xff] %v811
    %1171 = vst [vmem:[%s3 + $0x1a0] sm:$0xff] %v882
    %1172 = vst [vmem:[%s3 + $0x1a8] sm:$0xff] %v884
    %1173 = vst [vmem:[%s3 + $0x1b0] sm:$0xff] %v955
    %1174 = vst [vmem:[%s3 + $0x1b8] sm:$0xff] %v957
    %1175 = vst [vmem:[%s3 + $0x1c0] sm:$0xff] %v1028
    %1176 = vst [vmem:[%s3 + $0x1c8] sm:$0xff] %v1030
    %1177 = vst [vmem:[%s3 + $0x1d0] sm:$0xff] %v1101
    %1178 = vst [vmem:[%s3 + $0x1d8] sm:$0xff] %v1103
    %1179 = vst [vmem:[%s3 + $0x1e0] sm:$0xff] %v740
    %1180 = vst [vmem:[%s3 + $0x1e8] sm:$0xff] %v742
    %1181 = vst [vmem:[%s3 + $0x1f0] sm:$0xff] %v813
    %1182 = vst [vmem:[%s3 + $0x1f8] sm:$0xff] %v815
    %1183 = vst [vmem:[%s3 + $0x200] sm:$0xff] %v886
    %1184 = vst [vmem:[%s3 + $0x208] sm:$0xff] %v888
    %1185 = vst [vmem:[%s3 + $0x210] sm:$0xff] %v959
    %1186 = vst [vmem:[%s3 + $0x218] sm:$0xff] %v961
    %1187 = vst [vmem:[%s3 + $0x220] sm:$0xff] %v1032
    %1188 = vst [vmem:[%s3 + $0x228] sm:$0xff] %v1034
    %1189 = vst [vmem:[%s3 + $0x230] sm:$0xff] %v1105
    %1190 = vst [vmem:[%s3 + $0x238] sm:$0xff] %v1107
    %1191 = vst [vmem:[%s3 + $0x240] sm:$0xff] %v746
    %1192 = vst [vmem:[%s3 + $0x248] sm:$0xff] %v748
    %1193 = vst [vmem:[%s3 + $0x250] sm:$0xff] %v819
    %1194 = vst [vmem:[%s3 + $0x258] sm:$0xff] %v821
    %1195 = vst [vmem:[%s3 + $0x260] sm:$0xff] %v892
    %1196 = vst [vmem:[%s3 + $0x268] sm:$0xff] %v894
    %1197 = vst [vmem:[%s3 + $0x270] sm:$0xff] %v965
    %1198 = vst [vmem:[%s3 + $0x278] sm:$0xff] %v967
    %1199 = vst [vmem:[%s3 + $0x280] sm:$0xff] %v1038
    %1200 = vst [vmem:[%s3 + $0x288] sm:$0xff] %v1040
    %1201 = vst [vmem:[%s3 + $0x290] sm:$0xff] %v1111
    %1202 = vst [vmem:[%s3 + $0x298] sm:$0xff] %v1113
    %1203 = vst [vmem:[%s3 + $0x2a0] sm:$0xff] %v750
    %1204 = vst [vmem:[%s3 + $0x2a8] sm:$0xff] %v752
    %1205 = vst [vmem:[%s3 + $0x2b0] sm:$0xff] %v823
    %1206 = vst [vmem:[%s3 + $0x2b8] sm:$0xff] %v825
    %1207 = vst [vmem:[%s3 + $0x2c0] sm:$0xff] %v896
    %1208 = vst [vmem:[%s3 + $0x2c8] sm:$0xff] %v898
    %1209 = vst [vmem:[%s3 + $0x2d0] sm:$0xff] %v969
    %1210 = vst [vmem:[%s3 + $0x2d8] sm:$0xff] %v971
    %1211 = vst [vmem:[%s3 + $0x2e0] sm:$0xff] %v1042
    %1212 = vst [vmem:[%s3 + $0x2e8] sm:$0xff] %v1044
    %1213 = vst [vmem:[%s3 + $0x2f0] sm:$0xff] %v1115
    %1214 = vst [vmem:[%s3 + $0x2f8] sm:$0xff] %v1117
    // Predicated region
    $region18: #{vae_dummy_forward.2} parent=1 // pred_check
      _
    $region19: #{vae_dummy_forward.2} parent=1 // pred_check_branch
      %1216 = sbr.rel (0) target = $region21
    $region20: #{vae_dummy_forward.2} parent=1 // pred_region
      _
    $region21: #{vae_dummy_forward.2} parent=1 // pred_fallthru
      _
    // Predicated region
    $region22: #{vae_dummy_forward.2} parent=1 // pred_check
      _
    $region23: #{vae_dummy_forward.2} parent=1 // pred_check_branch
      %1218 = sbr.rel (0) target = $region25
    $region24: #{vae_dummy_forward.2} parent=1 // pred_region
      _
    $region25: #{vae_dummy_forward.2} parent=1 // pred_fallthru
      _
    %1219 = vsyncpa [#allocation3], 1

// kernel: vae_dummy_forward.3
$region0: #{vae_dummy_forward.3}
  #allocation0 [shape = 'u32[]', space=smem, size = 0x4, offset = 0x4, fixed_abs, tag = 'smem constant byte address 0x4 - core index']
  #allocation1 [shape = 'u32[144,128]{1,0:T(1,128)}', space=vmem, size = 0x12000, scoped, tag = 'internal scratch']
  #allocation2 [shape = 'f32[64,128]{1,0:T(8,128)}', space=vmem, size = 0x8000, scoped, tag = 'scratch operand']
  %s0 = inlined_call_operand.vmem [shape: f32[8,8,1536], index: 0, kind: input, shape index: {}]
  %s1 = inlined_call_operand.vmem [shape: f32[8,8,1], index: 1, kind: input, shape index: {}]
  %s2 = inlined_call_operand.vmem [shape: s32[64,1], index: 2, kind: input, shape index: {}]
  %s3 = inlined_call_operand.vmem [shape: bf16[128,512], index: 3, kind: input, shape index: {}]
  %s4 = inlined_call_operand.vmem [shape: bf16[128,512], index: 4, kind: input, shape index: {}]
  %s5 = inlined_call_operand.vmem [shape: bf16[128,512], index: 5, kind: input, shape index: {}]
  %s6 = inlined_call_operand.vmem [shape: bf16[128,128], index: 6, kind: input, shape index: {}]
  %s7 = inlined_call_operand.vmem [shape: f32[1,128], index: 7, kind: input, shape index: {}]
  %s8 = inlined_call_operand.vmem [shape: bf16[128,128], index: 8, kind: input, shape index: {}]
  %s9 = inlined_call_operand.vmem [shape: f32[1,128], index: 9, kind: input, shape index: {}]
  %s10 = inlined_call_operand.vmem [shape: bf16[128,128], index: 10, kind: input, shape index: {}]
  %s11 = inlined_call_operand.vmem [shape: f32[1,128], index: 11, kind: input, shape index: {}]
  %s12 = inlined_call_operand.hbm [shape: f32[1,1], index: 12, kind: output, shape index: {}]
  %s13 = sld [smem:[#allocation0]]
  $region58: #{vae_dummy_forward.3} parent=0
    _
  %s15 = ssub.s32 1, %s13
  %s16 = scalar_select 0, %s15, %s13
  $region1: #{vae_dummy_forward.3} parent=0
    #allocation3 [shape = 'u8[512]{0}', space=vmem, size = 0x400, scoped, tag = 'output window, operand 0, single buffered']
    #allocation4 [shape = 's32[1]{0}', space=sflag, size = 0x4, scoped, tag = 'scoped memory for vae_dummy_forward.3']
    %17 = vsyncpa [#allocation4], 0
    // Predicated region
    $region2: #{vae_dummy_forward.3} parent=1 // pred_check
      _
    $region3: #{vae_dummy_forward.3} parent=1 // pred_check_branch
      %19 = sbr.rel (0) target = $region5
    $region4: #{vae_dummy_forward.3} parent=1 // pred_region
      _
    $region5: #{vae_dummy_forward.3} parent=1 // pred_fallthru
      _
    // Predicated region
    $region6: #{vae_dummy_forward.3} parent=1 // pred_check
      _
    $region7: #{vae_dummy_forward.3} parent=1 // pred_check_branch
      %21 = sbr.rel (0) target = $region9
    $region8: #{vae_dummy_forward.3} parent=1 // pred_region
      _
    $region9: #{vae_dummy_forward.3} parent=1 // pred_fallthru
      _
    // Predicated region
    $region10: #{vae_dummy_forward.3} parent=1 // pred_check
      _
    $region11: #{vae_dummy_forward.3} parent=1 // pred_check_branch
      %23 = sbr.rel (0) target = $region13
    $region12: #{vae_dummy_forward.3} parent=1 // pred_region
      _
    $region13: #{vae_dummy_forward.3} parent=1 // pred_fallthru
      _
    // Predicated region
    $region14: #{vae_dummy_forward.3} parent=1 // pred_check
      _
    $region15: #{vae_dummy_forward.3} parent=1 // pred_check_branch
      %25 = sbr.rel (0) target = $region17
    $region16: #{vae_dummy_forward.3} parent=1 // pred_region
      _
    $region17: #{vae_dummy_forward.3} parent=1 // pred_fallthru
      _
    // Predicated region
    $region18: #{vae_dummy_forward.3} parent=1 // pred_check
      _
    $region19: #{vae_dummy_forward.3} parent=1 // pred_check_branch
      %27 = sbr.rel (0) target = $region21
    $region20: #{vae_dummy_forward.3} parent=1 // pred_region
      _
    $region21: #{vae_dummy_forward.3} parent=1 // pred_fallthru
      _
    // Predicated region
    $region22: #{vae_dummy_forward.3} parent=1 // pred_check
      _
    $region23: #{vae_dummy_forward.3} parent=1 // pred_check_branch
      %29 = sbr.rel (0) target = $region25
    $region24: #{vae_dummy_forward.3} parent=1 // pred_region
      _
    $region25: #{vae_dummy_forward.3} parent=1 // pred_fallthru
      _
    // Predicated region
    $region26: #{vae_dummy_forward.3} parent=1 // pred_check
      _
    $region27: #{vae_dummy_forward.3} parent=1 // pred_check_branch
      %31 = sbr.rel (0) target = $region29
    $region28: #{vae_dummy_forward.3} parent=1 // pred_region
      _
    $region29: #{vae_dummy_forward.3} parent=1 // pred_fallthru
      _
    // Predicated region
    $region30: #{vae_dummy_forward.3} parent=1 // pred_check
      _
    $region31: #{vae_dummy_forward.3} parent=1 // pred_check_branch
      %33 = sbr.rel (0) target = $region33
    $region32: #{vae_dummy_forward.3} parent=1 // pred_region
      _
    $region33: #{vae_dummy_forward.3} parent=1 // pred_fallthru
      _
    // Predicated region
    $region34: #{vae_dummy_forward.3} parent=1 // pred_check
      _
    $region35: #{vae_dummy_forward.3} parent=1 // pred_check_branch
      %35 = sbr.rel (0) target = $region37
    $region36: #{vae_dummy_forward.3} parent=1 // pred_region
      _
    $region37: #{vae_dummy_forward.3} parent=1 // pred_fallthru
      _
    // Predicated region
    $region38: #{vae_dummy_forward.3} parent=1 // pred_check
      _
    $region39: #{vae_dummy_forward.3} parent=1 // pred_check_branch
      %37 = sbr.rel (0) target = $region41
    $region40: #{vae_dummy_forward.3} parent=1 // pred_region
      _
    $region41: #{vae_dummy_forward.3} parent=1 // pred_fallthru
      _
    // Predicated region
    $region42: #{vae_dummy_forward.3} parent=1 // pred_check
      _
    $region43: #{vae_dummy_forward.3} parent=1 // pred_check_branch
      %39 = sbr.rel (0) target = $region45
    $region44: #{vae_dummy_forward.3} parent=1 // pred_region
      _
    $region45: #{vae_dummy_forward.3} parent=1 // pred_fallthru
      _
    // Predicated region
    $region46: #{vae_dummy_forward.3} parent=1 // pred_check
      _
    $region47: #{vae_dummy_forward.3} parent=1 // pred_check_branch
      %41 = sbr.rel (0) target = $region49
    $region48: #{vae_dummy_forward.3} parent=1 // pred_region
      _
    $region49: #{vae_dummy_forward.3} parent=1 // pred_fallthru
      _
    %v43 = vld [vmem:[%s3] sm:$0xff]
    %v44 = vld [vmem:[%s3 + $0x8] sm:$0xff]
    %v45 = vld [vmem:[%s3 + $0x10] sm:$0xff]
    %v46 = vld [vmem:[%s3 + $0x18] sm:$0xff]
    %v47 = vld [vmem:[%s3 + $0x20] sm:$0xff]
    %v48 = vld [vmem:[%s3 + $0x28] sm:$0xff]
    %v49 = vld [vmem:[%s3 + $0x30] sm:$0xff]
    %v50 = vld [vmem:[%s3 + $0x38] sm:$0xff]
    %v51 = vld [vmem:[%s3 + $0x40] sm:$0xff]
    %v52 = vld [vmem:[%s3 + $0x48] sm:$0xff]
    %v53 = vld [vmem:[%s3 + $0x50] sm:$0xff]
    %v54 = vld [vmem:[%s3 + $0x58] sm:$0xff]
    %v55 = vld [vmem:[%s3 + $0x60] sm:$0xff]
    %v56 = vld [vmem:[%s3 + $0x68] sm:$0xff]
    %v57 = vld [vmem:[%s3 + $0x70] sm:$0xff]
    %v58 = vld [vmem:[%s3 + $0x78] sm:$0xff]
    %v59 = vld [vmem:[%s3 + $0x80] sm:$0xff]
    %v60 = vld [vmem:[%s3 + $0x88] sm:$0xff]
    %v61 = vld [vmem:[%s3 + $0x90] sm:$0xff]
    %v62 = vld [vmem:[%s3 + $0x98] sm:$0xff]
    %v63 = vld [vmem:[%s3 + $0xa0] sm:$0xff]
    %v64 = vld [vmem:[%s3 + $0xa8] sm:$0xff]
    %v65 = vld [vmem:[%s3 + $0xb0] sm:$0xff]
    %v66 = vld [vmem:[%s3 + $0xb8] sm:$0xff]
    %v67 = vld [vmem:[%s3 + $0xc0] sm:$0xff]
    %v68 = vld [vmem:[%s3 + $0xc8] sm:$0xff]
    %v69 = vld [vmem:[%s3 + $0xd0] sm:$0xff]
    %v70 = vld [vmem:[%s3 + $0xd8] sm:$0xff]
    %v71 = vld [vmem:[%s3 + $0xe0] sm:$0xff]
    %v72 = vld [vmem:[%s3 + $0xe8] sm:$0xff]
    %v73 = vld [vmem:[%s3 + $0xf0] sm:$0xff]
    %v74 = vld [vmem:[%s3 + $0xf8] sm:$0xff]
    %v75 = vld [vmem:[%s4] sm:$0xff]
    %v76 = vld [vmem:[%s4 + $0x8] sm:$0xff]
    %v77 = vld [vmem:[%s4 + $0x10] sm:$0xff]
    %v78 = vld [vmem:[%s4 + $0x18] sm:$0xff]
    %v79 = vld [vmem:[%s4 + $0x20] sm:$0xff]
    %v80 = vld [vmem:[%s4 + $0x28] sm:$0xff]
    %v81 = vld [vmem:[%s4 + $0x30] sm:$0xff]
    %v82 = vld [vmem:[%s4 + $0x38] sm:$0xff]
    %v83 = vld [vmem:[%s4 + $0x40] sm:$0xff]
    %v84 = vld [vmem:[%s4 + $0x48] sm:$0xff]
    %v85 = vld [vmem:[%s4 + $0x50] sm:$0xff]
    %v86 = vld [vmem:[%s4 + $0x58] sm:$0xff]
    %v87 = vld [vmem:[%s4 + $0x60] sm:$0xff]
    %v88 = vld [vmem:[%s4 + $0x68] sm:$0xff]
    %v89 = vld [vmem:[%s4 + $0x70] sm:$0xff]
    %v90 = vld [vmem:[%s4 + $0x78] sm:$0xff]
    %v91 = vld [vmem:[%s4 + $0x80] sm:$0xff]
    %v92 = vld [vmem:[%s4 + $0x88] sm:$0xff]
    %v93 = vld [vmem:[%s4 + $0x90] sm:$0xff]
    %v94 = vld [vmem:[%s4 + $0x98] sm:$0xff]
    %v95 = vld [vmem:[%s4 + $0xa0] sm:$0xff]
    %v96 = vld [vmem:[%s4 + $0xa8] sm:$0xff]
    %v97 = vld [vmem:[%s4 + $0xb0] sm:$0xff]
    %v98 = vld [vmem:[%s4 + $0xb8] sm:$0xff]
    %v99 = vld [vmem:[%s4 + $0xc0] sm:$0xff]
    %v100 = vld [vmem:[%s4 + $0xc8] sm:$0xff]
    %v101 = vld [vmem:[%s4 + $0xd0] sm:$0xff]
    %v102 = vld [vmem:[%s4 + $0xd8] sm:$0xff]
    %v103 = vld [vmem:[%s4 + $0xe0] sm:$0xff]
    %v104 = vld [vmem:[%s4 + $0xe8] sm:$0xff]
    %v105 = vld [vmem:[%s4 + $0xf0] sm:$0xff]
    %v106 = vld [vmem:[%s4 + $0xf8] sm:$0xff]
    %v107 = vld [vmem:[%s5] sm:$0xff]
    %v108 = vld [vmem:[%s5 + $0x8] sm:$0xff]
    %v109 = vld [vmem:[%s5 + $0x10] sm:$0xff]
    %v110 = vld [vmem:[%s5 + $0x18] sm:$0xff]
    %v111 = vld [vmem:[%s5 + $0x20] sm:$0xff]
    %v112 = vld [vmem:[%s5 + $0x28] sm:$0xff]
    %v113 = vld [vmem:[%s5 + $0x30] sm:$0xff]
    %v114 = vld [vmem:[%s5 + $0x38] sm:$0xff]
    %v115 = vld [vmem:[%s5 + $0x40] sm:$0xff]
    %v116 = vld [vmem:[%s5 + $0x48] sm:$0xff]
    %v117 = vld [vmem:[%s5 + $0x50] sm:$0xff]
    %v118 = vld [vmem:[%s5 + $0x58] sm:$0xff]
    %v119 = vld [vmem:[%s5 + $0x60] sm:$0xff]
    %v120 = vld [vmem:[%s5 + $0x68] sm:$0xff]
    %v121 = vld [vmem:[%s5 + $0x70] sm:$0xff]
    %v122 = vld [vmem:[%s5 + $0x78] sm:$0xff]
    %v123 = vld [vmem:[%s5 + $0x80] sm:$0xff]
    %v124 = vld [vmem:[%s5 + $0x88] sm:$0xff]
    %v125 = vld [vmem:[%s5 + $0x90] sm:$0xff]
    %v126 = vld [vmem:[%s5 + $0x98] sm:$0xff]
    %v127 = vld [vmem:[%s5 + $0xa0] sm:$0xff]
    %v128 = vld [vmem:[%s5 + $0xa8] sm:$0xff]
    %v129 = vld [vmem:[%s5 + $0xb0] sm:$0xff]
    %v130 = vld [vmem:[%s5 + $0xb8] sm:$0xff]
    %v131 = vld [vmem:[%s5 + $0xc0] sm:$0xff]
    %v132 = vld [vmem:[%s5 + $0xc8] sm:$0xff]
    %v133 = vld [vmem:[%s5 + $0xd0] sm:$0xff]
    %v134 = vld [vmem:[%s5 + $0xd8] sm:$0xff]
    %v135 = vld [vmem:[%s5 + $0xe0] sm:$0xff]
    %v136 = vld [vmem:[%s5 + $0xe8] sm:$0xff]
    %v137 = vld [vmem:[%s5 + $0xf0] sm:$0xff]
    %v138 = vld [vmem:[%s5 + $0xf8] sm:$0xff]
    %v139 = vld [vmem:[%s0] sm:$0xff]
    %v140 = vld [vmem:[%s0 + $0x8] sm:$0xff]
    %v141 = vld [vmem:[%s0 + $0x10] sm:$0xff]
    %v142 = vld [vmem:[%s0 + $0x18] sm:$0xff]
    %v175 = vunpack.c.l.b16 %v43
    %v176 = vunpack.c.h.b16 %v43
    %v177 = vunpack.c.l.b16 %v44
    %v178 = vunpack.c.h.b16 %v44
    %v179 = vunpack.c.l.b16 %v45
    %v180 = vunpack.c.h.b16 %v45
    %v181 = vunpack.c.l.b16 %v46
    %v182 = vunpack.c.h.b16 %v46
    %v183 = vunpack.c.l.b16 %v47
    %v184 = vunpack.c.h.b16 %v47
    %v185 = vunpack.c.l.b16 %v48
    %v186 = vunpack.c.h.b16 %v48
    %v187 = vunpack.c.l.b16 %v49
    %v188 = vunpack.c.h.b16 %v49
    %v189 = vunpack.c.l.b16 %v50
    %v190 = vunpack.c.h.b16 %v50
    %v191 = vunpack.c.l.b16 %v51
    %v192 = vunpack.c.h.b16 %v51
    %v193 = vunpack.c.l.b16 %v52
    %v194 = vunpack.c.h.b16 %v52
    %v195 = vunpack.c.l.b16 %v53
    %v196 = vunpack.c.h.b16 %v53
    %v197 = vunpack.c.l.b16 %v54
    %v198 = vunpack.c.h.b16 %v54
    %v199 = vunpack.c.l.b16 %v55
    %v200 = vunpack.c.h.b16 %v55
    %v201 = vunpack.c.l.b16 %v56
    %v202 = vunpack.c.h.b16 %v56
    %v203 = vunpack.c.l.b16 %v57
    %v204 = vunpack.c.h.b16 %v57
    %v205 = vunpack.c.l.b16 %v58
    %v206 = vunpack.c.h.b16 %v58
    %v207 = vunpack.c.l.b16 %v59
    %v208 = vunpack.c.h.b16 %v59
    %v209 = vunpack.c.l.b16 %v60
    %v210 = vunpack.c.h.b16 %v60
    %v211 = vunpack.c.l.b16 %v61
    %v212 = vunpack.c.h.b16 %v61
    %v213 = vunpack.c.l.b16 %v62
    %v214 = vunpack.c.h.b16 %v62
    %v215 = vunpack.c.l.b16 %v63
    %v216 = vunpack.c.h.b16 %v63
    %v217 = vunpack.c.l.b16 %v64
    %v218 = vunpack.c.h.b16 %v64
    %v219 = vunpack.c.l.b16 %v65
    %v220 = vunpack.c.h.b16 %v65
    %v221 = vunpack.c.l.b16 %v66
    %v222 = vunpack.c.h.b16 %v66
    %v223 = vunpack.c.l.b16 %v67
    %v224 = vunpack.c.h.b16 %v67
    %v225 = vunpack.c.l.b16 %v68
    %v226 = vunpack.c.h.b16 %v68
    %v227 = vunpack.c.l.b16 %v69
    %v228 = vunpack.c.h.b16 %v69
    %v229 = vunpack.c.l.b16 %v70
    %v230 = vunpack.c.h.b16 %v70
    %v231 = vunpack.c.l.b16 %v71
    %v232 = vunpack.c.h.b16 %v71
    %v233 = vunpack.c.l.b16 %v72
    %v234 = vunpack.c.h.b16 %v72
    %v235 = vunpack.c.l.b16 %v73
    %v236 = vunpack.c.h.b16 %v73
    %v237 = vunpack.c.l.b16 %v74
    %v238 = vunpack.c.h.b16 %v74
    %v239 = vpack.c.b16 %v179, %v175
    %v240 = vpack.c.b16 %v180, %v176
    %v241 = vpack.c.b16 %v181, %v177
    %v242 = vpack.c.b16 %v182, %v178
    %v243 = vpack.c.b16 %v187, %v183
    %v244 = vpack.c.b16 %v188, %v184
    %v245 = vpack.c.b16 %v189, %v185
    %v246 = vpack.c.b16 %v190, %v186
    %v247 = vpack.c.b16 %v195, %v191
    %v248 = vpack.c.b16 %v196, %v192
    %v249 = vpack.c.b16 %v197, %v193
    %v250 = vpack.c.b16 %v198, %v194
    %v251 = vpack.c.b16 %v203, %v199
    %v252 = vpack.c.b16 %v204, %v200
    %v253 = vpack.c.b16 %v205, %v201
    %v254 = vpack.c.b16 %v206, %v202
    %v255 = vpack.c.b16 %v211, %v207
    %v256 = vpack.c.b16 %v212, %v208
    %v257 = vpack.c.b16 %v213, %v209
    %v258 = vpack.c.b16 %v214, %v210
    %v259 = vpack.c.b16 %v219, %v215
    %v260 = vpack.c.b16 %v220, %v216
    %v261 = vpack.c.b16 %v221, %v217
    %v262 = vpack.c.b16 %v222, %v218
    %v263 = vpack.c.b16 %v227, %v223
    %v264 = vpack.c.b16 %v228, %v224
    %v265 = vpack.c.b16 %v229, %v225
    %v266 = vpack.c.b16 %v230, %v226
    %v267 = vpack.c.b16 %v235, %v231
    %v268 = vpack.c.b16 %v236, %v232
    %v269 = vpack.c.b16 %v237, %v233
    %v270 = vpack.c.b16 %v238, %v234
    %303 = vmatprep.subr.bf16.mxu0 %v240
    %304 = vmatpush1.bf16.msra.mxu0 %v239
    %305 = vmatprep.subr.bf16.mxu0 %v244
    %306 = vmatpush1.bf16.msra.mxu0 %v243
    %307 = vmatprep.subr.bf16.mxu0 %v248
    %308 = vmatpush1.bf16.msra.mxu0 %v247
    %309 = vmatprep.subr.bf16.mxu0 %v252
    %310 = vmatpush1.bf16.msra.mxu0 %v251
    %311 = vmatprep.subr.bf16.mxu0 %v256
    %312 = vmatpush1.bf16.msra.mxu0 %v255
    %313 = vmatprep.subr.bf16.mxu0 %v260
    %314 = vmatpush1.bf16.msra.mxu0 %v259
    %315 = vmatprep.subr.bf16.mxu0 %v264
    %316 = vmatpush1.bf16.msra.mxu0 %v263
    %317 = vmatprep.subr.bf16.mxu0 %v268
    %318 = vmatpush1.bf16.msra.mxu0 %v267
    %319 = vmatprep.subr.bf16.mxu0 0
    %320 = vmatpush1.bf16.msra.mxu0 0
    %321 = vmatprep.subr.bf16.mxu0 0
    %322 = vmatpush1.bf16.msra.mxu0 0
    %323 = vmatprep.subr.bf16.mxu0 0
    %324 = vmatpush1.bf16.msra.mxu0 0
    %325 = vmatprep.subr.bf16.mxu0 0
    %326 = vmatpush1.bf16.msra.mxu0 0
    %327 = vmatprep.subr.bf16.mxu0 0
    %328 = vmatpush1.bf16.msra.mxu0 0
    %329 = vmatprep.subr.bf16.mxu0 0
    %330 = vmatpush1.bf16.msra.mxu0 0
    %331 = vmatprep.subr.bf16.mxu0 0
    %332 = vmatpush1.bf16.msra.mxu0 0
    %333 = vmatprep.subr.bf16.mxu0 0
    %334 = vmatpush1.bf16.msra.mxu0 0
    %335 = vmatprep.mubr.bf16.mxu0 0
    %336 = vmatmul.mubr.bf16.gmra.mrb[0].mxu0 0
    %v337 = vpop.f32.mrb[0].mxu0
    %v338 = vadd.f32 0.0, %v337
    %v339 = vpop.f32.mrb[0].mxu0
    %v340 = vadd.f32 0.0, %v339
    %v341 = vpop.f32.mrb[0].mxu0
    %v342 = vpop.f32.mrb[0].mxu0
    %343 = vdwg.mxu0
    %344 = vmatprep.subr.bf16.mxu0 %v242
    %345 = vmatpush1.bf16.msra.mxu0 %v241
    %346 = vmatprep.subr.bf16.mxu0 %v246
    %347 = vmatpush1.bf16.msra.mxu0 %v245
    %348 = vmatprep.subr.bf16.mxu0 %v250
    %349 = vmatpush1.bf16.msra.mxu0 %v249
    %350 = vmatprep.subr.bf16.mxu0 %v254
    %351 = vmatpush1.bf16.msra.mxu0 %v253
    %352 = vmatprep.subr.bf16.mxu0 %v258
    %353 = vmatpush1.bf16.msra.mxu0 %v257
    %354 = vmatprep.subr.bf16.mxu0 %v262
    %355 = vmatpush1.bf16.msra.mxu0 %v261
    %356 = vmatprep.subr.bf16.mxu0 %v266
    %357 = vmatpush1.bf16.msra.mxu0 %v265
    %358 = vmatprep.subr.bf16.mxu0 %v270
    %359 = vmatpush1.bf16.msra.mxu0 %v269
    %360 = vmatprep.subr.bf16.mxu0 0
    %361 = vmatpush1.bf16.msra.mxu0 0
    %362 = vmatprep.subr.bf16.mxu0 0
    %363 = vmatpush1.bf16.msra.mxu0 0
    %364 = vmatprep.subr.bf16.mxu0 0
    %365 = vmatpush1.bf16.msra.mxu0 0
    %366 = vmatprep.subr.bf16.mxu0 0
    %367 = vmatpush1.bf16.msra.mxu0 0
    %368 = vmatprep.subr.bf16.mxu0 0
    %369 = vmatpush1.bf16.msra.mxu0 0
    %370 = vmatprep.subr.bf16.mxu0 0
    %371 = vmatpush1.bf16.msra.mxu0 0
    %372 = vmatprep.subr.bf16.mxu0 0
    %373 = vmatpush1.bf16.msra.mxu0 0
    %374 = vmatprep.subr.bf16.mxu0 0
    %375 = vmatpush1.bf16.msra.mxu0 0
    %376 = vmatprep.mubr.bf16.mxu0 0
    %377 = vmatmul.mubr.bf16.gmra.mrb[0].mxu0 0
    %v378 = vpop.f32.mrb[0].mxu0
    %v379 = vadd.f32 0.0, %v378
    %v380 = vpop.f32.mrb[0].mxu0
    %v381 = vadd.f32 0.0, %v380
    %v382 = vpop.f32.mrb[0].mxu0
    %v383 = vpop.f32.mrb[0].mxu0
    %384 = vdwg.mxu0
    %v385 = vadd.f32 %v139, %v338
    %v386 = vadd.f32 %v140, %v340
    %v387 = vadd.f32 %v141, %v379
    %v388 = vadd.f32 %v142, %v381
    %v389 = vxor.u32 %v385, 2147483648
    %v390 = vmul.f32 %v389, 1.442695
    %v391 = vpow.pop %v390
    %v392 = vadd.f32 %v391, 1.0
    %v393 = vrcp.pop %v392
    %v394 = vmul.f32 1.0, %v393
    %v395 = vxor.u32 %v386, 2147483648
    %v396 = vmul.f32 %v395, 1.442695
    %v397 = vpow.pop %v396
    %v398 = vadd.f32 %v397, 1.0
    %v399 = vrcp.pop %v398
    %v400 = vmul.f32 1.0, %v399
    %v401 = vtanh.pop %v387
    %v402 = vxor.u32 %v388, 2147483648
    %v403 = vmul.f32 %v402, 1.442695
    %v404 = vpow.pop %v403
    %v405 = vadd.f32 %v404, 1.0
    %v406 = vrcp.pop %v405
    %v407 = vmul.f32 1.0, %v406
    %v408 = vmul.f32 %v400, 0.0
    %v409 = vmul.f32 %v394, %v401
    %v410 = vadd.f32 %v408, %v409
    %v411 = vtanh.pop %v410
    %v412 = vmul.f32 %v407, %v411
    %v413 = vld [vmem:[%s1] sm:$0xff]
    %vm414 = vcmp.gt.f32.partialorder %v413, 0.0
    %v415 = vsel %vm414, 1, 0
    %416 = vset.pattern.permute.xlu0 0
    %417 = vperm.xlu0 %416, %v415
    %v418 = vpop.permute.xlu0 %417
    %vm419 = vcmp.eq.s32.totalorder %v418, 1
    %v420 = vsel %vm419, %v412, 0.0
    %v421 = vsel %vm419, %v410, 0.0
    %s422 = scalar_lea.vmem %s0, 672
    %v423 = vld [vmem:[%s422 + $0x20] sm:$0xff]
    %v424 = vld [vmem:[%s422 + $0x28] sm:$0xff]
    %v425 = vld [vmem:[%s422 + $0x30] sm:$0xff]
    %v426 = vld [vmem:[%s422 + $0x38] sm:$0xff]
    %v459 = vunpack.c.l.b16 %v75
    %v460 = vunpack.c.h.b16 %v75
    %v461 = vunpack.c.l.b16 %v76
    %v462 = vunpack.c.h.b16 %v76
    %v463 = vunpack.c.l.b16 %v77
    %v464 = vunpack.c.h.b16 %v77
    %v465 = vunpack.c.l.b16 %v78
    %v466 = vunpack.c.h.b16 %v78
    %v467 = vunpack.c.l.b16 %v79
    %v468 = vunpack.c.h.b16 %v79
    %v469 = vunpack.c.l.b16 %v80
    %v470 = vunpack.c.h.b16 %v80
    %v471 = vunpack.c.l.b16 %v81
    %v472 = vunpack.c.h.b16 %v81
    %v473 = vunpack.c.l.b16 %v82
    %v474 = vunpack.c.h.b16 %v82
    %v475 = vunpack.c.l.b16 %v83
    %v476 = vunpack.c.h.b16 %v83
    %v477 = vunpack.c.l.b16 %v84
    %v478 = vunpack.c.h.b16 %v84
    %v479 = vunpack.c.l.b16 %v85
    %v480 = vunpack.c.h.b16 %v85
    %v481 = vunpack.c.l.b16 %v86
    %v482 = vunpack.c.h.b16 %v86
    %v483 = vunpack.c.l.b16 %v87
    %v484 = vunpack.c.h.b16 %v87
    %v485 = vunpack.c.l.b16 %v88
    %v486 = vunpack.c.h.b16 %v88
    %v487 = vunpack.c.l.b16 %v89
    %v488 = vunpack.c.h.b16 %v89
    %v489 = vunpack.c.l.b16 %v90
    %v490 = vunpack.c.h.b16 %v90
    %v491 = vunpack.c.l.b16 %v91
    %v492 = vunpack.c.h.b16 %v91
    %v493 = vunpack.c.l.b16 %v92
    %v494 = vunpack.c.h.b16 %v92
    %v495 = vunpack.c.l.b16 %v93
    %v496 = vunpack.c.h.b16 %v93
    %v497 = vunpack.c.l.b16 %v94
    %v498 = vunpack.c.h.b16 %v94
    %v499 = vunpack.c.l.b16 %v95
    %v500 = vunpack.c.h.b16 %v95
    %v501 = vunpack.c.l.b16 %v96
    %v502 = vunpack.c.h.b16 %v96
    %v503 = vunpack.c.l.b16 %v97
    %v504 = vunpack.c.h.b16 %v97
    %v505 = vunpack.c.l.b16 %v98
    %v506 = vunpack.c.h.b16 %v98
    %v507 = vunpack.c.l.b16 %v99
    %v508 = vunpack.c.h.b16 %v99
    %v509 = vunpack.c.l.b16 %v100
    %v510 = vunpack.c.h.b16 %v100
    %v511 = vunpack.c.l.b16 %v101
    %v512 = vunpack.c.h.b16 %v101
    %v513 = vunpack.c.l.b16 %v102
    %v514 = vunpack.c.h.b16 %v102
    %v515 = vunpack.c.l.b16 %v103
    %v516 = vunpack.c.h.b16 %v103
    %v517 = vunpack.c.l.b16 %v104
    %v518 = vunpack.c.h.b16 %v104
    %v519 = vunpack.c.l.b16 %v105
    %v520 = vunpack.c.h.b16 %v105
    %v521 = vunpack.c.l.b16 %v106
    %v522 = vunpack.c.h.b16 %v106
    %v523 = vpack.c.b16 %v463, %v459
    %v524 = vpack.c.b16 %v464, %v460
    %v525 = vpack.c.b16 %v465, %v461
    %v526 = vpack.c.b16 %v466, %v462
    %v527 = vpack.c.b16 %v471, %v467
    %v528 = vpack.c.b16 %v472, %v468
    %v529 = vpack.c.b16 %v473, %v469
    %v530 = vpack.c.b16 %v474, %v470
    %v531 = vpack.c.b16 %v479, %v475
    %v532 = vpack.c.b16 %v480, %v476
    %v533 = vpack.c.b16 %v481, %v477
    %v534 = vpack.c.b16 %v482, %v478
    %v535 = vpack.c.b16 %v487, %v483
    %v536 = vpack.c.b16 %v488, %v484
    %v537 = vpack.c.b16 %v489, %v485
    %v538 = vpack.c.b16 %v490, %v486
    %v539 = vpack.c.b16 %v495, %v491
    %v540 = vpack.c.b16 %v496, %v492
    %v541 = vpack.c.b16 %v497, %v493
    %v542 = vpack.c.b16 %v498, %v494
    %v543 = vpack.c.b16 %v503, %v499
    %v544 = vpack.c.b16 %v504, %v500
    %v545 = vpack.c.b16 %v505, %v501
    %v546 = vpack.c.b16 %v506, %v502
    %v547 = vpack.c.b16 %v511, %v507
    %v548 = vpack.c.b16 %v512, %v508
    %v549 = vpack.c.b16 %v513, %v509
    %v550 = vpack.c.b16 %v514, %v510
    %v551 = vpack.c.b16 %v519, %v515
    %v552 = vpack.c.b16 %v520, %v516
    %v553 = vpack.c.b16 %v521, %v517
    %v554 = vpack.c.b16 %v522, %v518
    %587 = vmatprep.subr.bf16.mxu0 %v524
    %588 = vmatpush1.bf16.msra.mxu0 %v523
    %589 = vmatprep.subr.bf16.mxu0 %v528
    %590 = vmatpush1.bf16.msra.mxu0 %v527
    %591 = vmatprep.subr.bf16.mxu0 %v532
    %592 = vmatpush1.bf16.msra.mxu0 %v531
    %593 = vmatprep.subr.bf16.mxu0 %v536
    %594 = vmatpush1.bf16.msra.mxu0 %v535
    %595 = vmatprep.subr.bf16.mxu0 %v540
    %596 = vmatpush1.bf16.msra.mxu0 %v539
    %597 = vmatprep.subr.bf16.mxu0 %v544
    %598 = vmatpush1.bf16.msra.mxu0 %v543
    %599 = vmatprep.subr.bf16.mxu0 %v548
    %600 = vmatpush1.bf16.msra.mxu0 %v547
    %601 = vmatprep.subr.bf16.mxu0 %v552
    %602 = vmatpush1.bf16.msra.mxu0 %v551
    %603 = vmatprep.subr.bf16.mxu0 0
    %604 = vmatpush1.bf16.msra.mxu0 0
    %605 = vmatprep.subr.bf16.mxu0 0
    %606 = vmatpush1.bf16.msra.mxu0 0
    %607 = vmatprep.subr.bf16.mxu0 0
    %608 = vmatpush1.bf16.msra.mxu0 0
    %609 = vmatprep.subr.bf16.mxu0 0
    %610 = vmatpush1.bf16.msra.mxu0 0
    %611 = vmatprep.subr.bf16.mxu0 0
    %612 = vmatpush1.bf16.msra.mxu0 0
    %613 = vmatprep.subr.bf16.mxu0 0
    %614 = vmatpush1.bf16.msra.mxu0 0
    %615 = vmatprep.subr.bf16.mxu0 0
    %616 = vmatpush1.bf16.msra.mxu0 0
    %617 = vmatprep.subr.bf16.mxu0 0
    %618 = vmatpush1.bf16.msra.mxu0 0
    %619 = vmatprep.mubr.bf16.mxu0 0
    %620 = vmatmul.mubr.bf16.gmra.mrb[0].mxu0 0
    %v621 = vpop.f32.mrb[0].mxu0
    %v622 = vadd.f32 0.0, %v621
    %v623 = vpop.f32.mrb[0].mxu0
    %v624 = vadd.f32 0.0, %v623
    %v625 = vpop.f32.mrb[0].mxu0
    %v626 = vpop.f32.mrb[0].mxu0
    %627 = vdwg.mxu0
    %628 = vmatprep.subr.bf16.mxu0 %v526
    %629 = vmatpush1.bf16.msra.mxu0 %v525
    %630 = vmatprep.subr.bf16.mxu0 %v530
    %631 = vmatpush1.bf16.msra.mxu0 %v529
    %632 = vmatprep.subr.bf16.mxu0 %v534
    %633 = vmatpush1.bf16.msra.mxu0 %v533
    %634 = vmatprep.subr.bf16.mxu0 %v538
    %635 = vmatpush1.bf16.msra.mxu0 %v537
    %636 = vmatprep.subr.bf16.mxu0 %v542
    %637 = vmatpush1.bf16.msra.mxu0 %v541
    %638 = vmatprep.subr.bf16.mxu0 %v546
    %639 = vmatpush1.bf16.msra.mxu0 %v545
    %640 = vmatprep.subr.bf16.mxu0 %v550
    %641 = vmatpush1.bf16.msra.mxu0 %v549
    %642 = vmatprep.subr.bf16.mxu0 %v554
    %643 = vmatpush1.bf16.msra.mxu0 %v553
    %644 = vmatprep.subr.bf16.mxu0 0
    %645 = vmatpush1.bf16.msra.mxu0 0
    %646 = vmatprep.subr.bf16.mxu0 0
    %647 = vmatpush1.bf16.msra.mxu0 0
    %648 = vmatprep.subr.bf16.mxu0 0
    %649 = vmatpush1.bf16.msra.mxu0 0
    %650 = vmatprep.subr.bf16.mxu0 0
    %651 = vmatpush1.bf16.msra.mxu0 0
    %652 = vmatprep.subr.bf16.mxu0 0
    %653 = vmatpush1.bf16.msra.mxu0 0
    %654 = vmatprep.subr.bf16.mxu0 0
    %655 = vmatpush1.bf16.msra.mxu0 0
    %656 = vmatprep.subr.bf16.mxu0 0
    %657 = vmatpush1.bf16.msra.mxu0 0
    %658 = vmatprep.subr.bf16.mxu0 0
    %659 = vmatpush1.bf16.msra.mxu0 0
    %660 = vmatprep.mubr.bf16.mxu0 0
    %661 = vmatmul.mubr.bf16.gmra.mrb[0].mxu0 0
    %v662 = vpop.f32.mrb[0].mxu0
    %v663 = vadd.f32 0.0, %v662
    %v664 = vpop.f32.mrb[0].mxu0
    %v665 = vadd.f32 0.0, %v664
    %v666 = vpop.f32.mrb[0].mxu0
    %v667 = vpop.f32.mrb[0].mxu0
    %668 = vdwg.mxu0
    %v669 = vadd.f32 %v423, %v622
    %v670 = vadd.f32 %v424, %v624
    %v671 = vadd.f32 %v425, %v663
    %v672 = vadd.f32 %v426, %v665
    %v673 = vxor.u32 %v669, 2147483648
    %v674 = vmul.f32 %v673, 1.442695
    %v675 = vpow.pop %v674
    %v676 = vadd.f32 %v675, 1.0
    %v677 = vrcp.pop %v676
    %v678 = vmul.f32 1.0, %v677
    %v679 = vxor.u32 %v670, 2147483648
    %v680 = vmul.f32 %v679, 1.442695
    %v681 = vpow.pop %v680
    %v682 = vadd.f32 %v681, 1.0
    %v683 = vrcp.pop %v682
    %v684 = vmul.f32 1.0, %v683
    %v685 = vtanh.pop %v671
    %v686 = vxor.u32 %v672, 2147483648
    %v687 = vmul.f32 %v686, 1.442695
    %v688 = vpow.pop %v687
    %v689 = vadd.f32 %v688, 1.0
    %v690 = vrcp.pop %v689
    %v691 = vmul.f32 1.0, %v690
    %v692 = vmul.f32 %v684, 0.0
    %v693 = vmul.f32 %v678, %v685
    %v694 = vadd.f32 %v692, %v693
    %v695 = vtanh.pop %v694
    %v696 = vmul.f32 %v691, %v695
    %s697 = scalar_lea.vmem %s1, 56
    %v698 = vld [vmem:[%s697] sm:$0xff]
    %vm699 = vcmp.gt.f32.partialorder %v698, 0.0
    %v700 = vsel %vm699, 1, 0
    %701 = vset.pattern.permute.xlu0 0
    %702 = vperm.xlu0 %701, %v700
    %v703 = vpop.permute.xlu0 %702
    %vm704 = vcmp.eq.s32.totalorder %v703, 1
    %v705 = vsel %vm704, %v696, 0.0
    %v706 = vsel %vm704, %v694, 0.0
    %s707 = scalar_lea.vmem %s0, 96
    %v708 = vld [vmem:[%s707] sm:$0xff]
    %v709 = vld [vmem:[%s707 + $0x8] sm:$0xff]
    %v710 = vld [vmem:[%s707 + $0x10] sm:$0xff]
    %v711 = vld [vmem:[%s707 + $0x18] sm:$0xff]
    %v712 = vpack.c.bf16 %v420, %v420
    %713 = vmatprep.subr.bf16.mxu0 %v240
    %714 = vmatpush1.bf16.msra.mxu0 %v239
    %715 = vmatprep.subr.bf16.mxu0 %v244
    %716 = vmatpush1.bf16.msra.mxu0 %v243
    %717 = vmatprep.subr.bf16.mxu0 %v248
    %718 = vmatpush1.bf16.msra.mxu0 %v247
    %719 = vmatprep.subr.bf16.mxu0 %v252
    %720 = vmatpush1.bf16.msra.mxu0 %v251
    %721 = vmatprep.subr.bf16.mxu0 %v256
    %722 = vmatpush1.bf16.msra.mxu0 %v255
    %723 = vmatprep.subr.bf16.mxu0 %v260
    %724 = vmatpush1.bf16.msra.mxu0 %v259
    %725 = vmatprep.subr.bf16.mxu0 %v264
    %726 = vmatpush1.bf16.msra.mxu0 %v263
    %727 = vmatprep.subr.bf16.mxu0 %v268
    %728 = vmatpush1.bf16.msra.mxu0 %v267
    %729 = vmatprep.subr.bf16.mxu0 0
    %730 = vmatpush1.bf16.msra.mxu0 0
    %731 = vmatprep.subr.bf16.mxu0 0
    %732 = vmatpush1.bf16.msra.mxu0 0
    %733 = vmatprep.subr.bf16.mxu0 0
    %734 = vmatpush1.bf16.msra.mxu0 0
    %735 = vmatprep.subr.bf16.mxu0 0
    %736 = vmatpush1.bf16.msra.mxu0 0
    %737 = vmatprep.subr.bf16.mxu0 0
    %738 = vmatpush1.bf16.msra.mxu0 0
    %739 = vmatprep.subr.bf16.mxu0 0
    %740 = vmatpush1.bf16.msra.mxu0 0
    %741 = vmatprep.subr.bf16.mxu0 0
    %742 = vmatpush1.bf16.msra.mxu0 0
    %743 = vmatprep.subr.bf16.mxu0 0
    %744 = vmatpush1.bf16.msra.mxu0 0
    %745 = vmatprep.mubr.bf16.mxu0 0
    %746 = vmatmul.mubr.bf16.gmra.mrb[0].mxu0 %v712
    %v747 = vpop.f32.mrb[0].mxu0
    %v748 = vadd.f32 0.0, %v747
    %v749 = vpop.f32.mrb[0].mxu0
    %v750 = vadd.f32 0.0, %v749
    %v751 = vpop.f32.mrb[0].mxu0
    %v752 = vpop.f32.mrb[0].mxu0
    %753 = vdwg.mxu0
    %754 = vmatprep.subr.bf16.mxu0 %v242
    %755 = vmatpush1.bf16.msra.mxu0 %v241
    %756 = vmatprep.subr.bf16.mxu0 %v246
    %757 = vmatpush1.bf16.msra.mxu0 %v245
    %758 = vmatprep.subr.bf16.mxu0 %v250
    %759 = vmatpush1.bf16.msra.mxu0 %v249
    %760 = vmatprep.subr.bf16.mxu0 %v254
    %761 = vmatpush1.bf16.msra.mxu0 %v253
    %762 = vmatprep.subr.bf16.mxu0 %v258
    %763 = vmatpush1.bf16.msra.mxu0 %v257
    %764 = vmatprep.subr.bf16.mxu0 %v262
    %765 = vmatpush1.bf16.msra.mxu0 %v261
    %766 = vmatprep.subr.bf16.mxu0 %v266
    %767 = vmatpush1.bf16.msra.mxu0 %v265
    %768 = vmatprep.subr.bf16.mxu0 %v270
    %769 = vmatpush1.bf16.msra.mxu0 %v269
    %770 = vmatprep.subr.bf16.mxu0 0
    %771 = vmatpush1.bf16.msra.mxu0 0
    %772 = vmatprep.subr.bf16.mxu0 0
    %773 = vmatpush1.bf16.msra.mxu0 0
    %774 = vmatprep.subr.bf16.mxu0 0
    %775 = vmatpush1.bf16.msra.mxu0 0
    %776 = vmatprep.subr.bf16.mxu0 0
    %777 = vmatpush1.bf16.msra.mxu0 0
    %778 = vmatprep.subr.bf16.mxu0 0
    %779 = vmatpush1.bf16.msra.mxu0 0
    %780 = vmatprep.subr.bf16.mxu0 0
    %781 = vmatpush1.bf16.msra.mxu0 0
    %782 = vmatprep.subr.bf16.mxu0 0
    %783 = vmatpush1.bf16.msra.mxu0 0
    %784 = vmatprep.subr.bf16.mxu0 0
    %785 = vmatpush1.bf16.msra.mxu0 0
    %786 = vmatprep.mubr.bf16.mxu0 0
    %787 = vmatmul.mubr.bf16.gmra.mrb[0].mxu0 %v712
    %v788 = vpop.f32.mrb[0].mxu0
    %v789 = vadd.f32 0.0, %v788
    %v790 = vpop.f32.mrb[0].mxu0
    %v791 = vadd.f32 0.0, %v790
    %v792 = vpop.f32.mrb[0].mxu0
    %v793 = vpop.f32.mrb[0].mxu0
    %794 = vdwg.mxu0
    %v795 = vadd.f32 %v708, %v748
    %v796 = vadd.f32 %v709, %v750
    %v797 = vadd.f32 %v710, %v789
    %v798 = vadd.f32 %v711, %v791
    %v799 = vxor.u32 %v795, 2147483648
    %v800 = vmul.f32 %v799, 1.442695
    %v801 = vpow.pop %v800
    %v802 = vadd.f32 %v801, 1.0
    %v803 = vrcp.pop %v802
    %v804 = vmul.f32 1.0, %v803
    %v805 = vxor.u32 %v796, 2147483648
    %v806 = vmul.f32 %v805, 1.442695
    %v807 = vpow.pop %v806
    %v808 = vadd.f32 %v807, 1.0
    %v809 = vrcp.pop %v808
    %v810 = vmul.f32 1.0, %v809
    %v811 = vtanh.pop %v797
    %v812 = vxor.u32 %v798, 2147483648
    %v813 = vmul.f32 %v812, 1.442695
    %v814 = vpow.pop %v813
    %v815 = vadd.f32 %v814, 1.0
    %v816 = vrcp.pop %v815
    %v817 = vmul.f32 1.0, %v816
    %v818 = vmul.f32 %v810, %v421
    %v819 = vmul.f32 %v804, %v811
    %v820 = vadd.f32 %v818, %v819
    %v821 = vtanh.pop %v820
    %v822 = vmul.f32 %v817, %v821
    %s823 = scalar_lea.vmem %s1, 8
    %v824 = vld [vmem:[%s823] sm:$0xff]
    %vm825 = vcmp.gt.f32.partialorder %v824, 0.0
    %v826 = vsel %vm825, 1, 0
    %827 = vset.pattern.permute.xlu0 0
    %828 = vperm.xlu0 %827, %v826
    %v829 = vpop.permute.xlu0 %828
    %vm830 = vcmp.eq.s32.totalorder %v829, 1
    %v831 = vsel %vm830, %v822, %v420
    %v832 = vsel %vm830, %v820, %v421
    %s833 = scalar_lea.vmem %s0, 576
    %v834 = vld [vmem:[%s833 + $0x20] sm:$0xff]
    %v835 = vld [vmem:[%s833 + $0x28] sm:$0xff]
    %v836 = vld [vmem:[%s833 + $0x30] sm:$0xff]
    %v837 = vld [vmem:[%s833 + $0x38] sm:$0xff]
    %v838 = vpack.c.bf16 %v705, %v705
    %839 = vmatprep.subr.bf16.mxu0 %v524
    %840 = vmatpush1.bf16.msra.mxu0 %v523
    %841 = vmatprep.subr.bf16.mxu0 %v528
    %842 = vmatpush1.bf16.msra.mxu0 %v527
    %843 = vmatprep.subr.bf16.mxu0 %v532
    %844 = vmatpush1.bf16.msra.mxu0 %v531
    %845 = vmatprep.subr.bf16.mxu0 %v536
    %846 = vmatpush1.bf16.msra.mxu0 %v535
    %847 = vmatprep.subr.bf16.mxu0 %v540
    %848 = vmatpush1.bf16.msra.mxu0 %v539
    %849 = vmatprep.subr.bf16.mxu0 %v544
    %850 = vmatpush1.bf16.msra.mxu0 %v543
    %851 = vmatprep.subr.bf16.mxu0 %v548
    %852 = vmatpush1.bf16.msra.mxu0 %v547
    %853 = vmatprep.subr.bf16.mxu0 %v552
    %854 = vmatpush1.bf16.msra.mxu0 %v551
    %855 = vmatprep.subr.bf16.mxu0 0
    %856 = vmatpush1.bf16.msra.mxu0 0
    %857 = vmatprep.subr.bf16.mxu0 0
    %858 = vmatpush1.bf16.msra.mxu0 0
    %859 = vmatprep.subr.bf16.mxu0 0
    %860 = vmatpush1.bf16.msra.mxu0 0
    %861 = vmatprep.subr.bf16.mxu0 0
    %862 = vmatpush1.bf16.msra.mxu0 0
    %863 = vmatprep.subr.bf16.mxu0 0
    %864 = vmatpush1.bf16.msra.mxu0 0
    %865 = vmatprep.subr.bf16.mxu0 0
    %866 = vmatpush1.bf16.msra.mxu0 0
    %867 = vmatprep.subr.bf16.mxu0 0
    %868 = vmatpush1.bf16.msra.mxu0 0
    %869 = vmatprep.subr.bf16.mxu0 0
    %870 = vmatpush1.bf16.msra.mxu0 0
    %871 = vmatprep.mubr.bf16.mxu0 0
    %872 = vmatmul.mubr.bf16.gmra.mrb[0].mxu0 %v838
    %v873 = vpop.f32.mrb[0].mxu0
    %v874 = vadd.f32 0.0, %v873
    %v875 = vpop.f32.mrb[0].mxu0
    %v876 = vadd.f32 0.0, %v875
    %v877 = vpop.f32.mrb[0].mxu0
    %v878 = vpop.f32.mrb[0].mxu0
    %879 = vdwg.mxu0
    %880 = vmatprep.subr.bf16.mxu0 %v526
    %881 = vmatpush1.bf16.msra.mxu0 %v525
    %882 = vmatprep.subr.bf16.mxu0 %v530
    %883 = vmatpush1.bf16.msra.mxu0 %v529
    %884 = vmatprep.subr.bf16.mxu0 %v534
    %885 = vmatpush1.bf16.msra.mxu0 %v533
    %886 = vmatprep.subr.bf16.mxu0 %v538
    %887 = vmatpush1.bf16.msra.mxu0 %v537
    %888 = vmatprep.subr.bf16.mxu0 %v542
    %889 = vmatpush1.bf16.msra.mxu0 %v541
    %890 = vmatprep.subr.bf16.mxu0 %v546
    %891 = vmatpush1.bf16.msra.mxu0 %v545
    %892 = vmatprep.subr.bf16.mxu0 %v550
    %893 = vmatpush1.bf16.msra.mxu0 %v549
    %894 = vmatprep.subr.bf16.mxu0 %v554
    %895 = vmatpush1.bf16.msra.mxu0 %v553
    %896 = vmatprep.subr.bf16.mxu0 0
    %897 = vmatpush1.bf16.msra.mxu0 0
    %898 = vmatprep.subr.bf16.mxu0 0
    %899 = vmatpush1.bf16.msra.mxu0 0
    %900 = vmatprep.subr.bf16.mxu0 0
    %901 = vmatpush1.bf16.msra.mxu0 0
    %902 = vmatprep.subr.bf16.mxu0 0
    %903 = vmatpush1.bf16.msra.mxu0 0
    %904 = vmatprep.subr.bf16.mxu0 0
    %905 = vmatpush1.bf16.msra.mxu0 0
    %906 = vmatprep.subr.bf16.mxu0 0
    %907 = vmatpush1.bf16.msra.mxu0 0
    %908 = vmatprep.subr.bf16.mxu0 0
    %909 = vmatpush1.bf16.msra.mxu0 0
    %910 = vmatprep.subr.bf16.mxu0 0
    %911 = vmatpush1.bf16.msra.mxu0 0
    %912 = vmatprep.mubr.bf16.mxu0 0
    %913 = vmatmul.mubr.bf16.gmra.mrb[0].mxu0 %v838
    %v914 = vpop.f32.mrb[0].mxu0
    %v915 = vadd.f32 0.0, %v914
    %v916 = vpop.f32.mrb[0].mxu0
    %v917 = vadd.f32 0.0, %v916
    %v918 = vpop.f32.mrb[0].mxu0
    %v919 = vpop.f32.mrb[0].mxu0
    %920 = vdwg.mxu0
    %v921 = vadd.f32 %v834, %v874
    %v922 = vadd.f32 %v835, %v876
    %v923 = vadd.f32 %v836, %v915
    %v924 = vadd.f32 %v837, %v917
    %v925 = vxor.u32 %v921, 2147483648
    %v926 = vmul.f32 %v925, 1.442695
    %v927 = vpow.pop %v926
    %v928 = vadd.f32 %v927, 1.0
    %v929 = vrcp.pop %v928
    %v930 = vmul.f32 1.0, %v929
    %v931 = vxor.u32 %v922, 2147483648
    %v932 = vmul.f32 %v931, 1.442695
    %v933 = vpow.pop %v932
    %v934 = vadd.f32 %v933, 1.0
    %v935 = vrcp.pop %v934
    %v936 = vmul.f32 1.0, %v935
    %v937 = vtanh.pop %v923
    %v938 = vxor.u32 %v924, 2147483648
    %v939 = vmul.f32 %v938, 1.442695
    %v940 = vpow.pop %v939
    %v941 = vadd.f32 %v940, 1.0
    %v942 = vrcp.pop %v941
    %v943 = vmul.f32 1.0, %v942
    %v944 = vmul.f32 %v936, %v706
    %v945 = vmul.f32 %v930, %v937
    %v946 = vadd.f32 %v944, %v945
    %v947 = vtanh.pop %v946
    %v948 = vmul.f32 %v943, %v947
    %s949 = scalar_lea.vmem %s1, 48
    %v950 = vld [vmem:[%s949] sm:$0xff]
    %vm951 = vcmp.gt.f32.partialorder %v950, 0.0
    %v952 = vsel %vm951, 1, 0
    %953 = vset.pattern.permute.xlu0 0
    %954 = vperm.xlu0 %953, %v952
    %v955 = vpop.permute.xlu0 %954
    %vm956 = vcmp.eq.s32.totalorder %v955, 1
    %v957 = vsel %vm956, %v948, %v705
    %v958 = vsel %vm956, %v946, %v706
    %s959 = scalar_lea.vmem %s0, 192
    %v960 = vld [vmem:[%s959] sm:$0xff]
    %v961 = vld [vmem:[%s959 + $0x8] sm:$0xff]
    %v962 = vld [vmem:[%s959 + $0x10] sm:$0xff]
    %v963 = vld [vmem:[%s959 + $0x18] sm:$0xff]
    %v964 = vpack.c.bf16 %v831, %v831
    %965 = vmatprep.subr.bf16.mxu0 %v240
    %966 = vmatpush1.bf16.msra.mxu0 %v239
    %967 = vmatprep.subr.bf16.mxu0 %v244
    %968 = vmatpush1.bf16.msra.mxu0 %v243
    %969 = vmatprep.subr.bf16.mxu0 %v248
    %970 = vmatpush1.bf16.msra.mxu0 %v247
    %971 = vmatprep.subr.bf16.mxu0 %v252
    %972 = vmatpush1.bf16.msra.mxu0 %v251
    %973 = vmatprep.subr.bf16.mxu0 %v256
    %974 = vmatpush1.bf16.msra.mxu0 %v255
    %975 = vmatprep.subr.bf16.mxu0 %v260
    %976 = vmatpush1.bf16.msra.mxu0 %v259
    %977 = vmatprep.subr.bf16.mxu0 %v264
    %978 = vmatpush1.bf16.msra.mxu0 %v263
    %979 = vmatprep.subr.bf16.mxu0 %v268
    %980 = vmatpush1.bf16.msra.mxu0 %v267
    %981 = vmatprep.subr.bf16.mxu0 0
    %982 = vmatpush1.bf16.msra.mxu0 0
    %983 = vmatprep.subr.bf16.mxu0 0
    %984 = vmatpush1.bf16.msra.mxu0 0
    %985 = vmatprep.subr.bf16.mxu0 0
    %986 = vmatpush1.bf16.msra.mxu0 0
    %987 = vmatprep.subr.bf16.mxu0 0
    %988 = vmatpush1.bf16.msra.mxu0 0
    %989 = vmatprep.subr.bf16.mxu0 0
    %990 = vmatpush1.bf16.msra.mxu0 0
    %991 = vmatprep.subr.bf16.mxu0 0
    %992 = vmatpush1.bf16.msra.mxu0 0
    %993 = vmatprep.subr.bf16.mxu0 0
    %994 = vmatpush1.bf16.msra.mxu0 0
    %995 = vmatprep.subr.bf16.mxu0 0
    %996 = vmatpush1.bf16.msra.mxu0 0
    %997 = vmatprep.mubr.bf16.mxu0 0
    %998 = vmatmul.mubr.bf16.gmra.mrb[0].mxu0 %v964
    %v999 = vpop.f32.mrb[0].mxu0
    %v1000 = vadd.f32 0.0, %v999
    %v1001 = vpop.f32.mrb[0].mxu0
    %v1002 = vadd.f32 0.0, %v1001
    %v1003 = vpop.f32.mrb[0].mxu0
    %v1004 = vpop.f32.mrb[0].mxu0
    %1005 = vdwg.mxu0
    %1006 = vmatprep.subr.bf16.mxu0 %v242
    %1007 = vmatpush1.bf16.msra.mxu0 %v241
    %1008 = vmatprep.subr.bf16.mxu0 %v246
    %1009 = vmatpush1.bf16.msra.mxu0 %v245
    %1010 = vmatprep.subr.bf16.mxu0 %v250
    %1011 = vmatpush1.bf16.msra.mxu0 %v249
    %1012 = vmatprep.subr.bf16.mxu0 %v254
    %1013 = vmatpush1.bf16.msra.mxu0 %v253
    %1014 = vmatprep.subr.bf16.mxu0 %v258
    %1015 = vmatpush1.bf16.msra.mxu0 %v257
    %1016 = vmatprep.subr.bf16.mxu0 %v262
    %1017 = vmatpush1.bf16.msra.mxu0 %v261
    %1018 = vmatprep.subr.bf16.mxu0 %v266
    %1019 = vmatpush1.bf16.msra.mxu0 %v265
    %1020 = vmatprep.subr.bf16.mxu0 %v270
    %1021 = vmatpush1.bf16.msra.mxu0 %v269
    %1022 = vmatprep.subr.bf16.mxu0 0
    %1023 = vmatpush1.bf16.msra.mxu0 0
    %1024 = vmatprep.subr.bf16.mxu0 0
    %1025 = vmatpush1.bf16.msra.mxu0 0
    %1026 = vmatprep.subr.bf16.mxu0 0
    %1027 = vmatpush1.bf16.msra.mxu0 0
    %1028 = vmatprep.subr.bf16.mxu0 0
    %1029 = vmatpush1.bf16.msra.mxu0 0
    %1030 = vmatprep.subr.bf16.mxu0 0
    %1031 = vmatpush1.bf16.msra.mxu0 0
    %1032 = vmatprep.subr.bf16.mxu0 0
    %1033 = vmatpush1.bf16.msra.mxu0 0
    %1034 = vmatprep.subr.bf16.mxu0 0
    %1035 = vmatpush1.bf16.msra.mxu0 0
    %1036 = vmatprep.subr.bf16.mxu0 0
    %1037 = vmatpush1.bf16.msra.mxu0 0
    %1038 = vmatprep.mubr.bf16.mxu0 0
    %1039 = vmatmul.mubr.bf16.gmra.mrb[0].mxu0 %v964
    %v1040 = vpop.f32.mrb[0].mxu0
    %v1041 = vadd.f32 0.0, %v1040
    %v1042 = vpop.f32.mrb[0].mxu0
    %v1043 = vadd.f32 0.0, %v1042
    %v1044 = vpop.f32.mrb[0].mxu0
    %v1045 = vpop.f32.mrb[0].mxu0
    %1046 = vdwg.mxu0
    %v1047 = vadd.f32 %v960, %v1000
    %v1048 = vadd.f32 %v961, %v1002
    %v1049 = vadd.f32 %v962, %v1041
    %v1050 = vadd.f32 %v963, %v1043
    %v1051 = vxor.u32 %v1047, 2147483648
    %v1052 = vmul.f32 %v1051, 1.442695
    %v1053 = vpow.pop %v1052
    %v1054 = vadd.f32 %v1053, 1.0
    %v1055 = vrcp.pop %v1054
    %v1056 = vmul.f32 1.0, %v1055
    %v1057 = vxor.u32 %v1048, 2147483648
    %v1058 = vmul.f32 %v1057, 1.442695
    %v1059 = vpow.pop %v1058
    %v1060 = vadd.f32 %v1059, 1.0
    %v1061 = vrcp.pop %v1060
    %v1062 = vmul.f32 1.0, %v1061
    %v1063 = vtanh.pop %v1049
    %v1064 = vxor.u32 %v1050, 2147483648
    %v1065 = vmul.f32 %v1064, 1.442695
    %v1066 = vpow.pop %v1065
    %v1067 = vadd.f32 %v1066, 1.0
    %v1068 = vrcp.pop %v1067
    %v1069 = vmul.f32 1.0, %v1068
    %v1070 = vmul.f32 %v1062, %v832
    %v1071 = vmul.f32 %v1056, %v1063
    %v1072 = vadd.f32 %v1070, %v1071
    %v1073 = vtanh.pop %v1072
    %v1074 = vmul.f32 %v1069, %v1073
    %s1075 = scalar_lea.vmem %s1, 16
    %v1076 = vld [vmem:[%s1075] sm:$0xff]
    %vm1077 = vcmp.gt.f32.partialorder %v1076, 0.0
    %v1078 = vsel %vm1077, 1, 0
    %1079 = vset.pattern.permute.xlu0 0
    %1080 = vperm.xlu0 %1079, %v1078
    %v1081 = vpop.permute.xlu0 %1080
    %vm1082 = vcmp.eq.s32.totalorder %v1081, 1
    %v1083 = vsel %vm1082, %v1074, %v831
    %v1084 = vsel %vm1082, %v1072, %v832
    %s1085 = scalar_lea.vmem %s0, 480
    %v1086 = vld [vmem:[%s1085 + $0x20] sm:$0xff]
    %v1087 = vld [vmem:[%s1085 + $0x28] sm:$0xff]
    %v1088 = vld [vmem:[%s1085 + $0x30] sm:$0xff]
    %v1089 = vld [vmem:[%s1085 + $0x38] sm:$0xff]
    %v1090 = vpack.c.bf16 %v957, %v957
    %1091 = vmatprep.subr.bf16.mxu0 %v524
    %1092 = vmatpush1.bf16.msra.mxu0 %v523
    %1093 = vmatprep.subr.bf16.mxu0 %v528
    %1094 = vmatpush1.bf16.msra.mxu0 %v527
    %1095 = vmatprep.subr.bf16.mxu0 %v532
    %1096 = vmatpush1.bf16.msra.mxu0 %v531
    %1097 = vmatprep.subr.bf16.mxu0 %v536
    %1098 = vmatpush1.bf16.msra.mxu0 %v535
    %1099 = vmatprep.subr.bf16.mxu0 %v540
    %1100 = vmatpush1.bf16.msra.mxu0 %v539
    %1101 = vmatprep.subr.bf16.mxu0 %v544
    %1102 = vmatpush1.bf16.msra.mxu0 %v543
    %1103 = vmatprep.subr.bf16.mxu0 %v548
    %1104 = vmatpush1.bf16.msra.mxu0 %v547
    %1105 = vmatprep.subr.bf16.mxu0 %v552
    %1106 = vmatpush1.bf16.msra.mxu0 %v551
    %1107 = vmatprep.subr.bf16.mxu0 0
    %1108 = vmatpush1.bf16.msra.mxu0 0
    %1109 = vmatprep.subr.bf16.mxu0 0
    %1110 = vmatpush1.bf16.msra.mxu0 0
    %1111 = vmatprep.subr.bf16.mxu0 0
    %1112 = vmatpush1.bf16.msra.mxu0 0
    %1113 = vmatprep.subr.bf16.mxu0 0
    %1114 = vmatpush1.bf16.msra.mxu0 0
    %1115 = vmatprep.subr.bf16.mxu0 0
    %1116 = vmatpush1.bf16.msra.mxu0 0
    %1117 = vmatprep.subr.bf16.mxu0 0
    %1118 = vmatpush1.bf16.msra.mxu0 0
    %1119 = vmatprep.subr.bf16.mxu0 0
    %1120 = vmatpush1.bf16.msra.mxu0 0
    %1121 = vmatprep.subr.bf16.mxu0 0
    %1122 = vmatpush1.bf16.msra.mxu0 0
    %1123 = vmatprep.mubr.bf16.mxu0 0
    %1124 = vmatmul.mubr.bf16.gmra.mrb[0].mxu0 %v1090
    %v1125 = vpop.f32.mrb[0].mxu0
    %v1126 = vadd.f32 0.0, %v1125
    %v1127 = vpop.f32.mrb[0].mxu0
    %v1128 = vadd.f32 0.0, %v1127
    %v1129 = vpop.f32.mrb[0].mxu0
    %v1130 = vpop.f32.mrb[0].mxu0
    %1131 = vdwg.mxu0
    %1132 = vmatprep.subr.bf16.mxu0 %v526
    %1133 = vmatpush1.bf16.msra.mxu0 %v525
    %1134 = vmatprep.subr.bf16.mxu0 %v530
    %1135 = vmatpush1.bf16.msra.mxu0 %v529
    %1136 = vmatprep.subr.bf16.mxu0 %v534
    %1137 = vmatpush1.bf16.msra.mxu0 %v533
    %1138 = vmatprep.subr.bf16.mxu0 %v538
    %1139 = vmatpush1.bf16.msra.mxu0 %v537
    %1140 = vmatprep.subr.bf16.mxu0 %v542
    %1141 = vmatpush1.bf16.msra.mxu0 %v541
    %1142 = vmatprep.subr.bf16.mxu0 %v546
    %1143 = vmatpush1.bf16.msra.mxu0 %v545
    %1144 = vmatprep.subr.bf16.mxu0 %v550
    %1145 = vmatpush1.bf16.msra.mxu0 %v549
    %1146 = vmatprep.subr.bf16.mxu0 %v554
    %1147 = vmatpush1.bf16.msra.mxu0 %v553
    %1148 = vmatprep.subr.bf16.mxu0 0
    %1149 = vmatpush1.bf16.msra.mxu0 0
    %1150 = vmatprep.subr.bf16.mxu0 0
    %1151 = vmatpush1.bf16.msra.mxu0 0
    %1152 = vmatprep.subr.bf16.mxu0 0
    %1153 = vmatpush1.bf16.msra.mxu0 0
    %1154 = vmatprep.subr.bf16.mxu0 0
    %1155 = vmatpush1.bf16.msra.mxu0 0
    %1156 = vmatprep.subr.bf16.mxu0 0
    %1157 = vmatpush1.bf16.msra.mxu0 0
    %1158 = vmatprep.subr.bf16.mxu0 0
    %1159 = vmatpush1.bf16.msra.mxu0 0
    %1160 = vmatprep.subr.bf16.mxu0 0
    %1161 = vmatpush1.bf16.msra.mxu0 0
    %1162 = vmatprep.subr.bf16.mxu0 0
    %1163 = vmatpush1.bf16.msra.mxu0 0
    %1164 = vmatprep.mubr.bf16.mxu0 0
    %1165 = vmatmul.mubr.bf16.gmra.mrb[0].mxu0 %v1090
    %v1166 = vpop.f32.mrb[0].mxu0
    %v1167 = vadd.f32 0.0, %v1166
    %v1168 = vpop.f32.mrb[0].mxu0
    %v1169 = vadd.f32 0.0, %v1168
    %v1170 = vpop.f32.mrb[0].mxu0
    %v1171 = vpop.f32.mrb[0].mxu0
    %1172 = vdwg.mxu0
    %v1173 = vadd.f32 %v1086, %v1126
    %v1174 = vadd.f32 %v1087, %v1128
    %v1175 = vadd.f32 %v1088, %v1167
    %v1176 = vadd.f32 %v1089, %v1169
    %v1177 = vxor.u32 %v1173, 2147483648
    %v1178 = vmul.f32 %v1177, 1.442695
    %v1179 = vpow.pop %v1178
    %v1180 = vadd.f32 %v1179, 1.0
    %v1181 = vrcp.pop %v1180
    %v1182 = vmul.f32 1.0, %v1181
    %v1183 = vxor.u32 %v1174, 2147483648
    %v1184 = vmul.f32 %v1183, 1.442695
    %v1185 = vpow.pop %v1184
    %v1186 = vadd.f32 %v1185, 1.0
    %v1187 = vrcp.pop %v1186
    %v1188 = vmul.f32 1.0, %v1187
    %v1189 = vtanh.pop %v1175
    %v1190 = vxor.u32 %v1176, 2147483648
    %v1191 = vmul.f32 %v1190, 1.442695
    %v1192 = vpow.pop %v1191
    %v1193 = vadd.f32 %v1192, 1.0
    %v1194 = vrcp.pop %v1193
    %v1195 = vmul.f32 1.0, %v1194
    %v1196 = vmul.f32 %v1188, %v958
    %v1197 = vmul.f32 %v1182, %v1189
    %v1198 = vadd.f32 %v1196, %v1197
    %v1199 = vtanh.pop %v1198
    %v1200 = vmul.f32 %v1195, %v1199
    %s1201 = scalar_lea.vmem %s1, 40
    %v1202 = vld [vmem:[%s1201] sm:$0xff]
    %vm1203 = vcmp.gt.f32.partialorder %v1202, 0.0
    %v1204 = vsel %vm1203, 1, 0
    %1205 = vset.pattern.permute.xlu0 0
    %1206 = vperm.xlu0 %1205, %v1204
    %v1207 = vpop.permute.xlu0 %1206
    %vm1208 = vcmp.eq.s32.totalorder %v1207, 1
    %v1209 = vsel %vm1208, %v1200, %v957
    %v1210 = vsel %vm1208, %v1198, %v958
    %s1211 = scalar_lea.vmem %s0, 288
    %v1212 = vld [vmem:[%s1211] sm:$0xff]
    %v1213 = vld [vmem:[%s1211 + $0x8] sm:$0xff]
    %v1214 = vld [vmem:[%s1211 + $0x10] sm:$0xff]
    %v1215 = vld [vmem:[%s1211 + $0x18] sm:$0xff]
    %v1216 = vpack.c.bf16 %v1083, %v1083
    %1217 = vmatprep.subr.bf16.mxu0 %v240
    %1218 = vmatpush1.bf16.msra.mxu0 %v239
    %1219 = vmatprep.subr.bf16.mxu0 %v244
    %1220 = vmatpush1.bf16.msra.mxu0 %v243
    %1221 = vmatprep.subr.bf16.mxu0 %v248
    %1222 = vmatpush1.bf16.msra.mxu0 %v247
    %1223 = vmatprep.subr.bf16.mxu0 %v252
    %1224 = vmatpush1.bf16.msra.mxu0 %v251
    %1225 = vmatprep.subr.bf16.mxu0 %v256
    %1226 = vmatpush1.bf16.msra.mxu0 %v255
    %1227 = vmatprep.subr.bf16.mxu0 %v260
    %1228 = vmatpush1.bf16.msra.mxu0 %v259
    %1229 = vmatprep.subr.bf16.mxu0 %v264
    %1230 = vmatpush1.bf16.msra.mxu0 %v263
    %1231 = vmatprep.subr.bf16.mxu0 %v268
    %1232 = vmatpush1.bf16.msra.mxu0 %v267
    %1233 = vmatprep.subr.bf16.mxu0 0
    %1234 = vmatpush1.bf16.msra.mxu0 0
    %1235 = vmatprep.subr.bf16.mxu0 0
    %1236 = vmatpush1.bf16.msra.mxu0 0
    %1237 = vmatprep.subr.bf16.mxu0 0
    %1238 = vmatpush1.bf16.msra.mxu0 0
    %1239 = vmatprep.subr.bf16.mxu0 0
    %1240 = vmatpush1.bf16.msra.mxu0 0
    %1241 = vmatprep.subr.bf16.mxu0 0
    %1242 = vmatpush1.bf16.msra.mxu0 0
    %1243 = vmatprep.subr.bf16.mxu0 0
    %1244 = vmatpush1.bf16.msra.mxu0 0
    %1245 = vmatprep.subr.bf16.mxu0 0
    %1246 = vmatpush1.bf16.msra.mxu0 0
    %1247 = vmatprep.subr.bf16.mxu0 0
    %1248 = vmatpush1.bf16.msra.mxu0 0
    %1249 = vmatprep.mubr.bf16.mxu0 0
    %1250 = vmatmul.mubr.bf16.gmra.mrb[0].mxu0 %v1216
    %v1251 = vpop.f32.mrb[0].mxu0
    %v1252 = vadd.f32 0.0, %v1251
    %v1253 = vpop.f32.mrb[0].mxu0
    %v1254 = vadd.f32 0.0, %v1253
    %v1255 = vpop.f32.mrb[0].mxu0
    %v1256 = vpop.f32.mrb[0].mxu0
    %1257 = vdwg.mxu0
    %1258 = vmatprep.subr.bf16.mxu0 %v242
    %1259 = vmatpush1.bf16.msra.mxu0 %v241
    %1260 = vmatprep.subr.bf16.mxu0 %v246
    %1261 = vmatpush1.bf16.msra.mxu0 %v245
    %1262 = vmatprep.subr.bf16.mxu0 %v250
    %1263 = vmatpush1.bf16.msra.mxu0 %v249
    %1264 = vmatprep.subr.bf16.mxu0 %v254
    %1265 = vmatpush1.bf16.msra.mxu0 %v253
    %1266 = vmatprep.subr.bf16.mxu0 %v258
    %1267 = vmatpush1.bf16.msra.mxu0 %v257
    %1268 = vmatprep.subr.bf16.mxu0 %v262
    %1269 = vmatpush1.bf16.msra.mxu0 %v261
    %1270 = vmatprep.subr.bf16.mxu0 %v266
    %1271 = vmatpush1.bf16.msra.mxu0 %v265
    %1272 = vmatprep.subr.bf16.mxu0 %v270
    %1273 = vmatpush1.bf16.msra.mxu0 %v269
    %1274 = vmatprep.subr.bf16.mxu0 0
    %1275 = vmatpush1.bf16.msra.mxu0 0
    %1276 = vmatprep.subr.bf16.mxu0 0
    %1277 = vmatpush1.bf16.msra.mxu0 0
    %1278 = vmatprep.subr.bf16.mxu0 0
    %1279 = vmatpush1.bf16.msra.mxu0 0
    %1280 = vmatprep.subr.bf16.mxu0 0
    %1281 = vmatpush1.bf16.msra.mxu0 0
    %1282 = vmatprep.subr.bf16.mxu0 0
    %1283 = vmatpush1.bf16.msra.mxu0 0
    %1284 = vmatprep.subr.bf16.mxu0 0
    %1285 = vmatpush1.bf16.msra.mxu0 0
    %1286 = vmatprep.subr.bf16.mxu0 0
    %1287 = vmatpush1.bf16.msra.mxu0 0
    %1288 = vmatprep.subr.bf16.mxu0 0
    %1289 = vmatpush1.bf16.msra.mxu0 0
    %1290 = vmatprep.mubr.bf16.mxu0 0
    %1291 = vmatmul.mubr.bf16.gmra.mrb[0].mxu0 %v1216
    %v1292 = vpop.f32.mrb[0].mxu0
    %v1293 = vadd.f32 0.0, %v1292
    %v1294 = vpop.f32.mrb[0].mxu0
    %v1295 = vadd.f32 0.0, %v1294
    %v1296 = vpop.f32.mrb[0].mxu0
    %v1297 = vpop.f32.mrb[0].mxu0
    %1298 = vdwg.mxu0
    %v1299 = vadd.f32 %v1212, %v1252
    %v1300 = vadd.f32 %v1213, %v1254
    %v1301 = vadd.f32 %v1214, %v1293
    %v1302 = vadd.f32 %v1215, %v1295
    %v1303 = vxor.u32 %v1299, 2147483648
    %v1304 = vmul.f32 %v1303, 1.442695
    %v1305 = vpow.pop %v1304
    %v1306 = vadd.f32 %v1305, 1.0
    %v1307 = vrcp.pop %v1306
    %v1308 = vmul.f32 1.0, %v1307
    %v1309 = vxor.u32 %v1300, 2147483648
    %v1310 = vmul.f32 %v1309, 1.442695
    %v1311 = vpow.pop %v1310
    %v1312 = vadd.f32 %v1311, 1.0
    %v1313 = vrcp.pop %v1312
    %v1314 = vmul.f32 1.0, %v1313
    %v1315 = vtanh.pop %v1301
    %v1316 = vxor.u32 %v1302, 2147483648
    %v1317 = vmul.f32 %v1316, 1.442695
    %v1318 = vpow.pop %v1317
    %v1319 = vadd.f32 %v1318, 1.0
    %v1320 = vrcp.pop %v1319
    %v1321 = vmul.f32 1.0, %v1320
    %v1322 = vmul.f32 %v1314, %v1084
    %v1323 = vmul.f32 %v1308, %v1315
    %v1324 = vadd.f32 %v1322, %v1323
    %v1325 = vtanh.pop %v1324
    %v1326 = vmul.f32 %v1321, %v1325
    %s1327 = scalar_lea.vmem %s1, 24
    %v1328 = vld [vmem:[%s1327] sm:$0xff]
    %vm1329 = vcmp.gt.f32.partialorder %v1328, 0.0
    %v1330 = vsel %vm1329, 1, 0
    %1331 = vset.pattern.permute.xlu0 0
    %1332 = vperm.xlu0 %1331, %v1330
    %v1333 = vpop.permute.xlu0 %1332
    %vm1334 = vcmp.eq.s32.totalorder %v1333, 1
    %v1335 = vsel %vm1334, %v1326, %v1083
    %v1336 = vsel %vm1334, %v1324, %v1084
    %s1337 = scalar_lea.vmem %s0, 384
    %v1338 = vld [vmem:[%s1337 + $0x20] sm:$0xff]
    %v1339 = vld [vmem:[%s1337 + $0x28] sm:$0xff]
    %v1340 = vld [vmem:[%s1337 + $0x30] sm:$0xff]
    %v1341 = vld [vmem:[%s1337 + $0x38] sm:$0xff]
    %v1342 = vpack.c.bf16 %v1209, %v1209
    %1343 = vmatprep.subr.bf16.mxu0 %v524
    %1344 = vmatpush1.bf16.msra.mxu0 %v523
    %1345 = vmatprep.subr.bf16.mxu0 %v528
    %1346 = vmatpush1.bf16.msra.mxu0 %v527
    %1347 = vmatprep.subr.bf16.mxu0 %v532
    %1348 = vmatpush1.bf16.msra.mxu0 %v531
    %1349 = vmatprep.subr.bf16.mxu0 %v536
    %1350 = vmatpush1.bf16.msra.mxu0 %v535
    %1351 = vmatprep.subr.bf16.mxu0 %v540
    %1352 = vmatpush1.bf16.msra.mxu0 %v539
    %1353 = vmatprep.subr.bf16.mxu0 %v544
    %1354 = vmatpush1.bf16.msra.mxu0 %v543
    %1355 = vmatprep.subr.bf16.mxu0 %v548
    %1356 = vmatpush1.bf16.msra.mxu0 %v547
    %1357 = vmatprep.subr.bf16.mxu0 %v552
    %1358 = vmatpush1.bf16.msra.mxu0 %v551
    %1359 = vmatprep.subr.bf16.mxu0 0
    %1360 = vmatpush1.bf16.msra.mxu0 0
    %1361 = vmatprep.subr.bf16.mxu0 0
    %1362 = vmatpush1.bf16.msra.mxu0 0
    %1363 = vmatprep.subr.bf16.mxu0 0
    %1364 = vmatpush1.bf16.msra.mxu0 0
    %1365 = vmatprep.subr.bf16.mxu0 0
    %1366 = vmatpush1.bf16.msra.mxu0 0
    %1367 = vmatprep.subr.bf16.mxu0 0
    %1368 = vmatpush1.bf16.msra.mxu0 0
    %1369 = vmatprep.subr.bf16.mxu0 0
    %1370 = vmatpush1.bf16.msra.mxu0 0
    %1371 = vmatprep.subr.bf16.mxu0 0
    %1372 = vmatpush1.bf16.msra.mxu0 0
    %1373 = vmatprep.subr.bf16.mxu0 0
    %1374 = vmatpush1.bf16.msra.mxu0 0
    %1375 = vmatprep.mubr.bf16.mxu0 0
    %1376 = vmatmul.mubr.bf16.gmra.mrb[0].mxu0 %v1342
    %v1377 = vpop.f32.mrb[0].mxu0
    %v1378 = vadd.f32 0.0, %v1377
    %v1379 = vpop.f32.mrb[0].mxu0
    %v1380 = vadd.f32 0.0, %v1379
    %v1381 = vpop.f32.mrb[0].mxu0
    %v1382 = vpop.f32.mrb[0].mxu0
    %1383 = vdwg.mxu0
    %1384 = vmatprep.subr.bf16.mxu0 %v526
    %1385 = vmatpush1.bf16.msra.mxu0 %v525
    %1386 = vmatprep.subr.bf16.mxu0 %v530
    %1387 = vmatpush1.bf16.msra.mxu0 %v529
    %1388 = vmatprep.subr.bf16.mxu0 %v534
    %1389 = vmatpush1.bf16.msra.mxu0 %v533
    %1390 = vmatprep.subr.bf16.mxu0 %v538
    %1391 = vmatpush1.bf16.msra.mxu0 %v537
    %1392 = vmatprep.subr.bf16.mxu0 %v542
    %1393 = vmatpush1.bf16.msra.mxu0 %v541
    %1394 = vmatprep.subr.bf16.mxu0 %v546
    %1395 = vmatpush1.bf16.msra.mxu0 %v545
    %1396 = vmatprep.subr.bf16.mxu0 %v550
    %1397 = vmatpush1.bf16.msra.mxu0 %v549
    %1398 = vmatprep.subr.bf16.mxu0 %v554
    %1399 = vmatpush1.bf16.msra.mxu0 %v553
    %1400 = vmatprep.subr.bf16.mxu0 0
    %1401 = vmatpush1.bf16.msra.mxu0 0
    %1402 = vmatprep.subr.bf16.mxu0 0
    %1403 = vmatpush1.bf16.msra.mxu0 0
    %1404 = vmatprep.subr.bf16.mxu0 0
    %1405 = vmatpush1.bf16.msra.mxu0 0
    %1406 = vmatprep.subr.bf16.mxu0 0
    %1407 = vmatpush1.bf16.msra.mxu0 0
    %1408 = vmatprep.subr.bf16.mxu0 0
    %1409 = vmatpush1.bf16.msra.mxu0 0
    %1410 = vmatprep.subr.bf16.mxu0 0
    %1411 = vmatpush1.bf16.msra.mxu0 0
    %1412 = vmatprep.subr.bf16.mxu0 0
    %1413 = vmatpush1.bf16.msra.mxu0 0
    %1414 = vmatprep.subr.bf16.mxu0 0
    %1415 = vmatpush1.bf16.msra.mxu0 0
    %1416 = vmatprep.mubr.bf16.mxu0 0
    %1417 = vmatmul.mubr.bf16.gmra.mrb[0].mxu0 %v1342
    %v1418 = vpop.f32.mrb[0].mxu0
    %v1419 = vadd.f32 0.0, %v1418
    %v1420 = vpop.f32.mrb[0].mxu0
    %v1421 = vadd.f32 0.0, %v1420
    %v1422 = vpop.f32.mrb[0].mxu0
    %v1423 = vpop.f32.mrb[0].mxu0
    %1424 = vdwg.mxu0
    %v1425 = vadd.f32 %v1338, %v1378
    %v1426 = vadd.f32 %v1339, %v1380
    %v1427 = vadd.f32 %v1340, %v1419
    %v1428 = vadd.f32 %v1341, %v1421
    %v1429 = vxor.u32 %v1425, 2147483648
    %v1430 = vmul.f32 %v1429, 1.442695
    %v1431 = vpow.pop %v1430
    %v1432 = vadd.f32 %v1431, 1.0
    %v1433 = vrcp.pop %v1432
    %v1434 = vmul.f32 1.0, %v1433
    %v1435 = vxor.u32 %v1426, 2147483648
    %v1436 = vmul.f32 %v1435, 1.442695
    %v1437 = vpow.pop %v1436
    %v1438 = vadd.f32 %v1437, 1.0
    %v1439 = vrcp.pop %v1438
    %v1440 = vmul.f32 1.0, %v1439
    %v1441 = vtanh.pop %v1427
    %v1442 = vxor.u32 %v1428, 2147483648
    %v1443 = vmul.f32 %v1442, 1.442695
    %v1444 = vpow.pop %v1443
    %v1445 = vadd.f32 %v1444, 1.0
    %v1446 = vrcp.pop %v1445
    %v1447 = vmul.f32 1.0, %v1446
    %v1448 = vmul.f32 %v1440, %v1210
    %v1449 = vmul.f32 %v1434, %v1441
    %v1450 = vadd.f32 %v1448, %v1449
    %v1451 = vtanh.pop %v1450
    %v1452 = vmul.f32 %v1447, %v1451
    %s1453 = scalar_lea.vmem %s1, 32
    %v1454 = vld [vmem:[%s1453] sm:$0xff]
    %vm1455 = vcmp.gt.f32.partialorder %v1454, 0.0
    %v1456 = vsel %vm1455, 1, 0
    %1457 = vset.pattern.permute.xlu0 0
    %1458 = vperm.xlu0 %1457, %v1456
    %v1459 = vpop.permute.xlu0 %1458
    %vm1460 = vcmp.eq.s32.totalorder %v1459, 1
    %v1461 = vsel %vm1460, %v1452, %v1209
    %v1462 = vsel %vm1460, %v1450, %v1210
    %v1463 = vld [vmem:[%s1337] sm:$0xff]
    %v1464 = vld [vmem:[%s1337 + $0x8] sm:$0xff]
    %v1465 = vld [vmem:[%s1337 + $0x10] sm:$0xff]
    %v1466 = vld [vmem:[%s1337 + $0x18] sm:$0xff]
    %v1467 = vpack.c.bf16 %v1335, %v1335
    %1468 = vmatprep.subr.bf16.mxu0 %v240
    %1469 = vmatpush1.bf16.msra.mxu0 %v239
    %1470 = vmatprep.subr.bf16.mxu0 %v244
    %1471 = vmatpush1.bf16.msra.mxu0 %v243
    %1472 = vmatprep.subr.bf16.mxu0 %v248
    %1473 = vmatpush1.bf16.msra.mxu0 %v247
    %1474 = vmatprep.subr.bf16.mxu0 %v252
    %1475 = vmatpush1.bf16.msra.mxu0 %v251
    %1476 = vmatprep.subr.bf16.mxu0 %v256
    %1477 = vmatpush1.bf16.msra.mxu0 %v255
    %1478 = vmatprep.subr.bf16.mxu0 %v260
    %1479 = vmatpush1.bf16.msra.mxu0 %v259
    %1480 = vmatprep.subr.bf16.mxu0 %v264
    %1481 = vmatpush1.bf16.msra.mxu0 %v263
    %1482 = vmatprep.subr.bf16.mxu0 %v268
    %1483 = vmatpush1.bf16.msra.mxu0 %v267
    %1484 = vmatprep.subr.bf16.mxu0 0
    %1485 = vmatpush1.bf16.msra.mxu0 0
    %1486 = vmatprep.subr.bf16.mxu0 0
    %1487 = vmatpush1.bf16.msra.mxu0 0
    %1488 = vmatprep.subr.bf16.mxu0 0
    %1489 = vmatpush1.bf16.msra.mxu0 0
    %1490 = vmatprep.subr.bf16.mxu0 0
    %1491 = vmatpush1.bf16.msra.mxu0 0
    %1492 = vmatprep.subr.bf16.mxu0 0
    %1493 = vmatpush1.bf16.msra.mxu0 0
    %1494 = vmatprep.subr.bf16.mxu0 0
    %1495 = vmatpush1.bf16.msra.mxu0 0
    %1496 = vmatprep.subr.bf16.mxu0 0
    %1497 = vmatpush1.bf16.msra.mxu0 0
    %1498 = vmatprep.subr.bf16.mxu0 0
    %1499 = vmatpush1.bf16.msra.mxu0 0
    %1500 = vmatprep.mubr.bf16.mxu0 0
    %1501 = vmatmul.mubr.bf16.gmra.mrb[0].mxu0 %v1467
    %v1502 = vpop.f32.mrb[0].mxu0
    %v1503 = vadd.f32 0.0, %v1502
    %v1504 = vpop.f32.mrb[0].mxu0
    %v1505 = vadd.f32 0.0, %v1504
    %v1506 = vpop.f32.mrb[0].mxu0
    %v1507 = vpop.f32.mrb[0].mxu0
    %1508 = vdwg.mxu0
    %1509 = vmatprep.subr.bf16.mxu0 %v242
    %1510 = vmatpush1.bf16.msra.mxu0 %v241
    %1511 = vmatprep.subr.bf16.mxu0 %v246
    %1512 = vmatpush1.bf16.msra.mxu0 %v245
    %1513 = vmatprep.subr.bf16.mxu0 %v250
    %1514 = vmatpush1.bf16.msra.mxu0 %v249
    %1515 = vmatprep.subr.bf16.mxu0 %v254
    %1516 = vmatpush1.bf16.msra.mxu0 %v253
    %1517 = vmatprep.subr.bf16.mxu0 %v258
    %1518 = vmatpush1.bf16.msra.mxu0 %v257
    %1519 = vmatprep.subr.bf16.mxu0 %v262
    %1520 = vmatpush1.bf16.msra.mxu0 %v261
    %1521 = vmatprep.subr.bf16.mxu0 %v266
    %1522 = vmatpush1.bf16.msra.mxu0 %v265
    %1523 = vmatprep.subr.bf16.mxu0 %v270
    %1524 = vmatpush1.bf16.msra.mxu0 %v269
    %1525 = vmatprep.subr.bf16.mxu0 0
    %1526 = vmatpush1.bf16.msra.mxu0 0
    %1527 = vmatprep.subr.bf16.mxu0 0
    %1528 = vmatpush1.bf16.msra.mxu0 0
    %1529 = vmatprep.subr.bf16.mxu0 0
    %1530 = vmatpush1.bf16.msra.mxu0 0
    %1531 = vmatprep.subr.bf16.mxu0 0
    %1532 = vmatpush1.bf16.msra.mxu0 0
    %1533 = vmatprep.subr.bf16.mxu0 0
    %1534 = vmatpush1.bf16.msra.mxu0 0
    %1535 = vmatprep.subr.bf16.mxu0 0
    %1536 = vmatpush1.bf16.msra.mxu0 0
    %1537 = vmatprep.subr.bf16.mxu0 0
    %1538 = vmatpush1.bf16.msra.mxu0 0
    %1539 = vmatprep.subr.bf16.mxu0 0
    %1540 = vmatpush1.bf16.msra.mxu0 0
    %1541 = vmatprep.mubr.bf16.mxu0 0
    %1542 = vmatmul.mubr.bf16.gmra.mrb[0].mxu0 %v1467
    %v1543 = vpop.f32.mrb[0].mxu0
    %v1544 = vadd.f32 0.0, %v1543
    %v1545 = vpop.f32.mrb[0].mxu0
    %v1546 = vadd.f32 0.0, %v1545
    %v1547 = vpop.f32.mrb[0].mxu0
    %v1548 = vpop.f32.mrb[0].mxu0
    %1549 = vdwg.mxu0
    %v1550 = vadd.f32 %v1463, %v1503
    %v1551 = vadd.f32 %v1464, %v1505
    %v1552 = vadd.f32 %v1465, %v1544
    %v1553 = vadd.f32 %v1466, %v1546
    %v1554 = vxor.u32 %v1550, 2147483648
    %v1555 = vmul.f32 %v1554, 1.442695
    %v1556 = vpow.pop %v1555
    %v1557 = vadd.f32 %v1556, 1.0
    %v1558 = vrcp.pop %v1557
    %v1559 = vmul.f32 1.0, %v1558
    %v1560 = vxor.u32 %v1551, 2147483648
    %v1561 = vmul.f32 %v1560, 1.442695
    %v1562 = vpow.pop %v1561
    %v1563 = vadd.f32 %v1562, 1.0
    %v1564 = vrcp.pop %v1563
    %v1565 = vmul.f32 1.0, %v1564
    %v1566 = vtanh.pop %v1552
    %v1567 = vxor.u32 %v1553, 2147483648
    %v1568 = vmul.f32 %v1567, 1.442695
    %v1569 = vpow.pop %v1568
    %v1570 = vadd.f32 %v1569, 1.0
    %v1571 = vrcp.pop %v1570
    %v1572 = vmul.f32 1.0, %v1571
    %v1573 = vmul.f32 %v1565, %v1336
    %v1574 = vmul.f32 %v1559, %v1566
    %v1575 = vadd.f32 %v1573, %v1574
    %v1576 = vtanh.pop %v1575
    %v1577 = vmul.f32 %v1572, %v1576
    %v1578 = vsel %vm1460, %v1577, %v1335
    %v1579 = vsel %vm1460, %v1575, %v1336
    %v1580 = vld [vmem:[%s1211 + $0x20] sm:$0xff]
    %v1581 = vld [vmem:[%s1211 + $0x28] sm:$0xff]
    %v1582 = vld [vmem:[%s1211 + $0x30] sm:$0xff]
    %v1583 = vld [vmem:[%s1211 + $0x38] sm:$0xff]
    %v1584 = vpack.c.bf16 %v1461, %v1461
    %1585 = vmatprep.subr.bf16.mxu0 %v524
    %1586 = vmatpush1.bf16.msra.mxu0 %v523
    %1587 = vmatprep.subr.bf16.mxu0 %v528
    %1588 = vmatpush1.bf16.msra.mxu0 %v527
    %1589 = vmatprep.subr.bf16.mxu0 %v532
    %1590 = vmatpush1.bf16.msra.mxu0 %v531
    %1591 = vmatprep.subr.bf16.mxu0 %v536
    %1592 = vmatpush1.bf16.msra.mxu0 %v535
    %1593 = vmatprep.subr.bf16.mxu0 %v540
    %1594 = vmatpush1.bf16.msra.mxu0 %v539
    %1595 = vmatprep.subr.bf16.mxu0 %v544
    %1596 = vmatpush1.bf16.msra.mxu0 %v543
    %1597 = vmatprep.subr.bf16.mxu0 %v548
    %1598 = vmatpush1.bf16.msra.mxu0 %v547
    %1599 = vmatprep.subr.bf16.mxu0 %v552
    %1600 = vmatpush1.bf16.msra.mxu0 %v551
    %1601 = vmatprep.subr.bf16.mxu0 0
    %1602 = vmatpush1.bf16.msra.mxu0 0
    %1603 = vmatprep.subr.bf16.mxu0 0
    %1604 = vmatpush1.bf16.msra.mxu0 0
    %1605 = vmatprep.subr.bf16.mxu0 0
    %1606 = vmatpush1.bf16.msra.mxu0 0
    %1607 = vmatprep.subr.bf16.mxu0 0
    %1608 = vmatpush1.bf16.msra.mxu0 0
    %1609 = vmatprep.subr.bf16.mxu0 0
    %1610 = vmatpush1.bf16.msra.mxu0 0
    %1611 = vmatprep.subr.bf16.mxu0 0
    %1612 = vmatpush1.bf16.msra.mxu0 0
    %1613 = vmatprep.subr.bf16.mxu0 0
    %1614 = vmatpush1.bf16.msra.mxu0 0
    %1615 = vmatprep.subr.bf16.mxu0 0
    %1616 = vmatpush1.bf16.msra.mxu0 0
    %1617 = vmatprep.mubr.bf16.mxu0 0
    %1618 = vmatmul.mubr.bf16.gmra.mrb[0].mxu0 %v1584
    %v1619 = vpop.f32.mrb[0].mxu0
    %v1620 = vadd.f32 0.0, %v1619
    %v1621 = vpop.f32.mrb[0].mxu0
    %v1622 = vadd.f32 0.0, %v1621
    %v1623 = vpop.f32.mrb[0].mxu0
    %v1624 = vpop.f32.mrb[0].mxu0
    %1625 = vdwg.mxu0
    %1626 = vmatprep.subr.bf16.mxu0 %v526
    %1627 = vmatpush1.bf16.msra.mxu0 %v525
    %1628 = vmatprep.subr.bf16.mxu0 %v530
    %1629 = vmatpush1.bf16.msra.mxu0 %v529
    %1630 = vmatprep.subr.bf16.mxu0 %v534
    %1631 = vmatpush1.bf16.msra.mxu0 %v533
    %1632 = vmatprep.subr.bf16.mxu0 %v538
    %1633 = vmatpush1.bf16.msra.mxu0 %v537
    %1634 = vmatprep.subr.bf16.mxu0 %v542
    %1635 = vmatpush1.bf16.msra.mxu0 %v541
    %1636 = vmatprep.subr.bf16.mxu0 %v546
    %1637 = vmatpush1.bf16.msra.mxu0 %v545
    %1638 = vmatprep.subr.bf16.mxu0 %v550
    %1639 = vmatpush1.bf16.msra.mxu0 %v549
    %1640 = vmatprep.subr.bf16.mxu0 %v554
    %1641 = vmatpush1.bf16.msra.mxu0 %v553
    %1642 = vmatprep.subr.bf16.mxu0 0
    %1643 = vmatpush1.bf16.msra.mxu0 0
    %1644 = vmatprep.subr.bf16.mxu0 0
    %1645 = vmatpush1.bf16.msra.mxu0 0
    %1646 = vmatprep.subr.bf16.mxu0 0
    %1647 = vmatpush1.bf16.msra.mxu0 0
    %1648 = vmatprep.subr.bf16.mxu0 0
    %1649 = vmatpush1.bf16.msra.mxu0 0
    %1650 = vmatprep.subr.bf16.mxu0 0
    %1651 = vmatpush1.bf16.msra.mxu0 0
    %1652 = vmatprep.subr.bf16.mxu0 0
    %1653 = vmatpush1.bf16.msra.mxu0 0
    %1654 = vmatprep.subr.bf16.mxu0 0
    %1655 = vmatpush1.bf16.msra.mxu0 0
    %1656 = vmatprep.subr.bf16.mxu0 0
    %1657 = vmatpush1.bf16.msra.mxu0 0
    %1658 = vmatprep.mubr.bf16.mxu0 0
    %1659 = vmatmul.mubr.bf16.gmra.mrb[0].mxu0 %v1584
    %v1660 = vpop.f32.mrb[0].mxu0
    %v1661 = vadd.f32 0.0, %v1660
    %v1662 = vpop.f32.mrb[0].mxu0
    %v1663 = vadd.f32 0.0, %v1662
    %v1664 = vpop.f32.mrb[0].mxu0
    %v1665 = vpop.f32.mrb[0].mxu0
    %1666 = vdwg.mxu0
    %v1667 = vadd.f32 %v1580, %v1620
    %v1668 = vadd.f32 %v1581, %v1622
    %v1669 = vadd.f32 %v1582, %v1661
    %v1670 = vadd.f32 %v1583, %v1663
    %v1671 = vxor.u32 %v1667, 2147483648
    %v1672 = vmul.f32 %v1671, 1.442695
    %v1673 = vpow.pop %v1672
    %v1674 = vadd.f32 %v1673, 1.0
    %v1675 = vrcp.pop %v1674
    %v1676 = vmul.f32 1.0, %v1675
    %v1677 = vxor.u32 %v1668, 2147483648
    %v1678 = vmul.f32 %v1677, 1.442695
    %v1679 = vpow.pop %v1678
    %v1680 = vadd.f32 %v1679, 1.0
    %v1681 = vrcp.pop %v1680
    %v1682 = vmul.f32 1.0, %v1681
    %v1683 = vtanh.pop %v1669
    %v1684 = vxor.u32 %v1670, 2147483648
    %v1685 = vmul.f32 %v1684, 1.442695
    %v1686 = vpow.pop %v1685
    %v1687 = vadd.f32 %v1686, 1.0
    %v1688 = vrcp.pop %v1687
    %v1689 = vmul.f32 1.0, %v1688
    %v1690 = vmul.f32 %v1682, %v1462
    %v1691 = vmul.f32 %v1676, %v1683
    %v1692 = vadd.f32 %v1690, %v1691
    %v1693 = vtanh.pop %v1692
    %v1694 = vmul.f32 %v1689, %v1693
    %v1695 = vsel %vm1334, %v1694, %v1461
    %v1696 = vsel %vm1334, %v1692, %v1462
    %v1697 = vld [vmem:[%s1085] sm:$0xff]
    %v1698 = vld [vmem:[%s1085 + $0x8] sm:$0xff]
    %v1699 = vld [vmem:[%s1085 + $0x10] sm:$0xff]
    %v1700 = vld [vmem:[%s1085 + $0x18] sm:$0xff]
    %v1701 = vpack.c.bf16 %v1578, %v1578
    %1702 = vmatprep.subr.bf16.mxu0 %v240
    %1703 = vmatpush1.bf16.msra.mxu0 %v239
    %1704 = vmatprep.subr.bf16.mxu0 %v244
    %1705 = vmatpush1.bf16.msra.mxu0 %v243
    %1706 = vmatprep.subr.bf16.mxu0 %v248
    %1707 = vmatpush1.bf16.msra.mxu0 %v247
    %1708 = vmatprep.subr.bf16.mxu0 %v252
    %1709 = vmatpush1.bf16.msra.mxu0 %v251
    %1710 = vmatprep.subr.bf16.mxu0 %v256
    %1711 = vmatpush1.bf16.msra.mxu0 %v255
    %1712 = vmatprep.subr.bf16.mxu0 %v260
    %1713 = vmatpush1.bf16.msra.mxu0 %v259
    %1714 = vmatprep.subr.bf16.mxu0 %v264
    %1715 = vmatpush1.bf16.msra.mxu0 %v263
    %1716 = vmatprep.subr.bf16.mxu0 %v268
    %1717 = vmatpush1.bf16.msra.mxu0 %v267
    %1718 = vmatprep.subr.bf16.mxu0 0
    %1719 = vmatpush1.bf16.msra.mxu0 0
    %1720 = vmatprep.subr.bf16.mxu0 0
    %1721 = vmatpush1.bf16.msra.mxu0 0
    %1722 = vmatprep.subr.bf16.mxu0 0
    %1723 = vmatpush1.bf16.msra.mxu0 0
    %1724 = vmatprep.subr.bf16.mxu0 0
    %1725 = vmatpush1.bf16.msra.mxu0 0
    %1726 = vmatprep.subr.bf16.mxu0 0
    %1727 = vmatpush1.bf16.msra.mxu0 0
    %1728 = vmatprep.subr.bf16.mxu0 0
    %1729 = vmatpush1.bf16.msra.mxu0 0
    %1730 = vmatprep.subr.bf16.mxu0 0
    %1731 = vmatpush1.bf16.msra.mxu0 0
    %1732 = vmatprep.subr.bf16.mxu0 0
    %1733 = vmatpush1.bf16.msra.mxu0 0
    %1734 = vmatprep.mubr.bf16.mxu0 0
    %1735 = vmatmul.mubr.bf16.gmra.mrb[0].mxu0 %v1701
    %v1736 = vpop.f32.mrb[0].mxu0
    %v1737 = vadd.f32 0.0, %v1736
    %v1738 = vpop.f32.mrb[0].mxu0
    %v1739 = vadd.f32 0.0, %v1738
    %v1740 = vpop.f32.mrb[0].mxu0
    %v1741 = vpop.f32.mrb[0].mxu0
    %1742 = vdwg.mxu0
    %1743 = vmatprep.subr.bf16.mxu0 %v242
    %1744 = vmatpush1.bf16.msra.mxu0 %v241
    %1745 = vmatprep.subr.bf16.mxu0 %v246
    %1746 = vmatpush1.bf16.msra.mxu0 %v245
    %1747 = vmatprep.subr.bf16.mxu0 %v250
    %1748 = vmatpush1.bf16.msra.mxu0 %v249
    %1749 = vmatprep.subr.bf16.mxu0 %v254
    %1750 = vmatpush1.bf16.msra.mxu0 %v253
    %1751 = vmatprep.subr.bf16.mxu0 %v258
    %1752 = vmatpush1.bf16.msra.mxu0 %v257
    %1753 = vmatprep.subr.bf16.mxu0 %v262
    %1754 = vmatpush1.bf16.msra.mxu0 %v261
    %1755 = vmatprep.subr.bf16.mxu0 %v266
    %1756 = vmatpush1.bf16.msra.mxu0 %v265
    %1757 = vmatprep.subr.bf16.mxu0 %v270
    %1758 = vmatpush1.bf16.msra.mxu0 %v269
    %1759 = vmatprep.subr.bf16.mxu0 0
    %1760 = vmatpush1.bf16.msra.mxu0 0
    %1761 = vmatprep.subr.bf16.mxu0 0
    %1762 = vmatpush1.bf16.msra.mxu0 0
    %1763 = vmatprep.subr.bf16.mxu0 0
    %1764 = vmatpush1.bf16.msra.mxu0 0
    %1765 = vmatprep.subr.bf16.mxu0 0
    %1766 = vmatpush1.bf16.msra.mxu0 0
    %1767 = vmatprep.subr.bf16.mxu0 0
    %1768 = vmatpush1.bf16.msra.mxu0 0
    %1769 = vmatprep.subr.bf16.mxu0 0
    %1770 = vmatpush1.bf16.msra.mxu0 0
    %1771 = vmatprep.subr.bf16.mxu0 0
    %1772 = vmatpush1.bf16.msra.mxu0 0
    %1773 = vmatprep.subr.bf16.mxu0 0
    %1774 = vmatpush1.bf16.msra.mxu0 0
    %1775 = vmatprep.mubr.bf16.mxu0 0
    %1776 = vmatmul.mubr.bf16.gmra.mrb[0].mxu0 %v1701
    %v1777 = vpop.f32.mrb[0].mxu0
    %v1778 = vadd.f32 0.0, %v1777
    %v1779 = vpop.f32.mrb[0].mxu0
    %v1780 = vadd.f32 0.0, %v1779
    %v1781 = vpop.f32.mrb[0].mxu0
    %v1782 = vpop.f32.mrb[0].mxu0
    %1783 = vdwg.mxu0
    %v1784 = vadd.f32 %v1697, %v1737
    %v1785 = vadd.f32 %v1698, %v1739
    %v1786 = vadd.f32 %v1699, %v1778
    %v1787 = vadd.f32 %v1700, %v1780
    %v1788 = vxor.u32 %v1784, 2147483648
    %v1789 = vmul.f32 %v1788, 1.442695
    %v1790 = vpow.pop %v1789
    %v1791 = vadd.f32 %v1790, 1.0
    %v1792 = vrcp.pop %v1791
    %v1793 = vmul.f32 1.0, %v1792
    %v1794 = vxor.u32 %v1785, 2147483648
    %v1795 = vmul.f32 %v1794, 1.442695
    %v1796 = vpow.pop %v1795
    %v1797 = vadd.f32 %v1796, 1.0
    %v1798 = vrcp.pop %v1797
    %v1799 = vmul.f32 1.0, %v1798
    %v1800 = vtanh.pop %v1786
    %v1801 = vxor.u32 %v1787, 2147483648
    %v1802 = vmul.f32 %v1801, 1.442695
    %v1803 = vpow.pop %v1802
    %v1804 = vadd.f32 %v1803, 1.0
    %v1805 = vrcp.pop %v1804
    %v1806 = vmul.f32 1.0, %v1805
    %v1807 = vmul.f32 %v1799, %v1579
    %v1808 = vmul.f32 %v1793, %v1800
    %v1809 = vadd.f32 %v1807, %v1808
    %v1810 = vtanh.pop %v1809
    %v1811 = vmul.f32 %v1806, %v1810
    %v1812 = vsel %vm1208, %v1811, %v1578
    %v1813 = vsel %vm1208, %v1809, %v1579
    %v1814 = vld [vmem:[%s959 + $0x20] sm:$0xff]
    %v1815 = vld [vmem:[%s959 + $0x28] sm:$0xff]
    %v1816 = vld [vmem:[%s959 + $0x30] sm:$0xff]
    %v1817 = vld [vmem:[%s959 + $0x38] sm:$0xff]
    %v1818 = vpack.c.bf16 %v1695, %v1695
    %1819 = vmatprep.subr.bf16.mxu0 %v524
    %1820 = vmatpush1.bf16.msra.mxu0 %v523
    %1821 = vmatprep.subr.bf16.mxu0 %v528
    %1822 = vmatpush1.bf16.msra.mxu0 %v527
    %1823 = vmatprep.subr.bf16.mxu0 %v532
    %1824 = vmatpush1.bf16.msra.mxu0 %v531
    %1825 = vmatprep.subr.bf16.mxu0 %v536
    %1826 = vmatpush1.bf16.msra.mxu0 %v535
    %1827 = vmatprep.subr.bf16.mxu0 %v540
    %1828 = vmatpush1.bf16.msra.mxu0 %v539
    %1829 = vmatprep.subr.bf16.mxu0 %v544
    %1830 = vmatpush1.bf16.msra.mxu0 %v543
    %1831 = vmatprep.subr.bf16.mxu0 %v548
    %1832 = vmatpush1.bf16.msra.mxu0 %v547
    %1833 = vmatprep.subr.bf16.mxu0 %v552
    %1834 = vmatpush1.bf16.msra.mxu0 %v551
    %1835 = vmatprep.subr.bf16.mxu0 0
    %1836 = vmatpush1.bf16.msra.mxu0 0
    %1837 = vmatprep.subr.bf16.mxu0 0
    %1838 = vmatpush1.bf16.msra.mxu0 0
    %1839 = vmatprep.subr.bf16.mxu0 0
    %1840 = vmatpush1.bf16.msra.mxu0 0
    %1841 = vmatprep.subr.bf16.mxu0 0
    %1842 = vmatpush1.bf16.msra.mxu0 0
    %1843 = vmatprep.subr.bf16.mxu0 0
    %1844 = vmatpush1.bf16.msra.mxu0 0
    %1845 = vmatprep.subr.bf16.mxu0 0
    %1846 = vmatpush1.bf16.msra.mxu0 0
    %1847 = vmatprep.subr.bf16.mxu0 0
    %1848 = vmatpush1.bf16.msra.mxu0 0
    %1849 = vmatprep.subr.bf16.mxu0 0
    %1850 = vmatpush1.bf16.msra.mxu0 0
    %1851 = vmatprep.mubr.bf16.mxu0 0
    %1852 = vmatmul.mubr.bf16.gmra.mrb[0].mxu0 %v1818
    %v1853 = vpop.f32.mrb[0].mxu0
    %v1854 = vadd.f32 0.0, %v1853
    %v1855 = vpop.f32.mrb[0].mxu0
    %v1856 = vadd.f32 0.0, %v1855
    %v1857 = vpop.f32.mrb[0].mxu0
    %v1858 = vpop.f32.mrb[0].mxu0
    %1859 = vdwg.mxu0
    %1860 = vmatprep.subr.bf16.mxu0 %v526
    %1861 = vmatpush1.bf16.msra.mxu0 %v525
    %1862 = vmatprep.subr.bf16.mxu0 %v530
    %1863 = vmatpush1.bf16.msra.mxu0 %v529
    %1864 = vmatprep.subr.bf16.mxu0 %v534
    %1865 = vmatpush1.bf16.msra.mxu0 %v533
    %1866 = vmatprep.subr.bf16.mxu0 %v538
    %1867 = vmatpush1.bf16.msra.mxu0 %v537
    %1868 = vmatprep.subr.bf16.mxu0 %v542
    %1869 = vmatpush1.bf16.msra.mxu0 %v541
    %1870 = vmatprep.subr.bf16.mxu0 %v546
    %1871 = vmatpush1.bf16.msra.mxu0 %v545
    %1872 = vmatprep.subr.bf16.mxu0 %v550
    %1873 = vmatpush1.bf16.msra.mxu0 %v549
    %1874 = vmatprep.subr.bf16.mxu0 %v554
    %1875 = vmatpush1.bf16.msra.mxu0 %v553
    %1876 = vmatprep.subr.bf16.mxu0 0
    %1877 = vmatpush1.bf16.msra.mxu0 0
    %1878 = vmatprep.subr.bf16.mxu0 0
    %1879 = vmatpush1.bf16.msra.mxu0 0
    %1880 = vmatprep.subr.bf16.mxu0 0
    %1881 = vmatpush1.bf16.msra.mxu0 0
    %1882 = vmatprep.subr.bf16.mxu0 0
    %1883 = vmatpush1.bf16.msra.mxu0 0
    %1884 = vmatprep.subr.bf16.mxu0 0
    %1885 = vmatpush1.bf16.msra.mxu0 0
    %1886 = vmatprep.subr.bf16.mxu0 0
    %1887 = vmatpush1.bf16.msra.mxu0 0
    %1888 = vmatprep.subr.bf16.mxu0 0
    %1889 = vmatpush1.bf16.msra.mxu0 0
    %1890 = vmatprep.subr.bf16.mxu0 0
    %1891 = vmatpush1.bf16.msra.mxu0 0
    %1892 = vmatprep.mubr.bf16.mxu0 0
    %1893 = vmatmul.mubr.bf16.gmra.mrb[0].mxu0 %v1818
    %v1894 = vpop.f32.mrb[0].mxu0
    %v1895 = vadd.f32 0.0, %v1894
    %v1896 = vpop.f32.mrb[0].mxu0
    %v1897 = vadd.f32 0.0, %v1896
    %v1898 = vpop.f32.mrb[0].mxu0
    %v1899 = vpop.f32.mrb[0].mxu0
    %1900 = vdwg.mxu0
    %v1901 = vadd.f32 %v1814, %v1854
    %v1902 = vadd.f32 %v1815, %v1856
    %v1903 = vadd.f32 %v1816, %v1895
    %v1904 = vadd.f32 %v1817, %v1897
    %v1905 = vxor.u32 %v1901, 2147483648
    %v1906 = vmul.f32 %v1905, 1.442695
    %v1907 = vpow.pop %v1906
    %v1908 = vadd.f32 %v1907, 1.0
    %v1909 = vrcp.pop %v1908
    %v1910 = vmul.f32 1.0, %v1909
    %v1911 = vxor.u32 %v1902, 2147483648
    %v1912 = vmul.f32 %v1911, 1.442695
    %v1913 = vpow.pop %v1912
    %v1914 = vadd.f32 %v1913, 1.0
    %v1915 = vrcp.pop %v1914
    %v1916 = vmul.f32 1.0, %v1915
    %v1917 = vtanh.pop %v1903
    %v1918 = vxor.u32 %v1904, 2147483648
    %v1919 = vmul.f32 %v1918, 1.442695
    %v1920 = vpow.pop %v1919
    %v1921 = vadd.f32 %v1920, 1.0
    %v1922 = vrcp.pop %v1921
    %v1923 = vmul.f32 1.0, %v1922
    %v1924 = vmul.f32 %v1916, %v1696
    %v1925 = vmul.f32 %v1910, %v1917
    %v1926 = vadd.f32 %v1924, %v1925
    %v1927 = vtanh.pop %v1926
    %v1928 = vmul.f32 %v1923, %v1927
    %v1929 = vsel %vm1082, %v1928, %v1695
    %v1930 = vsel %vm1082, %v1926, %v1696
    %v1931 = vld [vmem:[%s833] sm:$0xff]
    %v1932 = vld [vmem:[%s833 + $0x8] sm:$0xff]
    %v1933 = vld [vmem:[%s833 + $0x10] sm:$0xff]
    %v1934 = vld [vmem:[%s833 + $0x18] sm:$0xff]
    %v1935 = vpack.c.bf16 %v1812, %v1812
    %1936 = vmatprep.subr.bf16.mxu0 %v240
    %1937 = vmatpush1.bf16.msra.mxu0 %v239
    %1938 = vmatprep.subr.bf16.mxu0 %v244
    %1939 = vmatpush1.bf16.msra.mxu0 %v243
    %1940 = vmatprep.subr.bf16.mxu0 %v248
    %1941 = vmatpush1.bf16.msra.mxu0 %v247
    %1942 = vmatprep.subr.bf16.mxu0 %v252
    %1943 = vmatpush1.bf16.msra.mxu0 %v251
    %1944 = vmatprep.subr.bf16.mxu0 %v256
    %1945 = vmatpush1.bf16.msra.mxu0 %v255
    %1946 = vmatprep.subr.bf16.mxu0 %v260
    %1947 = vmatpush1.bf16.msra.mxu0 %v259
    %1948 = vmatprep.subr.bf16.mxu0 %v264
    %1949 = vmatpush1.bf16.msra.mxu0 %v263
    %1950 = vmatprep.subr.bf16.mxu0 %v268
    %1951 = vmatpush1.bf16.msra.mxu0 %v267
    %1952 = vmatprep.subr.bf16.mxu0 0
    %1953 = vmatpush1.bf16.msra.mxu0 0
    %1954 = vmatprep.subr.bf16.mxu0 0
    %1955 = vmatpush1.bf16.msra.mxu0 0
    %1956 = vmatprep.subr.bf16.mxu0 0
    %1957 = vmatpush1.bf16.msra.mxu0 0
    %1958 = vmatprep.subr.bf16.mxu0 0
    %1959 = vmatpush1.bf16.msra.mxu0 0
    %1960 = vmatprep.subr.bf16.mxu0 0
    %1961 = vmatpush1.bf16.msra.mxu0 0
    %1962 = vmatprep.subr.bf16.mxu0 0
    %1963 = vmatpush1.bf16.msra.mxu0 0
    %1964 = vmatprep.subr.bf16.mxu0 0
    %1965 = vmatpush1.bf16.msra.mxu0 0
    %1966 = vmatprep.subr.bf16.mxu0 0
    %1967 = vmatpush1.bf16.msra.mxu0 0
    %1968 = vmatprep.mubr.bf16.mxu0 0
    %1969 = vmatmul.mubr.bf16.gmra.mrb[0].mxu0 %v1935
    %v1970 = vpop.f32.mrb[0].mxu0
    %v1971 = vadd.f32 0.0, %v1970
    %v1972 = vpop.f32.mrb[0].mxu0
    %v1973 = vadd.f32 0.0, %v1972
    %v1974 = vpop.f32.mrb[0].mxu0
    %v1975 = vpop.f32.mrb[0].mxu0
    %1976 = vdwg.mxu0
    %1977 = vmatprep.subr.bf16.mxu0 %v242
    %1978 = vmatpush1.bf16.msra.mxu0 %v241
    %1979 = vmatprep.subr.bf16.mxu0 %v246
    %1980 = vmatpush1.bf16.msra.mxu0 %v245
    %1981 = vmatprep.subr.bf16.mxu0 %v250
    %1982 = vmatpush1.bf16.msra.mxu0 %v249
    %1983 = vmatprep.subr.bf16.mxu0 %v254
    %1984 = vmatpush1.bf16.msra.mxu0 %v253
    %1985 = vmatprep.subr.bf16.mxu0 %v258
    %1986 = vmatpush1.bf16.msra.mxu0 %v257
    %1987 = vmatprep.subr.bf16.mxu0 %v262
    %1988 = vmatpush1.bf16.msra.mxu0 %v261
    %1989 = vmatprep.subr.bf16.mxu0 %v266
    %1990 = vmatpush1.bf16.msra.mxu0 %v265
    %1991 = vmatprep.subr.bf16.mxu0 %v270
    %1992 = vmatpush1.bf16.msra.mxu0 %v269
    %1993 = vmatprep.subr.bf16.mxu0 0
    %1994 = vmatpush1.bf16.msra.mxu0 0
    %1995 = vmatprep.subr.bf16.mxu0 0
    %1996 = vmatpush1.bf16.msra.mxu0 0
    %1997 = vmatprep.subr.bf16.mxu0 0
    %1998 = vmatpush1.bf16.msra.mxu0 0
    %1999 = vmatprep.subr.bf16.mxu0 0
    %2000 = vmatpush1.bf16.msra.mxu0 0
    %2001 = vmatprep.subr.bf16.mxu0 0
    %2002 = vmatpush1.bf16.msra.mxu0 0
    %2003 = vmatprep.subr.bf16.mxu0 0
    %2004 = vmatpush1.bf16.msra.mxu0 0
    %2005 = vmatprep.subr.bf16.mxu0 0
    %2006 = vmatpush1.bf16.msra.mxu0 0
    %2007 = vmatprep.subr.bf16.mxu0 0
    %2008 = vmatpush1.bf16.msra.mxu0 0
    %2009 = vmatprep.mubr.bf16.mxu0 0
    %2010 = vmatmul.mubr.bf16.gmra.mrb[0].mxu0 %v1935
    %v2011 = vpop.f32.mrb[0].mxu0
    %v2012 = vadd.f32 0.0, %v2011
    %v2013 = vpop.f32.mrb[0].mxu0
    %v2014 = vadd.f32 0.0, %v2013
    %v2015 = vpop.f32.mrb[0].mxu0
    %v2016 = vpop.f32.mrb[0].mxu0
    %2017 = vdwg.mxu0
    %v2018 = vadd.f32 %v1931, %v1971
    %v2019 = vadd.f32 %v1932, %v1973
    %v2020 = vadd.f32 %v1933, %v2012
    %v2021 = vadd.f32 %v1934, %v2014
    %v2022 = vxor.u32 %v2018, 2147483648
    %v2023 = vmul.f32 %v2022, 1.442695
    %v2024 = vpow.pop %v2023
    %v2025 = vadd.f32 %v2024, 1.0
    %v2026 = vrcp.pop %v2025
    %v2027 = vmul.f32 1.0, %v2026
    %v2028 = vxor.u32 %v2019, 2147483648
    %v2029 = vmul.f32 %v2028, 1.442695
    %v2030 = vpow.pop %v2029
    %v2031 = vadd.f32 %v2030, 1.0
    %v2032 = vrcp.pop %v2031
    %v2033 = vmul.f32 1.0, %v2032
    %v2034 = vtanh.pop %v2020
    %v2035 = vxor.u32 %v2021, 2147483648
    %v2036 = vmul.f32 %v2035, 1.442695
    %v2037 = vpow.pop %v2036
    %v2038 = vadd.f32 %v2037, 1.0
    %v2039 = vrcp.pop %v2038
    %v2040 = vmul.f32 1.0, %v2039
    %v2041 = vmul.f32 %v2033, %v1813
    %v2042 = vmul.f32 %v2027, %v2034
    %v2043 = vadd.f32 %v2041, %v2042
    %v2044 = vtanh.pop %v2043
    %v2045 = vmul.f32 %v2040, %v2044
    %v2046 = vsel %vm956, %v2045, %v1812
    %v2047 = vsel %vm956, %v2043, %v1813
    %v2048 = vld [vmem:[%s707 + $0x20] sm:$0xff]
    %v2049 = vld [vmem:[%s707 + $0x28] sm:$0xff]
    %v2050 = vld [vmem:[%s707 + $0x30] sm:$0xff]
    %v2051 = vld [vmem:[%s707 + $0x38] sm:$0xff]
    %v2052 = vpack.c.bf16 %v1929, %v1929
    %2053 = vmatprep.subr.bf16.mxu0 %v524
    %2054 = vmatpush1.bf16.msra.mxu0 %v523
    %2055 = vmatprep.subr.bf16.mxu0 %v528
    %2056 = vmatpush1.bf16.msra.mxu0 %v527
    %2057 = vmatprep.subr.bf16.mxu0 %v532
    %2058 = vmatpush1.bf16.msra.mxu0 %v531
    %2059 = vmatprep.subr.bf16.mxu0 %v536
    %2060 = vmatpush1.bf16.msra.mxu0 %v535
    %2061 = vmatprep.subr.bf16.mxu0 %v540
    %2062 = vmatpush1.bf16.msra.mxu0 %v539
    %2063 = vmatprep.subr.bf16.mxu0 %v544
    %2064 = vmatpush1.bf16.msra.mxu0 %v543
    %2065 = vmatprep.subr.bf16.mxu0 %v548
    %2066 = vmatpush1.bf16.msra.mxu0 %v547
    %2067 = vmatprep.subr.bf16.mxu0 %v552
    %2068 = vmatpush1.bf16.msra.mxu0 %v551
    %2069 = vmatprep.subr.bf16.mxu0 0
    %2070 = vmatpush1.bf16.msra.mxu0 0
    %2071 = vmatprep.subr.bf16.mxu0 0
    %2072 = vmatpush1.bf16.msra.mxu0 0
    %2073 = vmatprep.subr.bf16.mxu0 0
    %2074 = vmatpush1.bf16.msra.mxu0 0
    %2075 = vmatprep.subr.bf16.mxu0 0
    %2076 = vmatpush1.bf16.msra.mxu0 0
    %2077 = vmatprep.subr.bf16.mxu0 0
    %2078 = vmatpush1.bf16.msra.mxu0 0
    %2079 = vmatprep.subr.bf16.mxu0 0
    %2080 = vmatpush1.bf16.msra.mxu0 0
    %2081 = vmatprep.subr.bf16.mxu0 0
    %2082 = vmatpush1.bf16.msra.mxu0 0
    %2083 = vmatprep.subr.bf16.mxu0 0
    %2084 = vmatpush1.bf16.msra.mxu0 0
    %2085 = vmatprep.mubr.bf16.mxu0 0
    %2086 = vmatmul.mubr.bf16.gmra.mrb[0].mxu0 %v2052
    %v2087 = vpop.f32.mrb[0].mxu0
    %v2088 = vadd.f32 0.0, %v2087
    %v2089 = vpop.f32.mrb[0].mxu0
    %v2090 = vadd.f32 0.0, %v2089
    %v2091 = vpop.f32.mrb[0].mxu0
    %v2092 = vpop.f32.mrb[0].mxu0
    %2093 = vdwg.mxu0
    %2094 = vmatprep.subr.bf16.mxu0 %v526
    %2095 = vmatpush1.bf16.msra.mxu0 %v525
    %2096 = vmatprep.subr.bf16.mxu0 %v530
    %2097 = vmatpush1.bf16.msra.mxu0 %v529
    %2098 = vmatprep.subr.bf16.mxu0 %v534
    %2099 = vmatpush1.bf16.msra.mxu0 %v533
    %2100 = vmatprep.subr.bf16.mxu0 %v538
    %2101 = vmatpush1.bf16.msra.mxu0 %v537
    %2102 = vmatprep.subr.bf16.mxu0 %v542
    %2103 = vmatpush1.bf16.msra.mxu0 %v541
    %2104 = vmatprep.subr.bf16.mxu0 %v546
    %2105 = vmatpush1.bf16.msra.mxu0 %v545
    %2106 = vmatprep.subr.bf16.mxu0 %v550
    %2107 = vmatpush1.bf16.msra.mxu0 %v549
    %2108 = vmatprep.subr.bf16.mxu0 %v554
    %2109 = vmatpush1.bf16.msra.mxu0 %v553
    %2110 = vmatprep.subr.bf16.mxu0 0
    %2111 = vmatpush1.bf16.msra.mxu0 0
    %2112 = vmatprep.subr.bf16.mxu0 0
    %2113 = vmatpush1.bf16.msra.mxu0 0
    %2114 = vmatprep.subr.bf16.mxu0 0
    %2115 = vmatpush1.bf16.msra.mxu0 0
    %2116 = vmatprep.subr.bf16.mxu0 0
    %2117 = vmatpush1.bf16.msra.mxu0 0
    %2118 = vmatprep.subr.bf16.mxu0 0
    %2119 = vmatpush1.bf16.msra.mxu0 0
    %2120 = vmatprep.subr.bf16.mxu0 0
    %2121 = vmatpush1.bf16.msra.mxu0 0
    %2122 = vmatprep.subr.bf16.mxu0 0
    %2123 = vmatpush1.bf16.msra.mxu0 0
    %2124 = vmatprep.subr.bf16.mxu0 0
    %2125 = vmatpush1.bf16.msra.mxu0 0
    %2126 = vmatprep.mubr.bf16.mxu0 0
    %2127 = vmatmul.mubr.bf16.gmra.mrb[0].mxu0 %v2052
    %v2128 = vpop.f32.mrb[0].mxu0
    %v2129 = vadd.f32 0.0, %v2128
    %v2130 = vpop.f32.mrb[0].mxu0
    %v2131 = vadd.f32 0.0, %v2130
    %v2132 = vpop.f32.mrb[0].mxu0
    %v2133 = vpop.f32.mrb[0].mxu0
    %2134 = vdwg.mxu0
    %v2135 = vadd.f32 %v2048, %v2088
    %v2136 = vadd.f32 %v2049, %v2090
    %v2137 = vadd.f32 %v2050, %v2129
    %v2138 = vadd.f32 %v2051, %v2131
    %v2139 = vxor.u32 %v2135, 2147483648
    %v2140 = vmul.f32 %v2139, 1.442695
    %v2141 = vpow.pop %v2140
    %v2142 = vadd.f32 %v2141, 1.0
    %v2143 = vrcp.pop %v2142
    %v2144 = vmul.f32 1.0, %v2143
    %v2145 = vxor.u32 %v2136, 2147483648
    %v2146 = vmul.f32 %v2145, 1.442695
    %v2147 = vpow.pop %v2146
    %v2148 = vadd.f32 %v2147, 1.0
    %v2149 = vrcp.pop %v2148
    %v2150 = vmul.f32 1.0, %v2149
    %v2151 = vtanh.pop %v2137
    %v2152 = vxor.u32 %v2138, 2147483648
    %v2153 = vmul.f32 %v2152, 1.442695
    %v2154 = vpow.pop %v2153
    %v2155 = vadd.f32 %v2154, 1.0
    %v2156 = vrcp.pop %v2155
    %v2157 = vmul.f32 1.0, %v2156
    %v2158 = vmul.f32 %v2150, %v1930
    %v2159 = vmul.f32 %v2144, %v2151
    %v2160 = vadd.f32 %v2158, %v2159
    %v2161 = vtanh.pop %v2160
    %v2162 = vmul.f32 %v2157, %v2161
    %v2163 = vsel %vm830, %v2162, %v1929
    %v2164 = vsel %vm830, %v2160, %v1930
    %v2165 = vld [vmem:[%s422] sm:$0xff]
    %v2166 = vld [vmem:[%s422 + $0x8] sm:$0xff]
    %v2167 = vld [vmem:[%s422 + $0x10] sm:$0xff]
    %v2168 = vld [vmem:[%s422 + $0x18] sm:$0xff]
    %v2169 = vpack.c.bf16 %v2046, %v2046
    %2170 = vmatprep.subr.bf16.mxu0 %v240
    %2171 = vmatpush1.bf16.msra.mxu0 %v239
    %2172 = vmatprep.subr.bf16.mxu0 %v244
    %2173 = vmatpush1.bf16.msra.mxu0 %v243
    %2174 = vmatprep.subr.bf16.mxu0 %v248
    %2175 = vmatpush1.bf16.msra.mxu0 %v247
    %2176 = vmatprep.subr.bf16.mxu0 %v252
    %2177 = vmatpush1.bf16.msra.mxu0 %v251
    %2178 = vmatprep.subr.bf16.mxu0 %v256
    %2179 = vmatpush1.bf16.msra.mxu0 %v255
    %2180 = vmatprep.subr.bf16.mxu0 %v260
    %2181 = vmatpush1.bf16.msra.mxu0 %v259
    %2182 = vmatprep.subr.bf16.mxu0 %v264
    %2183 = vmatpush1.bf16.msra.mxu0 %v263
    %2184 = vmatprep.subr.bf16.mxu0 %v268
    %2185 = vmatpush1.bf16.msra.mxu0 %v267
    %2186 = vmatprep.subr.bf16.mxu0 0
    %2187 = vmatpush1.bf16.msra.mxu0 0
    %2188 = vmatprep.subr.bf16.mxu0 0
    %2189 = vmatpush1.bf16.msra.mxu0 0
    %2190 = vmatprep.subr.bf16.mxu0 0
    %2191 = vmatpush1.bf16.msra.mxu0 0
    %2192 = vmatprep.subr.bf16.mxu0 0
    %2193 = vmatpush1.bf16.msra.mxu0 0
    %2194 = vmatprep.subr.bf16.mxu0 0
    %2195 = vmatpush1.bf16.msra.mxu0 0
    %2196 = vmatprep.subr.bf16.mxu0 0
    %2197 = vmatpush1.bf16.msra.mxu0 0
    %2198 = vmatprep.subr.bf16.mxu0 0
    %2199 = vmatpush1.bf16.msra.mxu0 0
    %2200 = vmatprep.subr.bf16.mxu0 0
    %2201 = vmatpush1.bf16.msra.mxu0 0
    %2202 = vmatprep.mubr.bf16.mxu0 0
    %2203 = vmatmul.mubr.bf16.gmra.mrb[0].mxu0 %v2169
    %v2204 = vpop.f32.mrb[0].mxu0
    %v2205 = vadd.f32 0.0, %v2204
    %v2206 = vpop.f32.mrb[0].mxu0
    %v2207 = vadd.f32 0.0, %v2206
    %v2208 = vpop.f32.mrb[0].mxu0
    %v2209 = vpop.f32.mrb[0].mxu0
    %2210 = vdwg.mxu0
    %2211 = vmatprep.subr.bf16.mxu0 %v242
    %2212 = vmatpush1.bf16.msra.mxu0 %v241
    %2213 = vmatprep.subr.bf16.mxu0 %v246
    %2214 = vmatpush1.bf16.msra.mxu0 %v245
    %2215 = vmatprep.subr.bf16.mxu0 %v250
    %2216 = vmatpush1.bf16.msra.mxu0 %v249
    %2217 = vmatprep.subr.bf16.mxu0 %v254
    %2218 = vmatpush1.bf16.msra.mxu0 %v253
    %2219 = vmatprep.subr.bf16.mxu0 %v258
    %2220 = vmatpush1.bf16.msra.mxu0 %v257
    %2221 = vmatprep.subr.bf16.mxu0 %v262
    %2222 = vmatpush1.bf16.msra.mxu0 %v261
    %2223 = vmatprep.subr.bf16.mxu0 %v266
    %2224 = vmatpush1.bf16.msra.mxu0 %v265
    %2225 = vmatprep.subr.bf16.mxu0 %v270
    %2226 = vmatpush1.bf16.msra.mxu0 %v269
    %2227 = vmatprep.subr.bf16.mxu0 0
    %2228 = vmatpush1.bf16.msra.mxu0 0
    %2229 = vmatprep.subr.bf16.mxu0 0
    %2230 = vmatpush1.bf16.msra.mxu0 0
    %2231 = vmatprep.subr.bf16.mxu0 0
    %2232 = vmatpush1.bf16.msra.mxu0 0
    %2233 = vmatprep.subr.bf16.mxu0 0
    %2234 = vmatpush1.bf16.msra.mxu0 0
    %2235 = vmatprep.subr.bf16.mxu0 0
    %2236 = vmatpush1.bf16.msra.mxu0 0
    %2237 = vmatprep.subr.bf16.mxu0 0
    %2238 = vmatpush1.bf16.msra.mxu0 0
    %2239 = vmatprep.subr.bf16.mxu0 0
    %2240 = vmatpush1.bf16.msra.mxu0 0
    %2241 = vmatprep.subr.bf16.mxu0 0
    %2242 = vmatpush1.bf16.msra.mxu0 0
    %2243 = vmatprep.mubr.bf16.mxu0 0
    %2244 = vmatmul.mubr.bf16.gmra.mrb[0].mxu0 %v2169
    %v2245 = vpop.f32.mrb[0].mxu0
    %v2246 = vadd.f32 0.0, %v2245
    %v2247 = vpop.f32.mrb[0].mxu0
    %v2248 = vadd.f32 0.0, %v2247
    %v2249 = vpop.f32.mrb[0].mxu0
    %v2250 = vpop.f32.mrb[0].mxu0
    %2251 = vdwg.mxu0
    %v2252 = vadd.f32 %v2165, %v2205
    %v2253 = vadd.f32 %v2166, %v2207
    %v2254 = vadd.f32 %v2167, %v2246
    %v2255 = vadd.f32 %v2168, %v2248
    %v2256 = vxor.u32 %v2252, 2147483648
    %v2257 = vmul.f32 %v2256, 1.442695
    %v2258 = vpow.pop %v2257
    %v2259 = vadd.f32 %v2258, 1.0
    %v2260 = vrcp.pop %v2259
    %v2261 = vmul.f32 1.0, %v2260
    %v2262 = vxor.u32 %v2253, 2147483648
    %v2263 = vmul.f32 %v2262, 1.442695
    %v2264 = vpow.pop %v2263
    %v2265 = vadd.f32 %v2264, 1.0
    %v2266 = vrcp.pop %v2265
    %v2267 = vmul.f32 1.0, %v2266
    %v2268 = vtanh.pop %v2254
    %v2269 = vxor.u32 %v2255, 2147483648
    %v2270 = vmul.f32 %v2269, 1.442695
    %v2271 = vpow.pop %v2270
    %v2272 = vadd.f32 %v2271, 1.0
    %v2273 = vrcp.pop %v2272
    %v2274 = vmul.f32 1.0, %v2273
    %v2275 = vmul.f32 %v2267, %v2047
    %v2276 = vmul.f32 %v2261, %v2268
    %v2277 = vadd.f32 %v2275, %v2276
    %v2278 = vtanh.pop %v2277
    %v2279 = vmul.f32 %v2274, %v2278
    %v2280 = vsel %vm704, %v2279, %v2046
    %v2281 = vsel %vm704, %v2277, %v2047
    %v2282 = vld [vmem:[%s0 + $0x20] sm:$0xff]
    %v2283 = vld [vmem:[%s0 + $0x28] sm:$0xff]
    %v2284 = vld [vmem:[%s0 + $0x30] sm:$0xff]
    %v2285 = vld [vmem:[%s0 + $0x38] sm:$0xff]
    %v2286 = vpack.c.bf16 %v2163, %v2163
    %2287 = vmatprep.subr.bf16.mxu0 %v524
    %2288 = vmatpush1.bf16.msra.mxu0 %v523
    %2289 = vmatprep.subr.bf16.mxu0 %v528
    %2290 = vmatpush1.bf16.msra.mxu0 %v527
    %2291 = vmatprep.subr.bf16.mxu0 %v532
    %2292 = vmatpush1.bf16.msra.mxu0 %v531
    %2293 = vmatprep.subr.bf16.mxu0 %v536
    %2294 = vmatpush1.bf16.msra.mxu0 %v535
    %2295 = vmatprep.subr.bf16.mxu0 %v540
    %2296 = vmatpush1.bf16.msra.mxu0 %v539
    %2297 = vmatprep.subr.bf16.mxu0 %v544
    %2298 = vmatpush1.bf16.msra.mxu0 %v543
    %2299 = vmatprep.subr.bf16.mxu0 %v548
    %2300 = vmatpush1.bf16.msra.mxu0 %v547
    %2301 = vmatprep.subr.bf16.mxu0 %v552
    %2302 = vmatpush1.bf16.msra.mxu0 %v551
    %2303 = vmatprep.subr.bf16.mxu0 0
    %2304 = vmatpush1.bf16.msra.mxu0 0
    %2305 = vmatprep.subr.bf16.mxu0 0
    %2306 = vmatpush1.bf16.msra.mxu0 0
    %2307 = vmatprep.subr.bf16.mxu0 0
    %2308 = vmatpush1.bf16.msra.mxu0 0
    %2309 = vmatprep.subr.bf16.mxu0 0
    %2310 = vmatpush1.bf16.msra.mxu0 0
    %2311 = vmatprep.subr.bf16.mxu0 0
    %2312 = vmatpush1.bf16.msra.mxu0 0
    %2313 = vmatprep.subr.bf16.mxu0 0
    %2314 = vmatpush1.bf16.msra.mxu0 0
    %2315 = vmatprep.subr.bf16.mxu0 0
    %2316 = vmatpush1.bf16.msra.mxu0 0
    %2317 = vmatprep.subr.bf16.mxu0 0
    %2318 = vmatpush1.bf16.msra.mxu0 0
    %2319 = vmatprep.mubr.bf16.mxu0 0
    %2320 = vmatmul.mubr.bf16.gmra.mrb[0].mxu0 %v2286
    %v2321 = vpop.f32.mrb[0].mxu0
    %v2322 = vadd.f32 0.0, %v2321
    %v2323 = vpop.f32.mrb[0].mxu0
    %v2324 = vadd.f32 0.0, %v2323
    %v2325 = vpop.f32.mrb[0].mxu0
    %v2326 = vpop.f32.mrb[0].mxu0
    %2327 = vdwg.mxu0
    %2328 = vmatprep.subr.bf16.mxu0 %v526
    %2329 = vmatpush1.bf16.msra.mxu0 %v525
    %2330 = vmatprep.subr.bf16.mxu0 %v530
    %2331 = vmatpush1.bf16.msra.mxu0 %v529
    %2332 = vmatprep.subr.bf16.mxu0 %v534
    %2333 = vmatpush1.bf16.msra.mxu0 %v533
    %2334 = vmatprep.subr.bf16.mxu0 %v538
    %2335 = vmatpush1.bf16.msra.mxu0 %v537
    %2336 = vmatprep.subr.bf16.mxu0 %v542
    %2337 = vmatpush1.bf16.msra.mxu0 %v541
    %2338 = vmatprep.subr.bf16.mxu0 %v546
    %2339 = vmatpush1.bf16.msra.mxu0 %v545
    %2340 = vmatprep.subr.bf16.mxu0 %v550
    %2341 = vmatpush1.bf16.msra.mxu0 %v549
    %2342 = vmatprep.subr.bf16.mxu0 %v554
    %2343 = vmatpush1.bf16.msra.mxu0 %v553
    %2344 = vmatprep.subr.bf16.mxu0 0
    %2345 = vmatpush1.bf16.msra.mxu0 0
    %2346 = vmatprep.subr.bf16.mxu0 0
    %2347 = vmatpush1.bf16.msra.mxu0 0
    %2348 = vmatprep.subr.bf16.mxu0 0
    %2349 = vmatpush1.bf16.msra.mxu0 0
    %2350 = vmatprep.subr.bf16.mxu0 0
    %2351 = vmatpush1.bf16.msra.mxu0 0
    %2352 = vmatprep.subr.bf16.mxu0 0
    %2353 = vmatpush1.bf16.msra.mxu0 0
    %2354 = vmatprep.subr.bf16.mxu0 0
    %2355 = vmatpush1.bf16.msra.mxu0 0
    %2356 = vmatprep.subr.bf16.mxu0 0
    %2357 = vmatpush1.bf16.msra.mxu0 0
    %2358 = vmatprep.subr.bf16.mxu0 0
    %2359 = vmatpush1.bf16.msra.mxu0 0
    %2360 = vmatprep.mubr.bf16.mxu0 0
    %2361 = vmatmul.mubr.bf16.gmra.mrb[0].mxu0 %v2286
    %v2362 = vpop.f32.mrb[0].mxu0
    %v2363 = vadd.f32 0.0, %v2362
    %v2364 = vpop.f32.mrb[0].mxu0
    %v2365 = vadd.f32 0.0, %v2364
    %v2366 = vpop.f32.mrb[0].mxu0
    %v2367 = vpop.f32.mrb[0].mxu0
    %2368 = vdwg.mxu0
    %v2369 = vadd.f32 %v2282, %v2322
    %v2370 = vadd.f32 %v2283, %v2324
    %v2371 = vadd.f32 %v2284, %v2363
    %v2372 = vadd.f32 %v2285, %v2365
    %v2373 = vxor.u32 %v2369, 2147483648
    %v2374 = vmul.f32 %v2373, 1.442695
    %v2375 = vpow.pop %v2374
    %v2376 = vadd.f32 %v2375, 1.0
    %v2377 = vrcp.pop %v2376
    %v2378 = vmul.f32 1.0, %v2377
    %v2379 = vxor.u32 %v2370, 2147483648
    %v2380 = vmul.f32 %v2379, 1.442695
    %v2381 = vpow.pop %v2380
    %v2382 = vadd.f32 %v2381, 1.0
    %v2383 = vrcp.pop %v2382
    %v2384 = vmul.f32 1.0, %v2383
    %v2385 = vtanh.pop %v2371
    %v2386 = vxor.u32 %v2372, 2147483648
    %v2387 = vmul.f32 %v2386, 1.442695
    %v2388 = vpow.pop %v2387
    %v2389 = vadd.f32 %v2388, 1.0
    %v2390 = vrcp.pop %v2389
    %v2391 = vmul.f32 1.0, %v2390
    %v2392 = vmul.f32 %v2384, %v2164
    %v2393 = vmul.f32 %v2378, %v2385
    %v2394 = vadd.f32 %v2392, %v2393
    %v2395 = vtanh.pop %v2394
    %v2396 = vmul.f32 %v2391, %v2395
    %v2397 = vsel %vm419, %v2396, %v2163
    %v2398 = vsel %vm419, %v2394, %v2164
    %v2399 = vadd.f32 %v2280, %v2397
    %v2400 = vadd.f32 %v2281, %v2398
    %v2401 = vpack.c.bf16 %v2399, %v2399
    %v2402 = vld [vmem:[%s6] sm:$0xf]
    %v2403 = vld [vmem:[%s6 + $0x4] sm:$0xf]
    %v2404 = vld [vmem:[%s6 + $0x8] sm:$0xf]
    %v2405 = vld [vmem:[%s6 + $0xc] sm:$0xf]
    %v2406 = vld [vmem:[%s6 + $0x10] sm:$0xf]
    %v2407 = vld [vmem:[%s6 + $0x14] sm:$0xf]
    %v2408 = vld [vmem:[%s6 + $0x18] sm:$0xf]
    %v2409 = vld [vmem:[%s6 + $0x1c] sm:$0xf]
    %v2410 = vld [vmem:[%s6 + $0x20] sm:$0xf]
    %v2411 = vld [vmem:[%s6 + $0x24] sm:$0xf]
    %v2412 = vld [vmem:[%s6 + $0x28] sm:$0xf]
    %v2413 = vld [vmem:[%s6 + $0x2c] sm:$0xf]
    %v2414 = vld [vmem:[%s6 + $0x30] sm:$0xf]
    %v2415 = vld [vmem:[%s6 + $0x34] sm:$0xf]
    %v2416 = vld [vmem:[%s6 + $0x38] sm:$0xf]
    %v2417 = vld [vmem:[%s6 + $0x3c] sm:$0xf]
    %v2418 = vld [vmem:[%s7] sm:$0x1]
    %v2420 = vlaneseq
    %v2421 = vshrl.u32 %v2420, 7
    %v2422 = vsub.s32 0, %v2421
    %v2423 = vrot.slane %v2418, %v2422
    %v2441 = vunpack.c.l.b16 %v2402
    %v2442 = vunpack.c.l.b16 %v2403
    %v2443 = vunpack.c.l.b16 %v2404
    %v2444 = vunpack.c.l.b16 %v2405
    %v2445 = vunpack.c.l.b16 %v2406
    %v2446 = vunpack.c.l.b16 %v2407
    %v2447 = vunpack.c.l.b16 %v2408
    %v2448 = vunpack.c.l.b16 %v2409
    %v2449 = vunpack.c.l.b16 %v2410
    %v2450 = vunpack.c.l.b16 %v2411
    %v2451 = vunpack.c.l.b16 %v2412
    %v2452 = vunpack.c.l.b16 %v2413
    %v2453 = vunpack.c.l.b16 %v2414
    %v2454 = vunpack.c.l.b16 %v2415
    %v2455 = vunpack.c.l.b16 %v2416
    %v2456 = vunpack.c.l.b16 %v2417
    %v2457 = vpack.c.b16 %v2442, %v2441
    %v2458 = vpack.c.b16 %v2444, %v2443
    %v2459 = vpack.c.b16 %v2446, %v2445
    %v2460 = vpack.c.b16 %v2448, %v2447
    %v2461 = vpack.c.b16 %v2450, %v2449
    %v2462 = vpack.c.b16 %v2452, %v2451
    %v2463 = vpack.c.b16 %v2454, %v2453
    %v2464 = vpack.c.b16 %v2456, %v2455
    %2473 = vmatprep.subr.bf16.mxu0 0
    %2474 = vmatpush1.bf16.msra.mxu0 %v2457
    %2475 = vmatprep.subr.bf16.mxu0 0
    %2476 = vmatpush1.bf16.msra.mxu0 %v2458
    %2477 = vmatprep.subr.bf16.mxu0 0
    %2478 = vmatpush1.bf16.msra.mxu0 %v2459
    %2479 = vmatprep.subr.bf16.mxu0 0
    %2480 = vmatpush1.bf16.msra.mxu0 %v2460
    %2481 = vmatprep.subr.bf16.mxu0 0
    %2482 = vmatpush1.bf16.msra.mxu0 %v2461
    %2483 = vmatprep.subr.bf16.mxu0 0
    %2484 = vmatpush1.bf16.msra.mxu0 %v2462
    %2485 = vmatprep.subr.bf16.mxu0 0
    %2486 = vmatpush1.bf16.msra.mxu0 %v2463
    %2487 = vmatprep.subr.bf16.mxu0 0
    %2488 = vmatpush1.bf16.msra.mxu0 %v2464
    %2489 = vmatprep.subr.bf16.mxu0 0
    %2490 = vmatpush1.bf16.msra.mxu0 0
    %2491 = vmatprep.subr.bf16.mxu0 0
    %2492 = vmatpush1.bf16.msra.mxu0 0
    %2493 = vmatprep.subr.bf16.mxu0 0
    %2494 = vmatpush1.bf16.msra.mxu0 0
    %2495 = vmatprep.subr.bf16.mxu0 0
    %2496 = vmatpush1.bf16.msra.mxu0 0
    %2497 = vmatprep.subr.bf16.mxu0 0
    %2498 = vmatpush1.bf16.msra.mxu0 0
    %2499 = vmatprep.subr.bf16.mxu0 0
    %2500 = vmatpush1.bf16.msra.mxu0 0
    %2501 = vmatprep.subr.bf16.mxu0 0
    %2502 = vmatpush1.bf16.msra.mxu0 0
    %2503 = vmatprep.subr.bf16.mxu0 0
    %2504 = vmatpush1.bf16.msra.mxu0 0
    %2505 = vmatprep.mubr.bf16.mxu0 0
    %2506 = vmatmul.mubr.bf16.gmra.mrb[0].mxu0 %v2401
    %v2507 = vpop.f32.mrb[0].mxu0
    %v2508 = vadd.f32 %v2423, %v2507
    %v2509 = vpop.f32.mrb[0].mxu0
    %v2510 = vpop.f32.mrb[0].mxu0
    %v2511 = vpop.f32.mrb[0].mxu0
    %2512 = vdwg.mxu0
    %v2513 = vpack.c.bf16 %v2400, %v2400
    %v2514 = vld [vmem:[%s8] sm:$0xf]
    %v2515 = vld [vmem:[%s8 + $0x4] sm:$0xf]
    %v2516 = vld [vmem:[%s8 + $0x8] sm:$0xf]
    %v2517 = vld [vmem:[%s8 + $0xc] sm:$0xf]
    %v2518 = vld [vmem:[%s8 + $0x10] sm:$0xf]
    %v2519 = vld [vmem:[%s8 + $0x14] sm:$0xf]
    %v2520 = vld [vmem:[%s8 + $0x18] sm:$0xf]
    %v2521 = vld [vmem:[%s8 + $0x1c] sm:$0xf]
    %v2522 = vld [vmem:[%s8 + $0x20] sm:$0xf]
    %v2523 = vld [vmem:[%s8 + $0x24] sm:$0xf]
    %v2524 = vld [vmem:[%s8 + $0x28] sm:$0xf]
    %v2525 = vld [vmem:[%s8 + $0x2c] sm:$0xf]
    %v2526 = vld [vmem:[%s8 + $0x30] sm:$0xf]
    %v2527 = vld [vmem:[%s8 + $0x34] sm:$0xf]
    %v2528 = vld [vmem:[%s8 + $0x38] sm:$0xf]
    %v2529 = vld [vmem:[%s8 + $0x3c] sm:$0xf]
    %v2530 = vld [vmem:[%s9] sm:$0x1]
    %v2532 = vlaneseq
    %v2533 = vshrl.u32 %v2532, 7
    %v2534 = vsub.s32 0, %v2533
    %v2535 = vrot.slane %v2530, %v2534
    %v2553 = vunpack.c.l.b16 %v2514
    %v2554 = vunpack.c.l.b16 %v2515
    %v2555 = vunpack.c.l.b16 %v2516
    %v2556 = vunpack.c.l.b16 %v2517
    %v2557 = vunpack.c.l.b16 %v2518
    %v2558 = vunpack.c.l.b16 %v2519
    %v2559 = vunpack.c.l.b16 %v2520
    %v2560 = vunpack.c.l.b16 %v2521
    %v2561 = vunpack.c.l.b16 %v2522
    %v2562 = vunpack.c.l.b16 %v2523
    %v2563 = vunpack.c.l.b16 %v2524
    %v2564 = vunpack.c.l.b16 %v2525
    %v2565 = vunpack.c.l.b16 %v2526
    %v2566 = vunpack.c.l.b16 %v2527
    %v2567 = vunpack.c.l.b16 %v2528
    %v2568 = vunpack.c.l.b16 %v2529
    %v2569 = vpack.c.b16 %v2554, %v2553
    %v2570 = vpack.c.b16 %v2556, %v2555
    %v2571 = vpack.c.b16 %v2558, %v2557
    %v2572 = vpack.c.b16 %v2560, %v2559
    %v2573 = vpack.c.b16 %v2562, %v2561
    %v2574 = vpack.c.b16 %v2564, %v2563
    %v2575 = vpack.c.b16 %v2566, %v2565
    %v2576 = vpack.c.b16 %v2568, %v2567
    %2585 = vmatprep.subr.bf16.mxu0 0
    %2586 = vmatpush1.bf16.msra.mxu0 %v2569
    %2587 = vmatprep.subr.bf16.mxu0 0
    %2588 = vmatpush1.bf16.msra.mxu0 %v2570
    %2589 = vmatprep.subr.bf16.mxu0 0
    %2590 = vmatpush1.bf16.msra.mxu0 %v2571
    %2591 = vmatprep.subr.bf16.mxu0 0
    %2592 = vmatpush1.bf16.msra.mxu0 %v2572
    %2593 = vmatprep.subr.bf16.mxu0 0
    %2594 = vmatpush1.bf16.msra.mxu0 %v2573
    %2595 = vmatprep.subr.bf16.mxu0 0
    %2596 = vmatpush1.bf16.msra.mxu0 %v2574
    %2597 = vmatprep.subr.bf16.mxu0 0
    %2598 = vmatpush1.bf16.msra.mxu0 %v2575
    %2599 = vmatprep.subr.bf16.mxu0 0
    %2600 = vmatpush1.bf16.msra.mxu0 %v2576
    %2601 = vmatprep.subr.bf16.mxu0 0
    %2602 = vmatpush1.bf16.msra.mxu0 0
    %2603 = vmatprep.subr.bf16.mxu0 0
    %2604 = vmatpush1.bf16.msra.mxu0 0
    %2605 = vmatprep.subr.bf16.mxu0 0
    %2606 = vmatpush1.bf16.msra.mxu0 0
    %2607 = vmatprep.subr.bf16.mxu0 0
    %2608 = vmatpush1.bf16.msra.mxu0 0
    %2609 = vmatprep.subr.bf16.mxu0 0
    %2610 = vmatpush1.bf16.msra.mxu0 0
    %2611 = vmatprep.subr.bf16.mxu0 0
    %2612 = vmatpush1.bf16.msra.mxu0 0
    %2613 = vmatprep.subr.bf16.mxu0 0
    %2614 = vmatpush1.bf16.msra.mxu0 0
    %2615 = vmatprep.subr.bf16.mxu0 0
    %2616 = vmatpush1.bf16.msra.mxu0 0
    %2617 = vmatprep.mubr.bf16.mxu0 0
    %2618 = vmatmul.mubr.bf16.gmra.mrb[0].mxu0 %v2513
    %v2619 = vpop.f32.mrb[0].mxu0
    %v2620 = vadd.f32 %v2535, %v2619
    %v2621 = vpop.f32.mrb[0].mxu0
    %v2622 = vpop.f32.mrb[0].mxu0
    %v2623 = vpop.f32.mrb[0].mxu0
    %2624 = vdwg.mxu0
    %v2625 = vld [vmem:[%s0 + $0x40] sm:$0xff]
    %v2626 = vld [vmem:[%s0 + $0x48] sm:$0xff]
    %v2627 = vld [vmem:[%s0 + $0x50] sm:$0xff]
    %v2628 = vld [vmem:[%s0 + $0x58] sm:$0xff]
    %v2629 = vpack.c.bf16 %v2508, %v2508
    %v2662 = vunpack.c.l.b16 %v107
    %v2663 = vunpack.c.h.b16 %v107
    %v2664 = vunpack.c.l.b16 %v108
    %v2665 = vunpack.c.h.b16 %v108
    %v2666 = vunpack.c.l.b16 %v109
    %v2667 = vunpack.c.h.b16 %v109
    %v2668 = vunpack.c.l.b16 %v110
    %v2669 = vunpack.c.h.b16 %v110
    %v2670 = vunpack.c.l.b16 %v111
    %v2671 = vunpack.c.h.b16 %v111
    %v2672 = vunpack.c.l.b16 %v112
    %v2673 = vunpack.c.h.b16 %v112
    %v2674 = vunpack.c.l.b16 %v113
    %v2675 = vunpack.c.h.b16 %v113
    %v2676 = vunpack.c.l.b16 %v114
    %v2677 = vunpack.c.h.b16 %v114
    %v2678 = vunpack.c.l.b16 %v115
    %v2679 = vunpack.c.h.b16 %v115
    %v2680 = vunpack.c.l.b16 %v116
    %v2681 = vunpack.c.h.b16 %v116
    %v2682 = vunpack.c.l.b16 %v117
    %v2683 = vunpack.c.h.b16 %v117
    %v2684 = vunpack.c.l.b16 %v118
    %v2685 = vunpack.c.h.b16 %v118
    %v2686 = vunpack.c.l.b16 %v119
    %v2687 = vunpack.c.h.b16 %v119
    %v2688 = vunpack.c.l.b16 %v120
    %v2689 = vunpack.c.h.b16 %v120
    %v2690 = vunpack.c.l.b16 %v121
    %v2691 = vunpack.c.h.b16 %v121
    %v2692 = vunpack.c.l.b16 %v122
    %v2693 = vunpack.c.h.b16 %v122
    %v2694 = vunpack.c.l.b16 %v123
    %v2695 = vunpack.c.h.b16 %v123
    %v2696 = vunpack.c.l.b16 %v124
    %v2697 = vunpack.c.h.b16 %v124
    %v2698 = vunpack.c.l.b16 %v125
    %v2699 = vunpack.c.h.b16 %v125
    %v2700 = vunpack.c.l.b16 %v126
    %v2701 = vunpack.c.h.b16 %v126
    %v2702 = vunpack.c.l.b16 %v127
    %v2703 = vunpack.c.h.b16 %v127
    %v2704 = vunpack.c.l.b16 %v128
    %v2705 = vunpack.c.h.b16 %v128
    %v2706 = vunpack.c.l.b16 %v129
    %v2707 = vunpack.c.h.b16 %v129
    %v2708 = vunpack.c.l.b16 %v130
    %v2709 = vunpack.c.h.b16 %v130
    %v2710 = vunpack.c.l.b16 %v131
    %v2711 = vunpack.c.h.b16 %v131
    %v2712 = vunpack.c.l.b16 %v132
    %v2713 = vunpack.c.h.b16 %v132
    %v2714 = vunpack.c.l.b16 %v133
    %v2715 = vunpack.c.h.b16 %v133
    %v2716 = vunpack.c.l.b16 %v134
    %v2717 = vunpack.c.h.b16 %v134
    %v2718 = vunpack.c.l.b16 %v135
    %v2719 = vunpack.c.h.b16 %v135
    %v2720 = vunpack.c.l.b16 %v136
    %v2721 = vunpack.c.h.b16 %v136
    %v2722 = vunpack.c.l.b16 %v137
    %v2723 = vunpack.c.h.b16 %v137
    %v2724 = vunpack.c.l.b16 %v138
    %v2725 = vunpack.c.h.b16 %v138
    %v2726 = vpack.c.b16 %v2666, %v2662
    %v2727 = vpack.c.b16 %v2667, %v2663
    %v2728 = vpack.c.b16 %v2668, %v2664
    %v2729 = vpack.c.b16 %v2669, %v2665
    %v2730 = vpack.c.b16 %v2674, %v2670
    %v2731 = vpack.c.b16 %v2675, %v2671
    %v2732 = vpack.c.b16 %v2676, %v2672
    %v2733 = vpack.c.b16 %v2677, %v2673
    %v2734 = vpack.c.b16 %v2682, %v2678
    %v2735 = vpack.c.b16 %v2683, %v2679
    %v2736 = vpack.c.b16 %v2684, %v2680
    %v2737 = vpack.c.b16 %v2685, %v2681
    %v2738 = vpack.c.b16 %v2690, %v2686
    %v2739 = vpack.c.b16 %v2691, %v2687
    %v2740 = vpack.c.b16 %v2692, %v2688
    %v2741 = vpack.c.b16 %v2693, %v2689
    %v2742 = vpack.c.b16 %v2698, %v2694
    %v2743 = vpack.c.b16 %v2699, %v2695
    %v2744 = vpack.c.b16 %v2700, %v2696
    %v2745 = vpack.c.b16 %v2701, %v2697
    %v2746 = vpack.c.b16 %v2706, %v2702
    %v2747 = vpack.c.b16 %v2707, %v2703
    %v2748 = vpack.c.b16 %v2708, %v2704
    %v2749 = vpack.c.b16 %v2709, %v2705
    %v2750 = vpack.c.b16 %v2714, %v2710
    %v2751 = vpack.c.b16 %v2715, %v2711
    %v2752 = vpack.c.b16 %v2716, %v2712
    %v2753 = vpack.c.b16 %v2717, %v2713
    %v2754 = vpack.c.b16 %v2722, %v2718
    %v2755 = vpack.c.b16 %v2723, %v2719
    %v2756 = vpack.c.b16 %v2724, %v2720
    %v2757 = vpack.c.b16 %v2725, %v2721
    %2790 = vmatprep.subr.bf16.mxu0 %v2727
    %2791 = vmatpush1.bf16.msra.mxu0 %v2726
    %2792 = vmatprep.subr.bf16.mxu0 %v2731
    %2793 = vmatpush1.bf16.msra.mxu0 %v2730
    %2794 = vmatprep.subr.bf16.mxu0 %v2735
    %2795 = vmatpush1.bf16.msra.mxu0 %v2734
    %2796 = vmatprep.subr.bf16.mxu0 %v2739
    %2797 = vmatpush1.bf16.msra.mxu0 %v2738
    %2798 = vmatprep.subr.bf16.mxu0 %v2743
    %2799 = vmatpush1.bf16.msra.mxu0 %v2742
    %2800 = vmatprep.subr.bf16.mxu0 %v2747
    %2801 = vmatpush1.bf16.msra.mxu0 %v2746
    %2802 = vmatprep.subr.bf16.mxu0 %v2751
    %2803 = vmatpush1.bf16.msra.mxu0 %v2750
    %2804 = vmatprep.subr.bf16.mxu0 %v2755
    %2805 = vmatpush1.bf16.msra.mxu0 %v2754
    %2806 = vmatprep.subr.bf16.mxu0 0
    %2807 = vmatpush1.bf16.msra.mxu0 0
    %2808 = vmatprep.subr.bf16.mxu0 0
    %2809 = vmatpush1.bf16.msra.mxu0 0
    %2810 = vmatprep.subr.bf16.mxu0 0
    %2811 = vmatpush1.bf16.msra.mxu0 0
    %2812 = vmatprep.subr.bf16.mxu0 0
    %2813 = vmatpush1.bf16.msra.mxu0 0
    %2814 = vmatprep.subr.bf16.mxu0 0
    %2815 = vmatpush1.bf16.msra.mxu0 0
    %2816 = vmatprep.subr.bf16.mxu0 0
    %2817 = vmatpush1.bf16.msra.mxu0 0
    %2818 = vmatprep.subr.bf16.mxu0 0
    %2819 = vmatpush1.bf16.msra.mxu0 0
    %2820 = vmatprep.subr.bf16.mxu0 0
    %2821 = vmatpush1.bf16.msra.mxu0 0
    %2822 = vmatprep.mubr.bf16.mxu0 0
    %2823 = vmatmul.mubr.bf16.gmra.mrb[0].mxu0 %v2629
    %v2824 = vpop.f32.mrb[0].mxu0
    %v2825 = vadd.f32 0.0, %v2824
    %v2826 = vpop.f32.mrb[0].mxu0
    %v2827 = vadd.f32 0.0, %v2826
    %v2828 = vpop.f32.mrb[0].mxu0
    %v2829 = vpop.f32.mrb[0].mxu0
    %2830 = vdwg.mxu0
    %2831 = vmatprep.subr.bf16.mxu0 %v2729
    %2832 = vmatpush1.bf16.msra.mxu0 %v2728
    %2833 = vmatprep.subr.bf16.mxu0 %v2733
    %2834 = vmatpush1.bf16.msra.mxu0 %v2732
    %2835 = vmatprep.subr.bf16.mxu0 %v2737
    %2836 = vmatpush1.bf16.msra.mxu0 %v2736
    %2837 = vmatprep.subr.bf16.mxu0 %v2741
    %2838 = vmatpush1.bf16.msra.mxu0 %v2740
    %2839 = vmatprep.subr.bf16.mxu0 %v2745
    %2840 = vmatpush1.bf16.msra.mxu0 %v2744
    %2841 = vmatprep.subr.bf16.mxu0 %v2749
    %2842 = vmatpush1.bf16.msra.mxu0 %v2748
    %2843 = vmatprep.subr.bf16.mxu0 %v2753
    %2844 = vmatpush1.bf16.msra.mxu0 %v2752
    %2845 = vmatprep.subr.bf16.mxu0 %v2757
    %2846 = vmatpush1.bf16.msra.mxu0 %v2756
    %2847 = vmatprep.subr.bf16.mxu0 0
    %2848 = vmatpush1.bf16.msra.mxu0 0
    %2849 = vmatprep.subr.bf16.mxu0 0
    %2850 = vmatpush1.bf16.msra.mxu0 0
    %2851 = vmatprep.subr.bf16.mxu0 0
    %2852 = vmatpush1.bf16.msra.mxu0 0
    %2853 = vmatprep.subr.bf16.mxu0 0
    %2854 = vmatpush1.bf16.msra.mxu0 0
    %2855 = vmatprep.subr.bf16.mxu0 0
    %2856 = vmatpush1.bf16.msra.mxu0 0
    %2857 = vmatprep.subr.bf16.mxu0 0
    %2858 = vmatpush1.bf16.msra.mxu0 0
    %2859 = vmatprep.subr.bf16.mxu0 0
    %2860 = vmatpush1.bf16.msra.mxu0 0
    %2861 = vmatprep.subr.bf16.mxu0 0
    %2862 = vmatpush1.bf16.msra.mxu0 0
    %2863 = vmatprep.mubr.bf16.mxu0 0
    %2864 = vmatmul.mubr.bf16.gmra.mrb[0].mxu0 %v2629
    %v2865 = vpop.f32.mrb[0].mxu0
    %v2866 = vadd.f32 0.0, %v2865
    %v2867 = vpop.f32.mrb[0].mxu0
    %v2868 = vadd.f32 0.0, %v2867
    %v2869 = vpop.f32.mrb[0].mxu0
    %v2870 = vpop.f32.mrb[0].mxu0
    %2871 = vdwg.mxu0
    %v2872 = vadd.f32 %v2625, %v2825
    %v2873 = vadd.f32 %v2626, %v2827
    %v2874 = vadd.f32 %v2627, %v2866
    %v2875 = vadd.f32 %v2628, %v2868
    %v2876 = vxor.u32 %v2872, 2147483648
    %v2877 = vmul.f32 %v2876, 1.442695
    %v2878 = vpow.pop %v2877
    %v2879 = vadd.f32 %v2878, 1.0
    %v2880 = vrcp.pop %v2879
    %v2881 = vmul.f32 1.0, %v2880
    %v2882 = vxor.u32 %v2873, 2147483648
    %v2883 = vmul.f32 %v2882, 1.442695
    %v2884 = vpow.pop %v2883
    %v2885 = vadd.f32 %v2884, 1.0
    %v2886 = vrcp.pop %v2885
    %v2887 = vmul.f32 1.0, %v2886
    %v2888 = vtanh.pop %v2874
    %v2889 = vxor.u32 %v2875, 2147483648
    %v2890 = vmul.f32 %v2889, 1.442695
    %v2891 = vpow.pop %v2890
    %v2892 = vadd.f32 %v2891, 1.0
    %v2893 = vrcp.pop %v2892
    %v2894 = vmul.f32 1.0, %v2893
    %v2895 = vmul.f32 %v2887, %v2620
    %v2896 = vmul.f32 %v2881, %v2888
    %v2897 = vadd.f32 %v2895, %v2896
    %v2898 = vtanh.pop %v2897
    %v2899 = vmul.f32 %v2894, %v2898
    %v2900 = vsel %vm419, %v2899, 0.0
    %2901 = vst [vmem:[#allocation2] sm:$0xff] %v2900
    %v2902 = vsel %vm419, %v2899, %v2508
    %v2903 = vsel %vm419, %v2897, %v2620
    %v2904 = vld [vmem:[%s707 + $0x40] sm:$0xff]
    %v2905 = vld [vmem:[%s707 + $0x48] sm:$0xff]
    %v2906 = vld [vmem:[%s707 + $0x50] sm:$0xff]
    %v2907 = vld [vmem:[%s707 + $0x58] sm:$0xff]
    %v2908 = vpack.c.bf16 %v2902, %v2902
    %2909 = vmatprep.subr.bf16.mxu0 %v2727
    %2910 = vmatpush1.bf16.msra.mxu0 %v2726
    %2911 = vmatprep.subr.bf16.mxu0 %v2731
    %2912 = vmatpush1.bf16.msra.mxu0 %v2730
    %2913 = vmatprep.subr.bf16.mxu0 %v2735
    %2914 = vmatpush1.bf16.msra.mxu0 %v2734
    %2915 = vmatprep.subr.bf16.mxu0 %v2739
    %2916 = vmatpush1.bf16.msra.mxu0 %v2738
    %2917 = vmatprep.subr.bf16.mxu0 %v2743
    %2918 = vmatpush1.bf16.msra.mxu0 %v2742
    %2919 = vmatprep.subr.bf16.mxu0 %v2747
    %2920 = vmatpush1.bf16.msra.mxu0 %v2746
    %2921 = vmatprep.subr.bf16.mxu0 %v2751
    %2922 = vmatpush1.bf16.msra.mxu0 %v2750
    %2923 = vmatprep.subr.bf16.mxu0 %v2755
    %2924 = vmatpush1.bf16.msra.mxu0 %v2754
    %2925 = vmatprep.subr.bf16.mxu0 0
    %2926 = vmatpush1.bf16.msra.mxu0 0
    %2927 = vmatprep.subr.bf16.mxu0 0
    %2928 = vmatpush1.bf16.msra.mxu0 0
    %2929 = vmatprep.subr.bf16.mxu0 0
    %2930 = vmatpush1.bf16.msra.mxu0 0
    %2931 = vmatprep.subr.bf16.mxu0 0
    %2932 = vmatpush1.bf16.msra.mxu0 0
    %2933 = vmatprep.subr.bf16.mxu0 0
    %2934 = vmatpush1.bf16.msra.mxu0 0
    %2935 = vmatprep.subr.bf16.mxu0 0
    %2936 = vmatpush1.bf16.msra.mxu0 0
    %2937 = vmatprep.subr.bf16.mxu0 0
    %2938 = vmatpush1.bf16.msra.mxu0 0
    %2939 = vmatprep.subr.bf16.mxu0 0
    %2940 = vmatpush1.bf16.msra.mxu0 0
    %2941 = vmatprep.mubr.bf16.mxu0 0
    %2942 = vmatmul.mubr.bf16.gmra.mrb[0].mxu0 %v2908
    %v2943 = vpop.f32.mrb[0].mxu0
    %v2944 = vadd.f32 0.0, %v2943
    %v2945 = vpop.f32.mrb[0].mxu0
    %v2946 = vadd.f32 0.0, %v2945
    %v2947 = vpop.f32.mrb[0].mxu0
    %v2948 = vpop.f32.mrb[0].mxu0
    %2949 = vdwg.mxu0
    %2950 = vmatprep.subr.bf16.mxu0 %v2729
    %2951 = vmatpush1.bf16.msra.mxu0 %v2728
    %2952 = vmatprep.subr.bf16.mxu0 %v2733
    %2953 = vmatpush1.bf16.msra.mxu0 %v2732
    %2954 = vmatprep.subr.bf16.mxu0 %v2737
    %2955 = vmatpush1.bf16.msra.mxu0 %v2736
    %2956 = vmatprep.subr.bf16.mxu0 %v2741
    %2957 = vmatpush1.bf16.msra.mxu0 %v2740
    %2958 = vmatprep.subr.bf16.mxu0 %v2745
    %2959 = vmatpush1.bf16.msra.mxu0 %v2744
    %2960 = vmatprep.subr.bf16.mxu0 %v2749
    %2961 = vmatpush1.bf16.msra.mxu0 %v2748
    %2962 = vmatprep.subr.bf16.mxu0 %v2753
    %2963 = vmatpush1.bf16.msra.mxu0 %v2752
    %2964 = vmatprep.subr.bf16.mxu0 %v2757
    %2965 = vmatpush1.bf16.msra.mxu0 %v2756
    %2966 = vmatprep.subr.bf16.mxu0 0
    %2967 = vmatpush1.bf16.msra.mxu0 0
    %2968 = vmatprep.subr.bf16.mxu0 0
    %2969 = vmatpush1.bf16.msra.mxu0 0
    %2970 = vmatprep.subr.bf16.mxu0 0
    %2971 = vmatpush1.bf16.msra.mxu0 0
    %2972 = vmatprep.subr.bf16.mxu0 0
    %2973 = vmatpush1.bf16.msra.mxu0 0
    %2974 = vmatprep.subr.bf16.mxu0 0
    %2975 = vmatpush1.bf16.msra.mxu0 0
    %2976 = vmatprep.subr.bf16.mxu0 0
    %2977 = vmatpush1.bf16.msra.mxu0 0
    %2978 = vmatprep.subr.bf16.mxu0 0
    %2979 = vmatpush1.bf16.msra.mxu0 0
    %2980 = vmatprep.subr.bf16.mxu0 0
    %2981 = vmatpush1.bf16.msra.mxu0 0
    %2982 = vmatprep.mubr.bf16.mxu0 0
    %2983 = vmatmul.mubr.bf16.gmra.mrb[0].mxu0 %v2908
    %v2984 = vpop.f32.mrb[0].mxu0
    %v2985 = vadd.f32 0.0, %v2984
    %v2986 = vpop.f32.mrb[0].mxu0
    %v2987 = vadd.f32 0.0, %v2986
    %v2988 = vpop.f32.mrb[0].mxu0
    %v2989 = vpop.f32.mrb[0].mxu0
    %2990 = vdwg.mxu0
    %v2991 = vadd.f32 %v2904, %v2944
    %v2992 = vadd.f32 %v2905, %v2946
    %v2993 = vadd.f32 %v2906, %v2985
    %v2994 = vadd.f32 %v2907, %v2987
    %v2995 = vxor.u32 %v2991, 2147483648
    %v2996 = vmul.f32 %v2995, 1.442695
    %v2997 = vpow.pop %v2996
    %v2998 = vadd.f32 %v2997, 1.0
    %v2999 = vrcp.pop %v2998
    %v3000 = vmul.f32 1.0, %v2999
    %v3001 = vxor.u32 %v2992, 2147483648
    %v3002 = vmul.f32 %v3001, 1.442695
    %v3003 = vpow.pop %v3002
    %v3004 = vadd.f32 %v3003, 1.0
    %v3005 = vrcp.pop %v3004
    %v3006 = vmul.f32 1.0, %v3005
    %v3007 = vtanh.pop %v2993
    %v3008 = vxor.u32 %v2994, 2147483648
    %v3009 = vmul.f32 %v3008, 1.442695
    %v3010 = vpow.pop %v3009
    %v3011 = vadd.f32 %v3010, 1.0
    %v3012 = vrcp.pop %v3011
    %v3013 = vmul.f32 1.0, %v3012
    %v3014 = vmul.f32 %v3006, %v2903
    %v3015 = vmul.f32 %v3000, %v3007
    %v3016 = vadd.f32 %v3014, %v3015
    %v3017 = vtanh.pop %v3016
    %v3018 = vmul.f32 %v3013, %v3017
    %v3019 = vld [vmem:[%s823] sm:$0xff]
    %vm3020 = vcmp.gt.f32.partialorder %v3019, 0.0
    %v3021 = vsel %vm3020, 1, 0
    %3022 = vset.pattern.permute.xlu0 0
    %3023 = vperm.xlu0 %3022, %v3021
    %v3024 = vpop.permute.xlu0 %3023
    %vm3025 = vcmp.eq.s32.totalorder %v3024, 1
    %v3026 = vsel %vm3025, %v3018, 0.0
    %3027 = vst [vmem:[#allocation2 + $0x8] sm:$0xff] %v3026
    %v3028 = vsel %vm3025, %v3018, %v2902
    %v3029 = vsel %vm3025, %v3016, %v2903
    %v3030 = vld [vmem:[%s959 + $0x40] sm:$0xff]
    %v3031 = vld [vmem:[%s959 + $0x48] sm:$0xff]
    %v3032 = vld [vmem:[%s959 + $0x50] sm:$0xff]
    %v3033 = vld [vmem:[%s959 + $0x58] sm:$0xff]
    %v3034 = vpack.c.bf16 %v3028, %v3028
    %3035 = vmatprep.subr.bf16.mxu0 %v2727
    %3036 = vmatpush1.bf16.msra.mxu0 %v2726
    %3037 = vmatprep.subr.bf16.mxu0 %v2731
    %3038 = vmatpush1.bf16.msra.mxu0 %v2730
    %3039 = vmatprep.subr.bf16.mxu0 %v2735
    %3040 = vmatpush1.bf16.msra.mxu0 %v2734
    %3041 = vmatprep.subr.bf16.mxu0 %v2739
    %3042 = vmatpush1.bf16.msra.mxu0 %v2738
    %3043 = vmatprep.subr.bf16.mxu0 %v2743
    %3044 = vmatpush1.bf16.msra.mxu0 %v2742
    %3045 = vmatprep.subr.bf16.mxu0 %v2747
    %3046 = vmatpush1.bf16.msra.mxu0 %v2746
    %3047 = vmatprep.subr.bf16.mxu0 %v2751
    %3048 = vmatpush1.bf16.msra.mxu0 %v2750
    %3049 = vmatprep.subr.bf16.mxu0 %v2755
    %3050 = vmatpush1.bf16.msra.mxu0 %v2754
    %3051 = vmatprep.subr.bf16.mxu0 0
    %3052 = vmatpush1.bf16.msra.mxu0 0
    %3053 = vmatprep.subr.bf16.mxu0 0
    %3054 = vmatpush1.bf16.msra.mxu0 0
    %3055 = vmatprep.subr.bf16.mxu0 0
    %3056 = vmatpush1.bf16.msra.mxu0 0
    %3057 = vmatprep.subr.bf16.mxu0 0
    %3058 = vmatpush1.bf16.msra.mxu0 0
    %3059 = vmatprep.subr.bf16.mxu0 0
    %3060 = vmatpush1.bf16.msra.mxu0 0
    %3061 = vmatprep.subr.bf16.mxu0 0
    %3062 = vmatpush1.bf16.msra.mxu0 0
    %3063 = vmatprep.subr.bf16.mxu0 0
    %3064 = vmatpush1.bf16.msra.mxu0 0
    %3065 = vmatprep.subr.bf16.mxu0 0
    %3066 = vmatpush1.bf16.msra.mxu0 0
    %3067 = vmatprep.mubr.bf16.mxu0 0
    %3068 = vmatmul.mubr.bf16.gmra.mrb[0].mxu0 %v3034
    %v3069 = vpop.f32.mrb[0].mxu0
    %v3070 = vadd.f32 0.0, %v3069
    %v3071 = vpop.f32.mrb[0].mxu0
    %v3072 = vadd.f32 0.0, %v3071
    %v3073 = vpop.f32.mrb[0].mxu0
    %v3074 = vpop.f32.mrb[0].mxu0
    %3075 = vdwg.mxu0
    %3076 = vmatprep.subr.bf16.mxu0 %v2729
    %3077 = vmatpush1.bf16.msra.mxu0 %v2728
    %3078 = vmatprep.subr.bf16.mxu0 %v2733
    %3079 = vmatpush1.bf16.msra.mxu0 %v2732
    %3080 = vmatprep.subr.bf16.mxu0 %v2737
    %3081 = vmatpush1.bf16.msra.mxu0 %v2736
    %3082 = vmatprep.subr.bf16.mxu0 %v2741
    %3083 = vmatpush1.bf16.msra.mxu0 %v2740
    %3084 = vmatprep.subr.bf16.mxu0 %v2745
    %3085 = vmatpush1.bf16.msra.mxu0 %v2744
    %3086 = vmatprep.subr.bf16.mxu0 %v2749
    %3087 = vmatpush1.bf16.msra.mxu0 %v2748
    %3088 = vmatprep.subr.bf16.mxu0 %v2753
    %3089 = vmatpush1.bf16.msra.mxu0 %v2752
    %3090 = vmatprep.subr.bf16.mxu0 %v2757
    %3091 = vmatpush1.bf16.msra.mxu0 %v2756
    %3092 = vmatprep.subr.bf16.mxu0 0
    %3093 = vmatpush1.bf16.msra.mxu0 0
    %3094 = vmatprep.subr.bf16.mxu0 0
    %3095 = vmatpush1.bf16.msra.mxu0 0
    %3096 = vmatprep.subr.bf16.mxu0 0
    %3097 = vmatpush1.bf16.msra.mxu0 0
    %3098 = vmatprep.subr.bf16.mxu0 0
    %3099 = vmatpush1.bf16.msra.mxu0 0
    %3100 = vmatprep.subr.bf16.mxu0 0
    %3101 = vmatpush1.bf16.msra.mxu0 0
    %3102 = vmatprep.subr.bf16.mxu0 0
    %3103 = vmatpush1.bf16.msra.mxu0 0
    %3104 = vmatprep.subr.bf16.mxu0 0
    %3105 = vmatpush1.bf16.msra.mxu0 0
    %3106 = vmatprep.subr.bf16.mxu0 0
    %3107 = vmatpush1.bf16.msra.mxu0 0
    %3108 = vmatprep.mubr.bf16.mxu0 0
    %3109 = vmatmul.mubr.bf16.gmra.mrb[0].mxu0 %v3034
    %v3110 = vpop.f32.mrb[0].mxu0
    %v3111 = vadd.f32 0.0, %v3110
    %v3112 = vpop.f32.mrb[0].mxu0
    %v3113 = vadd.f32 0.0, %v3112
    %v3114 = vpop.f32.mrb[0].mxu0
    %v3115 = vpop.f32.mrb[0].mxu0
    %3116 = vdwg.mxu0
    %v3117 = vadd.f32 %v3030, %v3070
    %v3118 = vadd.f32 %v3031, %v3072
    %v3119 = vadd.f32 %v3032, %v3111
    %v3120 = vadd.f32 %v3033, %v3113
    %v3121 = vxor.u32 %v3117, 2147483648
    %v3122 = vmul.f32 %v3121, 1.442695
    %v3123 = vpow.pop %v3122
    %v3124 = vadd.f32 %v3123, 1.0
    %v3125 = vrcp.pop %v3124
    %v3126 = vmul.f32 1.0, %v3125
    %v3127 = vxor.u32 %v3118, 2147483648
    %v3128 = vmul.f32 %v3127, 1.442695
    %v3129 = vpow.pop %v3128
    %v3130 = vadd.f32 %v3129, 1.0
    %v3131 = vrcp.pop %v3130
    %v3132 = vmul.f32 1.0, %v3131
    %v3133 = vtanh.pop %v3119
    %v3134 = vxor.u32 %v3120, 2147483648
    %v3135 = vmul.f32 %v3134, 1.442695
    %v3136 = vpow.pop %v3135
    %v3137 = vadd.f32 %v3136, 1.0
    %v3138 = vrcp.pop %v3137
    %v3139 = vmul.f32 1.0, %v3138
    %v3140 = vmul.f32 %v3132, %v3029
    %v3141 = vmul.f32 %v3126, %v3133
    %v3142 = vadd.f32 %v3140, %v3141
    %v3143 = vtanh.pop %v3142
    %v3144 = vmul.f32 %v3139, %v3143
    %v3145 = vld [vmem:[%s1075] sm:$0xff]
    %vm3146 = vcmp.gt.f32.partialorder %v3145, 0.0
    %v3147 = vsel %vm3146, 1, 0
    %3148 = vset.pattern.permute.xlu0 0
    %3149 = vperm.xlu0 %3148, %v3147
    %v3150 = vpop.permute.xlu0 %3149
    %vm3151 = vcmp.eq.s32.totalorder %v3150, 1
    %v3152 = vsel %vm3151, %v3144, 0.0
    %3153 = vst [vmem:[#allocation2 + $0x10] sm:$0xff] %v3152
    %v3154 = vsel %vm3151, %v3144, %v3028
    %v3155 = vsel %vm3151, %v3142, %v3029
    %v3156 = vld [vmem:[%s1211 + $0x40] sm:$0xff]
    %v3157 = vld [vmem:[%s1211 + $0x48] sm:$0xff]
    %v3158 = vld [vmem:[%s1211 + $0x50] sm:$0xff]
    %v3159 = vld [vmem:[%s1211 + $0x58] sm:$0xff]
    %v3160 = vpack.c.bf16 %v3154, %v3154
    %3161 = vmatprep.subr.bf16.mxu0 %v2727
    %3162 = vmatpush1.bf16.msra.mxu0 %v2726
    %3163 = vmatprep.subr.bf16.mxu0 %v2731
    %3164 = vmatpush1.bf16.msra.mxu0 %v2730
    %3165 = vmatprep.subr.bf16.mxu0 %v2735
    %3166 = vmatpush1.bf16.msra.mxu0 %v2734
    %3167 = vmatprep.subr.bf16.mxu0 %v2739
    %3168 = vmatpush1.bf16.msra.mxu0 %v2738
    %3169 = vmatprep.subr.bf16.mxu0 %v2743
    %3170 = vmatpush1.bf16.msra.mxu0 %v2742
    %3171 = vmatprep.subr.bf16.mxu0 %v2747
    %3172 = vmatpush1.bf16.msra.mxu0 %v2746
    %3173 = vmatprep.subr.bf16.mxu0 %v2751
    %3174 = vmatpush1.bf16.msra.mxu0 %v2750
    %3175 = vmatprep.subr.bf16.mxu0 %v2755
    %3176 = vmatpush1.bf16.msra.mxu0 %v2754
    %3177 = vmatprep.subr.bf16.mxu0 0
    %3178 = vmatpush1.bf16.msra.mxu0 0
    %3179 = vmatprep.subr.bf16.mxu0 0
    %3180 = vmatpush1.bf16.msra.mxu0 0
    %3181 = vmatprep.subr.bf16.mxu0 0
    %3182 = vmatpush1.bf16.msra.mxu0 0
    %3183 = vmatprep.subr.bf16.mxu0 0
    %3184 = vmatpush1.bf16.msra.mxu0 0
    %3185 = vmatprep.subr.bf16.mxu0 0
    %3186 = vmatpush1.bf16.msra.mxu0 0
    %3187 = vmatprep.subr.bf16.mxu0 0
    %3188 = vmatpush1.bf16.msra.mxu0 0
    %3189 = vmatprep.subr.bf16.mxu0 0
    %3190 = vmatpush1.bf16.msra.mxu0 0
    %3191 = vmatprep.subr.bf16.mxu0 0
    %3192 = vmatpush1.bf16.msra.mxu0 0
    %3193 = vmatprep.mubr.bf16.mxu0 0
    %3194 = vmatmul.mubr.bf16.gmra.mrb[0].mxu0 %v3160
    %v3195 = vpop.f32.mrb[0].mxu0
    %v3196 = vadd.f32 0.0, %v3195
    %v3197 = vpop.f32.mrb[0].mxu0
    %v3198 = vadd.f32 0.0, %v3197
    %v3199 = vpop.f32.mrb[0].mxu0
    %v3200 = vpop.f32.mrb[0].mxu0
    %3201 = vdwg.mxu0
    %3202 = vmatprep.subr.bf16.mxu0 %v2729
    %3203 = vmatpush1.bf16.msra.mxu0 %v2728
    %3204 = vmatprep.subr.bf16.mxu0 %v2733
    %3205 = vmatpush1.bf16.msra.mxu0 %v2732
    %3206 = vmatprep.subr.bf16.mxu0 %v2737
    %3207 = vmatpush1.bf16.msra.mxu0 %v2736
    %3208 = vmatprep.subr.bf16.mxu0 %v2741
    %3209 = vmatpush1.bf16.msra.mxu0 %v2740
    %3210 = vmatprep.subr.bf16.mxu0 %v2745
    %3211 = vmatpush1.bf16.msra.mxu0 %v2744
    %3212 = vmatprep.subr.bf16.mxu0 %v2749
    %3213 = vmatpush1.bf16.msra.mxu0 %v2748
    %3214 = vmatprep.subr.bf16.mxu0 %v2753
    %3215 = vmatpush1.bf16.msra.mxu0 %v2752
    %3216 = vmatprep.subr.bf16.mxu0 %v2757
    %3217 = vmatpush1.bf16.msra.mxu0 %v2756
    %3218 = vmatprep.subr.bf16.mxu0 0
    %3219 = vmatpush1.bf16.msra.mxu0 0
    %3220 = vmatprep.subr.bf16.mxu0 0
    %3221 = vmatpush1.bf16.msra.mxu0 0
    %3222 = vmatprep.subr.bf16.mxu0 0
    %3223 = vmatpush1.bf16.msra.mxu0 0
    %3224 = vmatprep.subr.bf16.mxu0 0
    %3225 = vmatpush1.bf16.msra.mxu0 0
    %3226 = vmatprep.subr.bf16.mxu0 0
    %3227 = vmatpush1.bf16.msra.mxu0 0
    %3228 = vmatprep.subr.bf16.mxu0 0
    %3229 = vmatpush1.bf16.msra.mxu0 0
    %3230 = vmatprep.subr.bf16.mxu0 0
    %3231 = vmatpush1.bf16.msra.mxu0 0
    %3232 = vmatprep.subr.bf16.mxu0 0
    %3233 = vmatpush1.bf16.msra.mxu0 0
    %3234 = vmatprep.mubr.bf16.mxu0 0
    %3235 = vmatmul.mubr.bf16.gmra.mrb[0].mxu0 %v3160
    %v3236 = vpop.f32.mrb[0].mxu0
    %v3237 = vadd.f32 0.0, %v3236
    %v3238 = vpop.f32.mrb[0].mxu0
    %v3239 = vadd.f32 0.0, %v3238
    %v3240 = vpop.f32.mrb[0].mxu0
    %v3241 = vpop.f32.mrb[0].mxu0
    %3242 = vdwg.mxu0
    %v3243 = vadd.f32 %v3156, %v3196
    %v3244 = vadd.f32 %v3157, %v3198
    %v3245 = vadd.f32 %v3158, %v3237
    %v3246 = vadd.f32 %v3159, %v3239
    %v3247 = vxor.u32 %v3243, 2147483648
    %v3248 = vmul.f32 %v3247, 1.442695
    %v3249 = vpow.pop %v3248
    %v3250 = vadd.f32 %v3249, 1.0
    %v3251 = vrcp.pop %v3250
    %v3252 = vmul.f32 1.0, %v3251
    %v3253 = vxor.u32 %v3244, 2147483648
    %v3254 = vmul.f32 %v3253, 1.442695
    %v3255 = vpow.pop %v3254
    %v3256 = vadd.f32 %v3255, 1.0
    %v3257 = vrcp.pop %v3256
    %v3258 = vmul.f32 1.0, %v3257
    %v3259 = vtanh.pop %v3245
    %v3260 = vxor.u32 %v3246, 2147483648
    %v3261 = vmul.f32 %v3260, 1.442695
    %v3262 = vpow.pop %v3261
    %v3263 = vadd.f32 %v3262, 1.0
    %v3264 = vrcp.pop %v3263
    %v3265 = vmul.f32 1.0, %v3264
    %v3266 = vmul.f32 %v3258, %v3155
    %v3267 = vmul.f32 %v3252, %v3259
    %v3268 = vadd.f32 %v3266, %v3267
    %v3269 = vtanh.pop %v3268
    %v3270 = vmul.f32 %v3265, %v3269
    %v3271 = vld [vmem:[%s1327] sm:$0xff]
    %vm3272 = vcmp.gt.f32.partialorder %v3271, 0.0
    %v3273 = vsel %vm3272, 1, 0
    %3274 = vset.pattern.permute.xlu0 0
    %3275 = vperm.xlu0 %3274, %v3273
    %v3276 = vpop.permute.xlu0 %3275
    %vm3277 = vcmp.eq.s32.totalorder %v3276, 1
    %v3278 = vsel %vm3277, %v3270, 0.0
    %3279 = vst [vmem:[#allocation2 + $0x18] sm:$0xff] %v3278
    %v3280 = vsel %vm3277, %v3270, %v3154
    %v3281 = vsel %vm3277, %v3268, %v3155
    %v3282 = vld [vmem:[%s1337 + $0x40] sm:$0xff]
    %v3283 = vld [vmem:[%s1337 + $0x48] sm:$0xff]
    %v3284 = vld [vmem:[%s1337 + $0x50] sm:$0xff]
    %v3285 = vld [vmem:[%s1337 + $0x58] sm:$0xff]
    %v3286 = vpack.c.bf16 %v3280, %v3280
    %3287 = vmatprep.subr.bf16.mxu0 %v2727
    %3288 = vmatpush1.bf16.msra.mxu0 %v2726
    %3289 = vmatprep.subr.bf16.mxu0 %v2731
    %3290 = vmatpush1.bf16.msra.mxu0 %v2730
    %3291 = vmatprep.subr.bf16.mxu0 %v2735
    %3292 = vmatpush1.bf16.msra.mxu0 %v2734
    %3293 = vmatprep.subr.bf16.mxu0 %v2739
    %3294 = vmatpush1.bf16.msra.mxu0 %v2738
    %3295 = vmatprep.subr.bf16.mxu0 %v2743
    %3296 = vmatpush1.bf16.msra.mxu0 %v2742
    %3297 = vmatprep.subr.bf16.mxu0 %v2747
    %3298 = vmatpush1.bf16.msra.mxu0 %v2746
    %3299 = vmatprep.subr.bf16.mxu0 %v2751
    %3300 = vmatpush1.bf16.msra.mxu0 %v2750
    %3301 = vmatprep.subr.bf16.mxu0 %v2755
    %3302 = vmatpush1.bf16.msra.mxu0 %v2754
    %3303 = vmatprep.subr.bf16.mxu0 0
    %3304 = vmatpush1.bf16.msra.mxu0 0
    %3305 = vmatprep.subr.bf16.mxu0 0
    %3306 = vmatpush1.bf16.msra.mxu0 0
    %3307 = vmatprep.subr.bf16.mxu0 0
    %3308 = vmatpush1.bf16.msra.mxu0 0
    %3309 = vmatprep.subr.bf16.mxu0 0
    %3310 = vmatpush1.bf16.msra.mxu0 0
    %3311 = vmatprep.subr.bf16.mxu0 0
    %3312 = vmatpush1.bf16.msra.mxu0 0
    %3313 = vmatprep.subr.bf16.mxu0 0
    %3314 = vmatpush1.bf16.msra.mxu0 0
    %3315 = vmatprep.subr.bf16.mxu0 0
    %3316 = vmatpush1.bf16.msra.mxu0 0
    %3317 = vmatprep.subr.bf16.mxu0 0
    %3318 = vmatpush1.bf16.msra.mxu0 0
    %3319 = vmatprep.mubr.bf16.mxu0 0
    %3320 = vmatmul.mubr.bf16.gmra.mrb[0].mxu0 %v3286
    %v3321 = vpop.f32.mrb[0].mxu0
    %v3322 = vadd.f32 0.0, %v3321
    %v3323 = vpop.f32.mrb[0].mxu0
    %v3324 = vadd.f32 0.0, %v3323
    %v3325 = vpop.f32.mrb[0].mxu0
    %v3326 = vpop.f32.mrb[0].mxu0
    %3327 = vdwg.mxu0
    %3328 = vmatprep.subr.bf16.mxu0 %v2729
    %3329 = vmatpush1.bf16.msra.mxu0 %v2728
    %3330 = vmatprep.subr.bf16.mxu0 %v2733
    %3331 = vmatpush1.bf16.msra.mxu0 %v2732
    %3332 = vmatprep.subr.bf16.mxu0 %v2737
    %3333 = vmatpush1.bf16.msra.mxu0 %v2736
    %3334 = vmatprep.subr.bf16.mxu0 %v2741
    %3335 = vmatpush1.bf16.msra.mxu0 %v2740
    %3336 = vmatprep.subr.bf16.mxu0 %v2745
    %3337 = vmatpush1.bf16.msra.mxu0 %v2744
    %3338 = vmatprep.subr.bf16.mxu0 %v2749
    %3339 = vmatpush1.bf16.msra.mxu0 %v2748
    %3340 = vmatprep.subr.bf16.mxu0 %v2753
    %3341 = vmatpush1.bf16.msra.mxu0 %v2752
    %3342 = vmatprep.subr.bf16.mxu0 %v2757
    %3343 = vmatpush1.bf16.msra.mxu0 %v2756
    %3344 = vmatprep.subr.bf16.mxu0 0
    %3345 = vmatpush1.bf16.msra.mxu0 0
    %3346 = vmatprep.subr.bf16.mxu0 0
    %3347 = vmatpush1.bf16.msra.mxu0 0
    %3348 = vmatprep.subr.bf16.mxu0 0
    %3349 = vmatpush1.bf16.msra.mxu0 0
    %3350 = vmatprep.subr.bf16.mxu0 0
    %3351 = vmatpush1.bf16.msra.mxu0 0
    %3352 = vmatprep.subr.bf16.mxu0 0
    %3353 = vmatpush1.bf16.msra.mxu0 0
    %3354 = vmatprep.subr.bf16.mxu0 0
    %3355 = vmatpush1.bf16.msra.mxu0 0
    %3356 = vmatprep.subr.bf16.mxu0 0
    %3357 = vmatpush1.bf16.msra.mxu0 0
    %3358 = vmatprep.subr.bf16.mxu0 0
    %3359 = vmatpush1.bf16.msra.mxu0 0
    %3360 = vmatprep.mubr.bf16.mxu0 0
    %3361 = vmatmul.mubr.bf16.gmra.mrb[0].mxu0 %v3286
    %v3362 = vpop.f32.mrb[0].mxu0
    %v3363 = vadd.f32 0.0, %v3362
    %v3364 = vpop.f32.mrb[0].mxu0
    %v3365 = vadd.f32 0.0, %v3364
    %v3366 = vpop.f32.mrb[0].mxu0
    %v3367 = vpop.f32.mrb[0].mxu0
    %3368 = vdwg.mxu0
    %v3369 = vadd.f32 %v3282, %v3322
    %v3370 = vadd.f32 %v3283, %v3324
    %v3371 = vadd.f32 %v3284, %v3363
    %v3372 = vadd.f32 %v3285, %v3365
    %v3373 = vxor.u32 %v3369, 2147483648
    %v3374 = vmul.f32 %v3373, 1.442695
    %v3375 = vpow.pop %v3374
    %v3376 = vadd.f32 %v3375, 1.0
    %v3377 = vrcp.pop %v3376
    %v3378 = vmul.f32 1.0, %v3377
    %v3379 = vxor.u32 %v3370, 2147483648
    %v3380 = vmul.f32 %v3379, 1.442695
    %v3381 = vpow.pop %v3380
    %v3382 = vadd.f32 %v3381, 1.0
    %v3383 = vrcp.pop %v3382
    %v3384 = vmul.f32 1.0, %v3383
    %v3385 = vtanh.pop %v3371
    %v3386 = vxor.u32 %v3372, 2147483648
    %v3387 = vmul.f32 %v3386, 1.442695
    %v3388 = vpow.pop %v3387
    %v3389 = vadd.f32 %v3388, 1.0
    %v3390 = vrcp.pop %v3389
    %v3391 = vmul.f32 1.0, %v3390
    %v3392 = vmul.f32 %v3384, %v3281
    %v3393 = vmul.f32 %v3378, %v3385
    %v3394 = vadd.f32 %v3392, %v3393
    %v3395 = vtanh.pop %v3394
    %v3396 = vmul.f32 %v3391, %v3395
    %v3397 = vld [vmem:[%s1453] sm:$0xff]
    %vm3398 = vcmp.gt.f32.partialorder %v3397, 0.0
    %v3399 = vsel %vm3398, 1, 0
    %3400 = vset.pattern.permute.xlu0 0
    %3401 = vperm.xlu0 %3400, %v3399
    %v3402 = vpop.permute.xlu0 %3401
    %vm3403 = vcmp.eq.s32.totalorder %v3402, 1
    %v3404 = vsel %vm3403, %v3396, 0.0
    %3405 = vst [vmem:[#allocation2 + $0x20] sm:$0xff] %v3404
    %v3406 = vsel %vm3403, %v3396, %v3280
    %v3407 = vsel %vm3403, %v3394, %v3281
    %v3408 = vld [vmem:[%s1085 + $0x40] sm:$0xff]
    %v3409 = vld [vmem:[%s1085 + $0x48] sm:$0xff]
    %v3410 = vld [vmem:[%s1085 + $0x50] sm:$0xff]
    %v3411 = vld [vmem:[%s1085 + $0x58] sm:$0xff]
    %v3412 = vpack.c.bf16 %v3406, %v3406
    %3413 = vmatprep.subr.bf16.mxu0 %v2727
    %3414 = vmatpush1.bf16.msra.mxu0 %v2726
    %3415 = vmatprep.subr.bf16.mxu0 %v2731
    %3416 = vmatpush1.bf16.msra.mxu0 %v2730
    %3417 = vmatprep.subr.bf16.mxu0 %v2735
    %3418 = vmatpush1.bf16.msra.mxu0 %v2734
    %3419 = vmatprep.subr.bf16.mxu0 %v2739
    %3420 = vmatpush1.bf16.msra.mxu0 %v2738
    %3421 = vmatprep.subr.bf16.mxu0 %v2743
    %3422 = vmatpush1.bf16.msra.mxu0 %v2742
    %3423 = vmatprep.subr.bf16.mxu0 %v2747
    %3424 = vmatpush1.bf16.msra.mxu0 %v2746
    %3425 = vmatprep.subr.bf16.mxu0 %v2751
    %3426 = vmatpush1.bf16.msra.mxu0 %v2750
    %3427 = vmatprep.subr.bf16.mxu0 %v2755
    %3428 = vmatpush1.bf16.msra.mxu0 %v2754
    %3429 = vmatprep.subr.bf16.mxu0 0
    %3430 = vmatpush1.bf16.msra.mxu0 0
    %3431 = vmatprep.subr.bf16.mxu0 0
    %3432 = vmatpush1.bf16.msra.mxu0 0
    %3433 = vmatprep.subr.bf16.mxu0 0
    %3434 = vmatpush1.bf16.msra.mxu0 0
    %3435 = vmatprep.subr.bf16.mxu0 0
    %3436 = vmatpush1.bf16.msra.mxu0 0
    %3437 = vmatprep.subr.bf16.mxu0 0
    %3438 = vmatpush1.bf16.msra.mxu0 0
    %3439 = vmatprep.subr.bf16.mxu0 0
    %3440 = vmatpush1.bf16.msra.mxu0 0
    %3441 = vmatprep.subr.bf16.mxu0 0
    %3442 = vmatpush1.bf16.msra.mxu0 0
    %3443 = vmatprep.subr.bf16.mxu0 0
    %3444 = vmatpush1.bf16.msra.mxu0 0
    %3445 = vmatprep.mubr.bf16.mxu0 0
    %3446 = vmatmul.mubr.bf16.gmra.mrb[0].mxu0 %v3412
    %v3447 = vpop.f32.mrb[0].mxu0
    %v3448 = vadd.f32 0.0, %v3447
    %v3449 = vpop.f32.mrb[0].mxu0
    %v3450 = vadd.f32 0.0, %v3449
    %v3451 = vpop.f32.mrb[0].mxu0
    %v3452 = vpop.f32.mrb[0].mxu0
    %3453 = vdwg.mxu0
    %3454 = vmatprep.subr.bf16.mxu0 %v2729
    %3455 = vmatpush1.bf16.msra.mxu0 %v2728
    %3456 = vmatprep.subr.bf16.mxu0 %v2733
    %3457 = vmatpush1.bf16.msra.mxu0 %v2732
    %3458 = vmatprep.subr.bf16.mxu0 %v2737
    %3459 = vmatpush1.bf16.msra.mxu0 %v2736
    %3460 = vmatprep.subr.bf16.mxu0 %v2741
    %3461 = vmatpush1.bf16.msra.mxu0 %v2740
    %3462 = vmatprep.subr.bf16.mxu0 %v2745
    %3463 = vmatpush1.bf16.msra.mxu0 %v2744
    %3464 = vmatprep.subr.bf16.mxu0 %v2749
    %3465 = vmatpush1.bf16.msra.mxu0 %v2748
    %3466 = vmatprep.subr.bf16.mxu0 %v2753
    %3467 = vmatpush1.bf16.msra.mxu0 %v2752
    %3468 = vmatprep.subr.bf16.mxu0 %v2757
    %3469 = vmatpush1.bf16.msra.mxu0 %v2756
    %3470 = vmatprep.subr.bf16.mxu0 0
    %3471 = vmatpush1.bf16.msra.mxu0 0
    %3472 = vmatprep.subr.bf16.mxu0 0
    %3473 = vmatpush1.bf16.msra.mxu0 0
    %3474 = vmatprep.subr.bf16.mxu0 0
    %3475 = vmatpush1.bf16.msra.mxu0 0
    %3476 = vmatprep.subr.bf16.mxu0 0
    %3477 = vmatpush1.bf16.msra.mxu0 0
    %3478 = vmatprep.subr.bf16.mxu0 0
    %3479 = vmatpush1.bf16.msra.mxu0 0
    %3480 = vmatprep.subr.bf16.mxu0 0
    %3481 = vmatpush1.bf16.msra.mxu0 0
    %3482 = vmatprep.subr.bf16.mxu0 0
    %3483 = vmatpush1.bf16.msra.mxu0 0
    %3484 = vmatprep.subr.bf16.mxu0 0
    %3485 = vmatpush1.bf16.msra.mxu0 0
    %3486 = vmatprep.mubr.bf16.mxu0 0
    %3487 = vmatmul.mubr.bf16.gmra.mrb[0].mxu0 %v3412
    %v3488 = vpop.f32.mrb[0].mxu0
    %v3489 = vadd.f32 0.0, %v3488
    %v3490 = vpop.f32.mrb[0].mxu0
    %v3491 = vadd.f32 0.0, %v3490
    %v3492 = vpop.f32.mrb[0].mxu0
    %v3493 = vpop.f32.mrb[0].mxu0
    %3494 = vdwg.mxu0
    %v3495 = vadd.f32 %v3408, %v3448
    %v3496 = vadd.f32 %v3409, %v3450
    %v3497 = vadd.f32 %v3410, %v3489
    %v3498 = vadd.f32 %v3411, %v3491
    %v3499 = vxor.u32 %v3495, 2147483648
    %v3500 = vmul.f32 %v3499, 1.442695
    %v3501 = vpow.pop %v3500
    %v3502 = vadd.f32 %v3501, 1.0
    %v3503 = vrcp.pop %v3502
    %v3504 = vmul.f32 1.0, %v3503
    %v3505 = vxor.u32 %v3496, 2147483648
    %v3506 = vmul.f32 %v3505, 1.442695
    %v3507 = vpow.pop %v3506
    %v3508 = vadd.f32 %v3507, 1.0
    %v3509 = vrcp.pop %v3508
    %v3510 = vmul.f32 1.0, %v3509
    %v3511 = vtanh.pop %v3497
    %v3512 = vxor.u32 %v3498, 2147483648
    %v3513 = vmul.f32 %v3512, 1.442695
    %v3514 = vpow.pop %v3513
    %v3515 = vadd.f32 %v3514, 1.0
    %v3516 = vrcp.pop %v3515
    %v3517 = vmul.f32 1.0, %v3516
    %v3518 = vmul.f32 %v3510, %v3407
    %v3519 = vmul.f32 %v3504, %v3511
    %v3520 = vadd.f32 %v3518, %v3519
    %v3521 = vtanh.pop %v3520
    %v3522 = vmul.f32 %v3517, %v3521
    %v3523 = vld [vmem:[%s1201] sm:$0xff]
    %vm3524 = vcmp.gt.f32.partialorder %v3523, 0.0
    %v3525 = vsel %vm3524, 1, 0
    %3526 = vset.pattern.permute.xlu0 0
    %3527 = vperm.xlu0 %3526, %v3525
    %v3528 = vpop.permute.xlu0 %3527
    %vm3529 = vcmp.eq.s32.totalorder %v3528, 1
    %v3530 = vsel %vm3529, %v3522, 0.0
    %3531 = vst [vmem:[#allocation2 + $0x28] sm:$0xff] %v3530
    %v3532 = vsel %vm3529, %v3522, %v3406
    %v3533 = vsel %vm3529, %v3520, %v3407
    %v3534 = vld [vmem:[%s833 + $0x40] sm:$0xff]
    %v3535 = vld [vmem:[%s833 + $0x48] sm:$0xff]
    %v3536 = vld [vmem:[%s833 + $0x50] sm:$0xff]
    %v3537 = vld [vmem:[%s833 + $0x58] sm:$0xff]
    %v3538 = vpack.c.bf16 %v3532, %v3532
    %3539 = vmatprep.subr.bf16.mxu0 %v2727
    %3540 = vmatpush1.bf16.msra.mxu0 %v2726
    %3541 = vmatprep.subr.bf16.mxu0 %v2731
    %3542 = vmatpush1.bf16.msra.mxu0 %v2730
    %3543 = vmatprep.subr.bf16.mxu0 %v2735
    %3544 = vmatpush1.bf16.msra.mxu0 %v2734
    %3545 = vmatprep.subr.bf16.mxu0 %v2739
    %3546 = vmatpush1.bf16.msra.mxu0 %v2738
    %3547 = vmatprep.subr.bf16.mxu0 %v2743
    %3548 = vmatpush1.bf16.msra.mxu0 %v2742
    %3549 = vmatprep.subr.bf16.mxu0 %v2747
    %3550 = vmatpush1.bf16.msra.mxu0 %v2746
    %3551 = vmatprep.subr.bf16.mxu0 %v2751
    %3552 = vmatpush1.bf16.msra.mxu0 %v2750
    %3553 = vmatprep.subr.bf16.mxu0 %v2755
    %3554 = vmatpush1.bf16.msra.mxu0 %v2754
    %3555 = vmatprep.subr.bf16.mxu0 0
    %3556 = vmatpush1.bf16.msra.mxu0 0
    %3557 = vmatprep.subr.bf16.mxu0 0
    %3558 = vmatpush1.bf16.msra.mxu0 0
    %3559 = vmatprep.subr.bf16.mxu0 0
    %3560 = vmatpush1.bf16.msra.mxu0 0
    %3561 = vmatprep.subr.bf16.mxu0 0
    %3562 = vmatpush1.bf16.msra.mxu0 0
    %3563 = vmatprep.subr.bf16.mxu0 0
    %3564 = vmatpush1.bf16.msra.mxu0 0
    %3565 = vmatprep.subr.bf16.mxu0 0
    %3566 = vmatpush1.bf16.msra.mxu0 0
    %3567 = vmatprep.subr.bf16.mxu0 0
    %3568 = vmatpush1.bf16.msra.mxu0 0
    %3569 = vmatprep.subr.bf16.mxu0 0
    %3570 = vmatpush1.bf16.msra.mxu0 0
    %3571 = vmatprep.mubr.bf16.mxu0 0
    %3572 = vmatmul.mubr.bf16.gmra.mrb[0].mxu0 %v3538
    %v3573 = vpop.f32.mrb[0].mxu0
    %v3574 = vadd.f32 0.0, %v3573
    %v3575 = vpop.f32.mrb[0].mxu0
    %v3576 = vadd.f32 0.0, %v3575
    %v3577 = vpop.f32.mrb[0].mxu0
    %v3578 = vpop.f32.mrb[0].mxu0
    %3579 = vdwg.mxu0
    %3580 = vmatprep.subr.bf16.mxu0 %v2729
    %3581 = vmatpush1.bf16.msra.mxu0 %v2728
    %3582 = vmatprep.subr.bf16.mxu0 %v2733
    %3583 = vmatpush1.bf16.msra.mxu0 %v2732
    %3584 = vmatprep.subr.bf16.mxu0 %v2737
    %3585 = vmatpush1.bf16.msra.mxu0 %v2736
    %3586 = vmatprep.subr.bf16.mxu0 %v2741
    %3587 = vmatpush1.bf16.msra.mxu0 %v2740
    %3588 = vmatprep.subr.bf16.mxu0 %v2745
    %3589 = vmatpush1.bf16.msra.mxu0 %v2744
    %3590 = vmatprep.subr.bf16.mxu0 %v2749
    %3591 = vmatpush1.bf16.msra.mxu0 %v2748
    %3592 = vmatprep.subr.bf16.mxu0 %v2753
    %3593 = vmatpush1.bf16.msra.mxu0 %v2752
    %3594 = vmatprep.subr.bf16.mxu0 %v2757
    %3595 = vmatpush1.bf16.msra.mxu0 %v2756
    %3596 = vmatprep.subr.bf16.mxu0 0
    %3597 = vmatpush1.bf16.msra.mxu0 0
    %3598 = vmatprep.subr.bf16.mxu0 0
    %3599 = vmatpush1.bf16.msra.mxu0 0
    %3600 = vmatprep.subr.bf16.mxu0 0
    %3601 = vmatpush1.bf16.msra.mxu0 0
    %3602 = vmatprep.subr.bf16.mxu0 0
    %3603 = vmatpush1.bf16.msra.mxu0 0
    %3604 = vmatprep.subr.bf16.mxu0 0
    %3605 = vmatpush1.bf16.msra.mxu0 0
    %3606 = vmatprep.subr.bf16.mxu0 0
    %3607 = vmatpush1.bf16.msra.mxu0 0
    %3608 = vmatprep.subr.bf16.mxu0 0
    %3609 = vmatpush1.bf16.msra.mxu0 0
    %3610 = vmatprep.subr.bf16.mxu0 0
    %3611 = vmatpush1.bf16.msra.mxu0 0
    %3612 = vmatprep.mubr.bf16.mxu0 0
    %3613 = vmatmul.mubr.bf16.gmra.mrb[0].mxu0 %v3538
    %v3614 = vpop.f32.mrb[0].mxu0
    %v3615 = vadd.f32 0.0, %v3614
    %v3616 = vpop.f32.mrb[0].mxu0
    %v3617 = vadd.f32 0.0, %v3616
    %v3618 = vpop.f32.mrb[0].mxu0
    %v3619 = vpop.f32.mrb[0].mxu0
    %3620 = vdwg.mxu0
    %v3621 = vadd.f32 %v3534, %v3574
    %v3622 = vadd.f32 %v3535, %v3576
    %v3623 = vadd.f32 %v3536, %v3615
    %v3624 = vadd.f32 %v3537, %v3617
    %v3625 = vxor.u32 %v3621, 2147483648
    %v3626 = vmul.f32 %v3625, 1.442695
    %v3627 = vpow.pop %v3626
    %v3628 = vadd.f32 %v3627, 1.0
    %v3629 = vrcp.pop %v3628
    %v3630 = vmul.f32 1.0, %v3629
    %v3631 = vxor.u32 %v3622, 2147483648
    %v3632 = vmul.f32 %v3631, 1.442695
    %v3633 = vpow.pop %v3632
    %v3634 = vadd.f32 %v3633, 1.0
    %v3635 = vrcp.pop %v3634
    %v3636 = vmul.f32 1.0, %v3635
    %v3637 = vtanh.pop %v3623
    %v3638 = vxor.u32 %v3624, 2147483648
    %v3639 = vmul.f32 %v3638, 1.442695
    %v3640 = vpow.pop %v3639
    %v3641 = vadd.f32 %v3640, 1.0
    %v3642 = vrcp.pop %v3641
    %v3643 = vmul.f32 1.0, %v3642
    %v3644 = vmul.f32 %v3636, %v3533
    %v3645 = vmul.f32 %v3630, %v3637
    %v3646 = vadd.f32 %v3644, %v3645
    %v3647 = vtanh.pop %v3646
    %v3648 = vmul.f32 %v3643, %v3647
    %v3649 = vld [vmem:[%s949] sm:$0xff]
    %vm3650 = vcmp.gt.f32.partialorder %v3649, 0.0
    %v3651 = vsel %vm3650, 1, 0
    %3652 = vset.pattern.permute.xlu0 0
    %3653 = vperm.xlu0 %3652, %v3651
    %v3654 = vpop.permute.xlu0 %3653
    %vm3655 = vcmp.eq.s32.totalorder %v3654, 1
    %v3656 = vsel %vm3655, %v3648, 0.0
    %3657 = vst [vmem:[#allocation2 + $0x30] sm:$0xff] %v3656
    %v3658 = vsel %vm3655, %v3648, %v3532
    %v3659 = vsel %vm3655, %v3646, %v3533
    %v3660 = vld [vmem:[%s422 + $0x40] sm:$0xff]
    %v3661 = vld [vmem:[%s422 + $0x48] sm:$0xff]
    %v3662 = vld [vmem:[%s422 + $0x50] sm:$0xff]
    %v3663 = vld [vmem:[%s422 + $0x58] sm:$0xff]
    %v3664 = vpack.c.bf16 %v3658, %v3658
    %3665 = vmatprep.subr.bf16.mxu0 %v2727
    %3666 = vmatpush1.bf16.msra.mxu0 %v2726
    %3667 = vmatprep.subr.bf16.mxu0 %v2731
    %3668 = vmatpush1.bf16.msra.mxu0 %v2730
    %3669 = vmatprep.subr.bf16.mxu0 %v2735
    %3670 = vmatpush1.bf16.msra.mxu0 %v2734
    %3671 = vmatprep.subr.bf16.mxu0 %v2739
    %3672 = vmatpush1.bf16.msra.mxu0 %v2738
    %3673 = vmatprep.subr.bf16.mxu0 %v2743
    %3674 = vmatpush1.bf16.msra.mxu0 %v2742
    %3675 = vmatprep.subr.bf16.mxu0 %v2747
    %3676 = vmatpush1.bf16.msra.mxu0 %v2746
    %3677 = vmatprep.subr.bf16.mxu0 %v2751
    %3678 = vmatpush1.bf16.msra.mxu0 %v2750
    %3679 = vmatprep.subr.bf16.mxu0 %v2755
    %3680 = vmatpush1.bf16.msra.mxu0 %v2754
    %3681 = vmatprep.subr.bf16.mxu0 0
    %3682 = vmatpush1.bf16.msra.mxu0 0
    %3683 = vmatprep.subr.bf16.mxu0 0
    %3684 = vmatpush1.bf16.msra.mxu0 0
    %3685 = vmatprep.subr.bf16.mxu0 0
    %3686 = vmatpush1.bf16.msra.mxu0 0
    %3687 = vmatprep.subr.bf16.mxu0 0
    %3688 = vmatpush1.bf16.msra.mxu0 0
    %3689 = vmatprep.subr.bf16.mxu0 0
    %3690 = vmatpush1.bf16.msra.mxu0 0
    %3691 = vmatprep.subr.bf16.mxu0 0
    %3692 = vmatpush1.bf16.msra.mxu0 0
    %3693 = vmatprep.subr.bf16.mxu0 0
    %3694 = vmatpush1.bf16.msra.mxu0 0
    %3695 = vmatprep.subr.bf16.mxu0 0
    %3696 = vmatpush1.bf16.msra.mxu0 0
    %3697 = vmatprep.mubr.bf16.mxu0 0
    %3698 = vmatmul.mubr.bf16.gmra.mrb[0].mxu0 %v3664
    %v3699 = vpop.f32.mrb[0].mxu0
    %v3700 = vadd.f32 0.0, %v3699
    %v3701 = vpop.f32.mrb[0].mxu0
    %v3702 = vadd.f32 0.0, %v3701
    %v3703 = vpop.f32.mrb[0].mxu0
    %v3704 = vpop.f32.mrb[0].mxu0
    %3705 = vdwg.mxu0
    %3706 = vmatprep.subr.bf16.mxu0 %v2729
    %3707 = vmatpush1.bf16.msra.mxu0 %v2728
    %3708 = vmatprep.subr.bf16.mxu0 %v2733
    %3709 = vmatpush1.bf16.msra.mxu0 %v2732
    %3710 = vmatprep.subr.bf16.mxu0 %v2737
    %3711 = vmatpush1.bf16.msra.mxu0 %v2736
    %3712 = vmatprep.subr.bf16.mxu0 %v2741
    %3713 = vmatpush1.bf16.msra.mxu0 %v2740
    %3714 = vmatprep.subr.bf16.mxu0 %v2745
    %3715 = vmatpush1.bf16.msra.mxu0 %v2744
    %3716 = vmatprep.subr.bf16.mxu0 %v2749
    %3717 = vmatpush1.bf16.msra.mxu0 %v2748
    %3718 = vmatprep.subr.bf16.mxu0 %v2753
    %3719 = vmatpush1.bf16.msra.mxu0 %v2752
    %3720 = vmatprep.subr.bf16.mxu0 %v2757
    %3721 = vmatpush1.bf16.msra.mxu0 %v2756
    %3722 = vmatprep.subr.bf16.mxu0 0
    %3723 = vmatpush1.bf16.msra.mxu0 0
    %3724 = vmatprep.subr.bf16.mxu0 0
    %3725 = vmatpush1.bf16.msra.mxu0 0
    %3726 = vmatprep.subr.bf16.mxu0 0
    %3727 = vmatpush1.bf16.msra.mxu0 0
    %3728 = vmatprep.subr.bf16.mxu0 0
    %3729 = vmatpush1.bf16.msra.mxu0 0
    %3730 = vmatprep.subr.bf16.mxu0 0
    %3731 = vmatpush1.bf16.msra.mxu0 0
    %3732 = vmatprep.subr.bf16.mxu0 0
    %3733 = vmatpush1.bf16.msra.mxu0 0
    %3734 = vmatprep.subr.bf16.mxu0 0
    %3735 = vmatpush1.bf16.msra.mxu0 0
    %3736 = vmatprep.subr.bf16.mxu0 0
    %3737 = vmatpush1.bf16.msra.mxu0 0
    %3738 = vmatprep.mubr.bf16.mxu0 0
    %3739 = vmatmul.mubr.bf16.gmra.mrb[0].mxu0 %v3664
    %v3740 = vpop.f32.mrb[0].mxu0
    %v3741 = vadd.f32 0.0, %v3740
    %v3742 = vpop.f32.mrb[0].mxu0
    %v3743 = vadd.f32 0.0, %v3742
    %v3744 = vpop.f32.mrb[0].mxu0
    %v3745 = vpop.f32.mrb[0].mxu0
    %3746 = vdwg.mxu0
    %v3747 = vadd.f32 %v3660, %v3700
    %v3748 = vadd.f32 %v3661, %v3702
    %v3749 = vadd.f32 %v3662, %v3741
    %v3750 = vadd.f32 %v3663, %v3743
    %v3751 = vxor.u32 %v3747, 2147483648
    %v3752 = vmul.f32 %v3751, 1.442695
    %v3753 = vpow.pop %v3752
    %v3754 = vadd.f32 %v3753, 1.0
    %v3755 = vrcp.pop %v3754
    %v3756 = vmul.f32 1.0, %v3755
    %v3757 = vxor.u32 %v3748, 2147483648
    %v3758 = vmul.f32 %v3757, 1.442695
    %v3759 = vpow.pop %v3758
    %v3760 = vadd.f32 %v3759, 1.0
    %v3761 = vrcp.pop %v3760
    %v3762 = vmul.f32 1.0, %v3761
    %v3763 = vtanh.pop %v3749
    %v3764 = vxor.u32 %v3750, 2147483648
    %v3765 = vmul.f32 %v3764, 1.442695
    %v3766 = vpow.pop %v3765
    %v3767 = vadd.f32 %v3766, 1.0
    %v3768 = vrcp.pop %v3767
    %v3769 = vmul.f32 1.0, %v3768
    %v3770 = vmul.f32 %v3762, %v3659
    %v3771 = vmul.f32 %v3756, %v3763
    %v3772 = vadd.f32 %v3770, %v3771
    %v3773 = vtanh.pop %v3772
    %v3774 = vmul.f32 %v3769, %v3773
    %v3775 = vld [vmem:[%s697] sm:$0xff]
    %vm3776 = vcmp.gt.f32.partialorder %v3775, 0.0
    %v3777 = vsel %vm3776, 1, 0
    %3778 = vset.pattern.permute.xlu0 0
    %3779 = vperm.xlu0 %3778, %v3777
    %v3780 = vpop.permute.xlu0 %3779
    %vm3781 = vcmp.eq.s32.totalorder %v3780, 1
    %v3782 = vsel %vm3781, %v3774, 0.0
    %3783 = vst [vmem:[#allocation2 + $0x38] sm:$0xff] %v3782
    %v3784 = vld [vmem:[#allocation2] sm:$0xff]
    %v3785 = vld [vmem:[#allocation2 + $0x8] sm:$0xff]
    %v3786 = vld [vmem:[#allocation2 + $0x10] sm:$0xff]
    %v3787 = vld [vmem:[#allocation2 + $0x18] sm:$0xff]
    %v3788 = vld [vmem:[#allocation2 + $0x20] sm:$0xff]
    %v3789 = vld [vmem:[#allocation2 + $0x28] sm:$0xff]
    %v3790 = vld [vmem:[#allocation2 + $0x30] sm:$0xff]
    %v3791 = vld [vmem:[#allocation2 + $0x38] sm:$0xff]
    %v3792 = vpack.c.bf16 %v3785, %v3784
    %v3793 = vpack.c.bf16 %v3787, %v3786
    %v3794 = vpack.c.bf16 %v3789, %v3788
    %v3795 = vpack.c.bf16 %v3791, %v3790
    %v3796 = vld [vmem:[%s10] sm:$0xf]
    %v3797 = vld [vmem:[%s10 + $0x4] sm:$0xf]
    %v3798 = vld [vmem:[%s10 + $0x8] sm:$0xf]
    %v3799 = vld [vmem:[%s10 + $0xc] sm:$0xf]
    %v3800 = vld [vmem:[%s10 + $0x10] sm:$0xf]
    %v3801 = vld [vmem:[%s10 + $0x14] sm:$0xf]
    %v3802 = vld [vmem:[%s10 + $0x18] sm:$0xf]
    %v3803 = vld [vmem:[%s10 + $0x1c] sm:$0xf]
    %v3804 = vld [vmem:[%s10 + $0x20] sm:$0xf]
    %v3805 = vld [vmem:[%s10 + $0x24] sm:$0xf]
    %v3806 = vld [vmem:[%s10 + $0x28] sm:$0xf]
    %v3807 = vld [vmem:[%s10 + $0x2c] sm:$0xf]
    %v3808 = vld [vmem:[%s10 + $0x30] sm:$0xf]
    %v3809 = vld [vmem:[%s10 + $0x34] sm:$0xf]
    %v3810 = vld [vmem:[%s10 + $0x38] sm:$0xf]
    %v3811 = vld [vmem:[%s10 + $0x3c] sm:$0xf]
    %v3812 = vld [vmem:[%s11] sm:$0x1]
    %v3814 = vlaneseq
    %v3815 = vshrl.u32 %v3814, 7
    %v3816 = vsub.s32 0, %v3815
    %v3817 = vrot.slane %v3812, %v3816
    %v3835 = vunpack.c.l.b16 %v3796
    %v3836 = vunpack.c.l.b16 %v3797
    %v3837 = vunpack.c.l.b16 %v3798
    %v3838 = vunpack.c.l.b16 %v3799
    %v3839 = vunpack.c.l.b16 %v3800
    %v3840 = vunpack.c.l.b16 %v3801
    %v3841 = vunpack.c.l.b16 %v3802
    %v3842 = vunpack.c.l.b16 %v3803
    %v3843 = vunpack.c.l.b16 %v3804
    %v3844 = vunpack.c.l.b16 %v3805
    %v3845 = vunpack.c.l.b16 %v3806
    %v3846 = vunpack.c.l.b16 %v3807
    %v3847 = vunpack.c.l.b16 %v3808
    %v3848 = vunpack.c.l.b16 %v3809
    %v3849 = vunpack.c.l.b16 %v3810
    %v3850 = vunpack.c.l.b16 %v3811
    %v3851 = vpack.c.b16 %v3836, %v3835
    %v3852 = vpack.c.b16 %v3838, %v3837
    %v3853 = vpack.c.b16 %v3840, %v3839
    %v3854 = vpack.c.b16 %v3842, %v3841
    %v3855 = vpack.c.b16 %v3844, %v3843
    %v3856 = vpack.c.b16 %v3846, %v3845
    %v3857 = vpack.c.b16 %v3848, %v3847
    %v3858 = vpack.c.b16 %v3850, %v3849
    %3867 = vmatprep.subr.bf16.mxu0 0
    %3868 = vmatpush1.bf16.msra.mxu0 %v3851
    %3869 = vmatprep.subr.bf16.mxu0 0
    %3870 = vmatpush1.bf16.msra.mxu0 %v3852
    %3871 = vmatprep.subr.bf16.mxu0 0
    %3872 = vmatpush1.bf16.msra.mxu0 %v3853
    %3873 = vmatprep.subr.bf16.mxu0 0
    %3874 = vmatpush1.bf16.msra.mxu0 %v3854
    %3875 = vmatprep.subr.bf16.mxu0 0
    %3876 = vmatpush1.bf16.msra.mxu0 %v3855
    %3877 = vmatprep.subr.bf16.mxu0 0
    %3878 = vmatpush1.bf16.msra.mxu0 %v3856
    %3879 = vmatprep.subr.bf16.mxu0 0
    %3880 = vmatpush1.bf16.msra.mxu0 %v3857
    %3881 = vmatprep.subr.bf16.mxu0 0
    %3882 = vmatpush1.bf16.msra.mxu0 %v3858
    %3883 = vmatprep.subr.bf16.mxu0 0
    %3884 = vmatpush1.bf16.msra.mxu0 0
    %3885 = vmatprep.subr.bf16.mxu0 0
    %3886 = vmatpush1.bf16.msra.mxu0 0
    %3887 = vmatprep.subr.bf16.mxu0 0
    %3888 = vmatpush1.bf16.msra.mxu0 0
    %3889 = vmatprep.subr.bf16.mxu0 0
    %3890 = vmatpush1.bf16.msra.mxu0 0
    %3891 = vmatprep.subr.bf16.mxu0 0
    %3892 = vmatpush1.bf16.msra.mxu0 0
    %3893 = vmatprep.subr.bf16.mxu0 0
    %3894 = vmatpush1.bf16.msra.mxu0 0
    %3895 = vmatprep.subr.bf16.mxu0 0
    %3896 = vmatpush1.bf16.msra.mxu0 0
    %3897 = vmatprep.subr.bf16.mxu0 0
    %3898 = vmatpush1.bf16.msra.mxu0 0
    %3899 = vmatprep.mubr.bf16.mxu0 0
    %3900 = vmatmul.mubr.bf16.gmra.mrb[0].mxu0 %v3792
    %v3901 = vpop.f32.mrb[0].mxu0
    %v3902 = vadd.f32 %v3817, %v3901
    %v3903 = vpop.f32.mrb[0].mxu0
    %v3904 = vpop.f32.mrb[0].mxu0
    %v3905 = vadd.f32 %v3817, %v3904
    %v3906 = vpop.f32.mrb[0].mxu0
    %3907 = vmatprep.mubr.bf16.mxu0 0
    %3908 = vmatmul.mubr.bf16.gmra.mrb[0].mxu0 %v3793
    %v3909 = vpop.f32.mrb[0].mxu0
    %v3910 = vadd.f32 %v3817, %v3909
    %v3911 = vpop.f32.mrb[0].mxu0
    %v3912 = vpop.f32.mrb[0].mxu0
    %v3913 = vadd.f32 %v3817, %v3912
    %v3914 = vpop.f32.mrb[0].mxu0
    %3915 = vmatprep.mubr.bf16.mxu0 0
    %3916 = vmatmul.mubr.bf16.gmra.mrb[0].mxu0 %v3794
    %v3917 = vpop.f32.mrb[0].mxu0
    %v3918 = vadd.f32 %v3817, %v3917
    %v3919 = vpop.f32.mrb[0].mxu0
    %v3920 = vpop.f32.mrb[0].mxu0
    %v3921 = vadd.f32 %v3817, %v3920
    %v3922 = vpop.f32.mrb[0].mxu0
    %3923 = vmatprep.mubr.bf16.mxu0 0
    %3924 = vmatmul.mubr.bf16.gmra.mrb[0].mxu0 %v3795
    %v3925 = vpop.f32.mrb[0].mxu0
    %v3926 = vadd.f32 %v3817, %v3925
    %v3927 = vpop.f32.mrb[0].mxu0
    %v3928 = vpop.f32.mrb[0].mxu0
    %v3929 = vadd.f32 %v3817, %v3928
    %v3930 = vpop.f32.mrb[0].mxu0
    %3931 = vdwg.mxu0
    %v3932 = vld [vmem:[%s2] sm:$0xff]
    %v3933 = vld [vmem:[%s2 + $0x8] sm:$0xff]
    %v3934 = vld [vmem:[%s2 + $0x10] sm:$0xff]
    %v3935 = vld [vmem:[%s2 + $0x18] sm:$0xff]
    %v3936 = vld [vmem:[%s2 + $0x20] sm:$0xff]
    %v3937 = vld [vmem:[%s2 + $0x28] sm:$0xff]
    %v3938 = vld [vmem:[%s2 + $0x30] sm:$0xff]
    %v3939 = vld [vmem:[%s2 + $0x38] sm:$0xff]
    %3940 = vmax.xlane.f32.xlu0 %v3902
    %v3941 = vpop.xlane.xlu0 %3940
    %3942 = vmax.xlane.f32.xlu0 %v3905
    %v3943 = vpop.xlane.xlu0 %3942
    %3944 = vmax.xlane.f32.xlu0 %v3910
    %v3945 = vpop.xlane.xlu0 %3944
    %3946 = vmax.xlane.f32.xlu0 %v3913
    %v3947 = vpop.xlane.xlu0 %3946
    %3948 = vmax.xlane.f32.xlu0 %v3918
    %v3949 = vpop.xlane.xlu0 %3948
    %3950 = vmax.xlane.f32.xlu0 %v3921
    %v3951 = vpop.xlane.xlu0 %3950
    %3952 = vmax.xlane.f32.xlu0 %v3926
    %v3953 = vpop.xlane.xlu0 %3952
    %3954 = vmax.xlane.f32.xlu0 %v3929
    %v3955 = vpop.xlane.xlu0 %3954
    %v3956 = vsub.f32 %v3902, %v3941
    %v3957 = vsub.f32 %v3905, %v3943
    %v3958 = vsub.f32 %v3910, %v3945
    %v3959 = vsub.f32 %v3913, %v3947
    %v3960 = vsub.f32 %v3918, %v3949
    %v3961 = vsub.f32 %v3921, %v3951
    %v3962 = vsub.f32 %v3926, %v3953
    %v3963 = vsub.f32 %v3929, %v3955
    %v3964 = vmul.f32 %v3956, 1.442695
    %v3965 = vpow.pop %v3964
    %v3966 = vmul.f32 %v3957, 1.442695
    %v3967 = vpow.pop %v3966
    %v3968 = vmul.f32 %v3958, 1.442695
    %v3969 = vpow.pop %v3968
    %v3970 = vmul.f32 %v3959, 1.442695
    %v3971 = vpow.pop %v3970
    %v3972 = vmul.f32 %v3960, 1.442695
    %v3973 = vpow.pop %v3972
    %v3974 = vmul.f32 %v3961, 1.442695
    %v3975 = vpow.pop %v3974
    %v3976 = vmul.f32 %v3962, 1.442695
    %v3977 = vpow.pop %v3976
    %v3978 = vmul.f32 %v3963, 1.442695
    %v3979 = vpow.pop %v3978
    %3980 = vadd.xlane.f32.xlu0 %v3965
    %v3981 = vpop.xlane.xlu0 %3980
    %3982 = vadd.xlane.f32.xlu0 %v3967
    %v3983 = vpop.xlane.xlu0 %3982
    %3984 = vadd.xlane.f32.xlu0 %v3969
    %v3985 = vpop.xlane.xlu0 %3984
    %3986 = vadd.xlane.f32.xlu0 %v3971
    %v3987 = vpop.xlane.xlu0 %3986
    %3988 = vadd.xlane.f32.xlu0 %v3973
    %v3989 = vpop.xlane.xlu0 %3988
    %3990 = vadd.xlane.f32.xlu0 %v3975
    %v3991 = vpop.xlane.xlu0 %3990
    %3992 = vadd.xlane.f32.xlu0 %v3977
    %v3993 = vpop.xlane.xlu0 %3992
    %3994 = vadd.xlane.f32.xlu0 %v3979
    %v3995 = vpop.xlane.xlu0 %3994
    %v3996 = vlog2.pop %v3981
    %v3997 = vmul.f32 %v3996, 0.6931472
    %v3998 = vlog2.pop %v3983
    %v3999 = vmul.f32 %v3998, 0.6931472
    %v4000 = vlog2.pop %v3985
    %v4001 = vmul.f32 %v4000, 0.6931472
    %v4002 = vlog2.pop %v3987
    %v4003 = vmul.f32 %v4002, 0.6931472
    %v4004 = vlog2.pop %v3989
    %v4005 = vmul.f32 %v4004, 0.6931472
    %v4006 = vlog2.pop %v3991
    %v4007 = vmul.f32 %v4006, 0.6931472
    %v4008 = vlog2.pop %v3993
    %v4009 = vmul.f32 %v4008, 0.6931472
    %v4010 = vlog2.pop %v3995
    %v4011 = vmul.f32 %v4010, 0.6931472
    %v4012 = vadd.f32 %v3997, %v3941
    %v4013 = vadd.f32 %v3999, %v3943
    %v4014 = vadd.f32 %v4001, %v3945
    %v4015 = vadd.f32 %v4003, %v3947
    %v4016 = vadd.f32 %v4005, %v3949
    %v4017 = vadd.f32 %v4007, %v3951
    %v4018 = vadd.f32 %v4009, %v3953
    %v4019 = vadd.f32 %v4011, %v3955
    %v4020 = vlaneseq
    %v4021 = vand.u32 %v4020, 127
    %4022 = vset.pattern.permute.xlu0 0
    %4023 = vperm.xlu0 %4022, %v3932
    %v4024 = vpop.permute.xlu0 %4023
    %4025 = vset.pattern.permute.xlu0 0
    %4026 = vperm.xlu0 %4025, %v3933
    %v4027 = vpop.permute.xlu0 %4026
    %4028 = vset.pattern.permute.xlu0 0
    %4029 = vperm.xlu0 %4028, %v3934
    %v4030 = vpop.permute.xlu0 %4029
    %4031 = vset.pattern.permute.xlu0 0
    %4032 = vperm.xlu0 %4031, %v3935
    %v4033 = vpop.permute.xlu0 %4032
    %4034 = vset.pattern.permute.xlu0 0
    %4035 = vperm.xlu0 %4034, %v3936
    %v4036 = vpop.permute.xlu0 %4035
    %4037 = vset.pattern.permute.xlu0 0
    %4038 = vperm.xlu0 %4037, %v3937
    %v4039 = vpop.permute.xlu0 %4038
    %4040 = vset.pattern.permute.xlu0 0
    %4041 = vperm.xlu0 %4040, %v3938
    %v4042 = vpop.permute.xlu0 %4041
    %4043 = vset.pattern.permute.xlu0 0
    %4044 = vperm.xlu0 %4043, %v3939
    %v4045 = vpop.permute.xlu0 %4044
    %vm4046 = vcmp.eq.s32.totalorder %v4021, %v4024
    %vm4047 = vcmp.eq.s32.totalorder %v4021, %v4027
    %vm4048 = vcmp.eq.s32.totalorder %v4021, %v4030
    %vm4049 = vcmp.eq.s32.totalorder %v4021, %v4033
    %vm4050 = vcmp.eq.s32.totalorder %v4021, %v4036
    %vm4051 = vcmp.eq.s32.totalorder %v4021, %v4039
    %vm4052 = vcmp.eq.s32.totalorder %v4021, %v4042
    %vm4053 = vcmp.eq.s32.totalorder %v4021, %v4045
    %v4054 = vsel %vm4046, %v3902, 0.0
    %v4055 = vsel %vm4047, %v3905, 0.0
    %v4056 = vsel %vm4048, %v3910, 0.0
    %v4057 = vsel %vm4049, %v3913, 0.0
    %v4058 = vsel %vm4050, %v3918, 0.0
    %v4059 = vsel %vm4051, %v3921, 0.0
    %v4060 = vsel %vm4052, %v3926, 0.0
    %v4061 = vsel %vm4053, %v3929, 0.0
    %4062 = vadd.xlane.f32.xlu0 %v4054
    %v4063 = vpop.xlane.xlu0 %4062
    %4064 = vadd.xlane.f32.xlu0 %v4055
    %v4065 = vpop.xlane.xlu0 %4064
    %4066 = vadd.xlane.f32.xlu0 %v4056
    %v4067 = vpop.xlane.xlu0 %4066
    %4068 = vadd.xlane.f32.xlu0 %v4057
    %v4069 = vpop.xlane.xlu0 %4068
    %4070 = vadd.xlane.f32.xlu0 %v4058
    %v4071 = vpop.xlane.xlu0 %4070
    %4072 = vadd.xlane.f32.xlu0 %v4059
    %v4073 = vpop.xlane.xlu0 %4072
    %4074 = vadd.xlane.f32.xlu0 %v4060
    %v4075 = vpop.xlane.xlu0 %4074
    %4076 = vadd.xlane.f32.xlu0 %v4061
    %v4077 = vpop.xlane.xlu0 %4076
    %vm4078 = vcmp.ne.s32.totalorder %v3932, 0
    %vm4079 = vcmp.ne.s32.totalorder %v3933, 0
    %vm4080 = vcmp.ne.s32.totalorder %v3934, 0
    %vm4081 = vcmp.ne.s32.totalorder %v3935, 0
    %vm4082 = vcmp.ne.s32.totalorder %v3936, 0
    %vm4083 = vcmp.ne.s32.totalorder %v3937, 0
    %vm4084 = vcmp.ne.s32.totalorder %v3938, 0
    %vm4085 = vcmp.ne.s32.totalorder %v3939, 0
    %v4086 = vsel %vm4078, 1, 0
    %v4087 = vsel %vm4079, 1, 0
    %v4088 = vsel %vm4080, 1, 0
    %v4089 = vsel %vm4081, 1, 0
    %v4090 = vsel %vm4082, 1, 0
    %v4091 = vsel %vm4083, 1, 0
    %v4092 = vsel %vm4084, 1, 0
    %v4093 = vsel %vm4085, 1, 0
    %v4094 = vcvt.s32.f32 %v4086
    %v4095 = vcvt.s32.f32 %v4087
    %v4096 = vcvt.s32.f32 %v4088
    %v4097 = vcvt.s32.f32 %v4089
    %v4098 = vcvt.s32.f32 %v4090
    %v4099 = vcvt.s32.f32 %v4091
    %v4100 = vcvt.s32.f32 %v4092
    %v4101 = vcvt.s32.f32 %v4093
    %v4102 = vsub.f32 %v4012, %v4063
    %v4103 = vsub.f32 %v4013, %v4065
    %v4104 = vsub.f32 %v4014, %v4067
    %v4105 = vsub.f32 %v4015, %v4069
    %v4106 = vsub.f32 %v4016, %v4071
    %v4107 = vsub.f32 %v4017, %v4073
    %v4108 = vsub.f32 %v4018, %v4075
    %v4109 = vsub.f32 %v4019, %v4077
    %v4110 = vmul.f32 %v4094, %v4102
    %v4111 = vmul.f32 %v4095, %v4103
    %v4112 = vmul.f32 %v4096, %v4104
    %v4113 = vmul.f32 %v4097, %v4105
    %v4114 = vmul.f32 %v4098, %v4106
    %v4115 = vmul.f32 %v4099, %v4107
    %v4116 = vmul.f32 %v4100, %v4108
    %v4117 = vmul.f32 %v4101, %v4109
    %vm4118 = vcmask 7168
    %v4119 = vsel %vm4118, %v4110, 0.0
    %v4120 = vsel %vm4118, %v4111, 0.0
    %v4121 = vadd.f32 %v4119, %v4120
    %v4122 = vsel %vm4118, %v4112, 0.0
    %v4123 = vadd.f32 %v4121, %v4122
    %v4124 = vsel %vm4118, %v4113, 0.0
    %v4125 = vadd.f32 %v4123, %v4124
    %v4126 = vsel %vm4118, %v4114, 0.0
    %v4127 = vadd.f32 %v4125, %v4126
    %v4128 = vsel %vm4118, %v4115, 0.0
    %v4129 = vadd.f32 %v4127, %v4128
    %v4130 = vsel %vm4118, %v4116, 0.0
    %v4131 = vadd.f32 %v4129, %v4130
    %v4132 = vsel %vm4118, %v4117, 0.0
    %v4133 = vadd.f32 %v4131, %v4132
    %4134 = vadd.xlane.f32.xlu0 %v4133
    %v4135 = vpop.xlane.xlu0 %4134
    %v4136 = vrot.slane %v4135, 4
    %v4137 = vadd.f32 %v4135, %v4136
    %v4138 = vrot.slane %v4137, 2
    %v4139 = vadd.f32 %v4137, %v4138
    %v4140 = vrot.slane %v4139, 1
    %v4141 = vadd.f32 %v4139, %v4140
    %s4142 = vtos %v4141
    %v4143 = vsel %vm4118, %v4094, 0.0
    %v4144 = vsel %vm4118, %v4095, 0.0
    %v4145 = vadd.f32 %v4143, %v4144
    %v4146 = vsel %vm4118, %v4096, 0.0
    %v4147 = vadd.f32 %v4145, %v4146
    %v4148 = vsel %vm4118, %v4097, 0.0
    %v4149 = vadd.f32 %v4147, %v4148
    %v4150 = vsel %vm4118, %v4098, 0.0
    %v4151 = vadd.f32 %v4149, %v4150
    %v4152 = vsel %vm4118, %v4099, 0.0
    %v4153 = vadd.f32 %v4151, %v4152
    %v4154 = vsel %vm4118, %v4100, 0.0
    %v4155 = vadd.f32 %v4153, %v4154
    %v4156 = vsel %vm4118, %v4101, 0.0
    %v4157 = vadd.f32 %v4155, %v4156
    %4158 = vadd.xlane.f32.xlu0 %v4157
    %v4159 = vpop.xlane.xlu0 %4158
    %v4160 = vrot.slane %v4159, 4
    %v4161 = vadd.f32 %v4159, %v4160
    %v4162 = vrot.slane %v4161, 2
    %v4163 = vadd.f32 %v4161, %v4162
    %v4164 = vrot.slane %v4163, 1
    %v4165 = vadd.f32 %v4163, %v4164
    %s4166 = vtos %v4165
    %s4167 = smax.f32 %s4166, 1.0
    %v4168 = vstv %s4167
    %v4169 = vrcp.pop %v4168
    %s4170 = vtos %v4169
    %s4171 = smul.f32 %s4142, %s4170
    %v4172 = vstv %s4171
    %vm4173 = vcmask 0
    %4174 = vst.msk [vmem:[#allocation3] sm:$0x1] %vm4173, %v4172
    // Predicated region
    $region50: #{vae_dummy_forward.3} parent=1 // pred_check
      _
    $region51: #{vae_dummy_forward.3} parent=1 // pred_check_branch
      %4176 = sbr.rel (0) target = $region53
    $region52: #{vae_dummy_forward.3} parent=1 // pred_region
      %s4178 = ssub.s32 16, 16
      %4179 = vsyncadd [#allocation4], %s4178
      %s4181 = sshll.u32 [#allocation3], 4
      %s4182 = int_to_ptr.vmem [resolvable:$true] %s4181
      %4184 = dma.vmem_to_hbm [thread:$0]  %s4182, 16, %s12, [#allocation4]
    $region53: #{vae_dummy_forward.3} parent=1 // pred_fallthru
      _
    // Predicated region
    $region54: #{vae_dummy_forward.3} parent=1 // pred_check
      _
    $region55: #{vae_dummy_forward.3} parent=1 // pred_check_branch
      %4186 = sbr.rel (0) target = $region57
    $region56: #{vae_dummy_forward.3} parent=1 // pred_region
      %4187 = dma.done [#allocation4], 16
    $region57: #{vae_dummy_forward.3} parent=1 // pred_fallthru
      _
    %4188 = vsyncpa [#allocation4], 1

</llo_original>
